<compile_context>
chip_gen: v7x
topology: tpu7x:2x2x1
jax: 0.10.0
libtpu: 0.0.40
codegen_flags: <defaults>
</compile_context>

<pallas_src>
import functools

import numpy as np
import jax
import jax.numpy as jnp
from jax.experimental import pallas as pl
from jax.experimental.pallas import tpu as pltpu


# ---------------------------------------------------------------------------
# Fused forward kernel (one grid step = one block of BB images)
# ---------------------------------------------------------------------------
def convonn_fused_kernel(
    x_ref,                               # (BB*32, 96) f32   rows=(b,h), cols=w*3+c
    s1_ref, w1_ref, b1_ref,              # (4,R1,R1) bf16, (5,96,168) bf16, (1,168) f32
    rh1e_ref, rh1o_ref,                  # (BB*14, R1) bf16  pool1 even/odd row selectors
    cw1e_ref, cw1o_ref,                  # (168, 84)   bf16  pool1 even/odd col selectors
    s2_ref, w2_ref, b2_ref,              # (4,R2,R2) bf16, (5,84,160) bf16, (1,160) f32
    rh2e_ref, rh2o_ref,                  # (5*BB, R2)  bf16  pool2 row selectors (h-major)
    cw2e_ref, cw2o_ref,                  # (160, 80)   bf16  pool2 col selectors
    wfc1_ref, bfc1_ref,                  # (5,80,120) bf16, (1,120) f32
    wfc2_ref, bfc2_ref,                  # (120,84)   bf16, (1,84)  f32
    wfc3_ref, bfc3_ref,                  # (84,128)   bf16, (1,128) f32 (zero padded)
    o_ref,                               # (BB, 128) f32
):
    f32, bf16 = jnp.float32, jnp.bfloat16
    BB = o_ref.shape[0]

    def mm(a, b):                        # bf16 operands, f32 accumulation
        return jnp.dot(a, b, preferred_element_type=f32)

    # ---- conv1 (valid 5x5) + bias + relu.  The kernel-row shift r -> r+i is
    #      done with aligned 0/1 shift matrices on the MXU (exact selection of
    #      bf16 values; no sublane-offset slices / relayouts).
    xb = x_ref[...].astype(bf16)                                    # (BB*32, 96)
    u = mm(xb, w1_ref[0])
    for i in range(1, 5):
        xi = mm(s1_ref[i - 1], xb).astype(bf16)                     # rows shifted by i
        u = u + mm(xi, w1_ref[i])
    y1 = jnp.maximum(u + b1_ref[...], 0.0)                          # (BB*32, 168) f32

    # ---- maxpool 2x2/2: even/odd row-selector matmuls, then even/odd
    #      column-block-selector matmuls (no non-128-aligned lane shifts).
    y1b = y1.astype(bf16)
    rp = jnp.maximum(mm(rh1e_ref[...], y1b), mm(rh1o_ref[...], y1b))   # (BB*14, 168)
    rpb = rp.astype(bf16)
    p1 = jnp.maximum(mm(rpb, cw1e_ref[...]), mm(rpb, cw1o_ref[...]))   # (BB*14, 84)

    # ---- conv2 (valid 5x5) + bias + relu
    p1b = p1.astype(bf16)
    u2 = mm(p1b, w2_ref[0])
    for i in range(1, 5):
        pi = mm(s2_ref[i - 1], p1b).astype(bf16)
        u2 = u2 + mm(pi, w2_ref[i])
    y2 = jnp.maximum(u2 + b2_ref[...], 0.0)                         # (BB*14, 160) f32

    # ---- maxpool 2x2/2, pooled rows emitted h-major (row h*BB + b)
    y2b = y2.astype(bf16)
    rp2 = jnp.maximum(mm(rh2e_ref[...], y2b), mm(rh2o_ref[...], y2b))  # (5*BB, 160)
    rp2b = rp2.astype(bf16)
    p2 = jnp.maximum(mm(rp2b, cw2e_ref[...]), mm(rp2b, cw2o_ref[...])) # (5*BB, 80)

    # ---- fc1 with no flatten/concat: sum over h of aligned (BB,80) row slabs
    #      times the matching (80,120) block of wfc1.
    p2b = p2.astype(bf16)
    h1 = mm(p2b[0:BB, :], wfc1_ref[0])
    for h in range(1, 5):
        h1 = h1 + mm(p2b[h * BB:(h + 1) * BB, :], wfc1_ref[h])
    h1 = jnp.maximum(h1 + bfc1_ref[...], 0.0)                       # (BB, 120)

    # ---- fc2 -> relu -> fc3 (logits zero-padded to 128 lanes: unmasked store)
    h2 = jnp.maximum(mm(h1.astype(bf16), wfc2_ref[...]) + bfc2_ref[...], 0.0)
    o_ref[...] = mm(h2.astype(bf16), wfc3_ref[...]) + bfc3_ref[...]


# ---------------------------------------------------------------------------
# One-time host-side weight preprocessing
# ---------------------------------------------------------------------------
def prepare_params(params, block_b=8):
    """Lower conv kernels to banded matrices, build 0/1 shift / pooling
    selector matrices, split fc1 into h-blocks, pad fc3 to 128 lanes, and cast
    all matmul operands to bf16 (biases stay f32).

    NOTE: fc1 rows are consumed in (h, w, c) flatten order -- a free
    re-parameterization for synthetic weights.  Real PyTorch ConvoNN weights
    would need fc1 rows permuted from (c, h, w) to (h, w, c) order first.
    """
    assert block_b % 8 == 0, "block_b must be a multiple of 8 (sublane tile)"
    BB = block_b
    R1, R2 = BB * 32, BB * 14
    f32 = np.float32

    def lower_conv(w, w_in):             # (kh,kw,cin,cout) -> (kh, w_in*cin, wo*cout)
        w = np.asarray(w, f32)
        kh, kw, cin, cout = w.shape
        wo = w_in - kw + 1
        mats = np.zeros((kh, w_in * cin, wo * cout), f32)
        for i in range(kh):
            for j in range(kw):
                mats[i] += np.kron(np.eye(w_in, wo, k=-j, dtype=f32), w[i, j])
        return mats

    def shift_mats(rows):                # S_i[r, r+i] = 1, i = 1..4
        return np.stack([np.eye(rows, rows, k=i, dtype=f32) for i in range(1, 5)])

    def row_pool_sel(h_in, h_out, parity, h_major):
        s = np.zeros((h_out * BB, h_in * BB), f32)
        for b in range(BB):
            for k in range(h_out):
                r_out = k * BB + b if h_major else b * h_out + k
                s[r_out, h_in * b + 2 * k + parity] = 1.0
        return s

    def col_pool_sel(w_in, w_out, c, parity):
        s = np.zeros((w_in * c, w_out * c), f32)
        for wp in range(w_out):
            for ch in range(c):
                s[(2 * wp + parity) * c + ch, wp * c + ch] = 1.0
        return s

    wfc3p = np.zeros((84, 128), f32)
    wfc3p[:, :10] = np.asarray(params["w_fc3"], f32)
    bfc3p = np.zeros((1, 128), f32)
    bfc3p[0, :10] = np.asarray(params["b_fc3"], f32)

    bf = lambda a: jnp.asarray(a, jnp.bfloat16)
    fl = lambda a: jnp.asarray(a, jnp.float32)

    return {
        "s1": bf(shift_mats(R1)),                                   # (4, R1, R1)
        "w1": bf(lower_conv(params["w1"], 32)),                     # (5, 96, 168)
        "b1": fl(np.tile(np.asarray(params["b1"], f32), 28)[None, :]),
        "rh1e": bf(row_pool_sel(32, 14, 0, h_major=False)),         # (BB*14, R1)
        "rh1o": bf(row_pool_sel(32, 14, 1, h_major=False)),
        "cw1e": bf(col_pool_sel(28, 14, 6, 0)),                     # (168, 84)
        "cw1o": bf(col_pool_sel(28, 14, 6, 1)),
        "s2": bf(shift_mats(R2)),                                   # (4, R2, R2)
        "w2": bf(lower_conv(params["w2"], 14)),                     # (5, 84, 160)
        "b2": fl(np.tile(np.asarray(params["b2"], f32), 10)[None, :]),
        "rh2e": bf(row_pool_sel(14, 5, 0, h_major=True)),           # (5*BB, R2)
        "rh2o": bf(row_pool_sel(14, 5, 1, h_major=True)),
        "cw2e": bf(col_pool_sel(10, 5, 16, 0)),                     # (160, 80)
        "cw2o": bf(col_pool_sel(10, 5, 16, 1)),
        "wfc1": bf(np.asarray(params["w_fc1"], f32).reshape(5, 80, 120)),
        "bfc1": fl(np.asarray(params["b_fc1"], f32)[None, :]),
        "wfc2": bf(params["w_fc2"]),
        "bfc2": fl(np.asarray(params["b_fc2"], f32)[None, :]),
        "wfc3": bf(wfc3p),                                          # (84, 128)
        "bfc3": fl(bfc3p),                                          # (1, 128)
    }


def _const_spec(shape):
    # whole-array block with a constant block index -> stays VMEM-resident
    return pl.BlockSpec(shape, lambda i, _n=len(shape): (0,) * _n)


@functools.partial(jax.jit, static_argnames=("block_b",))
def convonn_forward(x_nhwc, prep, *, block_b=8):
    """Fused ConvoNN forward.  Takes NHWC input (B, 32, 32, 3); do the
    NCHW->NHWC conversion once in the data pipeline (per the perf review)."""
    B = x_nhwc.shape[0]
    assert x_nhwc.shape[1:] == (32, 32, 3), x_nhwc.shape
    BB = block_b
    assert prep["rh1e"].shape[0] == BB * 14, "prep built for a different block_b"

    bp = ((B + BB - 1) // BB) * BB
    if bp != B:                                   # pad batch to a whole block
        x_nhwc = jnp.pad(x_nhwc, ((0, bp - B), (0, 0), (0, 0), (0, 0)))
    x2d = x_nhwc.reshape(bp * 32, 32 * 3)         # free contiguous reshape

    weights = (prep["s1"], prep["w1"], prep["b1"],
               prep["rh1e"], prep["rh1o"], prep["cw1e"], prep["cw1o"],
               prep["s2"], prep["w2"], prep["b2"],
               prep["rh2e"], prep["rh2o"], prep["cw2e"], prep["cw2o"],
               prep["wfc1"], prep["bfc1"], prep["wfc2"], prep["bfc2"],
               prep["wfc3"], prep["bfc3"])

    out = pl.pallas_call(
        convonn_fused_kernel,
        out_shape=jax.ShapeDtypeStruct((bp, 128), jnp.float32),
        grid=(bp // BB,),
        in_specs=[pl.BlockSpec((BB * 32, 96), lambda i: (i, 0))]
                 + [_const_spec(w.shape) for w in weights],
        out_specs=pl.BlockSpec((BB, 128), lambda i: (i, 0)),
        compiler_params=pltpu.CompilerParams(
            dimension_semantics=("parallel",)),      # both v7x TCs at batch
    )(x2d, *weights)
    return out[:B, :10]


# ---------------------------------------------------------------------------
# Parameter init (PyTorch-default-style uniform(-1/sqrt(fan_in), 1/sqrt(fan_in)))
# ---------------------------------------------------------------------------
def _uniform(key, shape, fan_in):
    bound = float(fan_in) ** -0.5
    return jax.random.uniform(key, shape, jnp.float32, -bound, bound)


def init_params(key):
    ks = jax.random.split(key, 10)
    return {
        "w1": _uniform(ks[0], (5, 5, 3, 6), 3 * 25),
        "b1": _uniform(ks[1], (6,), 3 * 25),
        "w2": _uniform(ks[2], (5, 5, 6, 16), 6 * 25),
        "b2": _uniform(ks[3], (16,), 6 * 25),
        "w_fc1": _uniform(ks[4], (16 * 5 * 5, 120), 16 * 5 * 5),
        "b_fc1": _uniform(ks[5], (120,), 16 * 5 * 5),
        "w_fc2": _uniform(ks[6], (120, 84), 120),
        "b_fc2": _uniform(ks[7], (84,), 120),
        "w_fc3": _uniform(ks[8], (84, 10), 84),
        "b_fc3": _uniform(ks[9], (10,), 84),
    }


# Pure-JAX reference using the SAME precision policy as the kernel
# (bf16 operands at every conv/fc dot boundary, f32 accumulation/elementwise),
# so the comparison isolates kernel-structure errors from requested bf16 math.
def reference_forward(x_nhwc, params):
    bf16, f32 = jnp.bfloat16, jnp.float32

    def conv_relu(x, w, b):
        y = jax.lax.conv_general_dilated(
            x.astype(bf16), jnp.asarray(w, bf16), (1, 1), "VALID",
            dimension_numbers=("NHWC", "HWIO", "NHWC"),
            preferred_element_type=f32)
        return jnp.maximum(y + b, 0.0)

    def pool(x):
        return jax.lax.reduce_window(x, -jnp.inf, jax.lax.max,
                                     (1, 2, 2, 1), (1, 2, 2, 1), "VALID")

    def fc(x, w, b):
        return jnp.dot(x.astype(bf16), jnp.asarray(w, bf16),
                       preferred_element_type=f32) + b

    x = pool(conv_relu(x_nhwc, params["w1"], params["b1"]))
    x = pool(conv_relu(x, params["w2"], params["b2"]))
    x = x.reshape(x.shape[0], -1)                    # (h, w, c) flatten order
    x = jnp.maximum(fc(x, params["w_fc1"], params["b_fc1"]), 0.0)
    x = jnp.maximum(fc(x, params["w_fc2"], params["b_fc2"]), 0.0)
    return fc(x, params["w_fc3"], params["b_fc3"])


if __name__ == "__main__":
    key = jax.random.PRNGKey(0)
    k_x, k_p = jax.random.split(key)
    # fc1's 16*5*5 inputs imply a 3x32x32 input (CIFAR-like); B=16 -> 2 grid blocks.
    B = 16
    x_nchw = jax.random.normal(k_x, (B, 3, 32, 32), jnp.float32)   # PyTorch layout
    params = init_params(k_p)
    prep = prepare_params(params, block_b=8)

    # One-time layout change; production pipelines should feed NHWC directly
    # so the fused kernel is the only consumer of the input in HBM.
    x_nhwc = jnp.transpose(x_nchw, (0, 2, 3, 1))

    out = jax.block_until_ready(convonn_forward(x_nhwc, prep, block_b=8))
    assert out.shape == (B, 10), out.shape

    ref = jax.block_until_ready(reference_forward(x_nhwc, params))
    max_err = float(jnp.max(jnp.abs(out - ref)))
    assert jnp.allclose(out, ref, rtol=2e-2, atol=2e-2), f"mismatch: {max_err}"
    print("KERNEL_OK")
</pallas_src>

<mosaic_0001>
module attributes {stable_mosaic.version = 11 : i64} {
  func.func @convonn_fused_kernel(%arg0: i32, %arg1: memref<256x96xf32, #tpu.memory_space<vmem>>, %arg2: memref<4x256x256xbf16, #tpu.memory_space<vmem>>, %arg3: memref<5x96x168xbf16, #tpu.memory_space<vmem>>, %arg4: memref<1x168xf32, #tpu.memory_space<vmem>>, %arg5: memref<112x256xbf16, #tpu.memory_space<vmem>>, %arg6: memref<112x256xbf16, #tpu.memory_space<vmem>>, %arg7: memref<168x84xbf16, #tpu.memory_space<vmem>>, %arg8: memref<168x84xbf16, #tpu.memory_space<vmem>>, %arg9: memref<4x112x112xbf16, #tpu.memory_space<vmem>>, %arg10: memref<5x84x160xbf16, #tpu.memory_space<vmem>>, %arg11: memref<1x160xf32, #tpu.memory_space<vmem>>, %arg12: memref<40x112xbf16, #tpu.memory_space<vmem>>, %arg13: memref<40x112xbf16, #tpu.memory_space<vmem>>, %arg14: memref<160x80xbf16, #tpu.memory_space<vmem>>, %arg15: memref<160x80xbf16, #tpu.memory_space<vmem>>, %arg16: memref<5x80x120xbf16, #tpu.memory_space<vmem>>, %arg17: memref<1x120xf32, #tpu.memory_space<vmem>>, %arg18: memref<120x84xbf16, #tpu.memory_space<vmem>>, %arg19: memref<1x84xf32, #tpu.memory_space<vmem>>, %arg20: memref<84x128xbf16, #tpu.memory_space<vmem>>, %arg21: memref<1x128xf32, #tpu.memory_space<vmem>>, %arg22: memref<8x128xf32, #tpu.memory_space<vmem>>) attributes {dimension_semantics = [#tpu.dimension_semantics<parallel>], iteration_bounds = array<i64: 2>, scalar_prefetch = 0 : i64, scratch_operands = 0 : i64, tpu.core_type = #tpu.core_type<tc>, window_params = [{transform_indices = @transform_0, window_bounds = array<i64: 256, 96>}, {pipeline_mode = #tpu.pipeline_mode<synchronous>, transform_indices = @transform_1, window_bounds = array<i64: 4, 256, 256>}, {pipeline_mode = #tpu.pipeline_mode<synchronous>, transform_indices = @transform_2, window_bounds = array<i64: 5, 96, 168>}, {pipeline_mode = #tpu.pipeline_mode<synchronous>, transform_indices = @transform_3, window_bounds = array<i64: 1, 168>}, {pipeline_mode = #tpu.pipeline_mode<synchronous>, transform_indices = @transform_4, window_bounds = array<i64: 112, 256>}, {pipeline_mode = #tpu.pipeline_mode<synchronous>, transform_indices = @transform_5, window_bounds = array<i64: 112, 256>}, {pipeline_mode = #tpu.pipeline_mode<synchronous>, transform_indices = @transform_6, window_bounds = array<i64: 168, 84>}, {pipeline_mode = #tpu.pipeline_mode<synchronous>, transform_indices = @transform_7, window_bounds = array<i64: 168, 84>}, {pipeline_mode = #tpu.pipeline_mode<synchronous>, transform_indices = @transform_8, window_bounds = array<i64: 4, 112, 112>}, {pipeline_mode = #tpu.pipeline_mode<synchronous>, transform_indices = @transform_9, window_bounds = array<i64: 5, 84, 160>}, {pipeline_mode = #tpu.pipeline_mode<synchronous>, transform_indices = @transform_10, window_bounds = array<i64: 1, 160>}, {pipeline_mode = #tpu.pipeline_mode<synchronous>, transform_indices = @transform_11, window_bounds = array<i64: 40, 112>}, {pipeline_mode = #tpu.pipeline_mode<synchronous>, transform_indices = @transform_12, window_bounds = array<i64: 40, 112>}, {pipeline_mode = #tpu.pipeline_mode<synchronous>, transform_indices = @transform_13, window_bounds = array<i64: 160, 80>}, {pipeline_mode = #tpu.pipeline_mode<synchronous>, transform_indices = @transform_14, window_bounds = array<i64: 160, 80>}, {pipeline_mode = #tpu.pipeline_mode<synchronous>, transform_indices = @transform_15, window_bounds = array<i64: 5, 80, 120>}, {pipeline_mode = #tpu.pipeline_mode<synchronous>, transform_indices = @transform_16, window_bounds = array<i64: 1, 120>}, {pipeline_mode = #tpu.pipeline_mode<synchronous>, transform_indices = @transform_17, window_bounds = array<i64: 120, 84>}, {pipeline_mode = #tpu.pipeline_mode<synchronous>, transform_indices = @transform_18, window_bounds = array<i64: 1, 84>}, {pipeline_mode = #tpu.pipeline_mode<synchronous>, transform_indices = @transform_19, window_bounds = array<i64: 84, 128>}, {pipeline_mode = #tpu.pipeline_mode<synchronous>, transform_indices = @transform_20, window_bounds = array<i64: 1, 128>}, {transform_indices = @transform_21, window_bounds = array<i64: 8, 128>}]} {
    %c0 = arith.constant 0 : index
    %c0_0 = arith.constant 0 : index
    %0 = vector.load %arg1[%c0, %c0_0] : memref<256x96xf32, #tpu.memory_space<vmem>>, vector<256x96xf32>
    %1 = arith.truncf %0 : vector<256x96xf32> to vector<256x96xbf16>
    %c0_1 = arith.constant 0 : index
    %c0_2 = arith.constant 0 : index
    %c0_3 = arith.constant 0 : index
    %2 = vector.load %arg3[%c0_1, %c0_2, %c0_3] : memref<5x96x168xbf16, #tpu.memory_space<vmem>>, vector<1x96x168xbf16>
    %3 = vector.shape_cast %2 : vector<1x96x168xbf16> to vector<96x168xbf16>
    %cst = arith.constant dense<0.000000e+00> : vector<256x168xf32>
    %4 = tpu.matmul %1, %3, %cst {dimension_numbers = #tpu.dot_dimension_numbers<[1], [0], [0], [1], [0, 0, 1, 1], [], []>} : vector<256x96xbf16>, vector<96x168xbf16>, vector<256x168xf32> -> vector<256x168xf32>
    %c0_4 = arith.constant 0 : index
    %c0_5 = arith.constant 0 : index
    %c0_6 = arith.constant 0 : index
    %5 = vector.load %arg2[%c0_4, %c0_5, %c0_6] : memref<4x256x256xbf16, #tpu.memory_space<vmem>>, vector<1x256x256xbf16>
    %6 = vector.shape_cast %5 : vector<1x256x256xbf16> to vector<256x256xbf16>
    %cst_7 = arith.constant dense<0.000000e+00> : vector<256x96xf32>
    %7 = tpu.matmul %6, %1, %cst_7 {dimension_numbers = #tpu.dot_dimension_numbers<[1], [0], [0], [1], [0, 0, 1, 1], [], []>} : vector<256x256xbf16>, vector<256x96xbf16>, vector<256x96xf32> -> vector<256x96xf32>
    %8 = arith.truncf %7 : vector<256x96xf32> to vector<256x96xbf16>
    %c1 = arith.constant 1 : index
    %c0_8 = arith.constant 0 : index
    %c0_9 = arith.constant 0 : index
    %9 = vector.load %arg3[%c1, %c0_8, %c0_9] : memref<5x96x168xbf16, #tpu.memory_space<vmem>>, vector<1x96x168xbf16>
    %10 = vector.shape_cast %9 : vector<1x96x168xbf16> to vector<96x168xbf16>
    %cst_10 = arith.constant dense<0.000000e+00> : vector<256x168xf32>
    %11 = tpu.matmul %8, %10, %cst_10 {dimension_numbers = #tpu.dot_dimension_numbers<[1], [0], [0], [1], [0, 0, 1, 1], [], []>} : vector<256x96xbf16>, vector<96x168xbf16>, vector<256x168xf32> -> vector<256x168xf32>
    %12 = arith.addf %4, %11 : vector<256x168xf32>
    %c1_11 = arith.constant 1 : index
    %c0_12 = arith.constant 0 : index
    %c0_13 = arith.constant 0 : index
    %13 = vector.load %arg2[%c1_11, %c0_12, %c0_13] : memref<4x256x256xbf16, #tpu.memory_space<vmem>>, vector<1x256x256xbf16>
    %14 = vector.shape_cast %13 : vector<1x256x256xbf16> to vector<256x256xbf16>
    %cst_14 = arith.constant dense<0.000000e+00> : vector<256x96xf32>
    %15 = tpu.matmul %14, %1, %cst_14 {dimension_numbers = #tpu.dot_dimension_numbers<[1], [0], [0], [1], [0, 0, 1, 1], [], []>} : vector<256x256xbf16>, vector<256x96xbf16>, vector<256x96xf32> -> vector<256x96xf32>
    %16 = arith.truncf %15 : vector<256x96xf32> to vector<256x96xbf16>
    %c2 = arith.constant 2 : index
    %c0_15 = arith.constant 0 : index
    %c0_16 = arith.constant 0 : index
    %17 = vector.load %arg3[%c2, %c0_15, %c0_16] : memref<5x96x168xbf16, #tpu.memory_space<vmem>>, vector<1x96x168xbf16>
    %18 = vector.shape_cast %17 : vector<1x96x168xbf16> to vector<96x168xbf16>
    %cst_17 = arith.constant dense<0.000000e+00> : vector<256x168xf32>
    %19 = tpu.matmul %16, %18, %cst_17 {dimension_numbers = #tpu.dot_dimension_numbers<[1], [0], [0], [1], [0, 0, 1, 1], [], []>} : vector<256x96xbf16>, vector<96x168xbf16>, vector<256x168xf32> -> vector<256x168xf32>
    %20 = arith.addf %12, %19 : vector<256x168xf32>
    %c2_18 = arith.constant 2 : index
    %c0_19 = arith.constant 0 : index
    %c0_20 = arith.constant 0 : index
    %21 = vector.load %arg2[%c2_18, %c0_19, %c0_20] : memref<4x256x256xbf16, #tpu.memory_space<vmem>>, vector<1x256x256xbf16>
    %22 = vector.shape_cast %21 : vector<1x256x256xbf16> to vector<256x256xbf16>
    %cst_21 = arith.constant dense<0.000000e+00> : vector<256x96xf32>
    %23 = tpu.matmul %22, %1, %cst_21 {dimension_numbers = #tpu.dot_dimension_numbers<[1], [0], [0], [1], [0, 0, 1, 1], [], []>} : vector<256x256xbf16>, vector<256x96xbf16>, vector<256x96xf32> -> vector<256x96xf32>
    %24 = arith.truncf %23 : vector<256x96xf32> to vector<256x96xbf16>
    %c3 = arith.constant 3 : index
    %c0_22 = arith.constant 0 : index
    %c0_23 = arith.constant 0 : index
    %25 = vector.load %arg3[%c3, %c0_22, %c0_23] : memref<5x96x168xbf16, #tpu.memory_space<vmem>>, vector<1x96x168xbf16>
    %26 = vector.shape_cast %25 : vector<1x96x168xbf16> to vector<96x168xbf16>
    %cst_24 = arith.constant dense<0.000000e+00> : vector<256x168xf32>
    %27 = tpu.matmul %24, %26, %cst_24 {dimension_numbers = #tpu.dot_dimension_numbers<[1], [0], [0], [1], [0, 0, 1, 1], [], []>} : vector<256x96xbf16>, vector<96x168xbf16>, vector<256x168xf32> -> vector<256x168xf32>
    %28 = arith.addf %20, %27 : vector<256x168xf32>
    %c3_25 = arith.constant 3 : index
    %c0_26 = arith.constant 0 : index
    %c0_27 = arith.constant 0 : index
    %29 = vector.load %arg2[%c3_25, %c0_26, %c0_27] : memref<4x256x256xbf16, #tpu.memory_space<vmem>>, vector<1x256x256xbf16>
    %30 = vector.shape_cast %29 : vector<1x256x256xbf16> to vector<256x256xbf16>
    %cst_28 = arith.constant dense<0.000000e+00> : vector<256x96xf32>
    %31 = tpu.matmul %30, %1, %cst_28 {dimension_numbers = #tpu.dot_dimension_numbers<[1], [0], [0], [1], [0, 0, 1, 1], [], []>} : vector<256x256xbf16>, vector<256x96xbf16>, vector<256x96xf32> -> vector<256x96xf32>
    %32 = arith.truncf %31 : vector<256x96xf32> to vector<256x96xbf16>
    %c4 = arith.constant 4 : index
    %c0_29 = arith.constant 0 : index
    %c0_30 = arith.constant 0 : index
    %33 = vector.load %arg3[%c4, %c0_29, %c0_30] : memref<5x96x168xbf16, #tpu.memory_space<vmem>>, vector<1x96x168xbf16>
    %34 = vector.shape_cast %33 : vector<1x96x168xbf16> to vector<96x168xbf16>
    %cst_31 = arith.constant dense<0.000000e+00> : vector<256x168xf32>
    %35 = tpu.matmul %32, %34, %cst_31 {dimension_numbers = #tpu.dot_dimension_numbers<[1], [0], [0], [1], [0, 0, 1, 1], [], []>} : vector<256x96xbf16>, vector<96x168xbf16>, vector<256x168xf32> -> vector<256x168xf32>
    %36 = arith.addf %28, %35 : vector<256x168xf32>
    %c0_32 = arith.constant 0 : index
    %c0_33 = arith.constant 0 : index
    %37 = vector.load %arg4[%c0_32, %c0_33] : memref<1x168xf32, #tpu.memory_space<vmem>>, vector<1x168xf32>
    %38 = vector.broadcast %37 : vector<1x168xf32> to vector<256x168xf32>
    %39 = arith.addf %36, %38 : vector<256x168xf32>
    %cst_34 = arith.constant 0.000000e+00 : f32
    %40 = vector.broadcast %cst_34 : f32 to vector<256x168xf32>
    %41 = arith.maximumf %39, %40 : vector<256x168xf32>
    %42 = arith.truncf %41 : vector<256x168xf32> to vector<256x168xbf16>
    %c0_35 = arith.constant 0 : index
    %c0_36 = arith.constant 0 : index
    %43 = vector.load %arg5[%c0_35, %c0_36] : memref<112x256xbf16, #tpu.memory_space<vmem>>, vector<112x256xbf16>
    %cst_37 = arith.constant dense<0.000000e+00> : vector<112x168xf32>
    %44 = tpu.matmul %43, %42, %cst_37 {dimension_numbers = #tpu.dot_dimension_numbers<[1], [0], [0], [1], [0, 0, 1, 1], [], []>} : vector<112x256xbf16>, vector<256x168xbf16>, vector<112x168xf32> -> vector<112x168xf32>
    %c0_38 = arith.constant 0 : index
    %c0_39 = arith.constant 0 : index
    %45 = vector.load %arg6[%c0_38, %c0_39] : memref<112x256xbf16, #tpu.memory_space<vmem>>, vector<112x256xbf16>
    %cst_40 = arith.constant dense<0.000000e+00> : vector<112x168xf32>
    %46 = tpu.matmul %45, %42, %cst_40 {dimension_numbers = #tpu.dot_dimension_numbers<[1], [0], [0], [1], [0, 0, 1, 1], [], []>} : vector<112x256xbf16>, vector<256x168xbf16>, vector<112x168xf32> -> vector<112x168xf32>
    %47 = arith.maximumf %44, %46 : vector<112x168xf32>
    %48 = arith.truncf %47 : vector<112x168xf32> to vector<112x168xbf16>
    %c0_41 = arith.constant 0 : index
    %c0_42 = arith.constant 0 : index
    %49 = vector.load %arg7[%c0_41, %c0_42] : memref<168x84xbf16, #tpu.memory_space<vmem>>, vector<168x84xbf16>
    %cst_43 = arith.constant dense<0.000000e+00> : vector<112x84xf32>
    %50 = tpu.matmul %48, %49, %cst_43 {dimension_numbers = #tpu.dot_dimension_numbers<[1], [0], [0], [1], [0, 0, 1, 1], [], []>} : vector<112x168xbf16>, vector<168x84xbf16>, vector<112x84xf32> -> vector<112x84xf32>
    %c0_44 = arith.constant 0 : index
    %c0_45 = arith.constant 0 : index
    %51 = vector.load %arg8[%c0_44, %c0_45] : memref<168x84xbf16, #tpu.memory_space<vmem>>, vector<168x84xbf16>
    %cst_46 = arith.constant dense<0.000000e+00> : vector<112x84xf32>
    %52 = tpu.matmul %48, %51, %cst_46 {dimension_numbers = #tpu.dot_dimension_numbers<[1], [0], [0], [1], [0, 0, 1, 1], [], []>} : vector<112x168xbf16>, vector<168x84xbf16>, vector<112x84xf32> -> vector<112x84xf32>
    %53 = arith.maximumf %50, %52 : vector<112x84xf32>
    %54 = arith.truncf %53 : vector<112x84xf32> to vector<112x84xbf16>
    %c0_47 = arith.constant 0 : index
    %c0_48 = arith.constant 0 : index
    %c0_49 = arith.constant 0 : index
    %55 = vector.load %arg10[%c0_47, %c0_48, %c0_49] : memref<5x84x160xbf16, #tpu.memory_space<vmem>>, vector<1x84x160xbf16>
    %56 = vector.shape_cast %55 : vector<1x84x160xbf16> to vector<84x160xbf16>
    %cst_50 = arith.constant dense<0.000000e+00> : vector<112x160xf32>
    %57 = tpu.matmul %54, %56, %cst_50 {dimension_numbers = #tpu.dot_dimension_numbers<[1], [0], [0], [1], [0, 0, 1, 1], [], []>} : vector<112x84xbf16>, vector<84x160xbf16>, vector<112x160xf32> -> vector<112x160xf32>
    %c0_51 = arith.constant 0 : index
    %c0_52 = arith.constant 0 : index
    %c0_53 = arith.constant 0 : index
    %58 = vector.load %arg9[%c0_51, %c0_52, %c0_53] : memref<4x112x112xbf16, #tpu.memory_space<vmem>>, vector<1x112x112xbf16>
    %59 = vector.shape_cast %58 : vector<1x112x112xbf16> to vector<112x112xbf16>
    %cst_54 = arith.constant dense<0.000000e+00> : vector<112x84xf32>
    %60 = tpu.matmul %59, %54, %cst_54 {dimension_numbers = #tpu.dot_dimension_numbers<[1], [0], [0], [1], [0, 0, 1, 1], [], []>} : vector<112x112xbf16>, vector<112x84xbf16>, vector<112x84xf32> -> vector<112x84xf32>
    %61 = arith.truncf %60 : vector<112x84xf32> to vector<112x84xbf16>
    %c1_55 = arith.constant 1 : index
    %c0_56 = arith.constant 0 : index
    %c0_57 = arith.constant 0 : index
    %62 = vector.load %arg10[%c1_55, %c0_56, %c0_57] : memref<5x84x160xbf16, #tpu.memory_space<vmem>>, vector<1x84x160xbf16>
    %63 = vector.shape_cast %62 : vector<1x84x160xbf16> to vector<84x160xbf16>
    %cst_58 = arith.constant dense<0.000000e+00> : vector<112x160xf32>
    %64 = tpu.matmul %61, %63, %cst_58 {dimension_numbers = #tpu.dot_dimension_numbers<[1], [0], [0], [1], [0, 0, 1, 1], [], []>} : vector<112x84xbf16>, vector<84x160xbf16>, vector<112x160xf32> -> vector<112x160xf32>
    %65 = arith.addf %57, %64 : vector<112x160xf32>
    %c1_59 = arith.constant 1 : index
    %c0_60 = arith.constant 0 : index
    %c0_61 = arith.constant 0 : index
    %66 = vector.load %arg9[%c1_59, %c0_60, %c0_61] : memref<4x112x112xbf16, #tpu.memory_space<vmem>>, vector<1x112x112xbf16>
    %67 = vector.shape_cast %66 : vector<1x112x112xbf16> to vector<112x112xbf16>
    %cst_62 = arith.constant dense<0.000000e+00> : vector<112x84xf32>
    %68 = tpu.matmul %67, %54, %cst_62 {dimension_numbers = #tpu.dot_dimension_numbers<[1], [0], [0], [1], [0, 0, 1, 1], [], []>} : vector<112x112xbf16>, vector<112x84xbf16>, vector<112x84xf32> -> vector<112x84xf32>
    %69 = arith.truncf %68 : vector<112x84xf32> to vector<112x84xbf16>
    %c2_63 = arith.constant 2 : index
    %c0_64 = arith.constant 0 : index
    %c0_65 = arith.constant 0 : index
    %70 = vector.load %arg10[%c2_63, %c0_64, %c0_65] : memref<5x84x160xbf16, #tpu.memory_space<vmem>>, vector<1x84x160xbf16>
    %71 = vector.shape_cast %70 : vector<1x84x160xbf16> to vector<84x160xbf16>
    %cst_66 = arith.constant dense<0.000000e+00> : vector<112x160xf32>
    %72 = tpu.matmul %69, %71, %cst_66 {dimension_numbers = #tpu.dot_dimension_numbers<[1], [0], [0], [1], [0, 0, 1, 1], [], []>} : vector<112x84xbf16>, vector<84x160xbf16>, vector<112x160xf32> -> vector<112x160xf32>
    %73 = arith.addf %65, %72 : vector<112x160xf32>
    %c2_67 = arith.constant 2 : index
    %c0_68 = arith.constant 0 : index
    %c0_69 = arith.constant 0 : index
    %74 = vector.load %arg9[%c2_67, %c0_68, %c0_69] : memref<4x112x112xbf16, #tpu.memory_space<vmem>>, vector<1x112x112xbf16>
    %75 = vector.shape_cast %74 : vector<1x112x112xbf16> to vector<112x112xbf16>
    %cst_70 = arith.constant dense<0.000000e+00> : vector<112x84xf32>
    %76 = tpu.matmul %75, %54, %cst_70 {dimension_numbers = #tpu.dot_dimension_numbers<[1], [0], [0], [1], [0, 0, 1, 1], [], []>} : vector<112x112xbf16>, vector<112x84xbf16>, vector<112x84xf32> -> vector<112x84xf32>
    %77 = arith.truncf %76 : vector<112x84xf32> to vector<112x84xbf16>
    %c3_71 = arith.constant 3 : index
    %c0_72 = arith.constant 0 : index
    %c0_73 = arith.constant 0 : index
    %78 = vector.load %arg10[%c3_71, %c0_72, %c0_73] : memref<5x84x160xbf16, #tpu.memory_space<vmem>>, vector<1x84x160xbf16>
    %79 = vector.shape_cast %78 : vector<1x84x160xbf16> to vector<84x160xbf16>
    %cst_74 = arith.constant dense<0.000000e+00> : vector<112x160xf32>
    %80 = tpu.matmul %77, %79, %cst_74 {dimension_numbers = #tpu.dot_dimension_numbers<[1], [0], [0], [1], [0, 0, 1, 1], [], []>} : vector<112x84xbf16>, vector<84x160xbf16>, vector<112x160xf32> -> vector<112x160xf32>
    %81 = arith.addf %73, %80 : vector<112x160xf32>
    %c3_75 = arith.constant 3 : index
    %c0_76 = arith.constant 0 : index
    %c0_77 = arith.constant 0 : index
    %82 = vector.load %arg9[%c3_75, %c0_76, %c0_77] : memref<4x112x112xbf16, #tpu.memory_space<vmem>>, vector<1x112x112xbf16>
    %83 = vector.shape_cast %82 : vector<1x112x112xbf16> to vector<112x112xbf16>
    %cst_78 = arith.constant dense<0.000000e+00> : vector<112x84xf32>
    %84 = tpu.matmul %83, %54, %cst_78 {dimension_numbers = #tpu.dot_dimension_numbers<[1], [0], [0], [1], [0, 0, 1, 1], [], []>} : vector<112x112xbf16>, vector<112x84xbf16>, vector<112x84xf32> -> vector<112x84xf32>
    %85 = arith.truncf %84 : vector<112x84xf32> to vector<112x84xbf16>
    %c4_79 = arith.constant 4 : index
    %c0_80 = arith.constant 0 : index
    %c0_81 = arith.constant 0 : index
    %86 = vector.load %arg10[%c4_79, %c0_80, %c0_81] : memref<5x84x160xbf16, #tpu.memory_space<vmem>>, vector<1x84x160xbf16>
    %87 = vector.shape_cast %86 : vector<1x84x160xbf16> to vector<84x160xbf16>
    %cst_82 = arith.constant dense<0.000000e+00> : vector<112x160xf32>
    %88 = tpu.matmul %85, %87, %cst_82 {dimension_numbers = #tpu.dot_dimension_numbers<[1], [0], [0], [1], [0, 0, 1, 1], [], []>} : vector<112x84xbf16>, vector<84x160xbf16>, vector<112x160xf32> -> vector<112x160xf32>
    %89 = arith.addf %81, %88 : vector<112x160xf32>
    %c0_83 = arith.constant 0 : index
    %c0_84 = arith.constant 0 : index
    %90 = vector.load %arg11[%c0_83, %c0_84] : memref<1x160xf32, #tpu.memory_space<vmem>>, vector<1x160xf32>
    %91 = vector.broadcast %90 : vector<1x160xf32> to vector<112x160xf32>
    %92 = arith.addf %89, %91 : vector<112x160xf32>
    %cst_85 = arith.constant 0.000000e+00 : f32
    %93 = vector.broadcast %cst_85 : f32 to vector<112x160xf32>
    %94 = arith.maximumf %92, %93 : vector<112x160xf32>
    %95 = arith.truncf %94 : vector<112x160xf32> to vector<112x160xbf16>
    %c0_86 = arith.constant 0 : index
    %c0_87 = arith.constant 0 : index
    %96 = vector.load %arg12[%c0_86, %c0_87] : memref<40x112xbf16, #tpu.memory_space<vmem>>, vector<40x112xbf16>
    %cst_88 = arith.constant dense<0.000000e+00> : vector<40x160xf32>
    %97 = tpu.matmul %96, %95, %cst_88 {dimension_numbers = #tpu.dot_dimension_numbers<[1], [0], [0], [1], [0, 0, 1, 1], [], []>} : vector<40x112xbf16>, vector<112x160xbf16>, vector<40x160xf32> -> vector<40x160xf32>
    %c0_89 = arith.constant 0 : index
    %c0_90 = arith.constant 0 : index
    %98 = vector.load %arg13[%c0_89, %c0_90] : memref<40x112xbf16, #tpu.memory_space<vmem>>, vector<40x112xbf16>
    %cst_91 = arith.constant dense<0.000000e+00> : vector<40x160xf32>
    %99 = tpu.matmul %98, %95, %cst_91 {dimension_numbers = #tpu.dot_dimension_numbers<[1], [0], [0], [1], [0, 0, 1, 1], [], []>} : vector<40x112xbf16>, vector<112x160xbf16>, vector<40x160xf32> -> vector<40x160xf32>
    %100 = arith.maximumf %97, %99 : vector<40x160xf32>
    %101 = arith.truncf %100 : vector<40x160xf32> to vector<40x160xbf16>
    %c0_92 = arith.constant 0 : index
    %c0_93 = arith.constant 0 : index
    %102 = vector.load %arg14[%c0_92, %c0_93] : memref<160x80xbf16, #tpu.memory_space<vmem>>, vector<160x80xbf16>
    %cst_94 = arith.constant dense<0.000000e+00> : vector<40x80xf32>
    %103 = tpu.matmul %101, %102, %cst_94 {dimension_numbers = #tpu.dot_dimension_numbers<[1], [0], [0], [1], [0, 0, 1, 1], [], []>} : vector<40x160xbf16>, vector<160x80xbf16>, vector<40x80xf32> -> vector<40x80xf32>
    %c0_95 = arith.constant 0 : index
    %c0_96 = arith.constant 0 : index
    %104 = vector.load %arg15[%c0_95, %c0_96] : memref<160x80xbf16, #tpu.memory_space<vmem>>, vector<160x80xbf16>
    %cst_97 = arith.constant dense<0.000000e+00> : vector<40x80xf32>
    %105 = tpu.matmul %101, %104, %cst_97 {dimension_numbers = #tpu.dot_dimension_numbers<[1], [0], [0], [1], [0, 0, 1, 1], [], []>} : vector<40x160xbf16>, vector<160x80xbf16>, vector<40x80xf32> -> vector<40x80xf32>
    %106 = arith.maximumf %103, %105 : vector<40x80xf32>
    %107 = arith.truncf %106 : vector<40x80xf32> to vector<40x80xbf16>
    %108 = vector.extract_strided_slice %107 {offsets = [0, 0], sizes = [8, 80], strides = [1, 1]} : vector<40x80xbf16> to vector<8x80xbf16>
    %c0_98 = arith.constant 0 : index
    %c0_99 = arith.constant 0 : index
    %c0_100 = arith.constant 0 : index
    %109 = vector.load %arg16[%c0_98, %c0_99, %c0_100] : memref<5x80x120xbf16, #tpu.memory_space<vmem>>, vector<1x80x120xbf16>
    %110 = vector.shape_cast %109 : vector<1x80x120xbf16> to vector<80x120xbf16>
    %cst_101 = arith.constant dense<0.000000e+00> : vector<8x120xf32>
    %111 = tpu.matmul %108, %110, %cst_101 {dimension_numbers = #tpu.dot_dimension_numbers<[1], [0], [0], [1], [0, 0, 1, 1], [], []>} : vector<8x80xbf16>, vector<80x120xbf16>, vector<8x120xf32> -> vector<8x120xf32>
    %112 = vector.extract_strided_slice %107 {offsets = [8, 0], sizes = [8, 80], strides = [1, 1]} : vector<40x80xbf16> to vector<8x80xbf16>
    %c1_102 = arith.constant 1 : index
    %c0_103 = arith.constant 0 : index
    %c0_104 = arith.constant 0 : index
    %113 = vector.load %arg16[%c1_102, %c0_103, %c0_104] : memref<5x80x120xbf16, #tpu.memory_space<vmem>>, vector<1x80x120xbf16>
    %114 = vector.shape_cast %113 : vector<1x80x120xbf16> to vector<80x120xbf16>
    %cst_105 = arith.constant dense<0.000000e+00> : vector<8x120xf32>
    %115 = tpu.matmul %112, %114, %cst_105 {dimension_numbers = #tpu.dot_dimension_numbers<[1], [0], [0], [1], [0, 0, 1, 1], [], []>} : vector<8x80xbf16>, vector<80x120xbf16>, vector<8x120xf32> -> vector<8x120xf32>
    %116 = arith.addf %111, %115 : vector<8x120xf32>
    %117 = vector.extract_strided_slice %107 {offsets = [16, 0], sizes = [8, 80], strides = [1, 1]} : vector<40x80xbf16> to vector<8x80xbf16>
    %c2_106 = arith.constant 2 : index
    %c0_107 = arith.constant 0 : index
    %c0_108 = arith.constant 0 : index
    %118 = vector.load %arg16[%c2_106, %c0_107, %c0_108] : memref<5x80x120xbf16, #tpu.memory_space<vmem>>, vector<1x80x120xbf16>
    %119 = vector.shape_cast %118 : vector<1x80x120xbf16> to vector<80x120xbf16>
    %cst_109 = arith.constant dense<0.000000e+00> : vector<8x120xf32>
    %120 = tpu.matmul %117, %119, %cst_109 {dimension_numbers = #tpu.dot_dimension_numbers<[1], [0], [0], [1], [0, 0, 1, 1], [], []>} : vector<8x80xbf16>, vector<80x120xbf16>, vector<8x120xf32> -> vector<8x120xf32>
    %121 = arith.addf %116, %120 : vector<8x120xf32>
    %122 = vector.extract_strided_slice %107 {offsets = [24, 0], sizes = [8, 80], strides = [1, 1]} : vector<40x80xbf16> to vector<8x80xbf16>
    %c3_110 = arith.constant 3 : index
    %c0_111 = arith.constant 0 : index
    %c0_112 = arith.constant 0 : index
    %123 = vector.load %arg16[%c3_110, %c0_111, %c0_112] : memref<5x80x120xbf16, #tpu.memory_space<vmem>>, vector<1x80x120xbf16>
    %124 = vector.shape_cast %123 : vector<1x80x120xbf16> to vector<80x120xbf16>
    %cst_113 = arith.constant dense<0.000000e+00> : vector<8x120xf32>
    %125 = tpu.matmul %122, %124, %cst_113 {dimension_numbers = #tpu.dot_dimension_numbers<[1], [0], [0], [1], [0, 0, 1, 1], [], []>} : vector<8x80xbf16>, vector<80x120xbf16>, vector<8x120xf32> -> vector<8x120xf32>
    %126 = arith.addf %121, %125 : vector<8x120xf32>
    %127 = vector.extract_strided_slice %107 {offsets = [32, 0], sizes = [8, 80], strides = [1, 1]} : vector<40x80xbf16> to vector<8x80xbf16>
    %c4_114 = arith.constant 4 : index
    %c0_115 = arith.constant 0 : index
    %c0_116 = arith.constant 0 : index
    %128 = vector.load %arg16[%c4_114, %c0_115, %c0_116] : memref<5x80x120xbf16, #tpu.memory_space<vmem>>, vector<1x80x120xbf16>
    %129 = vector.shape_cast %128 : vector<1x80x120xbf16> to vector<80x120xbf16>
    %cst_117 = arith.constant dense<0.000000e+00> : vector<8x120xf32>
    %130 = tpu.matmul %127, %129, %cst_117 {dimension_numbers = #tpu.dot_dimension_numbers<[1], [0], [0], [1], [0, 0, 1, 1], [], []>} : vector<8x80xbf16>, vector<80x120xbf16>, vector<8x120xf32> -> vector<8x120xf32>
    %131 = arith.addf %126, %130 : vector<8x120xf32>
    %c0_118 = arith.constant 0 : index
    %c0_119 = arith.constant 0 : index
    %132 = vector.load %arg17[%c0_118, %c0_119] : memref<1x120xf32, #tpu.memory_space<vmem>>, vector<1x120xf32>
    %133 = vector.broadcast %132 : vector<1x120xf32> to vector<8x120xf32>
    %134 = arith.addf %131, %133 : vector<8x120xf32>
    %cst_120 = arith.constant 0.000000e+00 : f32
    %135 = vector.broadcast %cst_120 : f32 to vector<8x120xf32>
    %136 = arith.maximumf %134, %135 : vector<8x120xf32>
    %137 = arith.truncf %136 : vector<8x120xf32> to vector<8x120xbf16>
    %c0_121 = arith.constant 0 : index
    %c0_122 = arith.constant 0 : index
    %138 = vector.load %arg18[%c0_121, %c0_122] : memref<120x84xbf16, #tpu.memory_space<vmem>>, vector<120x84xbf16>
    %cst_123 = arith.constant dense<0.000000e+00> : vector<8x84xf32>
    %139 = tpu.matmul %137, %138, %cst_123 {dimension_numbers = #tpu.dot_dimension_numbers<[1], [0], [0], [1], [0, 0, 1, 1], [], []>} : vector<8x120xbf16>, vector<120x84xbf16>, vector<8x84xf32> -> vector<8x84xf32>
    %c0_124 = arith.constant 0 : index
    %c0_125 = arith.constant 0 : index
    %140 = vector.load %arg19[%c0_124, %c0_125] : memref<1x84xf32, #tpu.memory_space<vmem>>, vector<1x84xf32>
    %141 = vector.broadcast %140 : vector<1x84xf32> to vector<8x84xf32>
    %142 = arith.addf %139, %141 : vector<8x84xf32>
    %cst_126 = arith.constant 0.000000e+00 : f32
    %143 = vector.broadcast %cst_126 : f32 to vector<8x84xf32>
    %144 = arith.maximumf %142, %143 : vector<8x84xf32>
    %145 = arith.truncf %144 : vector<8x84xf32> to vector<8x84xbf16>
    %c0_127 = arith.constant 0 : index
    %c0_128 = arith.constant 0 : index
    %146 = vector.load %arg20[%c0_127, %c0_128] : memref<84x128xbf16, #tpu.memory_space<vmem>>, vector<84x128xbf16>
    %cst_129 = arith.constant dense<0.000000e+00> : vector<8x128xf32>
    %147 = tpu.matmul %145, %146, %cst_129 {dimension_numbers = #tpu.dot_dimension_numbers<[1], [0], [0], [1], [0, 0, 1, 1], [], []>} : vector<8x84xbf16>, vector<84x128xbf16>, vector<8x128xf32> -> vector<8x128xf32>
    %c0_130 = arith.constant 0 : index
    %c0_131 = arith.constant 0 : index
    %148 = vector.load %arg21[%c0_130, %c0_131] : memref<1x128xf32, #tpu.memory_space<vmem>>, vector<1x128xf32>
    %149 = vector.broadcast %148 : vector<1x128xf32> to vector<8x128xf32>
    %150 = arith.addf %147, %149 : vector<8x128xf32>
    %c0_132 = arith.constant 0 : index
    %c0_133 = arith.constant 0 : index
    %151 = vector.load %arg22[%c0_132, %c0_133] : memref<8x128xf32, #tpu.memory_space<vmem>>, vector<8x128xf32>
    tpu.vector_store %arg22[%c0_132, %c0_133], %150 {strides = array<i32>} : memref<8x128xf32, #tpu.memory_space<vmem>>, vector<8x128xf32>,
    return
  }
  func.func @transform_0(%arg0: i32) -> (i32, i32) {
    %c0_i32 = arith.constant 0 : i32
    %c0_i32_0 = arith.constant 0 : i32
    return %arg0, %c0_i32 : i32, i32
  }
  func.func @transform_1(%arg0: i32) -> (i32, i32, i32) {
    %c0_i32 = arith.constant 0 : i32
    %c0_i32_0 = arith.constant 0 : i32
    %c0_i32_1 = arith.constant 0 : i32
    %c0_i32_2 = arith.constant 0 : i32
    return %c0_i32, %c0_i32_0, %c0_i32_1 : i32, i32, i32
  }
  func.func @transform_2(%arg0: i32) -> (i32, i32, i32) {
    %c0_i32 = arith.constant 0 : i32
    %c0_i32_0 = arith.constant 0 : i32
    %c0_i32_1 = arith.constant 0 : i32
    %c0_i32_2 = arith.constant 0 : i32
    return %c0_i32, %c0_i32_0, %c0_i32_1 : i32, i32, i32
  }
  func.func @transform_3(%arg0: i32) -> (i32, i32) {
    %c0_i32 = arith.constant 0 : i32
    %c0_i32_0 = arith.constant 0 : i32
    %c0_i32_1 = arith.constant 0 : i32
    return %c0_i32, %c0_i32_0 : i32, i32
  }
  func.func @transform_4(%arg0: i32) -> (i32, i32) {
    %c0_i32 = arith.constant 0 : i32
    %c0_i32_0 = arith.constant 0 : i32
    %c0_i32_1 = arith.constant 0 : i32
    return %c0_i32, %c0_i32_0 : i32, i32
  }
  func.func @transform_5(%arg0: i32) -> (i32, i32) {
    %c0_i32 = arith.constant 0 : i32
    %c0_i32_0 = arith.constant 0 : i32
    %c0_i32_1 = arith.constant 0 : i32
    return %c0_i32, %c0_i32_0 : i32, i32
  }
  func.func @transform_6(%arg0: i32) -> (i32, i32) {
    %c0_i32 = arith.constant 0 : i32
    %c0_i32_0 = arith.constant 0 : i32
    %c0_i32_1 = arith.constant 0 : i32
    return %c0_i32, %c0_i32_0 : i32, i32
  }
  func.func @transform_7(%arg0: i32) -> (i32, i32) {
    %c0_i32 = arith.constant 0 : i32
    %c0_i32_0 = arith.constant 0 : i32
    %c0_i32_1 = arith.constant 0 : i32
    return %c0_i32, %c0_i32_0 : i32, i32
  }
  func.func @transform_8(%arg0: i32) -> (i32, i32, i32) {
    %c0_i32 = arith.constant 0 : i32
    %c0_i32_0 = arith.constant 0 : i32
    %c0_i32_1 = arith.constant 0 : i32
    %c0_i32_2 = arith.constant 0 : i32
    return %c0_i32, %c0_i32_0, %c0_i32_1 : i32, i32, i32
  }
  func.func @transform_9(%arg0: i32) -> (i32, i32, i32) {
    %c0_i32 = arith.constant 0 : i32
    %c0_i32_0 = arith.constant 0 : i32
    %c0_i32_1 = arith.constant 0 : i32
    %c0_i32_2 = arith.constant 0 : i32
    return %c0_i32, %c0_i32_0, %c0_i32_1 : i32, i32, i32
  }
  func.func @transform_10(%arg0: i32) -> (i32, i32) {
    %c0_i32 = arith.constant 0 : i32
    %c0_i32_0 = arith.constant 0 : i32
    %c0_i32_1 = arith.constant 0 : i32
    return %c0_i32, %c0_i32_0 : i32, i32
  }
  func.func @transform_11(%arg0: i32) -> (i32, i32) {
    %c0_i32 = arith.constant 0 : i32
    %c0_i32_0 = arith.constant 0 : i32
    %c0_i32_1 = arith.constant 0 : i32
    return %c0_i32, %c0_i32_0 : i32, i32
  }
  func.func @transform_12(%arg0: i32) -> (i32, i32) {
    %c0_i32 = arith.constant 0 : i32
    %c0_i32_0 = arith.constant 0 : i32
    %c0_i32_1 = arith.constant 0 : i32
    return %c0_i32, %c0_i32_0 : i32, i32
  }
  func.func @transform_13(%arg0: i32) -> (i32, i32) {
    %c0_i32 = arith.constant 0 : i32
    %c0_i32_0 = arith.constant 0 : i32
    %c0_i32_1 = arith.constant 0 : i32
    return %c0_i32, %c0_i32_0 : i32, i32
  }
  func.func @transform_14(%arg0: i32) -> (i32, i32) {
    %c0_i32 = arith.constant 0 : i32
    %c0_i32_0 = arith.constant 0 : i32
    %c0_i32_1 = arith.constant 0 : i32
    return %c0_i32, %c0_i32_0 : i32, i32
  }
  func.func @transform_15(%arg0: i32) -> (i32, i32, i32) {
    %c0_i32 = arith.constant 0 : i32
    %c0_i32_0 = arith.constant 0 : i32
    %c0_i32_1 = arith.constant 0 : i32
    %c0_i32_2 = arith.constant 0 : i32
    return %c0_i32, %c0_i32_0, %c0_i32_1 : i32, i32, i32
  }
  func.func @transform_16(%arg0: i32) -> (i32, i32) {
    %c0_i32 = arith.constant 0 : i32
    %c0_i32_0 = arith.constant 0 : i32
    %c0_i32_1 = arith.constant 0 : i32
    return %c0_i32, %c0_i32_0 : i32, i32
  }
  func.func @transform_17(%arg0: i32) -> (i32, i32) {
    %c0_i32 = arith.constant 0 : i32
    %c0_i32_0 = arith.constant 0 : i32
    %c0_i32_1 = arith.constant 0 : i32
    return %c0_i32, %c0_i32_0 : i32, i32
  }
  func.func @transform_18(%arg0: i32) -> (i32, i32) {
    %c0_i32 = arith.constant 0 : i32
    %c0_i32_0 = arith.constant 0 : i32
    %c0_i32_1 = arith.constant 0 : i32
    return %c0_i32, %c0_i32_0 : i32, i32
  }
  func.func @transform_19(%arg0: i32) -> (i32, i32) {
    %c0_i32 = arith.constant 0 : i32
    %c0_i32_0 = arith.constant 0 : i32
    %c0_i32_1 = arith.constant 0 : i32
    return %c0_i32, %c0_i32_0 : i32, i32
  }
  func.func @transform_20(%arg0: i32) -> (i32, i32) {
    %c0_i32 = arith.constant 0 : i32
    %c0_i32_0 = arith.constant 0 : i32
    %c0_i32_1 = arith.constant 0 : i32
    return %c0_i32, %c0_i32_0 : i32, i32
  }
  func.func @transform_21(%arg0: i32) -> (i32, i32) {
    %c0_i32 = arith.constant 0 : i32
    %c0_i32_0 = arith.constant 0 : i32
    return %arg0, %c0_i32 : i32, i32
  }
}

</mosaic_0001>

<llo_original>
// kernel: convonn_forward.1
$region0: #{convonn_forward.1}
  #allocation0 [shape = 'u32[]', space=smem, size = 0x4, offset = 0x4, fixed_abs, tag = 'smem constant byte address 0x4 - core index']
  #allocation1 [shape = 'u32[144,128]{1,0:T(1,128)}', space=vmem, size = 0x12000, scoped, tag = 'internal scratch']
  %s0 = inlined_call_operand.vmem [shape: f32[512,96], index: 0, kind: input, shape index: {}]
  %s1 = inlined_call_operand.vmem [shape: bf16[4,256,256], index: 1, kind: input, shape index: {}]
  %s2 = inlined_call_operand.vmem [shape: bf16[5,96,168], index: 2, kind: input, shape index: {}]
  %s3 = inlined_call_operand.vmem [shape: f32[1,168], index: 3, kind: input, shape index: {}]
  %s4 = inlined_call_operand.vmem [shape: bf16[112,256], index: 4, kind: input, shape index: {}]
  %s5 = inlined_call_operand.vmem [shape: bf16[112,256], index: 5, kind: input, shape index: {}]
  %s6 = inlined_call_operand.vmem [shape: bf16[168,84], index: 6, kind: input, shape index: {}]
  %s7 = inlined_call_operand.vmem [shape: bf16[168,84], index: 7, kind: input, shape index: {}]
  %s8 = inlined_call_operand.vmem [shape: bf16[4,112,112], index: 8, kind: input, shape index: {}]
  %s9 = inlined_call_operand.vmem [shape: bf16[5,84,160], index: 9, kind: input, shape index: {}]
  %s10 = inlined_call_operand.vmem [shape: f32[1,160], index: 10, kind: input, shape index: {}]
  %s11 = inlined_call_operand.vmem [shape: bf16[40,112], index: 11, kind: input, shape index: {}]
  %s12 = inlined_call_operand.vmem [shape: bf16[40,112], index: 12, kind: input, shape index: {}]
  %s13 = inlined_call_operand.vmem [shape: bf16[160,80], index: 13, kind: input, shape index: {}]
  %s14 = inlined_call_operand.vmem [shape: bf16[160,80], index: 14, kind: input, shape index: {}]
  %s15 = inlined_call_operand.vmem [shape: bf16[5,80,120], index: 15, kind: input, shape index: {}]
  %s16 = inlined_call_operand.vmem [shape: f32[1,120], index: 16, kind: input, shape index: {}]
  %s17 = inlined_call_operand.vmem [shape: bf16[120,84], index: 17, kind: input, shape index: {}]
  %s18 = inlined_call_operand.vmem [shape: f32[1,84], index: 18, kind: input, shape index: {}]
  %s19 = inlined_call_operand.vmem [shape: bf16[84,128], index: 19, kind: input, shape index: {}]
  %s20 = inlined_call_operand.vmem [shape: f32[1,128], index: 20, kind: input, shape index: {}]
  %s21 = inlined_call_operand.hbm [shape: f32[16,128], index: 21, kind: output, shape index: {}]
  %s22 = sld [smem:[#allocation0]]
  $region117: #{convonn_forward.1} parent=0
    _
  %s24 = ssub.s32 1, %s22
  %s25 = scalar_select 0, %s24, %s22
  $region1: #{convonn_forward.1} parent=0
    #allocation2 [shape = 'u8[8192]{0}', space=vmem, size = 0x2000, scoped, tag = 'output window, operand 0']
    #allocation3 [shape = 's32[2]{0}', space=sflag, size = 0x8, scoped, tag = 'scoped memory for convonn_forward.1']
    %26 = vsyncpa [#allocation3], 0
    %s27 = scalar_lea.sflag [#allocation3], 1
    %28 = vsyncpa %s27, 0
    loop: start=0, step=1, limit=4
    $region2: #{convonn_forward.1} parent=1 // loop_pre_header
      _
    $region3: #{convonn_forward.1} parent=1 // loop_header
      %s30 = sphi 0, %s34
      %p31 = scmp.ge.s32.totalorder %s30, 4
      %s40 = sphi 0, %s42
      %s43 = sphi 0, %s40
      %s44 = sphi 0, %s43
      %s60 = sphi 0, %s44
      %s64 = sphi 0, %s64
      %s66 = sphi 0, %s64
      %s67 = sphi 0, %s66
      %s81 = sphi 0, %s67
      %s85 = sphi 0, %s85
      %s87 = sphi 0, %s85
      %s88 = sphi 0, %s87
      %s102 = sphi 0, %s88
      %s106 = sphi 0, %s106
      %s108 = sphi 0, %s106
      %s109 = sphi 0, %s108
      %s123 = sphi 0, %s109
      %s127 = sphi 0, %s127
      %s129 = sphi 0, %s127
      %s130 = sphi 0, %s129
      %s144 = sphi 0, %s130
      %s148 = sphi 0, %s148
      %s150 = sphi 0, %s148
      %s151 = sphi 0, %s150
      %s165 = sphi 0, %s151
      %s169 = sphi 0, %s169
      %s171 = sphi 0, %s169
      %s172 = sphi 0, %s171
      %s186 = sphi 0, %s172
      %s190 = sphi 0, %s190
      %s192 = sphi 0, %s190
      %s193 = sphi 0, %s192
      %s207 = sphi 0, %s193
      %s211 = sphi 0, %s211
      %s213 = sphi 0, %s211
      %s214 = sphi 0, %s213
      %s228 = sphi 0, %s214
      %s232 = sphi 0, %s232
      %s234 = sphi 0, %s232
      %s235 = sphi 0, %s234
      %s249 = sphi 0, %s235
      %s253 = sphi 0, %s253
      %s255 = sphi 0, %s253
      %s256 = sphi 0, %s255
      %s270 = sphi 0, %s256
      %s274 = sphi 0, %s274
      %s276 = sphi 0, %s274
      %s277 = sphi 0, %s276
      %s291 = sphi 0, %s277
      %s295 = sphi 0, %s295
      %s297 = sphi 0, %s295
      %s298 = sphi 0, %s297
      %s312 = sphi 0, %s298
      %s316 = sphi 0, %s316
      %s318 = sphi 0, %s316
      %s319 = sphi 0, %s318
      %s333 = sphi 0, %s319
      %s337 = sphi 0, %s337
      %s339 = sphi 0, %s337
      %s340 = sphi 0, %s339
      %s354 = sphi 0, %s340
      %s358 = sphi 0, %s358
      %s360 = sphi 0, %s358
      %s361 = sphi 0, %s360
      %s375 = sphi 0, %s361
      %s379 = sphi 0, %s379
      %s381 = sphi 0, %s379
      %s382 = sphi 0, %s381
      %s396 = sphi 0, %s382
      %s400 = sphi 0, %s400
      %s402 = sphi 0, %s400
      %s403 = sphi 0, %s402
      %s417 = sphi 0, %s403
      %s421 = sphi 0, %s421
      %s423 = sphi 0, %s421
      %s424 = sphi 0, %s423
      %s438 = sphi 0, %s424
      %s442 = sphi 0, %s442
      %s444 = sphi 0, %s442
      %s445 = sphi 0, %s444
      %s459 = sphi 0, %s445
      %s463 = sphi 0, %s463
      %s465 = sphi 0, %s463
      %s466 = sphi 0, %s465
      %s480 = sphi 0, %s466
      %s486 = sphi 0, %s488
      %s489 = sphi 0, %s486
      %s490 = sphi 0, %s489
      %s506 = sphi 0, %s490
    $region4: #{convonn_forward.1} parent=1 // loop_header_branch
      %33 = sbr.rel (%p31) target = $region8
    $region5: #{convonn_forward.1} parent=1 // loop_body
      %s35 = ssub.s32 %s30, 1
      %s36 = ssub.s32 %s30, 2
      %s37 = sadd.s32 %s30, 1
      %s38 = ssub.s32 %s30, %s37
      %p39 = scmp.eq.s32.totalorder %s38, 0
      %s41 = sadd.s32 %s40, 1
      %s42 = scalar_select %p39, %s40, %s41
      %p45 = pneg %p39
      %p46 = scmp.eq.s32.totalorder %s30, 1
      %p47 = por %p45, %p46
      %p48 = scmp.ne.s32.totalorder %s40, %s43
      %p49 = scmp.eq.s32.totalorder %s30, 0
      %p50 = por %p48, %p49
      %p51 = scmp.ne.s32.totalorder %s40, %s43
      %p52 = scmp.eq.s32.totalorder %s35, 1
      %p53 = por %p51, %p52
      %p54 = scmp.ne.s32.totalorder %s43, %s44
      %p55 = scmp.eq.s32.totalorder %s35, 0
      %p56 = por %p54, %p55
      %p57 = scmp.ne.s32.totalorder %s43, %s44
      %p58 = scmp.eq.s32.totalorder %s36, 1
      %p59 = por %p57, %p58
      %p61 = scmp.ne.s32.totalorder %s44, %s60
      %p62 = scmp.eq.s32.totalorder %s36, 0
      %p63 = por %p61, %p62
      %s65 = sadd.s32 %s64, 1
      %p68 = scmp.eq.s32.totalorder %s30, 1
      %p69 = scmp.ne.s32.totalorder %s64, %s66
      %p70 = scmp.eq.s32.totalorder %s30, 0
      %p71 = por %p69, %p70
      %p72 = scmp.ne.s32.totalorder %s64, %s66
      %p73 = scmp.eq.s32.totalorder %s35, 1
      %p74 = por %p72, %p73
      %p75 = scmp.ne.s32.totalorder %s66, %s67
      %p76 = scmp.eq.s32.totalorder %s35, 0
      %p77 = por %p75, %p76
      %p78 = scmp.ne.s32.totalorder %s66, %s67
      %p79 = scmp.eq.s32.totalorder %s36, 1
      %p80 = por %p78, %p79
      %p82 = scmp.ne.s32.totalorder %s67, %s81
      %p83 = scmp.eq.s32.totalorder %s36, 0
      %p84 = por %p82, %p83
      %s86 = sadd.s32 %s85, 1
      %p89 = scmp.eq.s32.totalorder %s30, 1
      %p90 = scmp.ne.s32.totalorder %s85, %s87
      %p91 = scmp.eq.s32.totalorder %s30, 0
      %p92 = por %p90, %p91
      %p93 = scmp.ne.s32.totalorder %s85, %s87
      %p94 = scmp.eq.s32.totalorder %s35, 1
      %p95 = por %p93, %p94
      %p96 = scmp.ne.s32.totalorder %s87, %s88
      %p97 = scmp.eq.s32.totalorder %s35, 0
      %p98 = por %p96, %p97
      %p99 = scmp.ne.s32.totalorder %s87, %s88
      %p100 = scmp.eq.s32.totalorder %s36, 1
      %p101 = por %p99, %p100
      %p103 = scmp.ne.s32.totalorder %s88, %s102
      %p104 = scmp.eq.s32.totalorder %s36, 0
      %p105 = por %p103, %p104
      %s107 = sadd.s32 %s106, 1
      %p110 = scmp.eq.s32.totalorder %s30, 1
      %p111 = scmp.ne.s32.totalorder %s106, %s108
      %p112 = scmp.eq.s32.totalorder %s30, 0
      %p113 = por %p111, %p112
      %p114 = scmp.ne.s32.totalorder %s106, %s108
      %p115 = scmp.eq.s32.totalorder %s35, 1
      %p116 = por %p114, %p115
      %p117 = scmp.ne.s32.totalorder %s108, %s109
      %p118 = scmp.eq.s32.totalorder %s35, 0
      %p119 = por %p117, %p118
      %p120 = scmp.ne.s32.totalorder %s108, %s109
      %p121 = scmp.eq.s32.totalorder %s36, 1
      %p122 = por %p120, %p121
      %p124 = scmp.ne.s32.totalorder %s109, %s123
      %p125 = scmp.eq.s32.totalorder %s36, 0
      %p126 = por %p124, %p125
      %s128 = sadd.s32 %s127, 1
      %p131 = scmp.eq.s32.totalorder %s30, 1
      %p132 = scmp.ne.s32.totalorder %s127, %s129
      %p133 = scmp.eq.s32.totalorder %s30, 0
      %p134 = por %p132, %p133
      %p135 = scmp.ne.s32.totalorder %s127, %s129
      %p136 = scmp.eq.s32.totalorder %s35, 1
      %p137 = por %p135, %p136
      %p138 = scmp.ne.s32.totalorder %s129, %s130
      %p139 = scmp.eq.s32.totalorder %s35, 0
      %p140 = por %p138, %p139
      %p141 = scmp.ne.s32.totalorder %s129, %s130
      %p142 = scmp.eq.s32.totalorder %s36, 1
      %p143 = por %p141, %p142
      %p145 = scmp.ne.s32.totalorder %s130, %s144
      %p146 = scmp.eq.s32.totalorder %s36, 0
      %p147 = por %p145, %p146
      %s149 = sadd.s32 %s148, 1
      %p152 = scmp.eq.s32.totalorder %s30, 1
      %p153 = scmp.ne.s32.totalorder %s148, %s150
      %p154 = scmp.eq.s32.totalorder %s30, 0
      %p155 = por %p153, %p154
      %p156 = scmp.ne.s32.totalorder %s148, %s150
      %p157 = scmp.eq.s32.totalorder %s35, 1
      %p158 = por %p156, %p157
      %p159 = scmp.ne.s32.totalorder %s150, %s151
      %p160 = scmp.eq.s32.totalorder %s35, 0
      %p161 = por %p159, %p160
      %p162 = scmp.ne.s32.totalorder %s150, %s151
      %p163 = scmp.eq.s32.totalorder %s36, 1
      %p164 = por %p162, %p163
      %p166 = scmp.ne.s32.totalorder %s151, %s165
      %p167 = scmp.eq.s32.totalorder %s36, 0
      %p168 = por %p166, %p167
      %s170 = sadd.s32 %s169, 1
      %p173 = scmp.eq.s32.totalorder %s30, 1
      %p174 = scmp.ne.s32.totalorder %s169, %s171
      %p175 = scmp.eq.s32.totalorder %s30, 0
      %p176 = por %p174, %p175
      %p177 = scmp.ne.s32.totalorder %s169, %s171
      %p178 = scmp.eq.s32.totalorder %s35, 1
      %p179 = por %p177, %p178
      %p180 = scmp.ne.s32.totalorder %s171, %s172
      %p181 = scmp.eq.s32.totalorder %s35, 0
      %p182 = por %p180, %p181
      %p183 = scmp.ne.s32.totalorder %s171, %s172
      %p184 = scmp.eq.s32.totalorder %s36, 1
      %p185 = por %p183, %p184
      %p187 = scmp.ne.s32.totalorder %s172, %s186
      %p188 = scmp.eq.s32.totalorder %s36, 0
      %p189 = por %p187, %p188
      %s191 = sadd.s32 %s190, 1
      %p194 = scmp.eq.s32.totalorder %s30, 1
      %p195 = scmp.ne.s32.totalorder %s190, %s192
      %p196 = scmp.eq.s32.totalorder %s30, 0
      %p197 = por %p195, %p196
      %p198 = scmp.ne.s32.totalorder %s190, %s192
      %p199 = scmp.eq.s32.totalorder %s35, 1
      %p200 = por %p198, %p199
      %p201 = scmp.ne.s32.totalorder %s192, %s193
      %p202 = scmp.eq.s32.totalorder %s35, 0
      %p203 = por %p201, %p202
      %p204 = scmp.ne.s32.totalorder %s192, %s193
      %p205 = scmp.eq.s32.totalorder %s36, 1
      %p206 = por %p204, %p205
      %p208 = scmp.ne.s32.totalorder %s193, %s207
      %p209 = scmp.eq.s32.totalorder %s36, 0
      %p210 = por %p208, %p209
      %s212 = sadd.s32 %s211, 1
      %p215 = scmp.eq.s32.totalorder %s30, 1
      %p216 = scmp.ne.s32.totalorder %s211, %s213
      %p217 = scmp.eq.s32.totalorder %s30, 0
      %p218 = por %p216, %p217
      %p219 = scmp.ne.s32.totalorder %s211, %s213
      %p220 = scmp.eq.s32.totalorder %s35, 1
      %p221 = por %p219, %p220
      %p222 = scmp.ne.s32.totalorder %s213, %s214
      %p223 = scmp.eq.s32.totalorder %s35, 0
      %p224 = por %p222, %p223
      %p225 = scmp.ne.s32.totalorder %s213, %s214
      %p226 = scmp.eq.s32.totalorder %s36, 1
      %p227 = por %p225, %p226
      %p229 = scmp.ne.s32.totalorder %s214, %s228
      %p230 = scmp.eq.s32.totalorder %s36, 0
      %p231 = por %p229, %p230
      %s233 = sadd.s32 %s232, 1
      %p236 = scmp.eq.s32.totalorder %s30, 1
      %p237 = scmp.ne.s32.totalorder %s232, %s234
      %p238 = scmp.eq.s32.totalorder %s30, 0
      %p239 = por %p237, %p238
      %p240 = scmp.ne.s32.totalorder %s232, %s234
      %p241 = scmp.eq.s32.totalorder %s35, 1
      %p242 = por %p240, %p241
      %p243 = scmp.ne.s32.totalorder %s234, %s235
      %p244 = scmp.eq.s32.totalorder %s35, 0
      %p245 = por %p243, %p244
      %p246 = scmp.ne.s32.totalorder %s234, %s235
      %p247 = scmp.eq.s32.totalorder %s36, 1
      %p248 = por %p246, %p247
      %p250 = scmp.ne.s32.totalorder %s235, %s249
      %p251 = scmp.eq.s32.totalorder %s36, 0
      %p252 = por %p250, %p251
      %s254 = sadd.s32 %s253, 1
      %p257 = scmp.eq.s32.totalorder %s30, 1
      %p258 = scmp.ne.s32.totalorder %s253, %s255
      %p259 = scmp.eq.s32.totalorder %s30, 0
      %p260 = por %p258, %p259
      %p261 = scmp.ne.s32.totalorder %s253, %s255
      %p262 = scmp.eq.s32.totalorder %s35, 1
      %p263 = por %p261, %p262
      %p264 = scmp.ne.s32.totalorder %s255, %s256
      %p265 = scmp.eq.s32.totalorder %s35, 0
      %p266 = por %p264, %p265
      %p267 = scmp.ne.s32.totalorder %s255, %s256
      %p268 = scmp.eq.s32.totalorder %s36, 1
      %p269 = por %p267, %p268
      %p271 = scmp.ne.s32.totalorder %s256, %s270
      %p272 = scmp.eq.s32.totalorder %s36, 0
      %p273 = por %p271, %p272
      %s275 = sadd.s32 %s274, 1
      %p278 = scmp.eq.s32.totalorder %s30, 1
      %p279 = scmp.ne.s32.totalorder %s274, %s276
      %p280 = scmp.eq.s32.totalorder %s30, 0
      %p281 = por %p279, %p280
      %p282 = scmp.ne.s32.totalorder %s274, %s276
      %p283 = scmp.eq.s32.totalorder %s35, 1
      %p284 = por %p282, %p283
      %p285 = scmp.ne.s32.totalorder %s276, %s277
      %p286 = scmp.eq.s32.totalorder %s35, 0
      %p287 = por %p285, %p286
      %p288 = scmp.ne.s32.totalorder %s276, %s277
      %p289 = scmp.eq.s32.totalorder %s36, 1
      %p290 = por %p288, %p289
      %p292 = scmp.ne.s32.totalorder %s277, %s291
      %p293 = scmp.eq.s32.totalorder %s36, 0
      %p294 = por %p292, %p293
      %s296 = sadd.s32 %s295, 1
      %p299 = scmp.eq.s32.totalorder %s30, 1
      %p300 = scmp.ne.s32.totalorder %s295, %s297
      %p301 = scmp.eq.s32.totalorder %s30, 0
      %p302 = por %p300, %p301
      %p303 = scmp.ne.s32.totalorder %s295, %s297
      %p304 = scmp.eq.s32.totalorder %s35, 1
      %p305 = por %p303, %p304
      %p306 = scmp.ne.s32.totalorder %s297, %s298
      %p307 = scmp.eq.s32.totalorder %s35, 0
      %p308 = por %p306, %p307
      %p309 = scmp.ne.s32.totalorder %s297, %s298
      %p310 = scmp.eq.s32.totalorder %s36, 1
      %p311 = por %p309, %p310
      %p313 = scmp.ne.s32.totalorder %s298, %s312
      %p314 = scmp.eq.s32.totalorder %s36, 0
      %p315 = por %p313, %p314
      %s317 = sadd.s32 %s316, 1
      %p320 = scmp.eq.s32.totalorder %s30, 1
      %p321 = scmp.ne.s32.totalorder %s316, %s318
      %p322 = scmp.eq.s32.totalorder %s30, 0
      %p323 = por %p321, %p322
      %p324 = scmp.ne.s32.totalorder %s316, %s318
      %p325 = scmp.eq.s32.totalorder %s35, 1
      %p326 = por %p324, %p325
      %p327 = scmp.ne.s32.totalorder %s318, %s319
      %p328 = scmp.eq.s32.totalorder %s35, 0
      %p329 = por %p327, %p328
      %p330 = scmp.ne.s32.totalorder %s318, %s319
      %p331 = scmp.eq.s32.totalorder %s36, 1
      %p332 = por %p330, %p331
      %p334 = scmp.ne.s32.totalorder %s319, %s333
      %p335 = scmp.eq.s32.totalorder %s36, 0
      %p336 = por %p334, %p335
      %s338 = sadd.s32 %s337, 1
      %p341 = scmp.eq.s32.totalorder %s30, 1
      %p342 = scmp.ne.s32.totalorder %s337, %s339
      %p343 = scmp.eq.s32.totalorder %s30, 0
      %p344 = por %p342, %p343
      %p345 = scmp.ne.s32.totalorder %s337, %s339
      %p346 = scmp.eq.s32.totalorder %s35, 1
      %p347 = por %p345, %p346
      %p348 = scmp.ne.s32.totalorder %s339, %s340
      %p349 = scmp.eq.s32.totalorder %s35, 0
      %p350 = por %p348, %p349
      %p351 = scmp.ne.s32.totalorder %s339, %s340
      %p352 = scmp.eq.s32.totalorder %s36, 1
      %p353 = por %p351, %p352
      %p355 = scmp.ne.s32.totalorder %s340, %s354
      %p356 = scmp.eq.s32.totalorder %s36, 0
      %p357 = por %p355, %p356
      %s359 = sadd.s32 %s358, 1
      %p362 = scmp.eq.s32.totalorder %s30, 1
      %p363 = scmp.ne.s32.totalorder %s358, %s360
      %p364 = scmp.eq.s32.totalorder %s30, 0
      %p365 = por %p363, %p364
      %p366 = scmp.ne.s32.totalorder %s358, %s360
      %p367 = scmp.eq.s32.totalorder %s35, 1
      %p368 = por %p366, %p367
      %p369 = scmp.ne.s32.totalorder %s360, %s361
      %p370 = scmp.eq.s32.totalorder %s35, 0
      %p371 = por %p369, %p370
      %p372 = scmp.ne.s32.totalorder %s360, %s361
      %p373 = scmp.eq.s32.totalorder %s36, 1
      %p374 = por %p372, %p373
      %p376 = scmp.ne.s32.totalorder %s361, %s375
      %p377 = scmp.eq.s32.totalorder %s36, 0
      %p378 = por %p376, %p377
      %s380 = sadd.s32 %s379, 1
      %p383 = scmp.eq.s32.totalorder %s30, 1
      %p384 = scmp.ne.s32.totalorder %s379, %s381
      %p385 = scmp.eq.s32.totalorder %s30, 0
      %p386 = por %p384, %p385
      %p387 = scmp.ne.s32.totalorder %s379, %s381
      %p388 = scmp.eq.s32.totalorder %s35, 1
      %p389 = por %p387, %p388
      %p390 = scmp.ne.s32.totalorder %s381, %s382
      %p391 = scmp.eq.s32.totalorder %s35, 0
      %p392 = por %p390, %p391
      %p393 = scmp.ne.s32.totalorder %s381, %s382
      %p394 = scmp.eq.s32.totalorder %s36, 1
      %p395 = por %p393, %p394
      %p397 = scmp.ne.s32.totalorder %s382, %s396
      %p398 = scmp.eq.s32.totalorder %s36, 0
      %p399 = por %p397, %p398
      %s401 = sadd.s32 %s400, 1
      %p404 = scmp.eq.s32.totalorder %s30, 1
      %p405 = scmp.ne.s32.totalorder %s400, %s402
      %p406 = scmp.eq.s32.totalorder %s30, 0
      %p407 = por %p405, %p406
      %p408 = scmp.ne.s32.totalorder %s400, %s402
      %p409 = scmp.eq.s32.totalorder %s35, 1
      %p410 = por %p408, %p409
      %p411 = scmp.ne.s32.totalorder %s402, %s403
      %p412 = scmp.eq.s32.totalorder %s35, 0
      %p413 = por %p411, %p412
      %p414 = scmp.ne.s32.totalorder %s402, %s403
      %p415 = scmp.eq.s32.totalorder %s36, 1
      %p416 = por %p414, %p415
      %p418 = scmp.ne.s32.totalorder %s403, %s417
      %p419 = scmp.eq.s32.totalorder %s36, 0
      %p420 = por %p418, %p419
      %s422 = sadd.s32 %s421, 1
      %p425 = scmp.eq.s32.totalorder %s30, 1
      %p426 = scmp.ne.s32.totalorder %s421, %s423
      %p427 = scmp.eq.s32.totalorder %s30, 0
      %p428 = por %p426, %p427
      %p429 = scmp.ne.s32.totalorder %s421, %s423
      %p430 = scmp.eq.s32.totalorder %s35, 1
      %p431 = por %p429, %p430
      %p432 = scmp.ne.s32.totalorder %s423, %s424
      %p433 = scmp.eq.s32.totalorder %s35, 0
      %p434 = por %p432, %p433
      %p435 = scmp.ne.s32.totalorder %s423, %s424
      %p436 = scmp.eq.s32.totalorder %s36, 1
      %p437 = por %p435, %p436
      %p439 = scmp.ne.s32.totalorder %s424, %s438
      %p440 = scmp.eq.s32.totalorder %s36, 0
      %p441 = por %p439, %p440
      %s443 = sadd.s32 %s442, 1
      %p446 = scmp.eq.s32.totalorder %s30, 1
      %p447 = scmp.ne.s32.totalorder %s442, %s444
      %p448 = scmp.eq.s32.totalorder %s30, 0
      %p449 = por %p447, %p448
      %p450 = scmp.ne.s32.totalorder %s442, %s444
      %p451 = scmp.eq.s32.totalorder %s35, 1
      %p452 = por %p450, %p451
      %p453 = scmp.ne.s32.totalorder %s444, %s445
      %p454 = scmp.eq.s32.totalorder %s35, 0
      %p455 = por %p453, %p454
      %p456 = scmp.ne.s32.totalorder %s444, %s445
      %p457 = scmp.eq.s32.totalorder %s36, 1
      %p458 = por %p456, %p457
      %p460 = scmp.ne.s32.totalorder %s445, %s459
      %p461 = scmp.eq.s32.totalorder %s36, 0
      %p462 = por %p460, %p461
      %s464 = sadd.s32 %s463, 1
      %p467 = scmp.eq.s32.totalorder %s30, 1
      %p468 = scmp.ne.s32.totalorder %s463, %s465
      %p469 = scmp.eq.s32.totalorder %s30, 0
      %p470 = por %p468, %p469
      %p471 = scmp.ne.s32.totalorder %s463, %s465
      %p472 = scmp.eq.s32.totalorder %s35, 1
      %p473 = por %p471, %p472
      %p474 = scmp.ne.s32.totalorder %s465, %s466
      %p475 = scmp.eq.s32.totalorder %s35, 0
      %p476 = por %p474, %p475
      %p477 = scmp.ne.s32.totalorder %s465, %s466
      %p478 = scmp.eq.s32.totalorder %s36, 1
      %p479 = por %p477, %p478
      %p481 = scmp.ne.s32.totalorder %s466, %s480
      %p482 = scmp.eq.s32.totalorder %s36, 0
      %p483 = por %p481, %p482
      %s484 = ssub.s32 %s30, %s37
      %p485 = scmp.eq.s32.totalorder %s484, 0
      %s487 = sadd.s32 %s486, 1
      %s488 = scalar_select %p485, %s486, %s487
      %p491 = pneg %p485
      %p492 = scmp.eq.s32.totalorder %s30, 1
      %p493 = por %p491, %p492
      %p494 = scmp.ne.s32.totalorder %s486, %s489
      %p495 = scmp.eq.s32.totalorder %s30, 0
      %p496 = por %p494, %p495
      %p497 = scmp.ne.s32.totalorder %s486, %s489
      %p498 = scmp.eq.s32.totalorder %s35, 1
      %p499 = por %p497, %p498
      %p500 = scmp.ne.s32.totalorder %s489, %s490
      %p501 = scmp.eq.s32.totalorder %s35, 0
      %p502 = por %p500, %p501
      %p503 = scmp.ne.s32.totalorder %s489, %s490
      %p504 = scmp.eq.s32.totalorder %s36, 1
      %p505 = por %p503, %p504
      %p507 = scmp.ne.s32.totalorder %s490, %s506
      %p508 = scmp.eq.s32.totalorder %s36, 0
      %p509 = por %p507, %p508
      %p510 = scmp.le.s32.totalorder 1, %s30
      %p511 = scmp.lt.s32.totalorder %s30, 3
      %p512 = pnand %p510, %p511
      %p513 = pneg %p512
      // Predicated region
      $region9: #{convonn_forward.1} parent=5 // pred_check
        _
      $region10: #{convonn_forward.1} parent=5 // pred_check_branch
        %515 = sbr.rel (%p512) target = $region12
      $region11: #{convonn_forward.1} parent=5 // pred_region
        %s516 = ssub.s32 %s30, 1
        // Predicated region
        $region13: #{convonn_forward.1} parent=11 // pred_check
          %p517 = pneg %p77
        $region14: #{convonn_forward.1} parent=11 // pred_check_branch
          %519 = sbr.rel (%p517) target = $region16
        $region15: #{convonn_forward.1} parent=11 // pred_region
          _
        $region16: #{convonn_forward.1} parent=11 // pred_fallthru
          _
        // Predicated region
        $region17: #{convonn_forward.1} parent=11 // pred_check
          %p520 = pneg %p98
        $region18: #{convonn_forward.1} parent=11 // pred_check_branch
          %522 = sbr.rel (%p520) target = $region20
        $region19: #{convonn_forward.1} parent=11 // pred_region
          _
        $region20: #{convonn_forward.1} parent=11 // pred_fallthru
          _
        // Predicated region
        $region21: #{convonn_forward.1} parent=11 // pred_check
          %p523 = pneg %p119
        $region22: #{convonn_forward.1} parent=11 // pred_check_branch
          %525 = sbr.rel (%p523) target = $region24
        $region23: #{convonn_forward.1} parent=11 // pred_region
          _
        $region24: #{convonn_forward.1} parent=11 // pred_fallthru
          _
        // Predicated region
        $region25: #{convonn_forward.1} parent=11 // pred_check
          %p526 = pneg %p140
        $region26: #{convonn_forward.1} parent=11 // pred_check_branch
          %528 = sbr.rel (%p526) target = $region28
        $region27: #{convonn_forward.1} parent=11 // pred_region
          _
        $region28: #{convonn_forward.1} parent=11 // pred_fallthru
          _
        // Predicated region
        $region29: #{convonn_forward.1} parent=11 // pred_check
          %p529 = pneg %p161
        $region30: #{convonn_forward.1} parent=11 // pred_check_branch
          %531 = sbr.rel (%p529) target = $region32
        $region31: #{convonn_forward.1} parent=11 // pred_region
          _
        $region32: #{convonn_forward.1} parent=11 // pred_fallthru
          _
        // Predicated region
        $region33: #{convonn_forward.1} parent=11 // pred_check
          %p532 = pneg %p182
        $region34: #{convonn_forward.1} parent=11 // pred_check_branch
          %534 = sbr.rel (%p532) target = $region36
        $region35: #{convonn_forward.1} parent=11 // pred_region
          _
        $region36: #{convonn_forward.1} parent=11 // pred_fallthru
          _
        // Predicated region
        $region37: #{convonn_forward.1} parent=11 // pred_check
          %p535 = pneg %p203
        $region38: #{convonn_forward.1} parent=11 // pred_check_branch
          %537 = sbr.rel (%p535) target = $region40
        $region39: #{convonn_forward.1} parent=11 // pred_region
          _
        $region40: #{convonn_forward.1} parent=11 // pred_fallthru
          _
        // Predicated region
        $region41: #{convonn_forward.1} parent=11 // pred_check
          %p538 = pneg %p224
        $region42: #{convonn_forward.1} parent=11 // pred_check_branch
          %540 = sbr.rel (%p538) target = $region44
        $region43: #{convonn_forward.1} parent=11 // pred_region
          _
        $region44: #{convonn_forward.1} parent=11 // pred_fallthru
          _
        // Predicated region
        $region45: #{convonn_forward.1} parent=11 // pred_check
          %p541 = pneg %p245
        $region46: #{convonn_forward.1} parent=11 // pred_check_branch
          %543 = sbr.rel (%p541) target = $region48
        $region47: #{convonn_forward.1} parent=11 // pred_region
          _
        $region48: #{convonn_forward.1} parent=11 // pred_fallthru
          _
        // Predicated region
        $region49: #{convonn_forward.1} parent=11 // pred_check
          %p544 = pneg %p266
        $region50: #{convonn_forward.1} parent=11 // pred_check_branch
          %546 = sbr.rel (%p544) target = $region52
        $region51: #{convonn_forward.1} parent=11 // pred_region
          _
        $region52: #{convonn_forward.1} parent=11 // pred_fallthru
          _
        // Predicated region
        $region53: #{convonn_forward.1} parent=11 // pred_check
          %p547 = pneg %p287
        $region54: #{convonn_forward.1} parent=11 // pred_check_branch
          %549 = sbr.rel (%p547) target = $region56
        $region55: #{convonn_forward.1} parent=11 // pred_region
          _
        $region56: #{convonn_forward.1} parent=11 // pred_fallthru
          _
        // Predicated region
        $region57: #{convonn_forward.1} parent=11 // pred_check
          %p550 = pneg %p308
        $region58: #{convonn_forward.1} parent=11 // pred_check_branch
          %552 = sbr.rel (%p550) target = $region60
        $region59: #{convonn_forward.1} parent=11 // pred_region
          _
        $region60: #{convonn_forward.1} parent=11 // pred_fallthru
          _
        // Predicated region
        $region61: #{convonn_forward.1} parent=11 // pred_check
          %p553 = pneg %p329
        $region62: #{convonn_forward.1} parent=11 // pred_check_branch
          %555 = sbr.rel (%p553) target = $region64
        $region63: #{convonn_forward.1} parent=11 // pred_region
          _
        $region64: #{convonn_forward.1} parent=11 // pred_fallthru
          _
        // Predicated region
        $region65: #{convonn_forward.1} parent=11 // pred_check
          %p556 = pneg %p350
        $region66: #{convonn_forward.1} parent=11 // pred_check_branch
          %558 = sbr.rel (%p556) target = $region68
        $region67: #{convonn_forward.1} parent=11 // pred_region
          _
        $region68: #{convonn_forward.1} parent=11 // pred_fallthru
          _
        // Predicated region
        $region69: #{convonn_forward.1} parent=11 // pred_check
          %p559 = pneg %p371
        $region70: #{convonn_forward.1} parent=11 // pred_check_branch
          %561 = sbr.rel (%p559) target = $region72
        $region71: #{convonn_forward.1} parent=11 // pred_region
          _
        $region72: #{convonn_forward.1} parent=11 // pred_fallthru
          _
        // Predicated region
        $region73: #{convonn_forward.1} parent=11 // pred_check
          %p562 = pneg %p392
        $region74: #{convonn_forward.1} parent=11 // pred_check_branch
          %564 = sbr.rel (%p562) target = $region76
        $region75: #{convonn_forward.1} parent=11 // pred_region
          _
        $region76: #{convonn_forward.1} parent=11 // pred_fallthru
          _
        // Predicated region
        $region77: #{convonn_forward.1} parent=11 // pred_check
          %p565 = pneg %p413
        $region78: #{convonn_forward.1} parent=11 // pred_check_branch
          %567 = sbr.rel (%p565) target = $region80
        $region79: #{convonn_forward.1} parent=11 // pred_region
          _
        $region80: #{convonn_forward.1} parent=11 // pred_fallthru
          _
        // Predicated region
        $region81: #{convonn_forward.1} parent=11 // pred_check
          %p568 = pneg %p434
        $region82: #{convonn_forward.1} parent=11 // pred_check_branch
          %570 = sbr.rel (%p568) target = $region84
        $region83: #{convonn_forward.1} parent=11 // pred_region
          _
        $region84: #{convonn_forward.1} parent=11 // pred_fallthru
          _
        // Predicated region
        $region85: #{convonn_forward.1} parent=11 // pred_check
          %p571 = pneg %p455
        $region86: #{convonn_forward.1} parent=11 // pred_check_branch
          %573 = sbr.rel (%p571) target = $region88
        $region87: #{convonn_forward.1} parent=11 // pred_region
          _
        $region88: #{convonn_forward.1} parent=11 // pred_fallthru
          _
        // Predicated region
        $region89: #{convonn_forward.1} parent=11 // pred_check
          %p574 = pneg %p476
        $region90: #{convonn_forward.1} parent=11 // pred_check_branch
          %576 = sbr.rel (%p574) target = $region92
        $region91: #{convonn_forward.1} parent=11 // pred_region
          _
        $region92: #{convonn_forward.1} parent=11 // pred_fallthru
          _
      $region12: #{convonn_forward.1} parent=5 // pred_fallthru
        _
      %p577 = scmp.lt.s32.totalorder %s30, 2
      // Predicated region
      $region93: #{convonn_forward.1} parent=5 // pred_check
        %p578 = pneg %p577
      $region94: #{convonn_forward.1} parent=5 // pred_check_branch
        %580 = sbr.rel (%p578) target = $region96
      $region95: #{convonn_forward.1} parent=5 // pred_region
        // Predicated region
        $region97: #{convonn_forward.1} parent=95 // pred_check
          %p581 = pneg %p50
        $region98: #{convonn_forward.1} parent=95 // pred_check_branch
          %583 = sbr.rel (%p581) target = $region100
        $region99: #{convonn_forward.1} parent=95 // pred_region
          %s584 = smul.u32 32, %s30
          %p585 = scmp.lt.s32.totalorder %s584, 63
          %s586 = scalar_select %p585, %s584, 63
          %s587 = smul.addr %s586, 8
          %s588 = scalar_lea.vmem %s0, %s587
          %s589 = smul.u32 32, %s30
        $region100: #{convonn_forward.1} parent=95 // pred_fallthru
          _
      $region96: #{convonn_forward.1} parent=5 // pred_fallthru
        _
      %p590 = scmp.le.s32.totalorder 1, %s30
      %p591 = scmp.lt.s32.totalorder %s30, 3
      %p592 = pnand %p590, %p591
      %p593 = pneg %p592
      // Predicated region
      $region101: #{convonn_forward.1} parent=5 // pred_check
        _
      $region102: #{convonn_forward.1} parent=5 // pred_check_branch
        %595 = sbr.rel (%p592) target = $region104
      $region103: #{convonn_forward.1} parent=5 // pred_region
        %s596 = ssub.s32 %s30, 1
        %s597 = smul.u32 32, %s35
        %p598 = scmp.lt.s32.totalorder %s597, 63
        %s599 = scalar_select %p598, %s597, 63
        %s600 = smul.addr %s599, 8
        %s601 = scalar_lea.vmem %s0, %s600
        %p602 = pneg %p56
        %p603 = pneg %p53
        %p604 = pneg %p77
        %p605 = pneg %p74
        %p606 = pneg %p98
        %p607 = pneg %p95
        %p608 = pneg %p119
        %p609 = pneg %p116
        %p610 = pneg %p140
        %p611 = pneg %p137
        %p612 = pneg %p161
        %p613 = pneg %p158
        %p614 = pneg %p182
        %p615 = pneg %p179
        %p616 = pneg %p203
        %p617 = pneg %p200
        %p618 = pneg %p224
        %p619 = pneg %p221
        %p620 = pneg %p245
        %p621 = pneg %p242
        %p622 = pneg %p266
        %p623 = pneg %p263
        %p624 = pneg %p287
        %p625 = pneg %p284
        %p626 = pneg %p308
        %p627 = pneg %p305
        %p628 = pneg %p329
        %p629 = pneg %p326
        %p630 = pneg %p350
        %p631 = pneg %p347
        %p632 = pneg %p371
        %p633 = pneg %p368
        %p634 = pneg %p392
        %p635 = pneg %p389
        %p636 = pneg %p413
        %p637 = pneg %p410
        %p638 = pneg %p434
        %p639 = pneg %p431
        %p640 = pneg %p455
        %p641 = pneg %p452
        %p642 = pneg %p476
        %p643 = pneg %p473
        %p644 = pneg %p502
        %p645 = pneg %p499
        %s646 = sand.u32 %s489, 1
        %s647 = scalar_lea.sflag [#allocation3], %s646
        %s648 = sand.u32 %s489, 1
        %s649 = smul.addr %s648, 8
        %s650 = scalar_lea.vmem [#allocation2], %s649
        %s651 = smul.u32 32, %s35
        %p652 = scmp.lt.s32.totalorder %s651, 63
        %s653 = scalar_select %p652, %s651, 63
        %s654 = smul.addr %s653, 8
        %s655 = scalar_lea.vmem %s0, %s654
        %s656 = smul.u32 32, %s35
        %v658 = vld [vmem:[%s655] sm:$0xff]
        %v659 = vld [vmem:[%s655 + $0x8] sm:$0xff]
        %v660 = vld [vmem:[%s655 + $0x10] sm:$0xff]
        %v661 = vld [vmem:[%s655 + $0x18] sm:$0xff]
        %v662 = vld [vmem:[%s655 + $0x20] sm:$0xff]
        %v663 = vld [vmem:[%s655 + $0x28] sm:$0xff]
        %v664 = vld [vmem:[%s655 + $0x30] sm:$0xff]
        %v665 = vld [vmem:[%s655 + $0x38] sm:$0xff]
        %v666 = vld [vmem:[%s655 + $0x40] sm:$0xff]
        %v667 = vld [vmem:[%s655 + $0x48] sm:$0xff]
        %v668 = vld [vmem:[%s655 + $0x50] sm:$0xff]
        %v669 = vld [vmem:[%s655 + $0x58] sm:$0xff]
        %v670 = vld [vmem:[%s655 + $0x60] sm:$0xff]
        %v671 = vld [vmem:[%s655 + $0x68] sm:$0xff]
        %v672 = vld [vmem:[%s655 + $0x70] sm:$0xff]
        %v673 = vld [vmem:[%s655 + $0x78] sm:$0xff]
        %v674 = vld [vmem:[%s655 + $0x80] sm:$0xff]
        %v675 = vld [vmem:[%s655 + $0x88] sm:$0xff]
        %v676 = vld [vmem:[%s655 + $0x90] sm:$0xff]
        %v677 = vld [vmem:[%s655 + $0x98] sm:$0xff]
        %v678 = vld [vmem:[%s655 + $0xa0] sm:$0xff]
        %v679 = vld [vmem:[%s655 + $0xa8] sm:$0xff]
        %v680 = vld [vmem:[%s655 + $0xb0] sm:$0xff]
        %v681 = vld [vmem:[%s655 + $0xb8] sm:$0xff]
        %v682 = vld [vmem:[%s655 + $0xc0] sm:$0xff]
        %v683 = vld [vmem:[%s655 + $0xc8] sm:$0xff]
        %v684 = vld [vmem:[%s655 + $0xd0] sm:$0xff]
        %v685 = vld [vmem:[%s655 + $0xd8] sm:$0xff]
        %v686 = vld [vmem:[%s655 + $0xe0] sm:$0xff]
        %v687 = vld [vmem:[%s655 + $0xe8] sm:$0xff]
        %v688 = vld [vmem:[%s655 + $0xf0] sm:$0xff]
        %v689 = vld [vmem:[%s655 + $0xf8] sm:$0xff]
        %v690 = vpack.c.bf16 %v659, %v658
        %v691 = vpack.c.bf16 %v661, %v660
        %v692 = vpack.c.bf16 %v663, %v662
        %v693 = vpack.c.bf16 %v665, %v664
        %v694 = vpack.c.bf16 %v667, %v666
        %v695 = vpack.c.bf16 %v669, %v668
        %v696 = vpack.c.bf16 %v671, %v670
        %v697 = vpack.c.bf16 %v673, %v672
        %v698 = vpack.c.bf16 %v675, %v674
        %v699 = vpack.c.bf16 %v677, %v676
        %v700 = vpack.c.bf16 %v679, %v678
        %v701 = vpack.c.bf16 %v681, %v680
        %v702 = vpack.c.bf16 %v683, %v682
        %v703 = vpack.c.bf16 %v685, %v684
        %v704 = vpack.c.bf16 %v687, %v686
        %v705 = vpack.c.bf16 %v689, %v688
        %v706 = vld [vmem:[%s2] sm:$0xff]
        %v707 = vld [vmem:[%s2 + $0x8] sm:$0xff]
        %v708 = vld [vmem:[%s2 + $0x10] sm:$0xff]
        %v709 = vld [vmem:[%s2 + $0x18] sm:$0xff]
        %v710 = vld [vmem:[%s2 + $0x20] sm:$0xff]
        %v711 = vld [vmem:[%s2 + $0x28] sm:$0xff]
        %v712 = vld [vmem:[%s2 + $0x30] sm:$0xff]
        %v713 = vld [vmem:[%s2 + $0x38] sm:$0xff]
        %v714 = vld [vmem:[%s2 + $0x40] sm:$0xff]
        %v715 = vld [vmem:[%s2 + $0x48] sm:$0xff]
        %v716 = vld [vmem:[%s2 + $0x50] sm:$0xff]
        %v717 = vld [vmem:[%s2 + $0x58] sm:$0xff]
        %v718 = vld [vmem:[%s1] sm:$0xff]
        %v719 = vld [vmem:[%s1 + $0x8] sm:$0xff]
        %v720 = vld [vmem:[%s1 + $0x10] sm:$0xff]
        %v721 = vld [vmem:[%s1 + $0x18] sm:$0xff]
        %v722 = vld [vmem:[%s1 + $0x20] sm:$0xff]
        %v723 = vld [vmem:[%s1 + $0x28] sm:$0xff]
        %v724 = vld [vmem:[%s1 + $0x30] sm:$0xff]
        %v725 = vld [vmem:[%s1 + $0x38] sm:$0xff]
        %v726 = vld [vmem:[%s1 + $0x40] sm:$0xff]
        %v727 = vld [vmem:[%s1 + $0x48] sm:$0xff]
        %v728 = vld [vmem:[%s1 + $0x50] sm:$0xff]
        %v729 = vld [vmem:[%s1 + $0x58] sm:$0xff]
        %v730 = vld [vmem:[%s1 + $0x60] sm:$0xff]
        %v731 = vld [vmem:[%s1 + $0x68] sm:$0xff]
        %v732 = vld [vmem:[%s1 + $0x70] sm:$0xff]
        %v733 = vld [vmem:[%s1 + $0x78] sm:$0xff]
        %v734 = vld [vmem:[%s1 + $0x80] sm:$0xff]
        %v735 = vld [vmem:[%s1 + $0x88] sm:$0xff]
        %v736 = vld [vmem:[%s1 + $0x90] sm:$0xff]
        %v737 = vld [vmem:[%s1 + $0x98] sm:$0xff]
        %v738 = vld [vmem:[%s1 + $0xa0] sm:$0xff]
        %v739 = vld [vmem:[%s1 + $0xa8] sm:$0xff]
        %v740 = vld [vmem:[%s1 + $0xb0] sm:$0xff]
        %v741 = vld [vmem:[%s1 + $0xb8] sm:$0xff]
        %v742 = vld [vmem:[%s1 + $0xc0] sm:$0xff]
        %v743 = vld [vmem:[%s1 + $0xc8] sm:$0xff]
        %v744 = vld [vmem:[%s1 + $0xd0] sm:$0xff]
        %v745 = vld [vmem:[%s1 + $0xd8] sm:$0xff]
        %v746 = vld [vmem:[%s1 + $0xe0] sm:$0xff]
        %v747 = vld [vmem:[%s1 + $0xe8] sm:$0xff]
        %v748 = vld [vmem:[%s1 + $0xf0] sm:$0xff]
        %v749 = vld [vmem:[%s1 + $0xf8] sm:$0xff]
        %v782 = vunpack.c.l.b16 %v718
        %v783 = vunpack.c.h.b16 %v718
        %v784 = vunpack.c.l.b16 %v719
        %v785 = vunpack.c.h.b16 %v719
        %v786 = vunpack.c.l.b16 %v720
        %v787 = vunpack.c.h.b16 %v720
        %v788 = vunpack.c.l.b16 %v721
        %v789 = vunpack.c.h.b16 %v721
        %v790 = vunpack.c.l.b16 %v722
        %v791 = vunpack.c.h.b16 %v722
        %v792 = vunpack.c.l.b16 %v723
        %v793 = vunpack.c.h.b16 %v723
        %v794 = vunpack.c.l.b16 %v724
        %v795 = vunpack.c.h.b16 %v724
        %v796 = vunpack.c.l.b16 %v725
        %v797 = vunpack.c.h.b16 %v725
        %v798 = vunpack.c.l.b16 %v726
        %v799 = vunpack.c.h.b16 %v726
        %v800 = vunpack.c.l.b16 %v727
        %v801 = vunpack.c.h.b16 %v727
        %v802 = vunpack.c.l.b16 %v728
        %v803 = vunpack.c.h.b16 %v728
        %v804 = vunpack.c.l.b16 %v729
        %v805 = vunpack.c.h.b16 %v729
        %v806 = vunpack.c.l.b16 %v730
        %v807 = vunpack.c.h.b16 %v730
        %v808 = vunpack.c.l.b16 %v731
        %v809 = vunpack.c.h.b16 %v731
        %v810 = vunpack.c.l.b16 %v732
        %v811 = vunpack.c.h.b16 %v732
        %v812 = vunpack.c.l.b16 %v733
        %v813 = vunpack.c.h.b16 %v733
        %v814 = vunpack.c.l.b16 %v734
        %v815 = vunpack.c.h.b16 %v734
        %v816 = vunpack.c.l.b16 %v735
        %v817 = vunpack.c.h.b16 %v735
        %v818 = vunpack.c.l.b16 %v736
        %v819 = vunpack.c.h.b16 %v736
        %v820 = vunpack.c.l.b16 %v737
        %v821 = vunpack.c.h.b16 %v737
        %v822 = vunpack.c.l.b16 %v738
        %v823 = vunpack.c.h.b16 %v738
        %v824 = vunpack.c.l.b16 %v739
        %v825 = vunpack.c.h.b16 %v739
        %v826 = vunpack.c.l.b16 %v740
        %v827 = vunpack.c.h.b16 %v740
        %v828 = vunpack.c.l.b16 %v741
        %v829 = vunpack.c.h.b16 %v741
        %v830 = vunpack.c.l.b16 %v742
        %v831 = vunpack.c.h.b16 %v742
        %v832 = vunpack.c.l.b16 %v743
        %v833 = vunpack.c.h.b16 %v743
        %v834 = vunpack.c.l.b16 %v744
        %v835 = vunpack.c.h.b16 %v744
        %v836 = vunpack.c.l.b16 %v745
        %v837 = vunpack.c.h.b16 %v745
        %v838 = vunpack.c.l.b16 %v746
        %v839 = vunpack.c.h.b16 %v746
        %v840 = vunpack.c.l.b16 %v747
        %v841 = vunpack.c.h.b16 %v747
        %v842 = vunpack.c.l.b16 %v748
        %v843 = vunpack.c.h.b16 %v748
        %v844 = vunpack.c.l.b16 %v749
        %v845 = vunpack.c.h.b16 %v749
        %v846 = vpack.c.b16 %v784, %v782
        %v847 = vpack.c.b16 %v785, %v783
        %v848 = vpack.c.b16 %v788, %v786
        %v849 = vpack.c.b16 %v789, %v787
        %v850 = vpack.c.b16 %v792, %v790
        %v851 = vpack.c.b16 %v793, %v791
        %v852 = vpack.c.b16 %v796, %v794
        %v853 = vpack.c.b16 %v797, %v795
        %v854 = vpack.c.b16 %v800, %v798
        %v855 = vpack.c.b16 %v801, %v799
        %v856 = vpack.c.b16 %v804, %v802
        %v857 = vpack.c.b16 %v805, %v803
        %v858 = vpack.c.b16 %v808, %v806
        %v859 = vpack.c.b16 %v809, %v807
        %v860 = vpack.c.b16 %v812, %v810
        %v861 = vpack.c.b16 %v813, %v811
        %v862 = vpack.c.b16 %v816, %v814
        %v863 = vpack.c.b16 %v817, %v815
        %v864 = vpack.c.b16 %v820, %v818
        %v865 = vpack.c.b16 %v821, %v819
        %v866 = vpack.c.b16 %v824, %v822
        %v867 = vpack.c.b16 %v825, %v823
        %v868 = vpack.c.b16 %v828, %v826
        %v869 = vpack.c.b16 %v829, %v827
        %v870 = vpack.c.b16 %v832, %v830
        %v871 = vpack.c.b16 %v833, %v831
        %v872 = vpack.c.b16 %v836, %v834
        %v873 = vpack.c.b16 %v837, %v835
        %v874 = vpack.c.b16 %v840, %v838
        %v875 = vpack.c.b16 %v841, %v839
        %v876 = vpack.c.b16 %v844, %v842
        %v877 = vpack.c.b16 %v845, %v843
        %910 = vmatprep.subr.bf16.mxu0 0
        %911 = vmatpush1.bf16.msra.mxu0 %v690
        %912 = vmatprep.subr.bf16.mxu0 0
        %913 = vmatpush1.bf16.msra.mxu0 %v691
        %914 = vmatprep.subr.bf16.mxu0 0
        %915 = vmatpush1.bf16.msra.mxu0 %v692
        %916 = vmatprep.subr.bf16.mxu0 0
        %917 = vmatpush1.bf16.msra.mxu0 %v693
        %918 = vmatprep.subr.bf16.mxu0 0
        %919 = vmatpush1.bf16.msra.mxu0 %v694
        %920 = vmatprep.subr.bf16.mxu0 0
        %921 = vmatpush1.bf16.msra.mxu0 %v695
        %922 = vmatprep.subr.bf16.mxu0 0
        %923 = vmatpush1.bf16.msra.mxu0 %v696
        %924 = vmatprep.subr.bf16.mxu0 0
        %925 = vmatpush1.bf16.msra.mxu0 %v697
        %926 = vmatprep.subr.bf16.mxu0 0
        %927 = vmatpush1.bf16.msra.mxu0 %v698
        %928 = vmatprep.subr.bf16.mxu0 0
        %929 = vmatpush1.bf16.msra.mxu0 %v699
        %930 = vmatprep.subr.bf16.mxu0 0
        %931 = vmatpush1.bf16.msra.mxu0 %v700
        %932 = vmatprep.subr.bf16.mxu0 0
        %933 = vmatpush1.bf16.msra.mxu0 %v701
        %934 = vmatprep.subr.bf16.mxu0 0
        %935 = vmatpush1.bf16.msra.mxu0 %v702
        %936 = vmatprep.subr.bf16.mxu0 0
        %937 = vmatpush1.bf16.msra.mxu0 %v703
        %938 = vmatprep.subr.bf16.mxu0 0
        %939 = vmatpush1.bf16.msra.mxu0 %v704
        %940 = vmatprep.subr.bf16.mxu0 0
        %941 = vmatpush1.bf16.msra.mxu0 %v705
        %942 = vmatprep.mubr.bf16.mxu0 %v847
        %943 = vmatmul.mubr.bf16.gmra.mrb[0].mxu0 %v846
        %v944 = vpop.f32.mrb[0].mxu0
        %v945 = vadd.f32 0.0, %v944
        %v946 = vpop.f32.mrb[0].mxu0
        %v947 = vpop.f32.mrb[0].mxu0
        %v948 = vadd.f32 0.0, %v947
        %v949 = vpop.f32.mrb[0].mxu0
        %950 = vmatprep.mubr.bf16.mxu0 %v849
        %951 = vmatmul.mubr.bf16.gmra.mrb[0].mxu0 %v848
        %v952 = vpop.f32.mrb[0].mxu0
        %v953 = vadd.f32 0.0, %v952
        %v954 = vpop.f32.mrb[0].mxu0
        %v955 = vpop.f32.mrb[0].mxu0
        %v956 = vadd.f32 0.0, %v955
        %v957 = vpop.f32.mrb[0].mxu0
        %958 = vmatprep.mubr.bf16.mxu0 %v851
        %959 = vmatmul.mubr.bf16.gmra.mrb[0].mxu0 %v850
        %v960 = vpop.f32.mrb[0].mxu0
        %v961 = vadd.f32 0.0, %v960
        %v962 = vpop.f32.mrb[0].mxu0
        %v963 = vpop.f32.mrb[0].mxu0
        %v964 = vadd.f32 0.0, %v963
        %v965 = vpop.f32.mrb[0].mxu0
        %966 = vmatprep.mubr.bf16.mxu0 %v853
        %967 = vmatmul.mubr.bf16.gmra.mrb[0].mxu0 %v852
        %v968 = vpop.f32.mrb[0].mxu0
        %v969 = vadd.f32 0.0, %v968
        %v970 = vpop.f32.mrb[0].mxu0
        %v971 = vpop.f32.mrb[0].mxu0
        %v972 = vadd.f32 0.0, %v971
        %v973 = vpop.f32.mrb[0].mxu0
        %974 = vmatprep.mubr.bf16.mxu0 %v855
        %975 = vmatmul.mubr.bf16.gmra.mrb[0].mxu0 %v854
        %v976 = vpop.f32.mrb[0].mxu0
        %v977 = vadd.f32 0.0, %v976
        %v978 = vpop.f32.mrb[0].mxu0
        %v979 = vpop.f32.mrb[0].mxu0
        %v980 = vadd.f32 0.0, %v979
        %v981 = vpop.f32.mrb[0].mxu0
        %982 = vmatprep.mubr.bf16.mxu0 %v857
        %983 = vmatmul.mubr.bf16.gmra.mrb[0].mxu0 %v856
        %v984 = vpop.f32.mrb[0].mxu0
        %v985 = vadd.f32 0.0, %v984
        %v986 = vpop.f32.mrb[0].mxu0
        %v987 = vpop.f32.mrb[0].mxu0
        %v988 = vadd.f32 0.0, %v987
        %v989 = vpop.f32.mrb[0].mxu0
        %990 = vmatprep.mubr.bf16.mxu0 %v859
        %991 = vmatmul.mubr.bf16.gmra.mrb[0].mxu0 %v858
        %v992 = vpop.f32.mrb[0].mxu0
        %v993 = vadd.f32 0.0, %v992
        %v994 = vpop.f32.mrb[0].mxu0
        %v995 = vpop.f32.mrb[0].mxu0
        %v996 = vadd.f32 0.0, %v995
        %v997 = vpop.f32.mrb[0].mxu0
        %998 = vmatprep.mubr.bf16.mxu0 %v861
        %999 = vmatmul.mubr.bf16.gmra.mrb[0].mxu0 %v860
        %v1000 = vpop.f32.mrb[0].mxu0
        %v1001 = vadd.f32 0.0, %v1000
        %v1002 = vpop.f32.mrb[0].mxu0
        %v1003 = vpop.f32.mrb[0].mxu0
        %v1004 = vadd.f32 0.0, %v1003
        %v1005 = vpop.f32.mrb[0].mxu0
        %1006 = vmatprep.mubr.bf16.mxu0 %v863
        %1007 = vmatmul.mubr.bf16.gmra.mrb[0].mxu0 %v862
        %v1008 = vpop.f32.mrb[0].mxu0
        %v1009 = vadd.f32 0.0, %v1008
        %v1010 = vpop.f32.mrb[0].mxu0
        %v1011 = vpop.f32.mrb[0].mxu0
        %v1012 = vadd.f32 0.0, %v1011
        %v1013 = vpop.f32.mrb[0].mxu0
        %1014 = vmatprep.mubr.bf16.mxu0 %v865
        %1015 = vmatmul.mubr.bf16.gmra.mrb[0].mxu0 %v864
        %v1016 = vpop.f32.mrb[0].mxu0
        %v1017 = vadd.f32 0.0, %v1016
        %v1018 = vpop.f32.mrb[0].mxu0
        %v1019 = vpop.f32.mrb[0].mxu0
        %v1020 = vadd.f32 0.0, %v1019
        %v1021 = vpop.f32.mrb[0].mxu0
        %1022 = vmatprep.mubr.bf16.mxu0 %v867
        %1023 = vmatmul.mubr.bf16.gmra.mrb[0].mxu0 %v866
        %v1024 = vpop.f32.mrb[0].mxu0
        %v1025 = vadd.f32 0.0, %v1024
        %v1026 = vpop.f32.mrb[0].mxu0
        %v1027 = vpop.f32.mrb[0].mxu0
        %v1028 = vadd.f32 0.0, %v1027
        %v1029 = vpop.f32.mrb[0].mxu0
        %1030 = vmatprep.mubr.bf16.mxu0 %v869
        %1031 = vmatmul.mubr.bf16.gmra.mrb[0].mxu0 %v868
        %v1032 = vpop.f32.mrb[0].mxu0
        %v1033 = vadd.f32 0.0, %v1032
        %v1034 = vpop.f32.mrb[0].mxu0
        %v1035 = vpop.f32.mrb[0].mxu0
        %v1036 = vadd.f32 0.0, %v1035
        %v1037 = vpop.f32.mrb[0].mxu0
        %1038 = vmatprep.mubr.bf16.mxu0 %v871
        %1039 = vmatmul.mubr.bf16.gmra.mrb[0].mxu0 %v870
        %v1040 = vpop.f32.mrb[0].mxu0
        %v1041 = vadd.f32 0.0, %v1040
        %v1042 = vpop.f32.mrb[0].mxu0
        %v1043 = vpop.f32.mrb[0].mxu0
        %v1044 = vadd.f32 0.0, %v1043
        %v1045 = vpop.f32.mrb[0].mxu0
        %1046 = vmatprep.mubr.bf16.mxu0 %v873
        %1047 = vmatmul.mubr.bf16.gmra.mrb[0].mxu0 %v872
        %v1048 = vpop.f32.mrb[0].mxu0
        %v1049 = vadd.f32 0.0, %v1048
        %v1050 = vpop.f32.mrb[0].mxu0
        %v1051 = vpop.f32.mrb[0].mxu0
        %v1052 = vadd.f32 0.0, %v1051
        %v1053 = vpop.f32.mrb[0].mxu0
        %1054 = vmatprep.mubr.bf16.mxu0 %v875
        %1055 = vmatmul.mubr.bf16.gmra.mrb[0].mxu0 %v874
        %v1056 = vpop.f32.mrb[0].mxu0
        %v1057 = vadd.f32 0.0, %v1056
        %v1058 = vpop.f32.mrb[0].mxu0
        %v1059 = vpop.f32.mrb[0].mxu0
        %v1060 = vadd.f32 0.0, %v1059
        %v1061 = vpop.f32.mrb[0].mxu0
        %1062 = vmatprep.mubr.bf16.mxu0 %v877
        %1063 = vmatmul.mubr.bf16.gmra.mrb[0].mxu0 %v876
        %v1064 = vpop.f32.mrb[0].mxu0
        %v1065 = vadd.f32 0.0, %v1064
        %v1066 = vpop.f32.mrb[0].mxu0
        %v1067 = vpop.f32.mrb[0].mxu0
        %v1068 = vadd.f32 0.0, %v1067
        %v1069 = vpop.f32.mrb[0].mxu0
        %1070 = vdwg.mxu0
        %v1071 = vpack.c.bf16 %v948, %v945
        %v1072 = vpack.c.bf16 %v956, %v953
        %v1073 = vpack.c.bf16 %v964, %v961
        %v1074 = vpack.c.bf16 %v972, %v969
        %v1075 = vpack.c.bf16 %v980, %v977
        %v1076 = vpack.c.bf16 %v988, %v985
        %v1077 = vpack.c.bf16 %v996, %v993
        %v1078 = vpack.c.bf16 %v1004, %v1001
        %v1079 = vpack.c.bf16 %v1012, %v1009
        %v1080 = vpack.c.bf16 %v1020, %v1017
        %v1081 = vpack.c.bf16 %v1028, %v1025
        %v1082 = vpack.c.bf16 %v1036, %v1033
        %v1083 = vpack.c.bf16 %v1044, %v1041
        %v1084 = vpack.c.bf16 %v1052, %v1049
        %v1085 = vpack.c.bf16 %v1060, %v1057
        %v1086 = vpack.c.bf16 %v1068, %v1065
        %s1087 = scalar_lea.vmem %s2, 96
        %v1088 = vld [vmem:[%s1087] sm:$0xff]
        %v1089 = vld [vmem:[%s1087 + $0x8] sm:$0xff]
        %v1090 = vld [vmem:[%s1087 + $0x10] sm:$0xff]
        %v1091 = vld [vmem:[%s1087 + $0x18] sm:$0xff]
        %v1092 = vld [vmem:[%s1087 + $0x20] sm:$0xff]
        %v1093 = vld [vmem:[%s1087 + $0x28] sm:$0xff]
        %v1094 = vld [vmem:[%s1087 + $0x30] sm:$0xff]
        %v1095 = vld [vmem:[%s1087 + $0x38] sm:$0xff]
        %v1096 = vld [vmem:[%s1087 + $0x40] sm:$0xff]
        %v1097 = vld [vmem:[%s1087 + $0x48] sm:$0xff]
        %v1098 = vld [vmem:[%s1087 + $0x50] sm:$0xff]
        %v1099 = vld [vmem:[%s1087 + $0x58] sm:$0xff]
        %v1112 = vunpack.c.l.b16 %v1088
        %v1113 = vunpack.c.h.b16 %v1088
        %v1114 = vunpack.c.l.b16 %v1089
        %v1115 = vunpack.c.h.b16 %v1089
        %v1116 = vunpack.c.l.b16 %v1090
        %v1117 = vunpack.c.h.b16 %v1090
        %v1118 = vunpack.c.l.b16 %v1091
        %v1119 = vunpack.c.h.b16 %v1091
        %v1120 = vunpack.c.l.b16 %v1092
        %v1121 = vunpack.c.h.b16 %v1092
        %v1122 = vunpack.c.l.b16 %v1093
        %v1123 = vunpack.c.h.b16 %v1093
        %v1124 = vunpack.c.l.b16 %v1094
        %v1125 = vunpack.c.h.b16 %v1094
        %v1126 = vunpack.c.l.b16 %v1095
        %v1127 = vunpack.c.h.b16 %v1095
        %v1128 = vunpack.c.l.b16 %v1096
        %v1129 = vunpack.c.h.b16 %v1096
        %v1130 = vunpack.c.l.b16 %v1097
        %v1131 = vunpack.c.h.b16 %v1097
        %v1132 = vunpack.c.l.b16 %v1098
        %v1133 = vunpack.c.h.b16 %v1098
        %v1134 = vunpack.c.l.b16 %v1099
        %v1135 = vunpack.c.h.b16 %v1099
        %v1136 = vpack.c.b16 %v1114, %v1112
        %v1137 = vpack.c.b16 %v1115, %v1113
        %v1138 = vpack.c.b16 %v1118, %v1116
        %v1139 = vpack.c.b16 %v1119, %v1117
        %v1140 = vpack.c.b16 %v1122, %v1120
        %v1141 = vpack.c.b16 %v1123, %v1121
        %v1142 = vpack.c.b16 %v1126, %v1124
        %v1143 = vpack.c.b16 %v1127, %v1125
        %v1144 = vpack.c.b16 %v1130, %v1128
        %v1145 = vpack.c.b16 %v1131, %v1129
        %v1146 = vpack.c.b16 %v1134, %v1132
        %v1147 = vpack.c.b16 %v1135, %v1133
        %vm1160 = vcmask 785408
        %v1162 = vsel %vm1160, %v1071, 0
        %v1165 = vsel %vm1160, %v1072, 0
        %v1168 = vsel %vm1160, %v1073, 0
        %v1171 = vsel %vm1160, %v1074, 0
        %v1174 = vsel %vm1160, %v1075, 0
        %v1177 = vsel %vm1160, %v1076, 0
        %v1180 = vsel %vm1160, %v1077, 0
        %v1183 = vsel %vm1160, %v1078, 0
        %v1186 = vsel %vm1160, %v1079, 0
        %v1189 = vsel %vm1160, %v1080, 0
        %v1192 = vsel %vm1160, %v1081, 0
        %v1195 = vsel %vm1160, %v1082, 0
        %v1198 = vsel %vm1160, %v1083, 0
        %v1201 = vsel %vm1160, %v1084, 0
        %v1204 = vsel %vm1160, %v1085, 0
        %v1207 = vsel %vm1160, %v1086, 0
        %1209 = vmatprep.subr.bf16.mxu0 %v1137
        %1210 = vmatpush1.bf16.msra.mxu0 %v1136
        %1211 = vmatprep.subr.bf16.mxu0 %v1139
        %1212 = vmatpush1.bf16.msra.mxu0 %v1138
        %1213 = vmatprep.subr.bf16.mxu0 %v1141
        %1214 = vmatpush1.bf16.msra.mxu0 %v1140
        %1215 = vmatprep.subr.bf16.mxu0 %v1143
        %1216 = vmatpush1.bf16.msra.mxu0 %v1142
        %1217 = vmatprep.subr.bf16.mxu0 %v1145
        %1218 = vmatpush1.bf16.msra.mxu0 %v1144
        %1219 = vmatprep.subr.bf16.mxu0 %v1147
        %1220 = vmatpush1.bf16.msra.mxu0 %v1146
        %1221 = vmatprep.subr.bf16.mxu0 0
        %1222 = vmatpush1.bf16.msra.mxu0 0
        %1223 = vmatprep.subr.bf16.mxu0 0
        %1224 = vmatpush1.bf16.msra.mxu0 0
        %1225 = vmatprep.subr.bf16.mxu0 0
        %1226 = vmatpush1.bf16.msra.mxu0 0
        %1227 = vmatprep.subr.bf16.mxu0 0
        %1228 = vmatpush1.bf16.msra.mxu0 0
        %1229 = vmatprep.subr.bf16.mxu0 0
        %1230 = vmatpush1.bf16.msra.mxu0 0
        %1231 = vmatprep.subr.bf16.mxu0 0
        %1232 = vmatpush1.bf16.msra.mxu0 0
        %1233 = vmatprep.subr.bf16.mxu0 0
        %1234 = vmatpush1.bf16.msra.mxu0 0
        %1235 = vmatprep.subr.bf16.mxu0 0
        %1236 = vmatpush1.bf16.msra.mxu0 0
        %1237 = vmatprep.subr.bf16.mxu0 0
        %1238 = vmatpush1.bf16.msra.mxu0 0
        %1239 = vmatprep.subr.bf16.mxu0 0
        %1240 = vmatpush1.bf16.msra.mxu0 0
        %1241 = vmatprep.mubr.bf16.mxu0 0
        %1242 = vmatmul.mubr.bf16.gmra.mrb[0].mxu0 %v1162
        %v1243 = vpop.f32.mrb[0].mxu0
        %v1244 = vadd.f32 0.0, %v1243
        %v1245 = vpop.f32.mrb[0].mxu0
        %v1246 = vadd.f32 0.0, %v1245
        %v1247 = vpop.f32.mrb[0].mxu0
        %v1248 = vadd.f32 0.0, %v1247
        %v1249 = vpop.f32.mrb[0].mxu0
        %v1250 = vadd.f32 0.0, %v1249
        %1251 = vmatprep.mubr.bf16.mxu0 0
        %1252 = vmatmul.mubr.bf16.gmra.mrb[0].mxu0 %v1165
        %v1253 = vpop.f32.mrb[0].mxu0
        %v1254 = vadd.f32 0.0, %v1253
        %v1255 = vpop.f32.mrb[0].mxu0
        %v1256 = vadd.f32 0.0, %v1255
        %v1257 = vpop.f32.mrb[0].mxu0
        %v1258 = vadd.f32 0.0, %v1257
        %v1259 = vpop.f32.mrb[0].mxu0
        %v1260 = vadd.f32 0.0, %v1259
        %1261 = vmatprep.mubr.bf16.mxu0 0
        %1262 = vmatmul.mubr.bf16.gmra.mrb[0].mxu0 %v1168
        %v1263 = vpop.f32.mrb[0].mxu0
        %v1264 = vadd.f32 0.0, %v1263
        %v1265 = vpop.f32.mrb[0].mxu0
        %v1266 = vadd.f32 0.0, %v1265
        %v1267 = vpop.f32.mrb[0].mxu0
        %v1268 = vadd.f32 0.0, %v1267
        %v1269 = vpop.f32.mrb[0].mxu0
        %v1270 = vadd.f32 0.0, %v1269
        %1271 = vmatprep.mubr.bf16.mxu0 0
        %1272 = vmatmul.mubr.bf16.gmra.mrb[0].mxu0 %v1171
        %v1273 = vpop.f32.mrb[0].mxu0
        %v1274 = vadd.f32 0.0, %v1273
        %v1275 = vpop.f32.mrb[0].mxu0
        %v1276 = vadd.f32 0.0, %v1275
        %v1277 = vpop.f32.mrb[0].mxu0
        %v1278 = vadd.f32 0.0, %v1277
        %v1279 = vpop.f32.mrb[0].mxu0
        %v1280 = vadd.f32 0.0, %v1279
        %1281 = vmatprep.mubr.bf16.mxu0 0
        %1282 = vmatmul.mubr.bf16.gmra.mrb[0].mxu0 %v1174
        %v1283 = vpop.f32.mrb[0].mxu0
        %v1284 = vadd.f32 0.0, %v1283
        %v1285 = vpop.f32.mrb[0].mxu0
        %v1286 = vadd.f32 0.0, %v1285
        %v1287 = vpop.f32.mrb[0].mxu0
        %v1288 = vadd.f32 0.0, %v1287
        %v1289 = vpop.f32.mrb[0].mxu0
        %v1290 = vadd.f32 0.0, %v1289
        %1291 = vmatprep.mubr.bf16.mxu0 0
        %1292 = vmatmul.mubr.bf16.gmra.mrb[0].mxu0 %v1177
        %v1293 = vpop.f32.mrb[0].mxu0
        %v1294 = vadd.f32 0.0, %v1293
        %v1295 = vpop.f32.mrb[0].mxu0
        %v1296 = vadd.f32 0.0, %v1295
        %v1297 = vpop.f32.mrb[0].mxu0
        %v1298 = vadd.f32 0.0, %v1297
        %v1299 = vpop.f32.mrb[0].mxu0
        %v1300 = vadd.f32 0.0, %v1299
        %1301 = vmatprep.mubr.bf16.mxu0 0
        %1302 = vmatmul.mubr.bf16.gmra.mrb[0].mxu0 %v1180
        %v1303 = vpop.f32.mrb[0].mxu0
        %v1304 = vadd.f32 0.0, %v1303
        %v1305 = vpop.f32.mrb[0].mxu0
        %v1306 = vadd.f32 0.0, %v1305
        %v1307 = vpop.f32.mrb[0].mxu0
        %v1308 = vadd.f32 0.0, %v1307
        %v1309 = vpop.f32.mrb[0].mxu0
        %v1310 = vadd.f32 0.0, %v1309
        %1311 = vmatprep.mubr.bf16.mxu0 0
        %1312 = vmatmul.mubr.bf16.gmra.mrb[0].mxu0 %v1183
        %v1313 = vpop.f32.mrb[0].mxu0
        %v1314 = vadd.f32 0.0, %v1313
        %v1315 = vpop.f32.mrb[0].mxu0
        %v1316 = vadd.f32 0.0, %v1315
        %v1317 = vpop.f32.mrb[0].mxu0
        %v1318 = vadd.f32 0.0, %v1317
        %v1319 = vpop.f32.mrb[0].mxu0
        %v1320 = vadd.f32 0.0, %v1319
        %1321 = vmatprep.mubr.bf16.mxu0 0
        %1322 = vmatmul.mubr.bf16.gmra.mrb[0].mxu0 %v1186
        %v1323 = vpop.f32.mrb[0].mxu0
        %v1324 = vadd.f32 0.0, %v1323
        %v1325 = vpop.f32.mrb[0].mxu0
        %v1326 = vadd.f32 0.0, %v1325
        %v1327 = vpop.f32.mrb[0].mxu0
        %v1328 = vadd.f32 0.0, %v1327
        %v1329 = vpop.f32.mrb[0].mxu0
        %v1330 = vadd.f32 0.0, %v1329
        %1331 = vmatprep.mubr.bf16.mxu0 0
        %1332 = vmatmul.mubr.bf16.gmra.mrb[0].mxu0 %v1189
        %v1333 = vpop.f32.mrb[0].mxu0
        %v1334 = vadd.f32 0.0, %v1333
        %v1335 = vpop.f32.mrb[0].mxu0
        %v1336 = vadd.f32 0.0, %v1335
        %v1337 = vpop.f32.mrb[0].mxu0
        %v1338 = vadd.f32 0.0, %v1337
        %v1339 = vpop.f32.mrb[0].mxu0
        %v1340 = vadd.f32 0.0, %v1339
        %1341 = vmatprep.mubr.bf16.mxu0 0
        %1342 = vmatmul.mubr.bf16.gmra.mrb[0].mxu0 %v1192
        %v1343 = vpop.f32.mrb[0].mxu0
        %v1344 = vadd.f32 0.0, %v1343
        %v1345 = vpop.f32.mrb[0].mxu0
        %v1346 = vadd.f32 0.0, %v1345
        %v1347 = vpop.f32.mrb[0].mxu0
        %v1348 = vadd.f32 0.0, %v1347
        %v1349 = vpop.f32.mrb[0].mxu0
        %v1350 = vadd.f32 0.0, %v1349
        %1351 = vmatprep.mubr.bf16.mxu0 0
        %1352 = vmatmul.mubr.bf16.gmra.mrb[0].mxu0 %v1195
        %v1353 = vpop.f32.mrb[0].mxu0
        %v1354 = vadd.f32 0.0, %v1353
        %v1355 = vpop.f32.mrb[0].mxu0
        %v1356 = vadd.f32 0.0, %v1355
        %v1357 = vpop.f32.mrb[0].mxu0
        %v1358 = vadd.f32 0.0, %v1357
        %v1359 = vpop.f32.mrb[0].mxu0
        %v1360 = vadd.f32 0.0, %v1359
        %1361 = vmatprep.mubr.bf16.mxu0 0
        %1362 = vmatmul.mubr.bf16.gmra.mrb[0].mxu0 %v1198
        %v1363 = vpop.f32.mrb[0].mxu0
        %v1364 = vadd.f32 0.0, %v1363
        %v1365 = vpop.f32.mrb[0].mxu0
        %v1366 = vadd.f32 0.0, %v1365
        %v1367 = vpop.f32.mrb[0].mxu0
        %v1368 = vadd.f32 0.0, %v1367
        %v1369 = vpop.f32.mrb[0].mxu0
        %v1370 = vadd.f32 0.0, %v1369
        %1371 = vmatprep.mubr.bf16.mxu0 0
        %1372 = vmatmul.mubr.bf16.gmra.mrb[0].mxu0 %v1201
        %v1373 = vpop.f32.mrb[0].mxu0
        %v1374 = vadd.f32 0.0, %v1373
        %v1375 = vpop.f32.mrb[0].mxu0
        %v1376 = vadd.f32 0.0, %v1375
        %v1377 = vpop.f32.mrb[0].mxu0
        %v1378 = vadd.f32 0.0, %v1377
        %v1379 = vpop.f32.mrb[0].mxu0
        %v1380 = vadd.f32 0.0, %v1379
        %1381 = vmatprep.mubr.bf16.mxu0 0
        %1382 = vmatmul.mubr.bf16.gmra.mrb[0].mxu0 %v1204
        %v1383 = vpop.f32.mrb[0].mxu0
        %v1384 = vadd.f32 0.0, %v1383
        %v1385 = vpop.f32.mrb[0].mxu0
        %v1386 = vadd.f32 0.0, %v1385
        %v1387 = vpop.f32.mrb[0].mxu0
        %v1388 = vadd.f32 0.0, %v1387
        %v1389 = vpop.f32.mrb[0].mxu0
        %v1390 = vadd.f32 0.0, %v1389
        %1391 = vmatprep.mubr.bf16.mxu0 0
        %1392 = vmatmul.mubr.bf16.gmra.mrb[0].mxu0 %v1207
        %v1393 = vpop.f32.mrb[0].mxu0
        %v1394 = vadd.f32 0.0, %v1393
        %v1395 = vpop.f32.mrb[0].mxu0
        %v1396 = vadd.f32 0.0, %v1395
        %v1397 = vpop.f32.mrb[0].mxu0
        %v1398 = vadd.f32 0.0, %v1397
        %v1399 = vpop.f32.mrb[0].mxu0
        %v1400 = vadd.f32 0.0, %v1399
        %1401 = vdwg.mxu0
        %v1414 = vunpack.c.l.b16 %v706
        %v1415 = vunpack.c.h.b16 %v706
        %v1416 = vunpack.c.l.b16 %v707
        %v1417 = vunpack.c.h.b16 %v707
        %v1418 = vunpack.c.l.b16 %v708
        %v1419 = vunpack.c.h.b16 %v708
        %v1420 = vunpack.c.l.b16 %v709
        %v1421 = vunpack.c.h.b16 %v709
        %v1422 = vunpack.c.l.b16 %v710
        %v1423 = vunpack.c.h.b16 %v710
        %v1424 = vunpack.c.l.b16 %v711
        %v1425 = vunpack.c.h.b16 %v711
        %v1426 = vunpack.c.l.b16 %v712
        %v1427 = vunpack.c.h.b16 %v712
        %v1428 = vunpack.c.l.b16 %v713
        %v1429 = vunpack.c.h.b16 %v713
        %v1430 = vunpack.c.l.b16 %v714
        %v1431 = vunpack.c.h.b16 %v714
        %v1432 = vunpack.c.l.b16 %v715
        %v1433 = vunpack.c.h.b16 %v715
        %v1434 = vunpack.c.l.b16 %v716
        %v1435 = vunpack.c.h.b16 %v716
        %v1436 = vunpack.c.l.b16 %v717
        %v1437 = vunpack.c.h.b16 %v717
        %v1438 = vpack.c.b16 %v1416, %v1414
        %v1439 = vpack.c.b16 %v1417, %v1415
        %v1440 = vpack.c.b16 %v1420, %v1418
        %v1441 = vpack.c.b16 %v1421, %v1419
        %v1442 = vpack.c.b16 %v1424, %v1422
        %v1443 = vpack.c.b16 %v1425, %v1423
        %v1444 = vpack.c.b16 %v1428, %v1426
        %v1445 = vpack.c.b16 %v1429, %v1427
        %v1446 = vpack.c.b16 %v1432, %v1430
        %v1447 = vpack.c.b16 %v1433, %v1431
        %v1448 = vpack.c.b16 %v1436, %v1434
        %v1449 = vpack.c.b16 %v1437, %v1435
        %v1463 = vsel %vm1160, %v690, 0
        %v1466 = vsel %vm1160, %v691, 0
        %v1469 = vsel %vm1160, %v692, 0
        %v1472 = vsel %vm1160, %v693, 0
        %v1475 = vsel %vm1160, %v694, 0
        %v1478 = vsel %vm1160, %v695, 0
        %v1481 = vsel %vm1160, %v696, 0
        %v1484 = vsel %vm1160, %v697, 0
        %v1487 = vsel %vm1160, %v698, 0
        %v1490 = vsel %vm1160, %v699, 0
        %v1493 = vsel %vm1160, %v700, 0
        %v1496 = vsel %vm1160, %v701, 0
        %v1499 = vsel %vm1160, %v702, 0
        %v1502 = vsel %vm1160, %v703, 0
        %v1505 = vsel %vm1160, %v704, 0
        %v1508 = vsel %vm1160, %v705, 0
        %1510 = vmatprep.subr.bf16.mxu0 %v1439
        %1511 = vmatpush1.bf16.msra.mxu0 %v1438
        %1512 = vmatprep.subr.bf16.mxu0 %v1441
        %1513 = vmatpush1.bf16.msra.mxu0 %v1440
        %1514 = vmatprep.subr.bf16.mxu0 %v1443
        %1515 = vmatpush1.bf16.msra.mxu0 %v1442
        %1516 = vmatprep.subr.bf16.mxu0 %v1445
        %1517 = vmatpush1.bf16.msra.mxu0 %v1444
        %1518 = vmatprep.subr.bf16.mxu0 %v1447
        %1519 = vmatpush1.bf16.msra.mxu0 %v1446
        %1520 = vmatprep.subr.bf16.mxu0 %v1449
        %1521 = vmatpush1.bf16.msra.mxu0 %v1448
        %1522 = vmatprep.subr.bf16.mxu0 0
        %1523 = vmatpush1.bf16.msra.mxu0 0
        %1524 = vmatprep.subr.bf16.mxu0 0
        %1525 = vmatpush1.bf16.msra.mxu0 0
        %1526 = vmatprep.subr.bf16.mxu0 0
        %1527 = vmatpush1.bf16.msra.mxu0 0
        %1528 = vmatprep.subr.bf16.mxu0 0
        %1529 = vmatpush1.bf16.msra.mxu0 0
        %1530 = vmatprep.subr.bf16.mxu0 0
        %1531 = vmatpush1.bf16.msra.mxu0 0
        %1532 = vmatprep.subr.bf16.mxu0 0
        %1533 = vmatpush1.bf16.msra.mxu0 0
        %1534 = vmatprep.subr.bf16.mxu0 0
        %1535 = vmatpush1.bf16.msra.mxu0 0
        %1536 = vmatprep.subr.bf16.mxu0 0
        %1537 = vmatpush1.bf16.msra.mxu0 0
        %1538 = vmatprep.subr.bf16.mxu0 0
        %1539 = vmatpush1.bf16.msra.mxu0 0
        %1540 = vmatprep.subr.bf16.mxu0 0
        %1541 = vmatpush1.bf16.msra.mxu0 0
        %1542 = vmatprep.mubr.bf16.mxu0 0
        %1543 = vmatmul.mubr.bf16.gmra.mrb[0].mxu0 %v1463
        %v1544 = vpop.f32.mrb[0].mxu0
        %v1545 = vadd.f32 %v1244, %v1544
        %v1546 = vpop.f32.mrb[0].mxu0
        %v1547 = vadd.f32 %v1246, %v1546
        %v1548 = vpop.f32.mrb[0].mxu0
        %v1549 = vadd.f32 %v1248, %v1548
        %v1550 = vpop.f32.mrb[0].mxu0
        %v1551 = vadd.f32 %v1250, %v1550
        %1552 = vmatprep.mubr.bf16.mxu0 0
        %1553 = vmatmul.mubr.bf16.gmra.mrb[0].mxu0 %v1466
        %v1554 = vpop.f32.mrb[0].mxu0
        %v1555 = vadd.f32 %v1254, %v1554
        %v1556 = vpop.f32.mrb[0].mxu0
        %v1557 = vadd.f32 %v1256, %v1556
        %v1558 = vpop.f32.mrb[0].mxu0
        %v1559 = vadd.f32 %v1258, %v1558
        %v1560 = vpop.f32.mrb[0].mxu0
        %v1561 = vadd.f32 %v1260, %v1560
        %1562 = vmatprep.mubr.bf16.mxu0 0
        %1563 = vmatmul.mubr.bf16.gmra.mrb[0].mxu0 %v1469
        %v1564 = vpop.f32.mrb[0].mxu0
        %v1565 = vadd.f32 %v1264, %v1564
        %v1566 = vpop.f32.mrb[0].mxu0
        %v1567 = vadd.f32 %v1266, %v1566
        %v1568 = vpop.f32.mrb[0].mxu0
        %v1569 = vadd.f32 %v1268, %v1568
        %v1570 = vpop.f32.mrb[0].mxu0
        %v1571 = vadd.f32 %v1270, %v1570
        %1572 = vmatprep.mubr.bf16.mxu0 0
        %1573 = vmatmul.mubr.bf16.gmra.mrb[0].mxu0 %v1472
        %v1574 = vpop.f32.mrb[0].mxu0
        %v1575 = vadd.f32 %v1274, %v1574
        %v1576 = vpop.f32.mrb[0].mxu0
        %v1577 = vadd.f32 %v1276, %v1576
        %v1578 = vpop.f32.mrb[0].mxu0
        %v1579 = vadd.f32 %v1278, %v1578
        %v1580 = vpop.f32.mrb[0].mxu0
        %v1581 = vadd.f32 %v1280, %v1580
        %1582 = vmatprep.mubr.bf16.mxu0 0
        %1583 = vmatmul.mubr.bf16.gmra.mrb[0].mxu0 %v1475
        %v1584 = vpop.f32.mrb[0].mxu0
        %v1585 = vadd.f32 %v1284, %v1584
        %v1586 = vpop.f32.mrb[0].mxu0
        %v1587 = vadd.f32 %v1286, %v1586
        %v1588 = vpop.f32.mrb[0].mxu0
        %v1589 = vadd.f32 %v1288, %v1588
        %v1590 = vpop.f32.mrb[0].mxu0
        %v1591 = vadd.f32 %v1290, %v1590
        %1592 = vmatprep.mubr.bf16.mxu0 0
        %1593 = vmatmul.mubr.bf16.gmra.mrb[0].mxu0 %v1478
        %v1594 = vpop.f32.mrb[0].mxu0
        %v1595 = vadd.f32 %v1294, %v1594
        %v1596 = vpop.f32.mrb[0].mxu0
        %v1597 = vadd.f32 %v1296, %v1596
        %v1598 = vpop.f32.mrb[0].mxu0
        %v1599 = vadd.f32 %v1298, %v1598
        %v1600 = vpop.f32.mrb[0].mxu0
        %v1601 = vadd.f32 %v1300, %v1600
        %1602 = vmatprep.mubr.bf16.mxu0 0
        %1603 = vmatmul.mubr.bf16.gmra.mrb[0].mxu0 %v1481
        %v1604 = vpop.f32.mrb[0].mxu0
        %v1605 = vadd.f32 %v1304, %v1604
        %v1606 = vpop.f32.mrb[0].mxu0
        %v1607 = vadd.f32 %v1306, %v1606
        %v1608 = vpop.f32.mrb[0].mxu0
        %v1609 = vadd.f32 %v1308, %v1608
        %v1610 = vpop.f32.mrb[0].mxu0
        %v1611 = vadd.f32 %v1310, %v1610
        %1612 = vmatprep.mubr.bf16.mxu0 0
        %1613 = vmatmul.mubr.bf16.gmra.mrb[0].mxu0 %v1484
        %v1614 = vpop.f32.mrb[0].mxu0
        %v1615 = vadd.f32 %v1314, %v1614
        %v1616 = vpop.f32.mrb[0].mxu0
        %v1617 = vadd.f32 %v1316, %v1616
        %v1618 = vpop.f32.mrb[0].mxu0
        %v1619 = vadd.f32 %v1318, %v1618
        %v1620 = vpop.f32.mrb[0].mxu0
        %v1621 = vadd.f32 %v1320, %v1620
        %1622 = vmatprep.mubr.bf16.mxu0 0
        %1623 = vmatmul.mubr.bf16.gmra.mrb[0].mxu0 %v1487
        %v1624 = vpop.f32.mrb[0].mxu0
        %v1625 = vadd.f32 %v1324, %v1624
        %v1626 = vpop.f32.mrb[0].mxu0
        %v1627 = vadd.f32 %v1326, %v1626
        %v1628 = vpop.f32.mrb[0].mxu0
        %v1629 = vadd.f32 %v1328, %v1628
        %v1630 = vpop.f32.mrb[0].mxu0
        %v1631 = vadd.f32 %v1330, %v1630
        %1632 = vmatprep.mubr.bf16.mxu0 0
        %1633 = vmatmul.mubr.bf16.gmra.mrb[0].mxu0 %v1490
        %v1634 = vpop.f32.mrb[0].mxu0
        %v1635 = vadd.f32 %v1334, %v1634
        %v1636 = vpop.f32.mrb[0].mxu0
        %v1637 = vadd.f32 %v1336, %v1636
        %v1638 = vpop.f32.mrb[0].mxu0
        %v1639 = vadd.f32 %v1338, %v1638
        %v1640 = vpop.f32.mrb[0].mxu0
        %v1641 = vadd.f32 %v1340, %v1640
        %1642 = vmatprep.mubr.bf16.mxu0 0
        %1643 = vmatmul.mubr.bf16.gmra.mrb[0].mxu0 %v1493
        %v1644 = vpop.f32.mrb[0].mxu0
        %v1645 = vadd.f32 %v1344, %v1644
        %v1646 = vpop.f32.mrb[0].mxu0
        %v1647 = vadd.f32 %v1346, %v1646
        %v1648 = vpop.f32.mrb[0].mxu0
        %v1649 = vadd.f32 %v1348, %v1648
        %v1650 = vpop.f32.mrb[0].mxu0
        %v1651 = vadd.f32 %v1350, %v1650
        %1652 = vmatprep.mubr.bf16.mxu0 0
        %1653 = vmatmul.mubr.bf16.gmra.mrb[0].mxu0 %v1496
        %v1654 = vpop.f32.mrb[0].mxu0
        %v1655 = vadd.f32 %v1354, %v1654
        %v1656 = vpop.f32.mrb[0].mxu0
        %v1657 = vadd.f32 %v1356, %v1656
        %v1658 = vpop.f32.mrb[0].mxu0
        %v1659 = vadd.f32 %v1358, %v1658
        %v1660 = vpop.f32.mrb[0].mxu0
        %v1661 = vadd.f32 %v1360, %v1660
        %1662 = vmatprep.mubr.bf16.mxu0 0
        %1663 = vmatmul.mubr.bf16.gmra.mrb[0].mxu0 %v1499
        %v1664 = vpop.f32.mrb[0].mxu0
        %v1665 = vadd.f32 %v1364, %v1664
        %v1666 = vpop.f32.mrb[0].mxu0
        %v1667 = vadd.f32 %v1366, %v1666
        %v1668 = vpop.f32.mrb[0].mxu0
        %v1669 = vadd.f32 %v1368, %v1668
        %v1670 = vpop.f32.mrb[0].mxu0
        %v1671 = vadd.f32 %v1370, %v1670
        %1672 = vmatprep.mubr.bf16.mxu0 0
        %1673 = vmatmul.mubr.bf16.gmra.mrb[0].mxu0 %v1502
        %v1674 = vpop.f32.mrb[0].mxu0
        %v1675 = vadd.f32 %v1374, %v1674
        %v1676 = vpop.f32.mrb[0].mxu0
        %v1677 = vadd.f32 %v1376, %v1676
        %v1678 = vpop.f32.mrb[0].mxu0
        %v1679 = vadd.f32 %v1378, %v1678
        %v1680 = vpop.f32.mrb[0].mxu0
        %v1681 = vadd.f32 %v1380, %v1680
        %1682 = vmatprep.mubr.bf16.mxu0 0
        %1683 = vmatmul.mubr.bf16.gmra.mrb[0].mxu0 %v1505
        %v1684 = vpop.f32.mrb[0].mxu0
        %v1685 = vadd.f32 %v1384, %v1684
        %v1686 = vpop.f32.mrb[0].mxu0
        %v1687 = vadd.f32 %v1386, %v1686
        %v1688 = vpop.f32.mrb[0].mxu0
        %v1689 = vadd.f32 %v1388, %v1688
        %v1690 = vpop.f32.mrb[0].mxu0
        %v1691 = vadd.f32 %v1390, %v1690
        %1692 = vmatprep.mubr.bf16.mxu0 0
        %1693 = vmatmul.mubr.bf16.gmra.mrb[0].mxu0 %v1508
        %v1694 = vpop.f32.mrb[0].mxu0
        %v1695 = vadd.f32 %v1394, %v1694
        %v1696 = vpop.f32.mrb[0].mxu0
        %v1697 = vadd.f32 %v1396, %v1696
        %v1698 = vpop.f32.mrb[0].mxu0
        %v1699 = vadd.f32 %v1398, %v1698
        %v1700 = vpop.f32.mrb[0].mxu0
        %v1701 = vadd.f32 %v1400, %v1700
        %1702 = vdwg.mxu0
        %s1703 = scalar_lea.vmem %s1, 256
        %v1704 = vld [vmem:[%s1703] sm:$0xff]
        %v1705 = vld [vmem:[%s1703 + $0x8] sm:$0xff]
        %v1706 = vld [vmem:[%s1703 + $0x10] sm:$0xff]
        %v1707 = vld [vmem:[%s1703 + $0x18] sm:$0xff]
        %v1708 = vld [vmem:[%s1703 + $0x20] sm:$0xff]
        %v1709 = vld [vmem:[%s1703 + $0x28] sm:$0xff]
        %v1710 = vld [vmem:[%s1703 + $0x30] sm:$0xff]
        %v1711 = vld [vmem:[%s1703 + $0x38] sm:$0xff]
        %v1712 = vld [vmem:[%s1703 + $0x40] sm:$0xff]
        %v1713 = vld [vmem:[%s1703 + $0x48] sm:$0xff]
        %v1714 = vld [vmem:[%s1703 + $0x50] sm:$0xff]
        %v1715 = vld [vmem:[%s1703 + $0x58] sm:$0xff]
        %v1716 = vld [vmem:[%s1703 + $0x60] sm:$0xff]
        %v1717 = vld [vmem:[%s1703 + $0x68] sm:$0xff]
        %v1718 = vld [vmem:[%s1703 + $0x70] sm:$0xff]
        %v1719 = vld [vmem:[%s1703 + $0x78] sm:$0xff]
        %v1720 = vld [vmem:[%s1703 + $0x80] sm:$0xff]
        %v1721 = vld [vmem:[%s1703 + $0x88] sm:$0xff]
        %v1722 = vld [vmem:[%s1703 + $0x90] sm:$0xff]
        %v1723 = vld [vmem:[%s1703 + $0x98] sm:$0xff]
        %v1724 = vld [vmem:[%s1703 + $0xa0] sm:$0xff]
        %v1725 = vld [vmem:[%s1703 + $0xa8] sm:$0xff]
        %v1726 = vld [vmem:[%s1703 + $0xb0] sm:$0xff]
        %v1727 = vld [vmem:[%s1703 + $0xb8] sm:$0xff]
        %v1728 = vld [vmem:[%s1703 + $0xc0] sm:$0xff]
        %v1729 = vld [vmem:[%s1703 + $0xc8] sm:$0xff]
        %v1730 = vld [vmem:[%s1703 + $0xd0] sm:$0xff]
        %v1731 = vld [vmem:[%s1703 + $0xd8] sm:$0xff]
        %v1732 = vld [vmem:[%s1703 + $0xe0] sm:$0xff]
        %v1733 = vld [vmem:[%s1703 + $0xe8] sm:$0xff]
        %v1734 = vld [vmem:[%s1703 + $0xf0] sm:$0xff]
        %v1735 = vld [vmem:[%s1703 + $0xf8] sm:$0xff]
        %v1768 = vunpack.c.l.b16 %v1704
        %v1769 = vunpack.c.h.b16 %v1704
        %v1770 = vunpack.c.l.b16 %v1705
        %v1771 = vunpack.c.h.b16 %v1705
        %v1772 = vunpack.c.l.b16 %v1706
        %v1773 = vunpack.c.h.b16 %v1706
        %v1774 = vunpack.c.l.b16 %v1707
        %v1775 = vunpack.c.h.b16 %v1707
        %v1776 = vunpack.c.l.b16 %v1708
        %v1777 = vunpack.c.h.b16 %v1708
        %v1778 = vunpack.c.l.b16 %v1709
        %v1779 = vunpack.c.h.b16 %v1709
        %v1780 = vunpack.c.l.b16 %v1710
        %v1781 = vunpack.c.h.b16 %v1710
        %v1782 = vunpack.c.l.b16 %v1711
        %v1783 = vunpack.c.h.b16 %v1711
        %v1784 = vunpack.c.l.b16 %v1712
        %v1785 = vunpack.c.h.b16 %v1712
        %v1786 = vunpack.c.l.b16 %v1713
        %v1787 = vunpack.c.h.b16 %v1713
        %v1788 = vunpack.c.l.b16 %v1714
        %v1789 = vunpack.c.h.b16 %v1714
        %v1790 = vunpack.c.l.b16 %v1715
        %v1791 = vunpack.c.h.b16 %v1715
        %v1792 = vunpack.c.l.b16 %v1716
        %v1793 = vunpack.c.h.b16 %v1716
        %v1794 = vunpack.c.l.b16 %v1717
        %v1795 = vunpack.c.h.b16 %v1717
        %v1796 = vunpack.c.l.b16 %v1718
        %v1797 = vunpack.c.h.b16 %v1718
        %v1798 = vunpack.c.l.b16 %v1719
        %v1799 = vunpack.c.h.b16 %v1719
        %v1800 = vunpack.c.l.b16 %v1720
        %v1801 = vunpack.c.h.b16 %v1720
        %v1802 = vunpack.c.l.b16 %v1721
        %v1803 = vunpack.c.h.b16 %v1721
        %v1804 = vunpack.c.l.b16 %v1722
        %v1805 = vunpack.c.h.b16 %v1722
        %v1806 = vunpack.c.l.b16 %v1723
        %v1807 = vunpack.c.h.b16 %v1723
        %v1808 = vunpack.c.l.b16 %v1724
        %v1809 = vunpack.c.h.b16 %v1724
        %v1810 = vunpack.c.l.b16 %v1725
        %v1811 = vunpack.c.h.b16 %v1725
        %v1812 = vunpack.c.l.b16 %v1726
        %v1813 = vunpack.c.h.b16 %v1726
        %v1814 = vunpack.c.l.b16 %v1727
        %v1815 = vunpack.c.h.b16 %v1727
        %v1816 = vunpack.c.l.b16 %v1728
        %v1817 = vunpack.c.h.b16 %v1728
        %v1818 = vunpack.c.l.b16 %v1729
        %v1819 = vunpack.c.h.b16 %v1729
        %v1820 = vunpack.c.l.b16 %v1730
        %v1821 = vunpack.c.h.b16 %v1730
        %v1822 = vunpack.c.l.b16 %v1731
        %v1823 = vunpack.c.h.b16 %v1731
        %v1824 = vunpack.c.l.b16 %v1732
        %v1825 = vunpack.c.h.b16 %v1732
        %v1826 = vunpack.c.l.b16 %v1733
        %v1827 = vunpack.c.h.b16 %v1733
        %v1828 = vunpack.c.l.b16 %v1734
        %v1829 = vunpack.c.h.b16 %v1734
        %v1830 = vunpack.c.l.b16 %v1735
        %v1831 = vunpack.c.h.b16 %v1735
        %v1832 = vpack.c.b16 %v1770, %v1768
        %v1833 = vpack.c.b16 %v1771, %v1769
        %v1834 = vpack.c.b16 %v1774, %v1772
        %v1835 = vpack.c.b16 %v1775, %v1773
        %v1836 = vpack.c.b16 %v1778, %v1776
        %v1837 = vpack.c.b16 %v1779, %v1777
        %v1838 = vpack.c.b16 %v1782, %v1780
        %v1839 = vpack.c.b16 %v1783, %v1781
        %v1840 = vpack.c.b16 %v1786, %v1784
        %v1841 = vpack.c.b16 %v1787, %v1785
        %v1842 = vpack.c.b16 %v1790, %v1788
        %v1843 = vpack.c.b16 %v1791, %v1789
        %v1844 = vpack.c.b16 %v1794, %v1792
        %v1845 = vpack.c.b16 %v1795, %v1793
        %v1846 = vpack.c.b16 %v1798, %v1796
        %v1847 = vpack.c.b16 %v1799, %v1797
        %v1848 = vpack.c.b16 %v1802, %v1800
        %v1849 = vpack.c.b16 %v1803, %v1801
        %v1850 = vpack.c.b16 %v1806, %v1804
        %v1851 = vpack.c.b16 %v1807, %v1805
        %v1852 = vpack.c.b16 %v1810, %v1808
        %v1853 = vpack.c.b16 %v1811, %v1809
        %v1854 = vpack.c.b16 %v1814, %v1812
        %v1855 = vpack.c.b16 %v1815, %v1813
        %v1856 = vpack.c.b16 %v1818, %v1816
        %v1857 = vpack.c.b16 %v1819, %v1817
        %v1858 = vpack.c.b16 %v1822, %v1820
        %v1859 = vpack.c.b16 %v1823, %v1821
        %v1860 = vpack.c.b16 %v1826, %v1824
        %v1861 = vpack.c.b16 %v1827, %v1825
        %v1862 = vpack.c.b16 %v1830, %v1828
        %v1863 = vpack.c.b16 %v1831, %v1829
        %1896 = vmatprep.subr.bf16.mxu0 0
        %1897 = vmatpush1.bf16.msra.mxu0 %v690
        %1898 = vmatprep.subr.bf16.mxu0 0
        %1899 = vmatpush1.bf16.msra.mxu0 %v691
        %1900 = vmatprep.subr.bf16.mxu0 0
        %1901 = vmatpush1.bf16.msra.mxu0 %v692
        %1902 = vmatprep.subr.bf16.mxu0 0
        %1903 = vmatpush1.bf16.msra.mxu0 %v693
        %1904 = vmatprep.subr.bf16.mxu0 0
        %1905 = vmatpush1.bf16.msra.mxu0 %v694
        %1906 = vmatprep.subr.bf16.mxu0 0
        %1907 = vmatpush1.bf16.msra.mxu0 %v695
        %1908 = vmatprep.subr.bf16.mxu0 0
        %1909 = vmatpush1.bf16.msra.mxu0 %v696
        %1910 = vmatprep.subr.bf16.mxu0 0
        %1911 = vmatpush1.bf16.msra.mxu0 %v697
        %1912 = vmatprep.subr.bf16.mxu0 0
        %1913 = vmatpush1.bf16.msra.mxu0 %v698
        %1914 = vmatprep.subr.bf16.mxu0 0
        %1915 = vmatpush1.bf16.msra.mxu0 %v699
        %1916 = vmatprep.subr.bf16.mxu0 0
        %1917 = vmatpush1.bf16.msra.mxu0 %v700
        %1918 = vmatprep.subr.bf16.mxu0 0
        %1919 = vmatpush1.bf16.msra.mxu0 %v701
        %1920 = vmatprep.subr.bf16.mxu0 0
        %1921 = vmatpush1.bf16.msra.mxu0 %v702
        %1922 = vmatprep.subr.bf16.mxu0 0
        %1923 = vmatpush1.bf16.msra.mxu0 %v703
        %1924 = vmatprep.subr.bf16.mxu0 0
        %1925 = vmatpush1.bf16.msra.mxu0 %v704
        %1926 = vmatprep.subr.bf16.mxu0 0
        %1927 = vmatpush1.bf16.msra.mxu0 %v705
        %1928 = vmatprep.mubr.bf16.mxu0 %v1833
        %1929 = vmatmul.mubr.bf16.gmra.mrb[0].mxu0 %v1832
        %v1930 = vpop.f32.mrb[0].mxu0
        %v1931 = vadd.f32 0.0, %v1930
        %v1932 = vpop.f32.mrb[0].mxu0
        %v1933 = vpop.f32.mrb[0].mxu0
        %v1934 = vadd.f32 0.0, %v1933
        %v1935 = vpop.f32.mrb[0].mxu0
        %1936 = vmatprep.mubr.bf16.mxu0 %v1835
        %1937 = vmatmul.mubr.bf16.gmra.mrb[0].mxu0 %v1834
        %v1938 = vpop.f32.mrb[0].mxu0
        %v1939 = vadd.f32 0.0, %v1938
        %v1940 = vpop.f32.mrb[0].mxu0
        %v1941 = vpop.f32.mrb[0].mxu0
        %v1942 = vadd.f32 0.0, %v1941
        %v1943 = vpop.f32.mrb[0].mxu0
        %1944 = vmatprep.mubr.bf16.mxu0 %v1837
        %1945 = vmatmul.mubr.bf16.gmra.mrb[0].mxu0 %v1836
        %v1946 = vpop.f32.mrb[0].mxu0
        %v1947 = vadd.f32 0.0, %v1946
        %v1948 = vpop.f32.mrb[0].mxu0
        %v1949 = vpop.f32.mrb[0].mxu0
        %v1950 = vadd.f32 0.0, %v1949
        %v1951 = vpop.f32.mrb[0].mxu0
        %1952 = vmatprep.mubr.bf16.mxu0 %v1839
        %1953 = vmatmul.mubr.bf16.gmra.mrb[0].mxu0 %v1838
        %v1954 = vpop.f32.mrb[0].mxu0
        %v1955 = vadd.f32 0.0, %v1954
        %v1956 = vpop.f32.mrb[0].mxu0
        %v1957 = vpop.f32.mrb[0].mxu0
        %v1958 = vadd.f32 0.0, %v1957
        %v1959 = vpop.f32.mrb[0].mxu0
        %1960 = vmatprep.mubr.bf16.mxu0 %v1841
        %1961 = vmatmul.mubr.bf16.gmra.mrb[0].mxu0 %v1840
        %v1962 = vpop.f32.mrb[0].mxu0
        %v1963 = vadd.f32 0.0, %v1962
        %v1964 = vpop.f32.mrb[0].mxu0
        %v1965 = vpop.f32.mrb[0].mxu0
        %v1966 = vadd.f32 0.0, %v1965
        %v1967 = vpop.f32.mrb[0].mxu0
        %1968 = vmatprep.mubr.bf16.mxu0 %v1843
        %1969 = vmatmul.mubr.bf16.gmra.mrb[0].mxu0 %v1842
        %v1970 = vpop.f32.mrb[0].mxu0
        %v1971 = vadd.f32 0.0, %v1970
        %v1972 = vpop.f32.mrb[0].mxu0
        %v1973 = vpop.f32.mrb[0].mxu0
        %v1974 = vadd.f32 0.0, %v1973
        %v1975 = vpop.f32.mrb[0].mxu0
        %1976 = vmatprep.mubr.bf16.mxu0 %v1845
        %1977 = vmatmul.mubr.bf16.gmra.mrb[0].mxu0 %v1844
        %v1978 = vpop.f32.mrb[0].mxu0
        %v1979 = vadd.f32 0.0, %v1978
        %v1980 = vpop.f32.mrb[0].mxu0
        %v1981 = vpop.f32.mrb[0].mxu0
        %v1982 = vadd.f32 0.0, %v1981
        %v1983 = vpop.f32.mrb[0].mxu0
        %1984 = vmatprep.mubr.bf16.mxu0 %v1847
        %1985 = vmatmul.mubr.bf16.gmra.mrb[0].mxu0 %v1846
        %v1986 = vpop.f32.mrb[0].mxu0
        %v1987 = vadd.f32 0.0, %v1986
        %v1988 = vpop.f32.mrb[0].mxu0
        %v1989 = vpop.f32.mrb[0].mxu0
        %v1990 = vadd.f32 0.0, %v1989
        %v1991 = vpop.f32.mrb[0].mxu0
        %1992 = vmatprep.mubr.bf16.mxu0 %v1849
        %1993 = vmatmul.mubr.bf16.gmra.mrb[0].mxu0 %v1848
        %v1994 = vpop.f32.mrb[0].mxu0
        %v1995 = vadd.f32 0.0, %v1994
        %v1996 = vpop.f32.mrb[0].mxu0
        %v1997 = vpop.f32.mrb[0].mxu0
        %v1998 = vadd.f32 0.0, %v1997
        %v1999 = vpop.f32.mrb[0].mxu0
        %2000 = vmatprep.mubr.bf16.mxu0 %v1851
        %2001 = vmatmul.mubr.bf16.gmra.mrb[0].mxu0 %v1850
        %v2002 = vpop.f32.mrb[0].mxu0
        %v2003 = vadd.f32 0.0, %v2002
        %v2004 = vpop.f32.mrb[0].mxu0
        %v2005 = vpop.f32.mrb[0].mxu0
        %v2006 = vadd.f32 0.0, %v2005
        %v2007 = vpop.f32.mrb[0].mxu0
        %2008 = vmatprep.mubr.bf16.mxu0 %v1853
        %2009 = vmatmul.mubr.bf16.gmra.mrb[0].mxu0 %v1852
        %v2010 = vpop.f32.mrb[0].mxu0
        %v2011 = vadd.f32 0.0, %v2010
        %v2012 = vpop.f32.mrb[0].mxu0
        %v2013 = vpop.f32.mrb[0].mxu0
        %v2014 = vadd.f32 0.0, %v2013
        %v2015 = vpop.f32.mrb[0].mxu0
        %2016 = vmatprep.mubr.bf16.mxu0 %v1855
        %2017 = vmatmul.mubr.bf16.gmra.mrb[0].mxu0 %v1854
        %v2018 = vpop.f32.mrb[0].mxu0
        %v2019 = vadd.f32 0.0, %v2018
        %v2020 = vpop.f32.mrb[0].mxu0
        %v2021 = vpop.f32.mrb[0].mxu0
        %v2022 = vadd.f32 0.0, %v2021
        %v2023 = vpop.f32.mrb[0].mxu0
        %2024 = vmatprep.mubr.bf16.mxu0 %v1857
        %2025 = vmatmul.mubr.bf16.gmra.mrb[0].mxu0 %v1856
        %v2026 = vpop.f32.mrb[0].mxu0
        %v2027 = vadd.f32 0.0, %v2026
        %v2028 = vpop.f32.mrb[0].mxu0
        %v2029 = vpop.f32.mrb[0].mxu0
        %v2030 = vadd.f32 0.0, %v2029
        %v2031 = vpop.f32.mrb[0].mxu0
        %2032 = vmatprep.mubr.bf16.mxu0 %v1859
        %2033 = vmatmul.mubr.bf16.gmra.mrb[0].mxu0 %v1858
        %v2034 = vpop.f32.mrb[0].mxu0
        %v2035 = vadd.f32 0.0, %v2034
        %v2036 = vpop.f32.mrb[0].mxu0
        %v2037 = vpop.f32.mrb[0].mxu0
        %v2038 = vadd.f32 0.0, %v2037
        %v2039 = vpop.f32.mrb[0].mxu0
        %2040 = vmatprep.mubr.bf16.mxu0 %v1861
        %2041 = vmatmul.mubr.bf16.gmra.mrb[0].mxu0 %v1860
        %v2042 = vpop.f32.mrb[0].mxu0
        %v2043 = vadd.f32 0.0, %v2042
        %v2044 = vpop.f32.mrb[0].mxu0
        %v2045 = vpop.f32.mrb[0].mxu0
        %v2046 = vadd.f32 0.0, %v2045
        %v2047 = vpop.f32.mrb[0].mxu0
        %2048 = vmatprep.mubr.bf16.mxu0 %v1863
        %2049 = vmatmul.mubr.bf16.gmra.mrb[0].mxu0 %v1862
        %v2050 = vpop.f32.mrb[0].mxu0
        %v2051 = vadd.f32 0.0, %v2050
        %v2052 = vpop.f32.mrb[0].mxu0
        %v2053 = vpop.f32.mrb[0].mxu0
        %v2054 = vadd.f32 0.0, %v2053
        %v2055 = vpop.f32.mrb[0].mxu0
        %2056 = vdwg.mxu0
        %v2057 = vpack.c.bf16 %v1934, %v1931
        %v2058 = vpack.c.bf16 %v1942, %v1939
        %v2059 = vpack.c.bf16 %v1950, %v1947
        %v2060 = vpack.c.bf16 %v1958, %v1955
        %v2061 = vpack.c.bf16 %v1966, %v1963
        %v2062 = vpack.c.bf16 %v1974, %v1971
        %v2063 = vpack.c.bf16 %v1982, %v1979
        %v2064 = vpack.c.bf16 %v1990, %v1987
        %v2065 = vpack.c.bf16 %v1998, %v1995
        %v2066 = vpack.c.bf16 %v2006, %v2003
        %v2067 = vpack.c.bf16 %v2014, %v2011
        %v2068 = vpack.c.bf16 %v2022, %v2019
        %v2069 = vpack.c.bf16 %v2030, %v2027
        %v2070 = vpack.c.bf16 %v2038, %v2035
        %v2071 = vpack.c.bf16 %v2046, %v2043
        %v2072 = vpack.c.bf16 %v2054, %v2051
        %s2073 = scalar_lea.vmem %s2, 192
        %v2074 = vld [vmem:[%s2073] sm:$0xff]
        %v2075 = vld [vmem:[%s2073 + $0x8] sm:$0xff]
        %v2076 = vld [vmem:[%s2073 + $0x10] sm:$0xff]
        %v2077 = vld [vmem:[%s2073 + $0x18] sm:$0xff]
        %v2078 = vld [vmem:[%s2073 + $0x20] sm:$0xff]
        %v2079 = vld [vmem:[%s2073 + $0x28] sm:$0xff]
        %v2080 = vld [vmem:[%s2073 + $0x30] sm:$0xff]
        %v2081 = vld [vmem:[%s2073 + $0x38] sm:$0xff]
        %v2082 = vld [vmem:[%s2073 + $0x40] sm:$0xff]
        %v2083 = vld [vmem:[%s2073 + $0x48] sm:$0xff]
        %v2084 = vld [vmem:[%s2073 + $0x50] sm:$0xff]
        %v2085 = vld [vmem:[%s2073 + $0x58] sm:$0xff]
        %v2098 = vunpack.c.l.b16 %v2074
        %v2099 = vunpack.c.h.b16 %v2074
        %v2100 = vunpack.c.l.b16 %v2075
        %v2101 = vunpack.c.h.b16 %v2075
        %v2102 = vunpack.c.l.b16 %v2076
        %v2103 = vunpack.c.h.b16 %v2076
        %v2104 = vunpack.c.l.b16 %v2077
        %v2105 = vunpack.c.h.b16 %v2077
        %v2106 = vunpack.c.l.b16 %v2078
        %v2107 = vunpack.c.h.b16 %v2078
        %v2108 = vunpack.c.l.b16 %v2079
        %v2109 = vunpack.c.h.b16 %v2079
        %v2110 = vunpack.c.l.b16 %v2080
        %v2111 = vunpack.c.h.b16 %v2080
        %v2112 = vunpack.c.l.b16 %v2081
        %v2113 = vunpack.c.h.b16 %v2081
        %v2114 = vunpack.c.l.b16 %v2082
        %v2115 = vunpack.c.h.b16 %v2082
        %v2116 = vunpack.c.l.b16 %v2083
        %v2117 = vunpack.c.h.b16 %v2083
        %v2118 = vunpack.c.l.b16 %v2084
        %v2119 = vunpack.c.h.b16 %v2084
        %v2120 = vunpack.c.l.b16 %v2085
        %v2121 = vunpack.c.h.b16 %v2085
        %v2122 = vpack.c.b16 %v2100, %v2098
        %v2123 = vpack.c.b16 %v2101, %v2099
        %v2124 = vpack.c.b16 %v2104, %v2102
        %v2125 = vpack.c.b16 %v2105, %v2103
        %v2126 = vpack.c.b16 %v2108, %v2106
        %v2127 = vpack.c.b16 %v2109, %v2107
        %v2128 = vpack.c.b16 %v2112, %v2110
        %v2129 = vpack.c.b16 %v2113, %v2111
        %v2130 = vpack.c.b16 %v2116, %v2114
        %v2131 = vpack.c.b16 %v2117, %v2115
        %v2132 = vpack.c.b16 %v2120, %v2118
        %v2133 = vpack.c.b16 %v2121, %v2119
        %v2147 = vsel %vm1160, %v2057, 0
        %v2150 = vsel %vm1160, %v2058, 0
        %v2153 = vsel %vm1160, %v2059, 0
        %v2156 = vsel %vm1160, %v2060, 0
        %v2159 = vsel %vm1160, %v2061, 0
        %v2162 = vsel %vm1160, %v2062, 0
        %v2165 = vsel %vm1160, %v2063, 0
        %v2168 = vsel %vm1160, %v2064, 0
        %v2171 = vsel %vm1160, %v2065, 0
        %v2174 = vsel %vm1160, %v2066, 0
        %v2177 = vsel %vm1160, %v2067, 0
        %v2180 = vsel %vm1160, %v2068, 0
        %v2183 = vsel %vm1160, %v2069, 0
        %v2186 = vsel %vm1160, %v2070, 0
        %v2189 = vsel %vm1160, %v2071, 0
        %v2192 = vsel %vm1160, %v2072, 0
        %2194 = vmatprep.subr.bf16.mxu0 %v2123
        %2195 = vmatpush1.bf16.msra.mxu0 %v2122
        %2196 = vmatprep.subr.bf16.mxu0 %v2125
        %2197 = vmatpush1.bf16.msra.mxu0 %v2124
        %2198 = vmatprep.subr.bf16.mxu0 %v2127
        %2199 = vmatpush1.bf16.msra.mxu0 %v2126
        %2200 = vmatprep.subr.bf16.mxu0 %v2129
        %2201 = vmatpush1.bf16.msra.mxu0 %v2128
        %2202 = vmatprep.subr.bf16.mxu0 %v2131
        %2203 = vmatpush1.bf16.msra.mxu0 %v2130
        %2204 = vmatprep.subr.bf16.mxu0 %v2133
        %2205 = vmatpush1.bf16.msra.mxu0 %v2132
        %2206 = vmatprep.subr.bf16.mxu0 0
        %2207 = vmatpush1.bf16.msra.mxu0 0
        %2208 = vmatprep.subr.bf16.mxu0 0
        %2209 = vmatpush1.bf16.msra.mxu0 0
        %2210 = vmatprep.subr.bf16.mxu0 0
        %2211 = vmatpush1.bf16.msra.mxu0 0
        %2212 = vmatprep.subr.bf16.mxu0 0
        %2213 = vmatpush1.bf16.msra.mxu0 0
        %2214 = vmatprep.subr.bf16.mxu0 0
        %2215 = vmatpush1.bf16.msra.mxu0 0
        %2216 = vmatprep.subr.bf16.mxu0 0
        %2217 = vmatpush1.bf16.msra.mxu0 0
        %2218 = vmatprep.subr.bf16.mxu0 0
        %2219 = vmatpush1.bf16.msra.mxu0 0
        %2220 = vmatprep.subr.bf16.mxu0 0
        %2221 = vmatpush1.bf16.msra.mxu0 0
        %2222 = vmatprep.subr.bf16.mxu0 0
        %2223 = vmatpush1.bf16.msra.mxu0 0
        %2224 = vmatprep.subr.bf16.mxu0 0
        %2225 = vmatpush1.bf16.msra.mxu0 0
        %2226 = vmatprep.mubr.bf16.mxu0 0
        %2227 = vmatmul.mubr.bf16.gmra.mrb[0].mxu0 %v2147
        %v2228 = vpop.f32.mrb[0].mxu0
        %v2229 = vadd.f32 0.0, %v2228
        %v2230 = vpop.f32.mrb[0].mxu0
        %v2231 = vadd.f32 0.0, %v2230
        %v2232 = vpop.f32.mrb[0].mxu0
        %v2233 = vadd.f32 0.0, %v2232
        %v2234 = vpop.f32.mrb[0].mxu0
        %v2235 = vadd.f32 0.0, %v2234
        %2236 = vmatprep.mubr.bf16.mxu0 0
        %2237 = vmatmul.mubr.bf16.gmra.mrb[0].mxu0 %v2150
        %v2238 = vpop.f32.mrb[0].mxu0
        %v2239 = vadd.f32 0.0, %v2238
        %v2240 = vpop.f32.mrb[0].mxu0
        %v2241 = vadd.f32 0.0, %v2240
        %v2242 = vpop.f32.mrb[0].mxu0
        %v2243 = vadd.f32 0.0, %v2242
        %v2244 = vpop.f32.mrb[0].mxu0
        %v2245 = vadd.f32 0.0, %v2244
        %2246 = vmatprep.mubr.bf16.mxu0 0
        %2247 = vmatmul.mubr.bf16.gmra.mrb[0].mxu0 %v2153
        %v2248 = vpop.f32.mrb[0].mxu0
        %v2249 = vadd.f32 0.0, %v2248
        %v2250 = vpop.f32.mrb[0].mxu0
        %v2251 = vadd.f32 0.0, %v2250
        %v2252 = vpop.f32.mrb[0].mxu0
        %v2253 = vadd.f32 0.0, %v2252
        %v2254 = vpop.f32.mrb[0].mxu0
        %v2255 = vadd.f32 0.0, %v2254
        %2256 = vmatprep.mubr.bf16.mxu0 0
        %2257 = vmatmul.mubr.bf16.gmra.mrb[0].mxu0 %v2156
        %v2258 = vpop.f32.mrb[0].mxu0
        %v2259 = vadd.f32 0.0, %v2258
        %v2260 = vpop.f32.mrb[0].mxu0
        %v2261 = vadd.f32 0.0, %v2260
        %v2262 = vpop.f32.mrb[0].mxu0
        %v2263 = vadd.f32 0.0, %v2262
        %v2264 = vpop.f32.mrb[0].mxu0
        %v2265 = vadd.f32 0.0, %v2264
        %2266 = vmatprep.mubr.bf16.mxu0 0
        %2267 = vmatmul.mubr.bf16.gmra.mrb[0].mxu0 %v2159
        %v2268 = vpop.f32.mrb[0].mxu0
        %v2269 = vadd.f32 0.0, %v2268
        %v2270 = vpop.f32.mrb[0].mxu0
        %v2271 = vadd.f32 0.0, %v2270
        %v2272 = vpop.f32.mrb[0].mxu0
        %v2273 = vadd.f32 0.0, %v2272
        %v2274 = vpop.f32.mrb[0].mxu0
        %v2275 = vadd.f32 0.0, %v2274
        %2276 = vmatprep.mubr.bf16.mxu0 0
        %2277 = vmatmul.mubr.bf16.gmra.mrb[0].mxu0 %v2162
        %v2278 = vpop.f32.mrb[0].mxu0
        %v2279 = vadd.f32 0.0, %v2278
        %v2280 = vpop.f32.mrb[0].mxu0
        %v2281 = vadd.f32 0.0, %v2280
        %v2282 = vpop.f32.mrb[0].mxu0
        %v2283 = vadd.f32 0.0, %v2282
        %v2284 = vpop.f32.mrb[0].mxu0
        %v2285 = vadd.f32 0.0, %v2284
        %2286 = vmatprep.mubr.bf16.mxu0 0
        %2287 = vmatmul.mubr.bf16.gmra.mrb[0].mxu0 %v2165
        %v2288 = vpop.f32.mrb[0].mxu0
        %v2289 = vadd.f32 0.0, %v2288
        %v2290 = vpop.f32.mrb[0].mxu0
        %v2291 = vadd.f32 0.0, %v2290
        %v2292 = vpop.f32.mrb[0].mxu0
        %v2293 = vadd.f32 0.0, %v2292
        %v2294 = vpop.f32.mrb[0].mxu0
        %v2295 = vadd.f32 0.0, %v2294
        %2296 = vmatprep.mubr.bf16.mxu0 0
        %2297 = vmatmul.mubr.bf16.gmra.mrb[0].mxu0 %v2168
        %v2298 = vpop.f32.mrb[0].mxu0
        %v2299 = vadd.f32 0.0, %v2298
        %v2300 = vpop.f32.mrb[0].mxu0
        %v2301 = vadd.f32 0.0, %v2300
        %v2302 = vpop.f32.mrb[0].mxu0
        %v2303 = vadd.f32 0.0, %v2302
        %v2304 = vpop.f32.mrb[0].mxu0
        %v2305 = vadd.f32 0.0, %v2304
        %2306 = vmatprep.mubr.bf16.mxu0 0
        %2307 = vmatmul.mubr.bf16.gmra.mrb[0].mxu0 %v2171
        %v2308 = vpop.f32.mrb[0].mxu0
        %v2309 = vadd.f32 0.0, %v2308
        %v2310 = vpop.f32.mrb[0].mxu0
        %v2311 = vadd.f32 0.0, %v2310
        %v2312 = vpop.f32.mrb[0].mxu0
        %v2313 = vadd.f32 0.0, %v2312
        %v2314 = vpop.f32.mrb[0].mxu0
        %v2315 = vadd.f32 0.0, %v2314
        %2316 = vmatprep.mubr.bf16.mxu0 0
        %2317 = vmatmul.mubr.bf16.gmra.mrb[0].mxu0 %v2174
        %v2318 = vpop.f32.mrb[0].mxu0
        %v2319 = vadd.f32 0.0, %v2318
        %v2320 = vpop.f32.mrb[0].mxu0
        %v2321 = vadd.f32 0.0, %v2320
        %v2322 = vpop.f32.mrb[0].mxu0
        %v2323 = vadd.f32 0.0, %v2322
        %v2324 = vpop.f32.mrb[0].mxu0
        %v2325 = vadd.f32 0.0, %v2324
        %2326 = vmatprep.mubr.bf16.mxu0 0
        %2327 = vmatmul.mubr.bf16.gmra.mrb[0].mxu0 %v2177
        %v2328 = vpop.f32.mrb[0].mxu0
        %v2329 = vadd.f32 0.0, %v2328
        %v2330 = vpop.f32.mrb[0].mxu0
        %v2331 = vadd.f32 0.0, %v2330
        %v2332 = vpop.f32.mrb[0].mxu0
        %v2333 = vadd.f32 0.0, %v2332
        %v2334 = vpop.f32.mrb[0].mxu0
        %v2335 = vadd.f32 0.0, %v2334
        %2336 = vmatprep.mubr.bf16.mxu0 0
        %2337 = vmatmul.mubr.bf16.gmra.mrb[0].mxu0 %v2180
        %v2338 = vpop.f32.mrb[0].mxu0
        %v2339 = vadd.f32 0.0, %v2338
        %v2340 = vpop.f32.mrb[0].mxu0
        %v2341 = vadd.f32 0.0, %v2340
        %v2342 = vpop.f32.mrb[0].mxu0
        %v2343 = vadd.f32 0.0, %v2342
        %v2344 = vpop.f32.mrb[0].mxu0
        %v2345 = vadd.f32 0.0, %v2344
        %2346 = vmatprep.mubr.bf16.mxu0 0
        %2347 = vmatmul.mubr.bf16.gmra.mrb[0].mxu0 %v2183
        %v2348 = vpop.f32.mrb[0].mxu0
        %v2349 = vadd.f32 0.0, %v2348
        %v2350 = vpop.f32.mrb[0].mxu0
        %v2351 = vadd.f32 0.0, %v2350
        %v2352 = vpop.f32.mrb[0].mxu0
        %v2353 = vadd.f32 0.0, %v2352
        %v2354 = vpop.f32.mrb[0].mxu0
        %v2355 = vadd.f32 0.0, %v2354
        %2356 = vmatprep.mubr.bf16.mxu0 0
        %2357 = vmatmul.mubr.bf16.gmra.mrb[0].mxu0 %v2186
        %v2358 = vpop.f32.mrb[0].mxu0
        %v2359 = vadd.f32 0.0, %v2358
        %v2360 = vpop.f32.mrb[0].mxu0
        %v2361 = vadd.f32 0.0, %v2360
        %v2362 = vpop.f32.mrb[0].mxu0
        %v2363 = vadd.f32 0.0, %v2362
        %v2364 = vpop.f32.mrb[0].mxu0
        %v2365 = vadd.f32 0.0, %v2364
        %2366 = vmatprep.mubr.bf16.mxu0 0
        %2367 = vmatmul.mubr.bf16.gmra.mrb[0].mxu0 %v2189
        %v2368 = vpop.f32.mrb[0].mxu0
        %v2369 = vadd.f32 0.0, %v2368
        %v2370 = vpop.f32.mrb[0].mxu0
        %v2371 = vadd.f32 0.0, %v2370
        %v2372 = vpop.f32.mrb[0].mxu0
        %v2373 = vadd.f32 0.0, %v2372
        %v2374 = vpop.f32.mrb[0].mxu0
        %v2375 = vadd.f32 0.0, %v2374
        %2376 = vmatprep.mubr.bf16.mxu0 0
        %2377 = vmatmul.mubr.bf16.gmra.mrb[0].mxu0 %v2192
        %v2378 = vpop.f32.mrb[0].mxu0
        %v2379 = vadd.f32 0.0, %v2378
        %v2380 = vpop.f32.mrb[0].mxu0
        %v2381 = vadd.f32 0.0, %v2380
        %v2382 = vpop.f32.mrb[0].mxu0
        %v2383 = vadd.f32 0.0, %v2382
        %v2384 = vpop.f32.mrb[0].mxu0
        %v2385 = vadd.f32 0.0, %v2384
        %2386 = vdwg.mxu0
        %v2387 = vadd.f32 %v1545, %v2229
        %v2388 = vadd.f32 %v1547, %v2231
        %v2389 = vadd.f32 %v1549, %v2233
        %v2390 = vadd.f32 %v1551, %v2235
        %v2391 = vadd.f32 %v1555, %v2239
        %v2392 = vadd.f32 %v1557, %v2241
        %v2393 = vadd.f32 %v1559, %v2243
        %v2394 = vadd.f32 %v1561, %v2245
        %v2395 = vadd.f32 %v1565, %v2249
        %v2396 = vadd.f32 %v1567, %v2251
        %v2397 = vadd.f32 %v1569, %v2253
        %v2398 = vadd.f32 %v1571, %v2255
        %v2399 = vadd.f32 %v1575, %v2259
        %v2400 = vadd.f32 %v1577, %v2261
        %v2401 = vadd.f32 %v1579, %v2263
        %v2402 = vadd.f32 %v1581, %v2265
        %v2403 = vadd.f32 %v1585, %v2269
        %v2404 = vadd.f32 %v1587, %v2271
        %v2405 = vadd.f32 %v1589, %v2273
        %v2406 = vadd.f32 %v1591, %v2275
        %v2407 = vadd.f32 %v1595, %v2279
        %v2408 = vadd.f32 %v1597, %v2281
        %v2409 = vadd.f32 %v1599, %v2283
        %v2410 = vadd.f32 %v1601, %v2285
        %v2411 = vadd.f32 %v1605, %v2289
        %v2412 = vadd.f32 %v1607, %v2291
        %v2413 = vadd.f32 %v1609, %v2293
        %v2414 = vadd.f32 %v1611, %v2295
        %v2415 = vadd.f32 %v1615, %v2299
        %v2416 = vadd.f32 %v1617, %v2301
        %v2417 = vadd.f32 %v1619, %v2303
        %v2418 = vadd.f32 %v1621, %v2305
        %v2419 = vadd.f32 %v1625, %v2309
        %v2420 = vadd.f32 %v1627, %v2311
        %v2421 = vadd.f32 %v1629, %v2313
        %v2422 = vadd.f32 %v1631, %v2315
        %v2423 = vadd.f32 %v1635, %v2319
        %v2424 = vadd.f32 %v1637, %v2321
        %v2425 = vadd.f32 %v1639, %v2323
        %v2426 = vadd.f32 %v1641, %v2325
        %v2427 = vadd.f32 %v1645, %v2329
        %v2428 = vadd.f32 %v1647, %v2331
        %v2429 = vadd.f32 %v1649, %v2333
        %v2430 = vadd.f32 %v1651, %v2335
        %v2431 = vadd.f32 %v1655, %v2339
        %v2432 = vadd.f32 %v1657, %v2341
        %v2433 = vadd.f32 %v1659, %v2343
        %v2434 = vadd.f32 %v1661, %v2345
        %v2435 = vadd.f32 %v1665, %v2349
        %v2436 = vadd.f32 %v1667, %v2351
        %v2437 = vadd.f32 %v1669, %v2353
        %v2438 = vadd.f32 %v1671, %v2355
        %v2439 = vadd.f32 %v1675, %v2359
        %v2440 = vadd.f32 %v1677, %v2361
        %v2441 = vadd.f32 %v1679, %v2363
        %v2442 = vadd.f32 %v1681, %v2365
        %v2443 = vadd.f32 %v1685, %v2369
        %v2444 = vadd.f32 %v1687, %v2371
        %v2445 = vadd.f32 %v1689, %v2373
        %v2446 = vadd.f32 %v1691, %v2375
        %v2447 = vadd.f32 %v1695, %v2379
        %v2448 = vadd.f32 %v1697, %v2381
        %v2449 = vadd.f32 %v1699, %v2383
        %v2450 = vadd.f32 %v1701, %v2385
        %s2451 = scalar_lea.vmem %s1, 512
        %v2452 = vld [vmem:[%s2451] sm:$0xff]
        %v2453 = vld [vmem:[%s2451 + $0x8] sm:$0xff]
        %v2454 = vld [vmem:[%s2451 + $0x10] sm:$0xff]
        %v2455 = vld [vmem:[%s2451 + $0x18] sm:$0xff]
        %v2456 = vld [vmem:[%s2451 + $0x20] sm:$0xff]
        %v2457 = vld [vmem:[%s2451 + $0x28] sm:$0xff]
        %v2458 = vld [vmem:[%s2451 + $0x30] sm:$0xff]
        %v2459 = vld [vmem:[%s2451 + $0x38] sm:$0xff]
        %v2460 = vld [vmem:[%s2451 + $0x40] sm:$0xff]
        %v2461 = vld [vmem:[%s2451 + $0x48] sm:$0xff]
        %v2462 = vld [vmem:[%s2451 + $0x50] sm:$0xff]
        %v2463 = vld [vmem:[%s2451 + $0x58] sm:$0xff]
        %v2464 = vld [vmem:[%s2451 + $0x60] sm:$0xff]
        %v2465 = vld [vmem:[%s2451 + $0x68] sm:$0xff]
        %v2466 = vld [vmem:[%s2451 + $0x70] sm:$0xff]
        %v2467 = vld [vmem:[%s2451 + $0x78] sm:$0xff]
        %v2468 = vld [vmem:[%s2451 + $0x80] sm:$0xff]
        %v2469 = vld [vmem:[%s2451 + $0x88] sm:$0xff]
        %v2470 = vld [vmem:[%s2451 + $0x90] sm:$0xff]
        %v2471 = vld [vmem:[%s2451 + $0x98] sm:$0xff]
        %v2472 = vld [vmem:[%s2451 + $0xa0] sm:$0xff]
        %v2473 = vld [vmem:[%s2451 + $0xa8] sm:$0xff]
        %v2474 = vld [vmem:[%s2451 + $0xb0] sm:$0xff]
        %v2475 = vld [vmem:[%s2451 + $0xb8] sm:$0xff]
        %v2476 = vld [vmem:[%s2451 + $0xc0] sm:$0xff]
        %v2477 = vld [vmem:[%s2451 + $0xc8] sm:$0xff]
        %v2478 = vld [vmem:[%s2451 + $0xd0] sm:$0xff]
        %v2479 = vld [vmem:[%s2451 + $0xd8] sm:$0xff]
        %v2480 = vld [vmem:[%s2451 + $0xe0] sm:$0xff]
        %v2481 = vld [vmem:[%s2451 + $0xe8] sm:$0xff]
        %v2482 = vld [vmem:[%s2451 + $0xf0] sm:$0xff]
        %v2483 = vld [vmem:[%s2451 + $0xf8] sm:$0xff]
        %v2516 = vunpack.c.l.b16 %v2452
        %v2517 = vunpack.c.h.b16 %v2452
        %v2518 = vunpack.c.l.b16 %v2453
        %v2519 = vunpack.c.h.b16 %v2453
        %v2520 = vunpack.c.l.b16 %v2454
        %v2521 = vunpack.c.h.b16 %v2454
        %v2522 = vunpack.c.l.b16 %v2455
        %v2523 = vunpack.c.h.b16 %v2455
        %v2524 = vunpack.c.l.b16 %v2456
        %v2525 = vunpack.c.h.b16 %v2456
        %v2526 = vunpack.c.l.b16 %v2457
        %v2527 = vunpack.c.h.b16 %v2457
        %v2528 = vunpack.c.l.b16 %v2458
        %v2529 = vunpack.c.h.b16 %v2458
        %v2530 = vunpack.c.l.b16 %v2459
        %v2531 = vunpack.c.h.b16 %v2459
        %v2532 = vunpack.c.l.b16 %v2460
        %v2533 = vunpack.c.h.b16 %v2460
        %v2534 = vunpack.c.l.b16 %v2461
        %v2535 = vunpack.c.h.b16 %v2461
        %v2536 = vunpack.c.l.b16 %v2462
        %v2537 = vunpack.c.h.b16 %v2462
        %v2538 = vunpack.c.l.b16 %v2463
        %v2539 = vunpack.c.h.b16 %v2463
        %v2540 = vunpack.c.l.b16 %v2464
        %v2541 = vunpack.c.h.b16 %v2464
        %v2542 = vunpack.c.l.b16 %v2465
        %v2543 = vunpack.c.h.b16 %v2465
        %v2544 = vunpack.c.l.b16 %v2466
        %v2545 = vunpack.c.h.b16 %v2466
        %v2546 = vunpack.c.l.b16 %v2467
        %v2547 = vunpack.c.h.b16 %v2467
        %v2548 = vunpack.c.l.b16 %v2468
        %v2549 = vunpack.c.h.b16 %v2468
        %v2550 = vunpack.c.l.b16 %v2469
        %v2551 = vunpack.c.h.b16 %v2469
        %v2552 = vunpack.c.l.b16 %v2470
        %v2553 = vunpack.c.h.b16 %v2470
        %v2554 = vunpack.c.l.b16 %v2471
        %v2555 = vunpack.c.h.b16 %v2471
        %v2556 = vunpack.c.l.b16 %v2472
        %v2557 = vunpack.c.h.b16 %v2472
        %v2558 = vunpack.c.l.b16 %v2473
        %v2559 = vunpack.c.h.b16 %v2473
        %v2560 = vunpack.c.l.b16 %v2474
        %v2561 = vunpack.c.h.b16 %v2474
        %v2562 = vunpack.c.l.b16 %v2475
        %v2563 = vunpack.c.h.b16 %v2475
        %v2564 = vunpack.c.l.b16 %v2476
        %v2565 = vunpack.c.h.b16 %v2476
        %v2566 = vunpack.c.l.b16 %v2477
        %v2567 = vunpack.c.h.b16 %v2477
        %v2568 = vunpack.c.l.b16 %v2478
        %v2569 = vunpack.c.h.b16 %v2478
        %v2570 = vunpack.c.l.b16 %v2479
        %v2571 = vunpack.c.h.b16 %v2479
        %v2572 = vunpack.c.l.b16 %v2480
        %v2573 = vunpack.c.h.b16 %v2480
        %v2574 = vunpack.c.l.b16 %v2481
        %v2575 = vunpack.c.h.b16 %v2481
        %v2576 = vunpack.c.l.b16 %v2482
        %v2577 = vunpack.c.h.b16 %v2482
        %v2578 = vunpack.c.l.b16 %v2483
        %v2579 = vunpack.c.h.b16 %v2483
        %v2580 = vpack.c.b16 %v2518, %v2516
        %v2581 = vpack.c.b16 %v2519, %v2517
        %v2582 = vpack.c.b16 %v2522, %v2520
        %v2583 = vpack.c.b16 %v2523, %v2521
        %v2584 = vpack.c.b16 %v2526, %v2524
        %v2585 = vpack.c.b16 %v2527, %v2525
        %v2586 = vpack.c.b16 %v2530, %v2528
        %v2587 = vpack.c.b16 %v2531, %v2529
        %v2588 = vpack.c.b16 %v2534, %v2532
        %v2589 = vpack.c.b16 %v2535, %v2533
        %v2590 = vpack.c.b16 %v2538, %v2536
        %v2591 = vpack.c.b16 %v2539, %v2537
        %v2592 = vpack.c.b16 %v2542, %v2540
        %v2593 = vpack.c.b16 %v2543, %v2541
        %v2594 = vpack.c.b16 %v2546, %v2544
        %v2595 = vpack.c.b16 %v2547, %v2545
        %v2596 = vpack.c.b16 %v2550, %v2548
        %v2597 = vpack.c.b16 %v2551, %v2549
        %v2598 = vpack.c.b16 %v2554, %v2552
        %v2599 = vpack.c.b16 %v2555, %v2553
        %v2600 = vpack.c.b16 %v2558, %v2556
        %v2601 = vpack.c.b16 %v2559, %v2557
        %v2602 = vpack.c.b16 %v2562, %v2560
        %v2603 = vpack.c.b16 %v2563, %v2561
        %v2604 = vpack.c.b16 %v2566, %v2564
        %v2605 = vpack.c.b16 %v2567, %v2565
        %v2606 = vpack.c.b16 %v2570, %v2568
        %v2607 = vpack.c.b16 %v2571, %v2569
        %v2608 = vpack.c.b16 %v2574, %v2572
        %v2609 = vpack.c.b16 %v2575, %v2573
        %v2610 = vpack.c.b16 %v2578, %v2576
        %v2611 = vpack.c.b16 %v2579, %v2577
        %2644 = vmatprep.subr.bf16.mxu0 0
        %2645 = vmatpush1.bf16.msra.mxu0 %v690
        %2646 = vmatprep.subr.bf16.mxu0 0
        %2647 = vmatpush1.bf16.msra.mxu0 %v691
        %2648 = vmatprep.subr.bf16.mxu0 0
        %2649 = vmatpush1.bf16.msra.mxu0 %v692
        %2650 = vmatprep.subr.bf16.mxu0 0
        %2651 = vmatpush1.bf16.msra.mxu0 %v693
        %2652 = vmatprep.subr.bf16.mxu0 0
        %2653 = vmatpush1.bf16.msra.mxu0 %v694
        %2654 = vmatprep.subr.bf16.mxu0 0
        %2655 = vmatpush1.bf16.msra.mxu0 %v695
        %2656 = vmatprep.subr.bf16.mxu0 0
        %2657 = vmatpush1.bf16.msra.mxu0 %v696
        %2658 = vmatprep.subr.bf16.mxu0 0
        %2659 = vmatpush1.bf16.msra.mxu0 %v697
        %2660 = vmatprep.subr.bf16.mxu0 0
        %2661 = vmatpush1.bf16.msra.mxu0 %v698
        %2662 = vmatprep.subr.bf16.mxu0 0
        %2663 = vmatpush1.bf16.msra.mxu0 %v699
        %2664 = vmatprep.subr.bf16.mxu0 0
        %2665 = vmatpush1.bf16.msra.mxu0 %v700
        %2666 = vmatprep.subr.bf16.mxu0 0
        %2667 = vmatpush1.bf16.msra.mxu0 %v701
        %2668 = vmatprep.subr.bf16.mxu0 0
        %2669 = vmatpush1.bf16.msra.mxu0 %v702
        %2670 = vmatprep.subr.bf16.mxu0 0
        %2671 = vmatpush1.bf16.msra.mxu0 %v703
        %2672 = vmatprep.subr.bf16.mxu0 0
        %2673 = vmatpush1.bf16.msra.mxu0 %v704
        %2674 = vmatprep.subr.bf16.mxu0 0
        %2675 = vmatpush1.bf16.msra.mxu0 %v705
        %2676 = vmatprep.mubr.bf16.mxu0 %v2581
        %2677 = vmatmul.mubr.bf16.gmra.mrb[0].mxu0 %v2580
        %v2678 = vpop.f32.mrb[0].mxu0
        %v2679 = vadd.f32 0.0, %v2678
        %v2680 = vpop.f32.mrb[0].mxu0
        %v2681 = vpop.f32.mrb[0].mxu0
        %v2682 = vadd.f32 0.0, %v2681
        %v2683 = vpop.f32.mrb[0].mxu0
        %2684 = vmatprep.mubr.bf16.mxu0 %v2583
        %2685 = vmatmul.mubr.bf16.gmra.mrb[0].mxu0 %v2582
        %v2686 = vpop.f32.mrb[0].mxu0
        %v2687 = vadd.f32 0.0, %v2686
        %v2688 = vpop.f32.mrb[0].mxu0
        %v2689 = vpop.f32.mrb[0].mxu0
        %v2690 = vadd.f32 0.0, %v2689
        %v2691 = vpop.f32.mrb[0].mxu0
        %2692 = vmatprep.mubr.bf16.mxu0 %v2585
        %2693 = vmatmul.mubr.bf16.gmra.mrb[0].mxu0 %v2584
        %v2694 = vpop.f32.mrb[0].mxu0
        %v2695 = vadd.f32 0.0, %v2694
        %v2696 = vpop.f32.mrb[0].mxu0
        %v2697 = vpop.f32.mrb[0].mxu0
        %v2698 = vadd.f32 0.0, %v2697
        %v2699 = vpop.f32.mrb[0].mxu0
        %2700 = vmatprep.mubr.bf16.mxu0 %v2587
        %2701 = vmatmul.mubr.bf16.gmra.mrb[0].mxu0 %v2586
        %v2702 = vpop.f32.mrb[0].mxu0
        %v2703 = vadd.f32 0.0, %v2702
        %v2704 = vpop.f32.mrb[0].mxu0
        %v2705 = vpop.f32.mrb[0].mxu0
        %v2706 = vadd.f32 0.0, %v2705
        %v2707 = vpop.f32.mrb[0].mxu0
        %2708 = vmatprep.mubr.bf16.mxu0 %v2589
        %2709 = vmatmul.mubr.bf16.gmra.mrb[0].mxu0 %v2588
        %v2710 = vpop.f32.mrb[0].mxu0
        %v2711 = vadd.f32 0.0, %v2710
        %v2712 = vpop.f32.mrb[0].mxu0
        %v2713 = vpop.f32.mrb[0].mxu0
        %v2714 = vadd.f32 0.0, %v2713
        %v2715 = vpop.f32.mrb[0].mxu0
        %2716 = vmatprep.mubr.bf16.mxu0 %v2591
        %2717 = vmatmul.mubr.bf16.gmra.mrb[0].mxu0 %v2590
        %v2718 = vpop.f32.mrb[0].mxu0
        %v2719 = vadd.f32 0.0, %v2718
        %v2720 = vpop.f32.mrb[0].mxu0
        %v2721 = vpop.f32.mrb[0].mxu0
        %v2722 = vadd.f32 0.0, %v2721
        %v2723 = vpop.f32.mrb[0].mxu0
        %2724 = vmatprep.mubr.bf16.mxu0 %v2593
        %2725 = vmatmul.mubr.bf16.gmra.mrb[0].mxu0 %v2592
        %v2726 = vpop.f32.mrb[0].mxu0
        %v2727 = vadd.f32 0.0, %v2726
        %v2728 = vpop.f32.mrb[0].mxu0
        %v2729 = vpop.f32.mrb[0].mxu0
        %v2730 = vadd.f32 0.0, %v2729
        %v2731 = vpop.f32.mrb[0].mxu0
        %2732 = vmatprep.mubr.bf16.mxu0 %v2595
        %2733 = vmatmul.mubr.bf16.gmra.mrb[0].mxu0 %v2594
        %v2734 = vpop.f32.mrb[0].mxu0
        %v2735 = vadd.f32 0.0, %v2734
        %v2736 = vpop.f32.mrb[0].mxu0
        %v2737 = vpop.f32.mrb[0].mxu0
        %v2738 = vadd.f32 0.0, %v2737
        %v2739 = vpop.f32.mrb[0].mxu0
        %2740 = vmatprep.mubr.bf16.mxu0 %v2597
        %2741 = vmatmul.mubr.bf16.gmra.mrb[0].mxu0 %v2596
        %v2742 = vpop.f32.mrb[0].mxu0
        %v2743 = vadd.f32 0.0, %v2742
        %v2744 = vpop.f32.mrb[0].mxu0
        %v2745 = vpop.f32.mrb[0].mxu0
        %v2746 = vadd.f32 0.0, %v2745
        %v2747 = vpop.f32.mrb[0].mxu0
        %2748 = vmatprep.mubr.bf16.mxu0 %v2599
        %2749 = vmatmul.mubr.bf16.gmra.mrb[0].mxu0 %v2598
        %v2750 = vpop.f32.mrb[0].mxu0
        %v2751 = vadd.f32 0.0, %v2750
        %v2752 = vpop.f32.mrb[0].mxu0
        %v2753 = vpop.f32.mrb[0].mxu0
        %v2754 = vadd.f32 0.0, %v2753
        %v2755 = vpop.f32.mrb[0].mxu0
        %2756 = vmatprep.mubr.bf16.mxu0 %v2601
        %2757 = vmatmul.mubr.bf16.gmra.mrb[0].mxu0 %v2600
        %v2758 = vpop.f32.mrb[0].mxu0
        %v2759 = vadd.f32 0.0, %v2758
        %v2760 = vpop.f32.mrb[0].mxu0
        %v2761 = vpop.f32.mrb[0].mxu0
        %v2762 = vadd.f32 0.0, %v2761
        %v2763 = vpop.f32.mrb[0].mxu0
        %2764 = vmatprep.mubr.bf16.mxu0 %v2603
        %2765 = vmatmul.mubr.bf16.gmra.mrb[0].mxu0 %v2602
        %v2766 = vpop.f32.mrb[0].mxu0
        %v2767 = vadd.f32 0.0, %v2766
        %v2768 = vpop.f32.mrb[0].mxu0
        %v2769 = vpop.f32.mrb[0].mxu0
        %v2770 = vadd.f32 0.0, %v2769
        %v2771 = vpop.f32.mrb[0].mxu0
        %2772 = vmatprep.mubr.bf16.mxu0 %v2605
        %2773 = vmatmul.mubr.bf16.gmra.mrb[0].mxu0 %v2604
        %v2774 = vpop.f32.mrb[0].mxu0
        %v2775 = vadd.f32 0.0, %v2774
        %v2776 = vpop.f32.mrb[0].mxu0
        %v2777 = vpop.f32.mrb[0].mxu0
        %v2778 = vadd.f32 0.0, %v2777
        %v2779 = vpop.f32.mrb[0].mxu0
        %2780 = vmatprep.mubr.bf16.mxu0 %v2607
        %2781 = vmatmul.mubr.bf16.gmra.mrb[0].mxu0 %v2606
        %v2782 = vpop.f32.mrb[0].mxu0
        %v2783 = vadd.f32 0.0, %v2782
        %v2784 = vpop.f32.mrb[0].mxu0
        %v2785 = vpop.f32.mrb[0].mxu0
        %v2786 = vadd.f32 0.0, %v2785
        %v2787 = vpop.f32.mrb[0].mxu0
        %2788 = vmatprep.mubr.bf16.mxu0 %v2609
        %2789 = vmatmul.mubr.bf16.gmra.mrb[0].mxu0 %v2608
        %v2790 = vpop.f32.mrb[0].mxu0
        %v2791 = vadd.f32 0.0, %v2790
        %v2792 = vpop.f32.mrb[0].mxu0
        %v2793 = vpop.f32.mrb[0].mxu0
        %v2794 = vadd.f32 0.0, %v2793
        %v2795 = vpop.f32.mrb[0].mxu0
        %2796 = vmatprep.mubr.bf16.mxu0 %v2611
        %2797 = vmatmul.mubr.bf16.gmra.mrb[0].mxu0 %v2610
        %v2798 = vpop.f32.mrb[0].mxu0
        %v2799 = vadd.f32 0.0, %v2798
        %v2800 = vpop.f32.mrb[0].mxu0
        %v2801 = vpop.f32.mrb[0].mxu0
        %v2802 = vadd.f32 0.0, %v2801
        %v2803 = vpop.f32.mrb[0].mxu0
        %2804 = vdwg.mxu0
        %v2805 = vpack.c.bf16 %v2682, %v2679
        %v2806 = vpack.c.bf16 %v2690, %v2687
        %v2807 = vpack.c.bf16 %v2698, %v2695
        %v2808 = vpack.c.bf16 %v2706, %v2703
        %v2809 = vpack.c.bf16 %v2714, %v2711
        %v2810 = vpack.c.bf16 %v2722, %v2719
        %v2811 = vpack.c.bf16 %v2730, %v2727
        %v2812 = vpack.c.bf16 %v2738, %v2735
        %v2813 = vpack.c.bf16 %v2746, %v2743
        %v2814 = vpack.c.bf16 %v2754, %v2751
        %v2815 = vpack.c.bf16 %v2762, %v2759
        %v2816 = vpack.c.bf16 %v2770, %v2767
        %v2817 = vpack.c.bf16 %v2778, %v2775
        %v2818 = vpack.c.bf16 %v2786, %v2783
        %v2819 = vpack.c.bf16 %v2794, %v2791
        %v2820 = vpack.c.bf16 %v2802, %v2799
        %s2821 = scalar_lea.vmem %s2, 288
        %v2822 = vld [vmem:[%s2821] sm:$0xff]
        %v2823 = vld [vmem:[%s2821 + $0x8] sm:$0xff]
        %v2824 = vld [vmem:[%s2821 + $0x10] sm:$0xff]
        %v2825 = vld [vmem:[%s2821 + $0x18] sm:$0xff]
        %v2826 = vld [vmem:[%s2821 + $0x20] sm:$0xff]
        %v2827 = vld [vmem:[%s2821 + $0x28] sm:$0xff]
        %v2828 = vld [vmem:[%s2821 + $0x30] sm:$0xff]
        %v2829 = vld [vmem:[%s2821 + $0x38] sm:$0xff]
        %v2830 = vld [vmem:[%s2821 + $0x40] sm:$0xff]
        %v2831 = vld [vmem:[%s2821 + $0x48] sm:$0xff]
        %v2832 = vld [vmem:[%s2821 + $0x50] sm:$0xff]
        %v2833 = vld [vmem:[%s2821 + $0x58] sm:$0xff]
        %v2846 = vunpack.c.l.b16 %v2822
        %v2847 = vunpack.c.h.b16 %v2822
        %v2848 = vunpack.c.l.b16 %v2823
        %v2849 = vunpack.c.h.b16 %v2823
        %v2850 = vunpack.c.l.b16 %v2824
        %v2851 = vunpack.c.h.b16 %v2824
        %v2852 = vunpack.c.l.b16 %v2825
        %v2853 = vunpack.c.h.b16 %v2825
        %v2854 = vunpack.c.l.b16 %v2826
        %v2855 = vunpack.c.h.b16 %v2826
        %v2856 = vunpack.c.l.b16 %v2827
        %v2857 = vunpack.c.h.b16 %v2827
        %v2858 = vunpack.c.l.b16 %v2828
        %v2859 = vunpack.c.h.b16 %v2828
        %v2860 = vunpack.c.l.b16 %v2829
        %v2861 = vunpack.c.h.b16 %v2829
        %v2862 = vunpack.c.l.b16 %v2830
        %v2863 = vunpack.c.h.b16 %v2830
        %v2864 = vunpack.c.l.b16 %v2831
        %v2865 = vunpack.c.h.b16 %v2831
        %v2866 = vunpack.c.l.b16 %v2832
        %v2867 = vunpack.c.h.b16 %v2832
        %v2868 = vunpack.c.l.b16 %v2833
        %v2869 = vunpack.c.h.b16 %v2833
        %v2870 = vpack.c.b16 %v2848, %v2846
        %v2871 = vpack.c.b16 %v2849, %v2847
        %v2872 = vpack.c.b16 %v2852, %v2850
        %v2873 = vpack.c.b16 %v2853, %v2851
        %v2874 = vpack.c.b16 %v2856, %v2854
        %v2875 = vpack.c.b16 %v2857, %v2855
        %v2876 = vpack.c.b16 %v2860, %v2858
        %v2877 = vpack.c.b16 %v2861, %v2859
        %v2878 = vpack.c.b16 %v2864, %v2862
        %v2879 = vpack.c.b16 %v2865, %v2863
        %v2880 = vpack.c.b16 %v2868, %v2866
        %v2881 = vpack.c.b16 %v2869, %v2867
        %v2895 = vsel %vm1160, %v2805, 0
        %v2898 = vsel %vm1160, %v2806, 0
        %v2901 = vsel %vm1160, %v2807, 0
        %v2904 = vsel %vm1160, %v2808, 0
        %v2907 = vsel %vm1160, %v2809, 0
        %v2910 = vsel %vm1160, %v2810, 0
        %v2913 = vsel %vm1160, %v2811, 0
        %v2916 = vsel %vm1160, %v2812, 0
        %v2919 = vsel %vm1160, %v2813, 0
        %v2922 = vsel %vm1160, %v2814, 0
        %v2925 = vsel %vm1160, %v2815, 0
        %v2928 = vsel %vm1160, %v2816, 0
        %v2931 = vsel %vm1160, %v2817, 0
        %v2934 = vsel %vm1160, %v2818, 0
        %v2937 = vsel %vm1160, %v2819, 0
        %v2940 = vsel %vm1160, %v2820, 0
        %2942 = vmatprep.subr.bf16.mxu0 %v2871
        %2943 = vmatpush1.bf16.msra.mxu0 %v2870
        %2944 = vmatprep.subr.bf16.mxu0 %v2873
        %2945 = vmatpush1.bf16.msra.mxu0 %v2872
        %2946 = vmatprep.subr.bf16.mxu0 %v2875
        %2947 = vmatpush1.bf16.msra.mxu0 %v2874
        %2948 = vmatprep.subr.bf16.mxu0 %v2877
        %2949 = vmatpush1.bf16.msra.mxu0 %v2876
        %2950 = vmatprep.subr.bf16.mxu0 %v2879
        %2951 = vmatpush1.bf16.msra.mxu0 %v2878
        %2952 = vmatprep.subr.bf16.mxu0 %v2881
        %2953 = vmatpush1.bf16.msra.mxu0 %v2880
        %2954 = vmatprep.subr.bf16.mxu0 0
        %2955 = vmatpush1.bf16.msra.mxu0 0
        %2956 = vmatprep.subr.bf16.mxu0 0
        %2957 = vmatpush1.bf16.msra.mxu0 0
        %2958 = vmatprep.subr.bf16.mxu0 0
        %2959 = vmatpush1.bf16.msra.mxu0 0
        %2960 = vmatprep.subr.bf16.mxu0 0
        %2961 = vmatpush1.bf16.msra.mxu0 0
        %2962 = vmatprep.subr.bf16.mxu0 0
        %2963 = vmatpush1.bf16.msra.mxu0 0
        %2964 = vmatprep.subr.bf16.mxu0 0
        %2965 = vmatpush1.bf16.msra.mxu0 0
        %2966 = vmatprep.subr.bf16.mxu0 0
        %2967 = vmatpush1.bf16.msra.mxu0 0
        %2968 = vmatprep.subr.bf16.mxu0 0
        %2969 = vmatpush1.bf16.msra.mxu0 0
        %2970 = vmatprep.subr.bf16.mxu0 0
        %2971 = vmatpush1.bf16.msra.mxu0 0
        %2972 = vmatprep.subr.bf16.mxu0 0
        %2973 = vmatpush1.bf16.msra.mxu0 0
        %2974 = vmatprep.mubr.bf16.mxu0 0
        %2975 = vmatmul.mubr.bf16.gmra.mrb[0].mxu0 %v2895
        %v2976 = vpop.f32.mrb[0].mxu0
        %v2977 = vadd.f32 0.0, %v2976
        %v2978 = vpop.f32.mrb[0].mxu0
        %v2979 = vadd.f32 0.0, %v2978
        %v2980 = vpop.f32.mrb[0].mxu0
        %v2981 = vadd.f32 0.0, %v2980
        %v2982 = vpop.f32.mrb[0].mxu0
        %v2983 = vadd.f32 0.0, %v2982
        %2984 = vmatprep.mubr.bf16.mxu0 0
        %2985 = vmatmul.mubr.bf16.gmra.mrb[0].mxu0 %v2898
        %v2986 = vpop.f32.mrb[0].mxu0
        %v2987 = vadd.f32 0.0, %v2986
        %v2988 = vpop.f32.mrb[0].mxu0
        %v2989 = vadd.f32 0.0, %v2988
        %v2990 = vpop.f32.mrb[0].mxu0
        %v2991 = vadd.f32 0.0, %v2990
        %v2992 = vpop.f32.mrb[0].mxu0
        %v2993 = vadd.f32 0.0, %v2992
        %2994 = vmatprep.mubr.bf16.mxu0 0
        %2995 = vmatmul.mubr.bf16.gmra.mrb[0].mxu0 %v2901
        %v2996 = vpop.f32.mrb[0].mxu0
        %v2997 = vadd.f32 0.0, %v2996
        %v2998 = vpop.f32.mrb[0].mxu0
        %v2999 = vadd.f32 0.0, %v2998
        %v3000 = vpop.f32.mrb[0].mxu0
        %v3001 = vadd.f32 0.0, %v3000
        %v3002 = vpop.f32.mrb[0].mxu0
        %v3003 = vadd.f32 0.0, %v3002
        %3004 = vmatprep.mubr.bf16.mxu0 0
        %3005 = vmatmul.mubr.bf16.gmra.mrb[0].mxu0 %v2904
        %v3006 = vpop.f32.mrb[0].mxu0
        %v3007 = vadd.f32 0.0, %v3006
        %v3008 = vpop.f32.mrb[0].mxu0
        %v3009 = vadd.f32 0.0, %v3008
        %v3010 = vpop.f32.mrb[0].mxu0
        %v3011 = vadd.f32 0.0, %v3010
        %v3012 = vpop.f32.mrb[0].mxu0
        %v3013 = vadd.f32 0.0, %v3012
        %3014 = vmatprep.mubr.bf16.mxu0 0
        %3015 = vmatmul.mubr.bf16.gmra.mrb[0].mxu0 %v2907
        %v3016 = vpop.f32.mrb[0].mxu0
        %v3017 = vadd.f32 0.0, %v3016
        %v3018 = vpop.f32.mrb[0].mxu0
        %v3019 = vadd.f32 0.0, %v3018
        %v3020 = vpop.f32.mrb[0].mxu0
        %v3021 = vadd.f32 0.0, %v3020
        %v3022 = vpop.f32.mrb[0].mxu0
        %v3023 = vadd.f32 0.0, %v3022
        %3024 = vmatprep.mubr.bf16.mxu0 0
        %3025 = vmatmul.mubr.bf16.gmra.mrb[0].mxu0 %v2910
        %v3026 = vpop.f32.mrb[0].mxu0
        %v3027 = vadd.f32 0.0, %v3026
        %v3028 = vpop.f32.mrb[0].mxu0
        %v3029 = vadd.f32 0.0, %v3028
        %v3030 = vpop.f32.mrb[0].mxu0
        %v3031 = vadd.f32 0.0, %v3030
        %v3032 = vpop.f32.mrb[0].mxu0
        %v3033 = vadd.f32 0.0, %v3032
        %3034 = vmatprep.mubr.bf16.mxu0 0
        %3035 = vmatmul.mubr.bf16.gmra.mrb[0].mxu0 %v2913
        %v3036 = vpop.f32.mrb[0].mxu0
        %v3037 = vadd.f32 0.0, %v3036
        %v3038 = vpop.f32.mrb[0].mxu0
        %v3039 = vadd.f32 0.0, %v3038
        %v3040 = vpop.f32.mrb[0].mxu0
        %v3041 = vadd.f32 0.0, %v3040
        %v3042 = vpop.f32.mrb[0].mxu0
        %v3043 = vadd.f32 0.0, %v3042
        %3044 = vmatprep.mubr.bf16.mxu0 0
        %3045 = vmatmul.mubr.bf16.gmra.mrb[0].mxu0 %v2916
        %v3046 = vpop.f32.mrb[0].mxu0
        %v3047 = vadd.f32 0.0, %v3046
        %v3048 = vpop.f32.mrb[0].mxu0
        %v3049 = vadd.f32 0.0, %v3048
        %v3050 = vpop.f32.mrb[0].mxu0
        %v3051 = vadd.f32 0.0, %v3050
        %v3052 = vpop.f32.mrb[0].mxu0
        %v3053 = vadd.f32 0.0, %v3052
        %3054 = vmatprep.mubr.bf16.mxu0 0
        %3055 = vmatmul.mubr.bf16.gmra.mrb[0].mxu0 %v2919
        %v3056 = vpop.f32.mrb[0].mxu0
        %v3057 = vadd.f32 0.0, %v3056
        %v3058 = vpop.f32.mrb[0].mxu0
        %v3059 = vadd.f32 0.0, %v3058
        %v3060 = vpop.f32.mrb[0].mxu0
        %v3061 = vadd.f32 0.0, %v3060
        %v3062 = vpop.f32.mrb[0].mxu0
        %v3063 = vadd.f32 0.0, %v3062
        %3064 = vmatprep.mubr.bf16.mxu0 0
        %3065 = vmatmul.mubr.bf16.gmra.mrb[0].mxu0 %v2922
        %v3066 = vpop.f32.mrb[0].mxu0
        %v3067 = vadd.f32 0.0, %v3066
        %v3068 = vpop.f32.mrb[0].mxu0
        %v3069 = vadd.f32 0.0, %v3068
        %v3070 = vpop.f32.mrb[0].mxu0
        %v3071 = vadd.f32 0.0, %v3070
        %v3072 = vpop.f32.mrb[0].mxu0
        %v3073 = vadd.f32 0.0, %v3072
        %3074 = vmatprep.mubr.bf16.mxu0 0
        %3075 = vmatmul.mubr.bf16.gmra.mrb[0].mxu0 %v2925
        %v3076 = vpop.f32.mrb[0].mxu0
        %v3077 = vadd.f32 0.0, %v3076
        %v3078 = vpop.f32.mrb[0].mxu0
        %v3079 = vadd.f32 0.0, %v3078
        %v3080 = vpop.f32.mrb[0].mxu0
        %v3081 = vadd.f32 0.0, %v3080
        %v3082 = vpop.f32.mrb[0].mxu0
        %v3083 = vadd.f32 0.0, %v3082
        %3084 = vmatprep.mubr.bf16.mxu0 0
        %3085 = vmatmul.mubr.bf16.gmra.mrb[0].mxu0 %v2928
        %v3086 = vpop.f32.mrb[0].mxu0
        %v3087 = vadd.f32 0.0, %v3086
        %v3088 = vpop.f32.mrb[0].mxu0
        %v3089 = vadd.f32 0.0, %v3088
        %v3090 = vpop.f32.mrb[0].mxu0
        %v3091 = vadd.f32 0.0, %v3090
        %v3092 = vpop.f32.mrb[0].mxu0
        %v3093 = vadd.f32 0.0, %v3092
        %3094 = vmatprep.mubr.bf16.mxu0 0
        %3095 = vmatmul.mubr.bf16.gmra.mrb[0].mxu0 %v2931
        %v3096 = vpop.f32.mrb[0].mxu0
        %v3097 = vadd.f32 0.0, %v3096
        %v3098 = vpop.f32.mrb[0].mxu0
        %v3099 = vadd.f32 0.0, %v3098
        %v3100 = vpop.f32.mrb[0].mxu0
        %v3101 = vadd.f32 0.0, %v3100
        %v3102 = vpop.f32.mrb[0].mxu0
        %v3103 = vadd.f32 0.0, %v3102
        %3104 = vmatprep.mubr.bf16.mxu0 0
        %3105 = vmatmul.mubr.bf16.gmra.mrb[0].mxu0 %v2934
        %v3106 = vpop.f32.mrb[0].mxu0
        %v3107 = vadd.f32 0.0, %v3106
        %v3108 = vpop.f32.mrb[0].mxu0
        %v3109 = vadd.f32 0.0, %v3108
        %v3110 = vpop.f32.mrb[0].mxu0
        %v3111 = vadd.f32 0.0, %v3110
        %v3112 = vpop.f32.mrb[0].mxu0
        %v3113 = vadd.f32 0.0, %v3112
        %3114 = vmatprep.mubr.bf16.mxu0 0
        %3115 = vmatmul.mubr.bf16.gmra.mrb[0].mxu0 %v2937
        %v3116 = vpop.f32.mrb[0].mxu0
        %v3117 = vadd.f32 0.0, %v3116
        %v3118 = vpop.f32.mrb[0].mxu0
        %v3119 = vadd.f32 0.0, %v3118
        %v3120 = vpop.f32.mrb[0].mxu0
        %v3121 = vadd.f32 0.0, %v3120
        %v3122 = vpop.f32.mrb[0].mxu0
        %v3123 = vadd.f32 0.0, %v3122
        %3124 = vmatprep.mubr.bf16.mxu0 0
        %3125 = vmatmul.mubr.bf16.gmra.mrb[0].mxu0 %v2940
        %v3126 = vpop.f32.mrb[0].mxu0
        %v3127 = vadd.f32 0.0, %v3126
        %v3128 = vpop.f32.mrb[0].mxu0
        %v3129 = vadd.f32 0.0, %v3128
        %v3130 = vpop.f32.mrb[0].mxu0
        %v3131 = vadd.f32 0.0, %v3130
        %v3132 = vpop.f32.mrb[0].mxu0
        %v3133 = vadd.f32 0.0, %v3132
        %3134 = vdwg.mxu0
        %v3135 = vadd.f32 %v2387, %v2977
        %v3136 = vadd.f32 %v2388, %v2979
        %v3137 = vadd.f32 %v2389, %v2981
        %v3138 = vadd.f32 %v2390, %v2983
        %v3139 = vadd.f32 %v2391, %v2987
        %v3140 = vadd.f32 %v2392, %v2989
        %v3141 = vadd.f32 %v2393, %v2991
        %v3142 = vadd.f32 %v2394, %v2993
        %v3143 = vadd.f32 %v2395, %v2997
        %v3144 = vadd.f32 %v2396, %v2999
        %v3145 = vadd.f32 %v2397, %v3001
        %v3146 = vadd.f32 %v2398, %v3003
        %v3147 = vadd.f32 %v2399, %v3007
        %v3148 = vadd.f32 %v2400, %v3009
        %v3149 = vadd.f32 %v2401, %v3011
        %v3150 = vadd.f32 %v2402, %v3013
        %v3151 = vadd.f32 %v2403, %v3017
        %v3152 = vadd.f32 %v2404, %v3019
        %v3153 = vadd.f32 %v2405, %v3021
        %v3154 = vadd.f32 %v2406, %v3023
        %v3155 = vadd.f32 %v2407, %v3027
        %v3156 = vadd.f32 %v2408, %v3029
        %v3157 = vadd.f32 %v2409, %v3031
        %v3158 = vadd.f32 %v2410, %v3033
        %v3159 = vadd.f32 %v2411, %v3037
        %v3160 = vadd.f32 %v2412, %v3039
        %v3161 = vadd.f32 %v2413, %v3041
        %v3162 = vadd.f32 %v2414, %v3043
        %v3163 = vadd.f32 %v2415, %v3047
        %v3164 = vadd.f32 %v2416, %v3049
        %v3165 = vadd.f32 %v2417, %v3051
        %v3166 = vadd.f32 %v2418, %v3053
        %v3167 = vadd.f32 %v2419, %v3057
        %v3168 = vadd.f32 %v2420, %v3059
        %v3169 = vadd.f32 %v2421, %v3061
        %v3170 = vadd.f32 %v2422, %v3063
        %v3171 = vadd.f32 %v2423, %v3067
        %v3172 = vadd.f32 %v2424, %v3069
        %v3173 = vadd.f32 %v2425, %v3071
        %v3174 = vadd.f32 %v2426, %v3073
        %v3175 = vadd.f32 %v2427, %v3077
        %v3176 = vadd.f32 %v2428, %v3079
        %v3177 = vadd.f32 %v2429, %v3081
        %v3178 = vadd.f32 %v2430, %v3083
        %v3179 = vadd.f32 %v2431, %v3087
        %v3180 = vadd.f32 %v2432, %v3089
        %v3181 = vadd.f32 %v2433, %v3091
        %v3182 = vadd.f32 %v2434, %v3093
        %v3183 = vadd.f32 %v2435, %v3097
        %v3184 = vadd.f32 %v2436, %v3099
        %v3185 = vadd.f32 %v2437, %v3101
        %v3186 = vadd.f32 %v2438, %v3103
        %v3187 = vadd.f32 %v2439, %v3107
        %v3188 = vadd.f32 %v2440, %v3109
        %v3189 = vadd.f32 %v2441, %v3111
        %v3190 = vadd.f32 %v2442, %v3113
        %v3191 = vadd.f32 %v2443, %v3117
        %v3192 = vadd.f32 %v2444, %v3119
        %v3193 = vadd.f32 %v2445, %v3121
        %v3194 = vadd.f32 %v2446, %v3123
        %v3195 = vadd.f32 %v2447, %v3127
        %v3196 = vadd.f32 %v2448, %v3129
        %v3197 = vadd.f32 %v2449, %v3131
        %v3198 = vadd.f32 %v2450, %v3133
        %s3199 = scalar_lea.vmem %s1, 768
        %v3200 = vld [vmem:[%s3199] sm:$0xff]
        %v3201 = vld [vmem:[%s3199 + $0x8] sm:$0xff]
        %v3202 = vld [vmem:[%s3199 + $0x10] sm:$0xff]
        %v3203 = vld [vmem:[%s3199 + $0x18] sm:$0xff]
        %v3204 = vld [vmem:[%s3199 + $0x20] sm:$0xff]
        %v3205 = vld [vmem:[%s3199 + $0x28] sm:$0xff]
        %v3206 = vld [vmem:[%s3199 + $0x30] sm:$0xff]
        %v3207 = vld [vmem:[%s3199 + $0x38] sm:$0xff]
        %v3208 = vld [vmem:[%s3199 + $0x40] sm:$0xff]
        %v3209 = vld [vmem:[%s3199 + $0x48] sm:$0xff]
        %v3210 = vld [vmem:[%s3199 + $0x50] sm:$0xff]
        %v3211 = vld [vmem:[%s3199 + $0x58] sm:$0xff]
        %v3212 = vld [vmem:[%s3199 + $0x60] sm:$0xff]
        %v3213 = vld [vmem:[%s3199 + $0x68] sm:$0xff]
        %v3214 = vld [vmem:[%s3199 + $0x70] sm:$0xff]
        %v3215 = vld [vmem:[%s3199 + $0x78] sm:$0xff]
        %v3216 = vld [vmem:[%s3199 + $0x80] sm:$0xff]
        %v3217 = vld [vmem:[%s3199 + $0x88] sm:$0xff]
        %v3218 = vld [vmem:[%s3199 + $0x90] sm:$0xff]
        %v3219 = vld [vmem:[%s3199 + $0x98] sm:$0xff]
        %v3220 = vld [vmem:[%s3199 + $0xa0] sm:$0xff]
        %v3221 = vld [vmem:[%s3199 + $0xa8] sm:$0xff]
        %v3222 = vld [vmem:[%s3199 + $0xb0] sm:$0xff]
        %v3223 = vld [vmem:[%s3199 + $0xb8] sm:$0xff]
        %v3224 = vld [vmem:[%s3199 + $0xc0] sm:$0xff]
        %v3225 = vld [vmem:[%s3199 + $0xc8] sm:$0xff]
        %v3226 = vld [vmem:[%s3199 + $0xd0] sm:$0xff]
        %v3227 = vld [vmem:[%s3199 + $0xd8] sm:$0xff]
        %v3228 = vld [vmem:[%s3199 + $0xe0] sm:$0xff]
        %v3229 = vld [vmem:[%s3199 + $0xe8] sm:$0xff]
        %v3230 = vld [vmem:[%s3199 + $0xf0] sm:$0xff]
        %v3231 = vld [vmem:[%s3199 + $0xf8] sm:$0xff]
        %v3264 = vunpack.c.l.b16 %v3200
        %v3265 = vunpack.c.h.b16 %v3200
        %v3266 = vunpack.c.l.b16 %v3201
        %v3267 = vunpack.c.h.b16 %v3201
        %v3268 = vunpack.c.l.b16 %v3202
        %v3269 = vunpack.c.h.b16 %v3202
        %v3270 = vunpack.c.l.b16 %v3203
        %v3271 = vunpack.c.h.b16 %v3203
        %v3272 = vunpack.c.l.b16 %v3204
        %v3273 = vunpack.c.h.b16 %v3204
        %v3274 = vunpack.c.l.b16 %v3205
        %v3275 = vunpack.c.h.b16 %v3205
        %v3276 = vunpack.c.l.b16 %v3206
        %v3277 = vunpack.c.h.b16 %v3206
        %v3278 = vunpack.c.l.b16 %v3207
        %v3279 = vunpack.c.h.b16 %v3207
        %v3280 = vunpack.c.l.b16 %v3208
        %v3281 = vunpack.c.h.b16 %v3208
        %v3282 = vunpack.c.l.b16 %v3209
        %v3283 = vunpack.c.h.b16 %v3209
        %v3284 = vunpack.c.l.b16 %v3210
        %v3285 = vunpack.c.h.b16 %v3210
        %v3286 = vunpack.c.l.b16 %v3211
        %v3287 = vunpack.c.h.b16 %v3211
        %v3288 = vunpack.c.l.b16 %v3212
        %v3289 = vunpack.c.h.b16 %v3212
        %v3290 = vunpack.c.l.b16 %v3213
        %v3291 = vunpack.c.h.b16 %v3213
        %v3292 = vunpack.c.l.b16 %v3214
        %v3293 = vunpack.c.h.b16 %v3214
        %v3294 = vunpack.c.l.b16 %v3215
        %v3295 = vunpack.c.h.b16 %v3215
        %v3296 = vunpack.c.l.b16 %v3216
        %v3297 = vunpack.c.h.b16 %v3216
        %v3298 = vunpack.c.l.b16 %v3217
        %v3299 = vunpack.c.h.b16 %v3217
        %v3300 = vunpack.c.l.b16 %v3218
        %v3301 = vunpack.c.h.b16 %v3218
        %v3302 = vunpack.c.l.b16 %v3219
        %v3303 = vunpack.c.h.b16 %v3219
        %v3304 = vunpack.c.l.b16 %v3220
        %v3305 = vunpack.c.h.b16 %v3220
        %v3306 = vunpack.c.l.b16 %v3221
        %v3307 = vunpack.c.h.b16 %v3221
        %v3308 = vunpack.c.l.b16 %v3222
        %v3309 = vunpack.c.h.b16 %v3222
        %v3310 = vunpack.c.l.b16 %v3223
        %v3311 = vunpack.c.h.b16 %v3223
        %v3312 = vunpack.c.l.b16 %v3224
        %v3313 = vunpack.c.h.b16 %v3224
        %v3314 = vunpack.c.l.b16 %v3225
        %v3315 = vunpack.c.h.b16 %v3225
        %v3316 = vunpack.c.l.b16 %v3226
        %v3317 = vunpack.c.h.b16 %v3226
        %v3318 = vunpack.c.l.b16 %v3227
        %v3319 = vunpack.c.h.b16 %v3227
        %v3320 = vunpack.c.l.b16 %v3228
        %v3321 = vunpack.c.h.b16 %v3228
        %v3322 = vunpack.c.l.b16 %v3229
        %v3323 = vunpack.c.h.b16 %v3229
        %v3324 = vunpack.c.l.b16 %v3230
        %v3325 = vunpack.c.h.b16 %v3230
        %v3326 = vunpack.c.l.b16 %v3231
        %v3327 = vunpack.c.h.b16 %v3231
        %v3328 = vpack.c.b16 %v3266, %v3264
        %v3329 = vpack.c.b16 %v3267, %v3265
        %v3330 = vpack.c.b16 %v3270, %v3268
        %v3331 = vpack.c.b16 %v3271, %v3269
        %v3332 = vpack.c.b16 %v3274, %v3272
        %v3333 = vpack.c.b16 %v3275, %v3273
        %v3334 = vpack.c.b16 %v3278, %v3276
        %v3335 = vpack.c.b16 %v3279, %v3277
        %v3336 = vpack.c.b16 %v3282, %v3280
        %v3337 = vpack.c.b16 %v3283, %v3281
        %v3338 = vpack.c.b16 %v3286, %v3284
        %v3339 = vpack.c.b16 %v3287, %v3285
        %v3340 = vpack.c.b16 %v3290, %v3288
        %v3341 = vpack.c.b16 %v3291, %v3289
        %v3342 = vpack.c.b16 %v3294, %v3292
        %v3343 = vpack.c.b16 %v3295, %v3293
        %v3344 = vpack.c.b16 %v3298, %v3296
        %v3345 = vpack.c.b16 %v3299, %v3297
        %v3346 = vpack.c.b16 %v3302, %v3300
        %v3347 = vpack.c.b16 %v3303, %v3301
        %v3348 = vpack.c.b16 %v3306, %v3304
        %v3349 = vpack.c.b16 %v3307, %v3305
        %v3350 = vpack.c.b16 %v3310, %v3308
        %v3351 = vpack.c.b16 %v3311, %v3309
        %v3352 = vpack.c.b16 %v3314, %v3312
        %v3353 = vpack.c.b16 %v3315, %v3313
        %v3354 = vpack.c.b16 %v3318, %v3316
        %v3355 = vpack.c.b16 %v3319, %v3317
        %v3356 = vpack.c.b16 %v3322, %v3320
        %v3357 = vpack.c.b16 %v3323, %v3321
        %v3358 = vpack.c.b16 %v3326, %v3324
        %v3359 = vpack.c.b16 %v3327, %v3325
        %3392 = vmatprep.subr.bf16.mxu0 0
        %3393 = vmatpush1.bf16.msra.mxu0 %v690
        %3394 = vmatprep.subr.bf16.mxu0 0
        %3395 = vmatpush1.bf16.msra.mxu0 %v691
        %3396 = vmatprep.subr.bf16.mxu0 0
        %3397 = vmatpush1.bf16.msra.mxu0 %v692
        %3398 = vmatprep.subr.bf16.mxu0 0
        %3399 = vmatpush1.bf16.msra.mxu0 %v693
        %3400 = vmatprep.subr.bf16.mxu0 0
        %3401 = vmatpush1.bf16.msra.mxu0 %v694
        %3402 = vmatprep.subr.bf16.mxu0 0
        %3403 = vmatpush1.bf16.msra.mxu0 %v695
        %3404 = vmatprep.subr.bf16.mxu0 0
        %3405 = vmatpush1.bf16.msra.mxu0 %v696
        %3406 = vmatprep.subr.bf16.mxu0 0
        %3407 = vmatpush1.bf16.msra.mxu0 %v697
        %3408 = vmatprep.subr.bf16.mxu0 0
        %3409 = vmatpush1.bf16.msra.mxu0 %v698
        %3410 = vmatprep.subr.bf16.mxu0 0
        %3411 = vmatpush1.bf16.msra.mxu0 %v699
        %3412 = vmatprep.subr.bf16.mxu0 0
        %3413 = vmatpush1.bf16.msra.mxu0 %v700
        %3414 = vmatprep.subr.bf16.mxu0 0
        %3415 = vmatpush1.bf16.msra.mxu0 %v701
        %3416 = vmatprep.subr.bf16.mxu0 0
        %3417 = vmatpush1.bf16.msra.mxu0 %v702
        %3418 = vmatprep.subr.bf16.mxu0 0
        %3419 = vmatpush1.bf16.msra.mxu0 %v703
        %3420 = vmatprep.subr.bf16.mxu0 0
        %3421 = vmatpush1.bf16.msra.mxu0 %v704
        %3422 = vmatprep.subr.bf16.mxu0 0
        %3423 = vmatpush1.bf16.msra.mxu0 %v705
        %3424 = vmatprep.mubr.bf16.mxu0 %v3329
        %3425 = vmatmul.mubr.bf16.gmra.mrb[0].mxu0 %v3328
        %v3426 = vpop.f32.mrb[0].mxu0
        %v3427 = vadd.f32 0.0, %v3426
        %v3428 = vpop.f32.mrb[0].mxu0
        %v3429 = vpop.f32.mrb[0].mxu0
        %v3430 = vadd.f32 0.0, %v3429
        %v3431 = vpop.f32.mrb[0].mxu0
        %3432 = vmatprep.mubr.bf16.mxu0 %v3331
        %3433 = vmatmul.mubr.bf16.gmra.mrb[0].mxu0 %v3330
        %v3434 = vpop.f32.mrb[0].mxu0
        %v3435 = vadd.f32 0.0, %v3434
        %v3436 = vpop.f32.mrb[0].mxu0
        %v3437 = vpop.f32.mrb[0].mxu0
        %v3438 = vadd.f32 0.0, %v3437
        %v3439 = vpop.f32.mrb[0].mxu0
        %3440 = vmatprep.mubr.bf16.mxu0 %v3333
        %3441 = vmatmul.mubr.bf16.gmra.mrb[0].mxu0 %v3332
        %v3442 = vpop.f32.mrb[0].mxu0
        %v3443 = vadd.f32 0.0, %v3442
        %v3444 = vpop.f32.mrb[0].mxu0
        %v3445 = vpop.f32.mrb[0].mxu0
        %v3446 = vadd.f32 0.0, %v3445
        %v3447 = vpop.f32.mrb[0].mxu0
        %3448 = vmatprep.mubr.bf16.mxu0 %v3335
        %3449 = vmatmul.mubr.bf16.gmra.mrb[0].mxu0 %v3334
        %v3450 = vpop.f32.mrb[0].mxu0
        %v3451 = vadd.f32 0.0, %v3450
        %v3452 = vpop.f32.mrb[0].mxu0
        %v3453 = vpop.f32.mrb[0].mxu0
        %v3454 = vadd.f32 0.0, %v3453
        %v3455 = vpop.f32.mrb[0].mxu0
        %3456 = vmatprep.mubr.bf16.mxu0 %v3337
        %3457 = vmatmul.mubr.bf16.gmra.mrb[0].mxu0 %v3336
        %v3458 = vpop.f32.mrb[0].mxu0
        %v3459 = vadd.f32 0.0, %v3458
        %v3460 = vpop.f32.mrb[0].mxu0
        %v3461 = vpop.f32.mrb[0].mxu0
        %v3462 = vadd.f32 0.0, %v3461
        %v3463 = vpop.f32.mrb[0].mxu0
        %3464 = vmatprep.mubr.bf16.mxu0 %v3339
        %3465 = vmatmul.mubr.bf16.gmra.mrb[0].mxu0 %v3338
        %v3466 = vpop.f32.mrb[0].mxu0
        %v3467 = vadd.f32 0.0, %v3466
        %v3468 = vpop.f32.mrb[0].mxu0
        %v3469 = vpop.f32.mrb[0].mxu0
        %v3470 = vadd.f32 0.0, %v3469
        %v3471 = vpop.f32.mrb[0].mxu0
        %3472 = vmatprep.mubr.bf16.mxu0 %v3341
        %3473 = vmatmul.mubr.bf16.gmra.mrb[0].mxu0 %v3340
        %v3474 = vpop.f32.mrb[0].mxu0
        %v3475 = vadd.f32 0.0, %v3474
        %v3476 = vpop.f32.mrb[0].mxu0
        %v3477 = vpop.f32.mrb[0].mxu0
        %v3478 = vadd.f32 0.0, %v3477
        %v3479 = vpop.f32.mrb[0].mxu0
        %3480 = vmatprep.mubr.bf16.mxu0 %v3343
        %3481 = vmatmul.mubr.bf16.gmra.mrb[0].mxu0 %v3342
        %v3482 = vpop.f32.mrb[0].mxu0
        %v3483 = vadd.f32 0.0, %v3482
        %v3484 = vpop.f32.mrb[0].mxu0
        %v3485 = vpop.f32.mrb[0].mxu0
        %v3486 = vadd.f32 0.0, %v3485
        %v3487 = vpop.f32.mrb[0].mxu0
        %3488 = vmatprep.mubr.bf16.mxu0 %v3345
        %3489 = vmatmul.mubr.bf16.gmra.mrb[0].mxu0 %v3344
        %v3490 = vpop.f32.mrb[0].mxu0
        %v3491 = vadd.f32 0.0, %v3490
        %v3492 = vpop.f32.mrb[0].mxu0
        %v3493 = vpop.f32.mrb[0].mxu0
        %v3494 = vadd.f32 0.0, %v3493
        %v3495 = vpop.f32.mrb[0].mxu0
        %3496 = vmatprep.mubr.bf16.mxu0 %v3347
        %3497 = vmatmul.mubr.bf16.gmra.mrb[0].mxu0 %v3346
        %v3498 = vpop.f32.mrb[0].mxu0
        %v3499 = vadd.f32 0.0, %v3498
        %v3500 = vpop.f32.mrb[0].mxu0
        %v3501 = vpop.f32.mrb[0].mxu0
        %v3502 = vadd.f32 0.0, %v3501
        %v3503 = vpop.f32.mrb[0].mxu0
        %3504 = vmatprep.mubr.bf16.mxu0 %v3349
        %3505 = vmatmul.mubr.bf16.gmra.mrb[0].mxu0 %v3348
        %v3506 = vpop.f32.mrb[0].mxu0
        %v3507 = vadd.f32 0.0, %v3506
        %v3508 = vpop.f32.mrb[0].mxu0
        %v3509 = vpop.f32.mrb[0].mxu0
        %v3510 = vadd.f32 0.0, %v3509
        %v3511 = vpop.f32.mrb[0].mxu0
        %3512 = vmatprep.mubr.bf16.mxu0 %v3351
        %3513 = vmatmul.mubr.bf16.gmra.mrb[0].mxu0 %v3350
        %v3514 = vpop.f32.mrb[0].mxu0
        %v3515 = vadd.f32 0.0, %v3514
        %v3516 = vpop.f32.mrb[0].mxu0
        %v3517 = vpop.f32.mrb[0].mxu0
        %v3518 = vadd.f32 0.0, %v3517
        %v3519 = vpop.f32.mrb[0].mxu0
        %3520 = vmatprep.mubr.bf16.mxu0 %v3353
        %3521 = vmatmul.mubr.bf16.gmra.mrb[0].mxu0 %v3352
        %v3522 = vpop.f32.mrb[0].mxu0
        %v3523 = vadd.f32 0.0, %v3522
        %v3524 = vpop.f32.mrb[0].mxu0
        %v3525 = vpop.f32.mrb[0].mxu0
        %v3526 = vadd.f32 0.0, %v3525
        %v3527 = vpop.f32.mrb[0].mxu0
        %3528 = vmatprep.mubr.bf16.mxu0 %v3355
        %3529 = vmatmul.mubr.bf16.gmra.mrb[0].mxu0 %v3354
        %v3530 = vpop.f32.mrb[0].mxu0
        %v3531 = vadd.f32 0.0, %v3530
        %v3532 = vpop.f32.mrb[0].mxu0
        %v3533 = vpop.f32.mrb[0].mxu0
        %v3534 = vadd.f32 0.0, %v3533
        %v3535 = vpop.f32.mrb[0].mxu0
        %3536 = vmatprep.mubr.bf16.mxu0 %v3357
        %3537 = vmatmul.mubr.bf16.gmra.mrb[0].mxu0 %v3356
        %v3538 = vpop.f32.mrb[0].mxu0
        %v3539 = vadd.f32 0.0, %v3538
        %v3540 = vpop.f32.mrb[0].mxu0
        %v3541 = vpop.f32.mrb[0].mxu0
        %v3542 = vadd.f32 0.0, %v3541
        %v3543 = vpop.f32.mrb[0].mxu0
        %3544 = vmatprep.mubr.bf16.mxu0 %v3359
        %3545 = vmatmul.mubr.bf16.gmra.mrb[0].mxu0 %v3358
        %v3546 = vpop.f32.mrb[0].mxu0
        %v3547 = vadd.f32 0.0, %v3546
        %v3548 = vpop.f32.mrb[0].mxu0
        %v3549 = vpop.f32.mrb[0].mxu0
        %v3550 = vadd.f32 0.0, %v3549
        %v3551 = vpop.f32.mrb[0].mxu0
        %3552 = vdwg.mxu0
        %v3553 = vpack.c.bf16 %v3430, %v3427
        %v3554 = vpack.c.bf16 %v3438, %v3435
        %v3555 = vpack.c.bf16 %v3446, %v3443
        %v3556 = vpack.c.bf16 %v3454, %v3451
        %v3557 = vpack.c.bf16 %v3462, %v3459
        %v3558 = vpack.c.bf16 %v3470, %v3467
        %v3559 = vpack.c.bf16 %v3478, %v3475
        %v3560 = vpack.c.bf16 %v3486, %v3483
        %v3561 = vpack.c.bf16 %v3494, %v3491
        %v3562 = vpack.c.bf16 %v3502, %v3499
        %v3563 = vpack.c.bf16 %v3510, %v3507
        %v3564 = vpack.c.bf16 %v3518, %v3515
        %v3565 = vpack.c.bf16 %v3526, %v3523
        %v3566 = vpack.c.bf16 %v3534, %v3531
        %v3567 = vpack.c.bf16 %v3542, %v3539
        %v3568 = vpack.c.bf16 %v3550, %v3547
        %s3569 = scalar_lea.vmem %s2, 384
        %v3570 = vld [vmem:[%s3569] sm:$0xff]
        %v3571 = vld [vmem:[%s3569 + $0x8] sm:$0xff]
        %v3572 = vld [vmem:[%s3569 + $0x10] sm:$0xff]
        %v3573 = vld [vmem:[%s3569 + $0x18] sm:$0xff]
        %v3574 = vld [vmem:[%s3569 + $0x20] sm:$0xff]
        %v3575 = vld [vmem:[%s3569 + $0x28] sm:$0xff]
        %v3576 = vld [vmem:[%s3569 + $0x30] sm:$0xff]
        %v3577 = vld [vmem:[%s3569 + $0x38] sm:$0xff]
        %v3578 = vld [vmem:[%s3569 + $0x40] sm:$0xff]
        %v3579 = vld [vmem:[%s3569 + $0x48] sm:$0xff]
        %v3580 = vld [vmem:[%s3569 + $0x50] sm:$0xff]
        %v3581 = vld [vmem:[%s3569 + $0x58] sm:$0xff]
        %v3594 = vunpack.c.l.b16 %v3570
        %v3595 = vunpack.c.h.b16 %v3570
        %v3596 = vunpack.c.l.b16 %v3571
        %v3597 = vunpack.c.h.b16 %v3571
        %v3598 = vunpack.c.l.b16 %v3572
        %v3599 = vunpack.c.h.b16 %v3572
        %v3600 = vunpack.c.l.b16 %v3573
        %v3601 = vunpack.c.h.b16 %v3573
        %v3602 = vunpack.c.l.b16 %v3574
        %v3603 = vunpack.c.h.b16 %v3574
        %v3604 = vunpack.c.l.b16 %v3575
        %v3605 = vunpack.c.h.b16 %v3575
        %v3606 = vunpack.c.l.b16 %v3576
        %v3607 = vunpack.c.h.b16 %v3576
        %v3608 = vunpack.c.l.b16 %v3577
        %v3609 = vunpack.c.h.b16 %v3577
        %v3610 = vunpack.c.l.b16 %v3578
        %v3611 = vunpack.c.h.b16 %v3578
        %v3612 = vunpack.c.l.b16 %v3579
        %v3613 = vunpack.c.h.b16 %v3579
        %v3614 = vunpack.c.l.b16 %v3580
        %v3615 = vunpack.c.h.b16 %v3580
        %v3616 = vunpack.c.l.b16 %v3581
        %v3617 = vunpack.c.h.b16 %v3581
        %v3618 = vpack.c.b16 %v3596, %v3594
        %v3619 = vpack.c.b16 %v3597, %v3595
        %v3620 = vpack.c.b16 %v3600, %v3598
        %v3621 = vpack.c.b16 %v3601, %v3599
        %v3622 = vpack.c.b16 %v3604, %v3602
        %v3623 = vpack.c.b16 %v3605, %v3603
        %v3624 = vpack.c.b16 %v3608, %v3606
        %v3625 = vpack.c.b16 %v3609, %v3607
        %v3626 = vpack.c.b16 %v3612, %v3610
        %v3627 = vpack.c.b16 %v3613, %v3611
        %v3628 = vpack.c.b16 %v3616, %v3614
        %v3629 = vpack.c.b16 %v3617, %v3615
        %v3643 = vsel %vm1160, %v3553, 0
        %v3646 = vsel %vm1160, %v3554, 0
        %v3649 = vsel %vm1160, %v3555, 0
        %v3652 = vsel %vm1160, %v3556, 0
        %v3655 = vsel %vm1160, %v3557, 0
        %v3658 = vsel %vm1160, %v3558, 0
        %v3661 = vsel %vm1160, %v3559, 0
        %v3664 = vsel %vm1160, %v3560, 0
        %v3667 = vsel %vm1160, %v3561, 0
        %v3670 = vsel %vm1160, %v3562, 0
        %v3673 = vsel %vm1160, %v3563, 0
        %v3676 = vsel %vm1160, %v3564, 0
        %v3679 = vsel %vm1160, %v3565, 0
        %v3682 = vsel %vm1160, %v3566, 0
        %v3685 = vsel %vm1160, %v3567, 0
        %v3688 = vsel %vm1160, %v3568, 0
        %3690 = vmatprep.subr.bf16.mxu0 %v3619
        %3691 = vmatpush1.bf16.msra.mxu0 %v3618
        %3692 = vmatprep.subr.bf16.mxu0 %v3621
        %3693 = vmatpush1.bf16.msra.mxu0 %v3620
        %3694 = vmatprep.subr.bf16.mxu0 %v3623
        %3695 = vmatpush1.bf16.msra.mxu0 %v3622
        %3696 = vmatprep.subr.bf16.mxu0 %v3625
        %3697 = vmatpush1.bf16.msra.mxu0 %v3624
        %3698 = vmatprep.subr.bf16.mxu0 %v3627
        %3699 = vmatpush1.bf16.msra.mxu0 %v3626
        %3700 = vmatprep.subr.bf16.mxu0 %v3629
        %3701 = vmatpush1.bf16.msra.mxu0 %v3628
        %3702 = vmatprep.subr.bf16.mxu0 0
        %3703 = vmatpush1.bf16.msra.mxu0 0
        %3704 = vmatprep.subr.bf16.mxu0 0
        %3705 = vmatpush1.bf16.msra.mxu0 0
        %3706 = vmatprep.subr.bf16.mxu0 0
        %3707 = vmatpush1.bf16.msra.mxu0 0
        %3708 = vmatprep.subr.bf16.mxu0 0
        %3709 = vmatpush1.bf16.msra.mxu0 0
        %3710 = vmatprep.subr.bf16.mxu0 0
        %3711 = vmatpush1.bf16.msra.mxu0 0
        %3712 = vmatprep.subr.bf16.mxu0 0
        %3713 = vmatpush1.bf16.msra.mxu0 0
        %3714 = vmatprep.subr.bf16.mxu0 0
        %3715 = vmatpush1.bf16.msra.mxu0 0
        %3716 = vmatprep.subr.bf16.mxu0 0
        %3717 = vmatpush1.bf16.msra.mxu0 0
        %3718 = vmatprep.subr.bf16.mxu0 0
        %3719 = vmatpush1.bf16.msra.mxu0 0
        %3720 = vmatprep.subr.bf16.mxu0 0
        %3721 = vmatpush1.bf16.msra.mxu0 0
        %3722 = vmatprep.mubr.bf16.mxu0 0
        %3723 = vmatmul.mubr.bf16.gmra.mrb[0].mxu0 %v3643
        %v3724 = vpop.f32.mrb[0].mxu0
        %v3725 = vadd.f32 0.0, %v3724
        %v3726 = vpop.f32.mrb[0].mxu0
        %v3727 = vadd.f32 0.0, %v3726
        %v3728 = vpop.f32.mrb[0].mxu0
        %v3729 = vadd.f32 0.0, %v3728
        %v3730 = vpop.f32.mrb[0].mxu0
        %v3731 = vadd.f32 0.0, %v3730
        %3732 = vmatprep.mubr.bf16.mxu0 0
        %3733 = vmatmul.mubr.bf16.gmra.mrb[0].mxu0 %v3646
        %v3734 = vpop.f32.mrb[0].mxu0
        %v3735 = vadd.f32 0.0, %v3734
        %v3736 = vpop.f32.mrb[0].mxu0
        %v3737 = vadd.f32 0.0, %v3736
        %v3738 = vpop.f32.mrb[0].mxu0
        %v3739 = vadd.f32 0.0, %v3738
        %v3740 = vpop.f32.mrb[0].mxu0
        %v3741 = vadd.f32 0.0, %v3740
        %3742 = vmatprep.mubr.bf16.mxu0 0
        %3743 = vmatmul.mubr.bf16.gmra.mrb[0].mxu0 %v3649
        %v3744 = vpop.f32.mrb[0].mxu0
        %v3745 = vadd.f32 0.0, %v3744
        %v3746 = vpop.f32.mrb[0].mxu0
        %v3747 = vadd.f32 0.0, %v3746
        %v3748 = vpop.f32.mrb[0].mxu0
        %v3749 = vadd.f32 0.0, %v3748
        %v3750 = vpop.f32.mrb[0].mxu0
        %v3751 = vadd.f32 0.0, %v3750
        %3752 = vmatprep.mubr.bf16.mxu0 0
        %3753 = vmatmul.mubr.bf16.gmra.mrb[0].mxu0 %v3652
        %v3754 = vpop.f32.mrb[0].mxu0
        %v3755 = vadd.f32 0.0, %v3754
        %v3756 = vpop.f32.mrb[0].mxu0
        %v3757 = vadd.f32 0.0, %v3756
        %v3758 = vpop.f32.mrb[0].mxu0
        %v3759 = vadd.f32 0.0, %v3758
        %v3760 = vpop.f32.mrb[0].mxu0
        %v3761 = vadd.f32 0.0, %v3760
        %3762 = vmatprep.mubr.bf16.mxu0 0
        %3763 = vmatmul.mubr.bf16.gmra.mrb[0].mxu0 %v3655
        %v3764 = vpop.f32.mrb[0].mxu0
        %v3765 = vadd.f32 0.0, %v3764
        %v3766 = vpop.f32.mrb[0].mxu0
        %v3767 = vadd.f32 0.0, %v3766
        %v3768 = vpop.f32.mrb[0].mxu0
        %v3769 = vadd.f32 0.0, %v3768
        %v3770 = vpop.f32.mrb[0].mxu0
        %v3771 = vadd.f32 0.0, %v3770
        %3772 = vmatprep.mubr.bf16.mxu0 0
        %3773 = vmatmul.mubr.bf16.gmra.mrb[0].mxu0 %v3658
        %v3774 = vpop.f32.mrb[0].mxu0
        %v3775 = vadd.f32 0.0, %v3774
        %v3776 = vpop.f32.mrb[0].mxu0
        %v3777 = vadd.f32 0.0, %v3776
        %v3778 = vpop.f32.mrb[0].mxu0
        %v3779 = vadd.f32 0.0, %v3778
        %v3780 = vpop.f32.mrb[0].mxu0
        %v3781 = vadd.f32 0.0, %v3780
        %3782 = vmatprep.mubr.bf16.mxu0 0
        %3783 = vmatmul.mubr.bf16.gmra.mrb[0].mxu0 %v3661
        %v3784 = vpop.f32.mrb[0].mxu0
        %v3785 = vadd.f32 0.0, %v3784
        %v3786 = vpop.f32.mrb[0].mxu0
        %v3787 = vadd.f32 0.0, %v3786
        %v3788 = vpop.f32.mrb[0].mxu0
        %v3789 = vadd.f32 0.0, %v3788
        %v3790 = vpop.f32.mrb[0].mxu0
        %v3791 = vadd.f32 0.0, %v3790
        %3792 = vmatprep.mubr.bf16.mxu0 0
        %3793 = vmatmul.mubr.bf16.gmra.mrb[0].mxu0 %v3664
        %v3794 = vpop.f32.mrb[0].mxu0
        %v3795 = vadd.f32 0.0, %v3794
        %v3796 = vpop.f32.mrb[0].mxu0
        %v3797 = vadd.f32 0.0, %v3796
        %v3798 = vpop.f32.mrb[0].mxu0
        %v3799 = vadd.f32 0.0, %v3798
        %v3800 = vpop.f32.mrb[0].mxu0
        %v3801 = vadd.f32 0.0, %v3800
        %3802 = vmatprep.mubr.bf16.mxu0 0
        %3803 = vmatmul.mubr.bf16.gmra.mrb[0].mxu0 %v3667
        %v3804 = vpop.f32.mrb[0].mxu0
        %v3805 = vadd.f32 0.0, %v3804
        %v3806 = vpop.f32.mrb[0].mxu0
        %v3807 = vadd.f32 0.0, %v3806
        %v3808 = vpop.f32.mrb[0].mxu0
        %v3809 = vadd.f32 0.0, %v3808
        %v3810 = vpop.f32.mrb[0].mxu0
        %v3811 = vadd.f32 0.0, %v3810
        %3812 = vmatprep.mubr.bf16.mxu0 0
        %3813 = vmatmul.mubr.bf16.gmra.mrb[0].mxu0 %v3670
        %v3814 = vpop.f32.mrb[0].mxu0
        %v3815 = vadd.f32 0.0, %v3814
        %v3816 = vpop.f32.mrb[0].mxu0
        %v3817 = vadd.f32 0.0, %v3816
        %v3818 = vpop.f32.mrb[0].mxu0
        %v3819 = vadd.f32 0.0, %v3818
        %v3820 = vpop.f32.mrb[0].mxu0
        %v3821 = vadd.f32 0.0, %v3820
        %3822 = vmatprep.mubr.bf16.mxu0 0
        %3823 = vmatmul.mubr.bf16.gmra.mrb[0].mxu0 %v3673
        %v3824 = vpop.f32.mrb[0].mxu0
        %v3825 = vadd.f32 0.0, %v3824
        %v3826 = vpop.f32.mrb[0].mxu0
        %v3827 = vadd.f32 0.0, %v3826
        %v3828 = vpop.f32.mrb[0].mxu0
        %v3829 = vadd.f32 0.0, %v3828
        %v3830 = vpop.f32.mrb[0].mxu0
        %v3831 = vadd.f32 0.0, %v3830
        %3832 = vmatprep.mubr.bf16.mxu0 0
        %3833 = vmatmul.mubr.bf16.gmra.mrb[0].mxu0 %v3676
        %v3834 = vpop.f32.mrb[0].mxu0
        %v3835 = vadd.f32 0.0, %v3834
        %v3836 = vpop.f32.mrb[0].mxu0
        %v3837 = vadd.f32 0.0, %v3836
        %v3838 = vpop.f32.mrb[0].mxu0
        %v3839 = vadd.f32 0.0, %v3838
        %v3840 = vpop.f32.mrb[0].mxu0
        %v3841 = vadd.f32 0.0, %v3840
        %3842 = vmatprep.mubr.bf16.mxu0 0
        %3843 = vmatmul.mubr.bf16.gmra.mrb[0].mxu0 %v3679
        %v3844 = vpop.f32.mrb[0].mxu0
        %v3845 = vadd.f32 0.0, %v3844
        %v3846 = vpop.f32.mrb[0].mxu0
        %v3847 = vadd.f32 0.0, %v3846
        %v3848 = vpop.f32.mrb[0].mxu0
        %v3849 = vadd.f32 0.0, %v3848
        %v3850 = vpop.f32.mrb[0].mxu0
        %v3851 = vadd.f32 0.0, %v3850
        %3852 = vmatprep.mubr.bf16.mxu0 0
        %3853 = vmatmul.mubr.bf16.gmra.mrb[0].mxu0 %v3682
        %v3854 = vpop.f32.mrb[0].mxu0
        %v3855 = vadd.f32 0.0, %v3854
        %v3856 = vpop.f32.mrb[0].mxu0
        %v3857 = vadd.f32 0.0, %v3856
        %v3858 = vpop.f32.mrb[0].mxu0
        %v3859 = vadd.f32 0.0, %v3858
        %v3860 = vpop.f32.mrb[0].mxu0
        %v3861 = vadd.f32 0.0, %v3860
        %3862 = vmatprep.mubr.bf16.mxu0 0
        %3863 = vmatmul.mubr.bf16.gmra.mrb[0].mxu0 %v3685
        %v3864 = vpop.f32.mrb[0].mxu0
        %v3865 = vadd.f32 0.0, %v3864
        %v3866 = vpop.f32.mrb[0].mxu0
        %v3867 = vadd.f32 0.0, %v3866
        %v3868 = vpop.f32.mrb[0].mxu0
        %v3869 = vadd.f32 0.0, %v3868
        %v3870 = vpop.f32.mrb[0].mxu0
        %v3871 = vadd.f32 0.0, %v3870
        %3872 = vmatprep.mubr.bf16.mxu0 0
        %3873 = vmatmul.mubr.bf16.gmra.mrb[0].mxu0 %v3688
        %v3874 = vpop.f32.mrb[0].mxu0
        %v3875 = vadd.f32 0.0, %v3874
        %v3876 = vpop.f32.mrb[0].mxu0
        %v3877 = vadd.f32 0.0, %v3876
        %v3878 = vpop.f32.mrb[0].mxu0
        %v3879 = vadd.f32 0.0, %v3878
        %v3880 = vpop.f32.mrb[0].mxu0
        %v3881 = vadd.f32 0.0, %v3880
        %3882 = vdwg.mxu0
        %v3883 = vadd.f32 %v3135, %v3725
        %v3884 = vadd.f32 %v3136, %v3727
        %v3885 = vadd.f32 %v3137, %v3729
        %v3886 = vadd.f32 %v3138, %v3731
        %v3887 = vadd.f32 %v3139, %v3735
        %v3888 = vadd.f32 %v3140, %v3737
        %v3889 = vadd.f32 %v3141, %v3739
        %v3890 = vadd.f32 %v3142, %v3741
        %v3891 = vadd.f32 %v3143, %v3745
        %v3892 = vadd.f32 %v3144, %v3747
        %v3893 = vadd.f32 %v3145, %v3749
        %v3894 = vadd.f32 %v3146, %v3751
        %v3895 = vadd.f32 %v3147, %v3755
        %v3896 = vadd.f32 %v3148, %v3757
        %v3897 = vadd.f32 %v3149, %v3759
        %v3898 = vadd.f32 %v3150, %v3761
        %v3899 = vadd.f32 %v3151, %v3765
        %v3900 = vadd.f32 %v3152, %v3767
        %v3901 = vadd.f32 %v3153, %v3769
        %v3902 = vadd.f32 %v3154, %v3771
        %v3903 = vadd.f32 %v3155, %v3775
        %v3904 = vadd.f32 %v3156, %v3777
        %v3905 = vadd.f32 %v3157, %v3779
        %v3906 = vadd.f32 %v3158, %v3781
        %v3907 = vadd.f32 %v3159, %v3785
        %v3908 = vadd.f32 %v3160, %v3787
        %v3909 = vadd.f32 %v3161, %v3789
        %v3910 = vadd.f32 %v3162, %v3791
        %v3911 = vadd.f32 %v3163, %v3795
        %v3912 = vadd.f32 %v3164, %v3797
        %v3913 = vadd.f32 %v3165, %v3799
        %v3914 = vadd.f32 %v3166, %v3801
        %v3915 = vadd.f32 %v3167, %v3805
        %v3916 = vadd.f32 %v3168, %v3807
        %v3917 = vadd.f32 %v3169, %v3809
        %v3918 = vadd.f32 %v3170, %v3811
        %v3919 = vadd.f32 %v3171, %v3815
        %v3920 = vadd.f32 %v3172, %v3817
        %v3921 = vadd.f32 %v3173, %v3819
        %v3922 = vadd.f32 %v3174, %v3821
        %v3923 = vadd.f32 %v3175, %v3825
        %v3924 = vadd.f32 %v3176, %v3827
        %v3925 = vadd.f32 %v3177, %v3829
        %v3926 = vadd.f32 %v3178, %v3831
        %v3927 = vadd.f32 %v3179, %v3835
        %v3928 = vadd.f32 %v3180, %v3837
        %v3929 = vadd.f32 %v3181, %v3839
        %v3930 = vadd.f32 %v3182, %v3841
        %v3931 = vadd.f32 %v3183, %v3845
        %v3932 = vadd.f32 %v3184, %v3847
        %v3933 = vadd.f32 %v3185, %v3849
        %v3934 = vadd.f32 %v3186, %v3851
        %v3935 = vadd.f32 %v3187, %v3855
        %v3936 = vadd.f32 %v3188, %v3857
        %v3937 = vadd.f32 %v3189, %v3859
        %v3938 = vadd.f32 %v3190, %v3861
        %v3939 = vadd.f32 %v3191, %v3865
        %v3940 = vadd.f32 %v3192, %v3867
        %v3941 = vadd.f32 %v3193, %v3869
        %v3942 = vadd.f32 %v3194, %v3871
        %v3943 = vadd.f32 %v3195, %v3875
        %v3944 = vadd.f32 %v3196, %v3877
        %v3945 = vadd.f32 %v3197, %v3879
        %v3946 = vadd.f32 %v3198, %v3881
        %v3947 = vld [vmem:[%s3] sm:$0x3]
        %v3949 = vlaneseq
        %v3950 = vshrl.u32 %v3949, 7
        %v3951 = vsub.s32 0, %v3950
        %v3952 = vrot.slane %v3947, %v3951
        %v3953 = vlaneseq
        %v3954 = vshrl.u32 %v3953, 7
        %v3955 = vsub.s32 1, %v3954
        %v3956 = vrot.slane %v3947, %v3955
        %v3959 = vadd.f32 %v3883, %v3952
        %v3960 = vadd.f32 %v3884, %v3956
        %v3961 = vadd.f32 %v3885, %v3952
        %v3962 = vadd.f32 %v3886, %v3956
        %v3963 = vadd.f32 %v3887, %v3952
        %v3964 = vadd.f32 %v3888, %v3956
        %v3965 = vadd.f32 %v3889, %v3952
        %v3966 = vadd.f32 %v3890, %v3956
        %v3967 = vadd.f32 %v3891, %v3952
        %v3968 = vadd.f32 %v3892, %v3956
        %v3969 = vadd.f32 %v3893, %v3952
        %v3970 = vadd.f32 %v3894, %v3956
        %v3971 = vadd.f32 %v3895, %v3952
        %v3972 = vadd.f32 %v3896, %v3956
        %v3973 = vadd.f32 %v3897, %v3952
        %v3974 = vadd.f32 %v3898, %v3956
        %v3975 = vadd.f32 %v3899, %v3952
        %v3976 = vadd.f32 %v3900, %v3956
        %v3977 = vadd.f32 %v3901, %v3952
        %v3978 = vadd.f32 %v3902, %v3956
        %v3979 = vadd.f32 %v3903, %v3952
        %v3980 = vadd.f32 %v3904, %v3956
        %v3981 = vadd.f32 %v3905, %v3952
        %v3982 = vadd.f32 %v3906, %v3956
        %v3983 = vadd.f32 %v3907, %v3952
        %v3984 = vadd.f32 %v3908, %v3956
        %v3985 = vadd.f32 %v3909, %v3952
        %v3986 = vadd.f32 %v3910, %v3956
        %v3987 = vadd.f32 %v3911, %v3952
        %v3988 = vadd.f32 %v3912, %v3956
        %v3989 = vadd.f32 %v3913, %v3952
        %v3990 = vadd.f32 %v3914, %v3956
        %v3991 = vadd.f32 %v3915, %v3952
        %v3992 = vadd.f32 %v3916, %v3956
        %v3993 = vadd.f32 %v3917, %v3952
        %v3994 = vadd.f32 %v3918, %v3956
        %v3995 = vadd.f32 %v3919, %v3952
        %v3996 = vadd.f32 %v3920, %v3956
        %v3997 = vadd.f32 %v3921, %v3952
        %v3998 = vadd.f32 %v3922, %v3956
        %v3999 = vadd.f32 %v3923, %v3952
        %v4000 = vadd.f32 %v3924, %v3956
        %v4001 = vadd.f32 %v3925, %v3952
        %v4002 = vadd.f32 %v3926, %v3956
        %v4003 = vadd.f32 %v3927, %v3952
        %v4004 = vadd.f32 %v3928, %v3956
        %v4005 = vadd.f32 %v3929, %v3952
        %v4006 = vadd.f32 %v3930, %v3956
        %v4007 = vadd.f32 %v3931, %v3952
        %v4008 = vadd.f32 %v3932, %v3956
        %v4009 = vadd.f32 %v3933, %v3952
        %v4010 = vadd.f32 %v3934, %v3956
        %v4011 = vadd.f32 %v3935, %v3952
        %v4012 = vadd.f32 %v3936, %v3956
        %v4013 = vadd.f32 %v3937, %v3952
        %v4014 = vadd.f32 %v3938, %v3956
        %v4015 = vadd.f32 %v3939, %v3952
        %v4016 = vadd.f32 %v3940, %v3956
        %v4017 = vadd.f32 %v3941, %v3952
        %v4018 = vadd.f32 %v3942, %v3956
        %v4019 = vadd.f32 %v3943, %v3952
        %v4020 = vadd.f32 %v3944, %v3956
        %v4021 = vadd.f32 %v3945, %v3952
        %v4022 = vadd.f32 %v3946, %v3956
        %v4023 = vmax.f32 %v3959, 0.0
        %v4024 = vmax.f32 %v3960, 0.0
        %v4025 = vmax.f32 %v3961, 0.0
        %v4026 = vmax.f32 %v3962, 0.0
        %v4027 = vmax.f32 %v3963, 0.0
        %v4028 = vmax.f32 %v3964, 0.0
        %v4029 = vmax.f32 %v3965, 0.0
        %v4030 = vmax.f32 %v3966, 0.0
        %v4031 = vmax.f32 %v3967, 0.0
        %v4032 = vmax.f32 %v3968, 0.0
        %v4033 = vmax.f32 %v3969, 0.0
        %v4034 = vmax.f32 %v3970, 0.0
        %v4035 = vmax.f32 %v3971, 0.0
        %v4036 = vmax.f32 %v3972, 0.0
        %v4037 = vmax.f32 %v3973, 0.0
        %v4038 = vmax.f32 %v3974, 0.0
        %v4039 = vmax.f32 %v3975, 0.0
        %v4040 = vmax.f32 %v3976, 0.0
        %v4041 = vmax.f32 %v3977, 0.0
        %v4042 = vmax.f32 %v3978, 0.0
        %v4043 = vmax.f32 %v3979, 0.0
        %v4044 = vmax.f32 %v3980, 0.0
        %v4045 = vmax.f32 %v3981, 0.0
        %v4046 = vmax.f32 %v3982, 0.0
        %v4047 = vmax.f32 %v3983, 0.0
        %v4048 = vmax.f32 %v3984, 0.0
        %v4049 = vmax.f32 %v3985, 0.0
        %v4050 = vmax.f32 %v3986, 0.0
        %v4051 = vmax.f32 %v3987, 0.0
        %v4052 = vmax.f32 %v3988, 0.0
        %v4053 = vmax.f32 %v3989, 0.0
        %v4054 = vmax.f32 %v3990, 0.0
        %v4055 = vmax.f32 %v3991, 0.0
        %v4056 = vmax.f32 %v3992, 0.0
        %v4057 = vmax.f32 %v3993, 0.0
        %v4058 = vmax.f32 %v3994, 0.0
        %v4059 = vmax.f32 %v3995, 0.0
        %v4060 = vmax.f32 %v3996, 0.0
        %v4061 = vmax.f32 %v3997, 0.0
        %v4062 = vmax.f32 %v3998, 0.0
        %v4063 = vmax.f32 %v3999, 0.0
        %v4064 = vmax.f32 %v4000, 0.0
        %v4065 = vmax.f32 %v4001, 0.0
        %v4066 = vmax.f32 %v4002, 0.0
        %v4067 = vmax.f32 %v4003, 0.0
        %v4068 = vmax.f32 %v4004, 0.0
        %v4069 = vmax.f32 %v4005, 0.0
        %v4070 = vmax.f32 %v4006, 0.0
        %v4071 = vmax.f32 %v4007, 0.0
        %v4072 = vmax.f32 %v4008, 0.0
        %v4073 = vmax.f32 %v4009, 0.0
        %v4074 = vmax.f32 %v4010, 0.0
        %v4075 = vmax.f32 %v4011, 0.0
        %v4076 = vmax.f32 %v4012, 0.0
        %v4077 = vmax.f32 %v4013, 0.0
        %v4078 = vmax.f32 %v4014, 0.0
        %v4079 = vmax.f32 %v4015, 0.0
        %v4080 = vmax.f32 %v4016, 0.0
        %v4081 = vmax.f32 %v4017, 0.0
        %v4082 = vmax.f32 %v4018, 0.0
        %v4083 = vmax.f32 %v4019, 0.0
        %v4084 = vmax.f32 %v4020, 0.0
        %v4085 = vmax.f32 %v4021, 0.0
        %v4086 = vmax.f32 %v4022, 0.0
        %v4087 = vpack.c.bf16 %v4025, %v4023
        %v4088 = vpack.c.bf16 %v4026, %v4024
        %v4089 = vpack.c.bf16 %v4029, %v4027
        %v4090 = vpack.c.bf16 %v4030, %v4028
        %v4091 = vpack.c.bf16 %v4033, %v4031
        %v4092 = vpack.c.bf16 %v4034, %v4032
        %v4093 = vpack.c.bf16 %v4037, %v4035
        %v4094 = vpack.c.bf16 %v4038, %v4036
        %v4095 = vpack.c.bf16 %v4041, %v4039
        %v4096 = vpack.c.bf16 %v4042, %v4040
        %v4097 = vpack.c.bf16 %v4045, %v4043
        %v4098 = vpack.c.bf16 %v4046, %v4044
        %v4099 = vpack.c.bf16 %v4049, %v4047
        %v4100 = vpack.c.bf16 %v4050, %v4048
        %v4101 = vpack.c.bf16 %v4053, %v4051
        %v4102 = vpack.c.bf16 %v4054, %v4052
        %v4103 = vpack.c.bf16 %v4057, %v4055
        %v4104 = vpack.c.bf16 %v4058, %v4056
        %v4105 = vpack.c.bf16 %v4061, %v4059
        %v4106 = vpack.c.bf16 %v4062, %v4060
        %v4107 = vpack.c.bf16 %v4065, %v4063
        %v4108 = vpack.c.bf16 %v4066, %v4064
        %v4109 = vpack.c.bf16 %v4069, %v4067
        %v4110 = vpack.c.bf16 %v4070, %v4068
        %v4111 = vpack.c.bf16 %v4073, %v4071
        %v4112 = vpack.c.bf16 %v4074, %v4072
        %v4113 = vpack.c.bf16 %v4077, %v4075
        %v4114 = vpack.c.bf16 %v4078, %v4076
        %v4115 = vpack.c.bf16 %v4081, %v4079
        %v4116 = vpack.c.bf16 %v4082, %v4080
        %v4117 = vpack.c.bf16 %v4085, %v4083
        %v4118 = vpack.c.bf16 %v4086, %v4084
        %v4119 = vld [vmem:[%s4] sm:$0xff]
        %v4120 = vld [vmem:[%s4 + $0x8] sm:$0xff]
        %v4121 = vld [vmem:[%s4 + $0x10] sm:$0xff]
        %v4122 = vld [vmem:[%s4 + $0x18] sm:$0xff]
        %v4123 = vld [vmem:[%s4 + $0x20] sm:$0xff]
        %v4124 = vld [vmem:[%s4 + $0x28] sm:$0xff]
        %v4125 = vld [vmem:[%s4 + $0x30] sm:$0xff]
        %v4126 = vld [vmem:[%s4 + $0x38] sm:$0xff]
        %v4127 = vld [vmem:[%s4 + $0x40] sm:$0xff]
        %v4128 = vld [vmem:[%s4 + $0x48] sm:$0xff]
        %v4129 = vld [vmem:[%s4 + $0x50] sm:$0xff]
        %v4130 = vld [vmem:[%s4 + $0x58] sm:$0xff]
        %v4131 = vld [vmem:[%s4 + $0x60] sm:$0xff]
        %v4132 = vld [vmem:[%s4 + $0x68] sm:$0xff]
        %v4147 = vunpack.c.l.b16 %v4119
        %v4148 = vunpack.c.h.b16 %v4119
        %v4149 = vunpack.c.l.b16 %v4120
        %v4150 = vunpack.c.h.b16 %v4120
        %v4151 = vunpack.c.l.b16 %v4121
        %v4152 = vunpack.c.h.b16 %v4121
        %v4153 = vunpack.c.l.b16 %v4122
        %v4154 = vunpack.c.h.b16 %v4122
        %v4155 = vunpack.c.l.b16 %v4123
        %v4156 = vunpack.c.h.b16 %v4123
        %v4157 = vunpack.c.l.b16 %v4124
        %v4158 = vunpack.c.h.b16 %v4124
        %v4159 = vunpack.c.l.b16 %v4125
        %v4160 = vunpack.c.h.b16 %v4125
        %v4161 = vunpack.c.l.b16 %v4126
        %v4162 = vunpack.c.h.b16 %v4126
        %v4163 = vunpack.c.l.b16 %v4127
        %v4164 = vunpack.c.h.b16 %v4127
        %v4165 = vunpack.c.l.b16 %v4128
        %v4166 = vunpack.c.h.b16 %v4128
        %v4167 = vunpack.c.l.b16 %v4129
        %v4168 = vunpack.c.h.b16 %v4129
        %v4169 = vunpack.c.l.b16 %v4130
        %v4170 = vunpack.c.h.b16 %v4130
        %v4171 = vunpack.c.l.b16 %v4131
        %v4172 = vunpack.c.h.b16 %v4131
        %v4173 = vunpack.c.l.b16 %v4132
        %v4174 = vunpack.c.h.b16 %v4132
        %v4175 = vpack.c.b16 %v4149, %v4147
        %v4176 = vpack.c.b16 %v4150, %v4148
        %v4177 = vpack.c.b16 %v4153, %v4151
        %v4178 = vpack.c.b16 %v4154, %v4152
        %v4179 = vpack.c.b16 %v4157, %v4155
        %v4180 = vpack.c.b16 %v4158, %v4156
        %v4181 = vpack.c.b16 %v4161, %v4159
        %v4182 = vpack.c.b16 %v4162, %v4160
        %v4183 = vpack.c.b16 %v4165, %v4163
        %v4184 = vpack.c.b16 %v4166, %v4164
        %v4185 = vpack.c.b16 %v4169, %v4167
        %v4186 = vpack.c.b16 %v4170, %v4168
        %v4187 = vpack.c.b16 %v4173, %v4171
        %v4188 = vpack.c.b16 %v4174, %v4172
        %4203 = vmatprep.subr.bf16.mxu0 %v4088
        %4204 = vmatpush1.bf16.msra.mxu0 %v4087
        %4205 = vmatprep.subr.bf16.mxu0 %v4090
        %4206 = vmatpush1.bf16.msra.mxu0 %v4089
        %4207 = vmatprep.subr.bf16.mxu0 %v4092
        %4208 = vmatpush1.bf16.msra.mxu0 %v4091
        %4209 = vmatprep.subr.bf16.mxu0 %v4094
        %4210 = vmatpush1.bf16.msra.mxu0 %v4093
        %4211 = vmatprep.subr.bf16.mxu0 %v4096
        %4212 = vmatpush1.bf16.msra.mxu0 %v4095
        %4213 = vmatprep.subr.bf16.mxu0 %v4098
        %4214 = vmatpush1.bf16.msra.mxu0 %v4097
        %4215 = vmatprep.subr.bf16.mxu0 %v4100
        %4216 = vmatpush1.bf16.msra.mxu0 %v4099
        %4217 = vmatprep.subr.bf16.mxu0 %v4102
        %4218 = vmatpush1.bf16.msra.mxu0 %v4101
        %4219 = vmatprep.subr.bf16.mxu0 %v4104
        %4220 = vmatpush1.bf16.msra.mxu0 %v4103
        %4221 = vmatprep.subr.bf16.mxu0 %v4106
        %4222 = vmatpush1.bf16.msra.mxu0 %v4105
        %4223 = vmatprep.subr.bf16.mxu0 %v4108
        %4224 = vmatpush1.bf16.msra.mxu0 %v4107
        %4225 = vmatprep.subr.bf16.mxu0 %v4110
        %4226 = vmatpush1.bf16.msra.mxu0 %v4109
        %4227 = vmatprep.subr.bf16.mxu0 %v4112
        %4228 = vmatpush1.bf16.msra.mxu0 %v4111
        %4229 = vmatprep.subr.bf16.mxu0 %v4114
        %4230 = vmatpush1.bf16.msra.mxu0 %v4113
        %4231 = vmatprep.subr.bf16.mxu0 %v4116
        %4232 = vmatpush1.bf16.msra.mxu0 %v4115
        %4233 = vmatprep.subr.bf16.mxu0 %v4118
        %4234 = vmatpush1.bf16.msra.mxu0 %v4117
        %4235 = vmatprep.mubr.bf16.mxu0 %v4176
        %4236 = vmatmul.mubr.bf16.gmra.mrb[0].mxu0 %v4175
        %v4237 = vpop.f32.mrb[0].mxu0
        %v4238 = vadd.f32 0.0, %v4237
        %v4239 = vpop.f32.mrb[0].mxu0
        %v4240 = vadd.f32 0.0, %v4239
        %v4241 = vpop.f32.mrb[0].mxu0
        %v4242 = vadd.f32 0.0, %v4241
        %v4243 = vpop.f32.mrb[0].mxu0
        %v4244 = vadd.f32 0.0, %v4243
        %4245 = vmatprep.mubr.bf16.mxu0 %v4178
        %4246 = vmatmul.mubr.bf16.gmra.mrb[0].mxu0 %v4177
        %v4247 = vpop.f32.mrb[0].mxu0
        %v4248 = vadd.f32 0.0, %v4247
        %v4249 = vpop.f32.mrb[0].mxu0
        %v4250 = vadd.f32 0.0, %v4249
        %v4251 = vpop.f32.mrb[0].mxu0
        %v4252 = vadd.f32 0.0, %v4251
        %v4253 = vpop.f32.mrb[0].mxu0
        %v4254 = vadd.f32 0.0, %v4253
        %4255 = vmatprep.mubr.bf16.mxu0 %v4180
        %4256 = vmatmul.mubr.bf16.gmra.mrb[0].mxu0 %v4179
        %v4257 = vpop.f32.mrb[0].mxu0
        %v4258 = vadd.f32 0.0, %v4257
        %v4259 = vpop.f32.mrb[0].mxu0
        %v4260 = vadd.f32 0.0, %v4259
        %v4261 = vpop.f32.mrb[0].mxu0
        %v4262 = vadd.f32 0.0, %v4261
        %v4263 = vpop.f32.mrb[0].mxu0
        %v4264 = vadd.f32 0.0, %v4263
        %4265 = vmatprep.mubr.bf16.mxu0 %v4182
        %4266 = vmatmul.mubr.bf16.gmra.mrb[0].mxu0 %v4181
        %v4267 = vpop.f32.mrb[0].mxu0
        %v4268 = vadd.f32 0.0, %v4267
        %v4269 = vpop.f32.mrb[0].mxu0
        %v4270 = vadd.f32 0.0, %v4269
        %v4271 = vpop.f32.mrb[0].mxu0
        %v4272 = vadd.f32 0.0, %v4271
        %v4273 = vpop.f32.mrb[0].mxu0
        %v4274 = vadd.f32 0.0, %v4273
        %4275 = vmatprep.mubr.bf16.mxu0 %v4184
        %4276 = vmatmul.mubr.bf16.gmra.mrb[0].mxu0 %v4183
        %v4277 = vpop.f32.mrb[0].mxu0
        %v4278 = vadd.f32 0.0, %v4277
        %v4279 = vpop.f32.mrb[0].mxu0
        %v4280 = vadd.f32 0.0, %v4279
        %v4281 = vpop.f32.mrb[0].mxu0
        %v4282 = vadd.f32 0.0, %v4281
        %v4283 = vpop.f32.mrb[0].mxu0
        %v4284 = vadd.f32 0.0, %v4283
        %4285 = vmatprep.mubr.bf16.mxu0 %v4186
        %4286 = vmatmul.mubr.bf16.gmra.mrb[0].mxu0 %v4185
        %v4287 = vpop.f32.mrb[0].mxu0
        %v4288 = vadd.f32 0.0, %v4287
        %v4289 = vpop.f32.mrb[0].mxu0
        %v4290 = vadd.f32 0.0, %v4289
        %v4291 = vpop.f32.mrb[0].mxu0
        %v4292 = vadd.f32 0.0, %v4291
        %v4293 = vpop.f32.mrb[0].mxu0
        %v4294 = vadd.f32 0.0, %v4293
        %4295 = vmatprep.mubr.bf16.mxu0 %v4188
        %4296 = vmatmul.mubr.bf16.gmra.mrb[0].mxu0 %v4187
        %v4297 = vpop.f32.mrb[0].mxu0
        %v4298 = vadd.f32 0.0, %v4297
        %v4299 = vpop.f32.mrb[0].mxu0
        %v4300 = vadd.f32 0.0, %v4299
        %v4301 = vpop.f32.mrb[0].mxu0
        %v4302 = vadd.f32 0.0, %v4301
        %v4303 = vpop.f32.mrb[0].mxu0
        %v4304 = vadd.f32 0.0, %v4303
        %4305 = vdwg.mxu0
        %v4306 = vld [vmem:[%s5] sm:$0xff]
        %v4307 = vld [vmem:[%s5 + $0x8] sm:$0xff]
        %v4308 = vld [vmem:[%s5 + $0x10] sm:$0xff]
        %v4309 = vld [vmem:[%s5 + $0x18] sm:$0xff]
        %v4310 = vld [vmem:[%s5 + $0x20] sm:$0xff]
        %v4311 = vld [vmem:[%s5 + $0x28] sm:$0xff]
        %v4312 = vld [vmem:[%s5 + $0x30] sm:$0xff]
        %v4313 = vld [vmem:[%s5 + $0x38] sm:$0xff]
        %v4314 = vld [vmem:[%s5 + $0x40] sm:$0xff]
        %v4315 = vld [vmem:[%s5 + $0x48] sm:$0xff]
        %v4316 = vld [vmem:[%s5 + $0x50] sm:$0xff]
        %v4317 = vld [vmem:[%s5 + $0x58] sm:$0xff]
        %v4318 = vld [vmem:[%s5 + $0x60] sm:$0xff]
        %v4319 = vld [vmem:[%s5 + $0x68] sm:$0xff]
        %v4334 = vunpack.c.l.b16 %v4306
        %v4335 = vunpack.c.h.b16 %v4306
        %v4336 = vunpack.c.l.b16 %v4307
        %v4337 = vunpack.c.h.b16 %v4307
        %v4338 = vunpack.c.l.b16 %v4308
        %v4339 = vunpack.c.h.b16 %v4308
        %v4340 = vunpack.c.l.b16 %v4309
        %v4341 = vunpack.c.h.b16 %v4309
        %v4342 = vunpack.c.l.b16 %v4310
        %v4343 = vunpack.c.h.b16 %v4310
        %v4344 = vunpack.c.l.b16 %v4311
        %v4345 = vunpack.c.h.b16 %v4311
        %v4346 = vunpack.c.l.b16 %v4312
        %v4347 = vunpack.c.h.b16 %v4312
        %v4348 = vunpack.c.l.b16 %v4313
        %v4349 = vunpack.c.h.b16 %v4313
        %v4350 = vunpack.c.l.b16 %v4314
        %v4351 = vunpack.c.h.b16 %v4314
        %v4352 = vunpack.c.l.b16 %v4315
        %v4353 = vunpack.c.h.b16 %v4315
        %v4354 = vunpack.c.l.b16 %v4316
        %v4355 = vunpack.c.h.b16 %v4316
        %v4356 = vunpack.c.l.b16 %v4317
        %v4357 = vunpack.c.h.b16 %v4317
        %v4358 = vunpack.c.l.b16 %v4318
        %v4359 = vunpack.c.h.b16 %v4318
        %v4360 = vunpack.c.l.b16 %v4319
        %v4361 = vunpack.c.h.b16 %v4319
        %v4362 = vpack.c.b16 %v4336, %v4334
        %v4363 = vpack.c.b16 %v4337, %v4335
        %v4364 = vpack.c.b16 %v4340, %v4338
        %v4365 = vpack.c.b16 %v4341, %v4339
        %v4366 = vpack.c.b16 %v4344, %v4342
        %v4367 = vpack.c.b16 %v4345, %v4343
        %v4368 = vpack.c.b16 %v4348, %v4346
        %v4369 = vpack.c.b16 %v4349, %v4347
        %v4370 = vpack.c.b16 %v4352, %v4350
        %v4371 = vpack.c.b16 %v4353, %v4351
        %v4372 = vpack.c.b16 %v4356, %v4354
        %v4373 = vpack.c.b16 %v4357, %v4355
        %v4374 = vpack.c.b16 %v4360, %v4358
        %v4375 = vpack.c.b16 %v4361, %v4359
        %4390 = vmatprep.subr.bf16.mxu0 %v4088
        %4391 = vmatpush1.bf16.msra.mxu0 %v4087
        %4392 = vmatprep.subr.bf16.mxu0 %v4090
        %4393 = vmatpush1.bf16.msra.mxu0 %v4089
        %4394 = vmatprep.subr.bf16.mxu0 %v4092
        %4395 = vmatpush1.bf16.msra.mxu0 %v4091
        %4396 = vmatprep.subr.bf16.mxu0 %v4094
        %4397 = vmatpush1.bf16.msra.mxu0 %v4093
        %4398 = vmatprep.subr.bf16.mxu0 %v4096
        %4399 = vmatpush1.bf16.msra.mxu0 %v4095
        %4400 = vmatprep.subr.bf16.mxu0 %v4098
        %4401 = vmatpush1.bf16.msra.mxu0 %v4097
        %4402 = vmatprep.subr.bf16.mxu0 %v4100
        %4403 = vmatpush1.bf16.msra.mxu0 %v4099
        %4404 = vmatprep.subr.bf16.mxu0 %v4102
        %4405 = vmatpush1.bf16.msra.mxu0 %v4101
        %4406 = vmatprep.subr.bf16.mxu0 %v4104
        %4407 = vmatpush1.bf16.msra.mxu0 %v4103
        %4408 = vmatprep.subr.bf16.mxu0 %v4106
        %4409 = vmatpush1.bf16.msra.mxu0 %v4105
        %4410 = vmatprep.subr.bf16.mxu0 %v4108
        %4411 = vmatpush1.bf16.msra.mxu0 %v4107
        %4412 = vmatprep.subr.bf16.mxu0 %v4110
        %4413 = vmatpush1.bf16.msra.mxu0 %v4109
        %4414 = vmatprep.subr.bf16.mxu0 %v4112
        %4415 = vmatpush1.bf16.msra.mxu0 %v4111
        %4416 = vmatprep.subr.bf16.mxu0 %v4114
        %4417 = vmatpush1.bf16.msra.mxu0 %v4113
        %4418 = vmatprep.subr.bf16.mxu0 %v4116
        %4419 = vmatpush1.bf16.msra.mxu0 %v4115
        %4420 = vmatprep.subr.bf16.mxu0 %v4118
        %4421 = vmatpush1.bf16.msra.mxu0 %v4117
        %4422 = vmatprep.mubr.bf16.mxu0 %v4363
        %4423 = vmatmul.mubr.bf16.gmra.mrb[0].mxu0 %v4362
        %v4424 = vpop.f32.mrb[0].mxu0
        %v4425 = vadd.f32 0.0, %v4424
        %v4426 = vpop.f32.mrb[0].mxu0
        %v4427 = vadd.f32 0.0, %v4426
        %v4428 = vpop.f32.mrb[0].mxu0
        %v4429 = vadd.f32 0.0, %v4428
        %v4430 = vpop.f32.mrb[0].mxu0
        %v4431 = vadd.f32 0.0, %v4430
        %4432 = vmatprep.mubr.bf16.mxu0 %v4365
        %4433 = vmatmul.mubr.bf16.gmra.mrb[0].mxu0 %v4364
        %v4434 = vpop.f32.mrb[0].mxu0
        %v4435 = vadd.f32 0.0, %v4434
        %v4436 = vpop.f32.mrb[0].mxu0
        %v4437 = vadd.f32 0.0, %v4436
        %v4438 = vpop.f32.mrb[0].mxu0
        %v4439 = vadd.f32 0.0, %v4438
        %v4440 = vpop.f32.mrb[0].mxu0
        %v4441 = vadd.f32 0.0, %v4440
        %4442 = vmatprep.mubr.bf16.mxu0 %v4367
        %4443 = vmatmul.mubr.bf16.gmra.mrb[0].mxu0 %v4366
        %v4444 = vpop.f32.mrb[0].mxu0
        %v4445 = vadd.f32 0.0, %v4444
        %v4446 = vpop.f32.mrb[0].mxu0
        %v4447 = vadd.f32 0.0, %v4446
        %v4448 = vpop.f32.mrb[0].mxu0
        %v4449 = vadd.f32 0.0, %v4448
        %v4450 = vpop.f32.mrb[0].mxu0
        %v4451 = vadd.f32 0.0, %v4450
        %4452 = vmatprep.mubr.bf16.mxu0 %v4369
        %4453 = vmatmul.mubr.bf16.gmra.mrb[0].mxu0 %v4368
        %v4454 = vpop.f32.mrb[0].mxu0
        %v4455 = vadd.f32 0.0, %v4454
        %v4456 = vpop.f32.mrb[0].mxu0
        %v4457 = vadd.f32 0.0, %v4456
        %v4458 = vpop.f32.mrb[0].mxu0
        %v4459 = vadd.f32 0.0, %v4458
        %v4460 = vpop.f32.mrb[0].mxu0
        %v4461 = vadd.f32 0.0, %v4460
        %4462 = vmatprep.mubr.bf16.mxu0 %v4371
        %4463 = vmatmul.mubr.bf16.gmra.mrb[0].mxu0 %v4370
        %v4464 = vpop.f32.mrb[0].mxu0
        %v4465 = vadd.f32 0.0, %v4464
        %v4466 = vpop.f32.mrb[0].mxu0
        %v4467 = vadd.f32 0.0, %v4466
        %v4468 = vpop.f32.mrb[0].mxu0
        %v4469 = vadd.f32 0.0, %v4468
        %v4470 = vpop.f32.mrb[0].mxu0
        %v4471 = vadd.f32 0.0, %v4470
        %4472 = vmatprep.mubr.bf16.mxu0 %v4373
        %4473 = vmatmul.mubr.bf16.gmra.mrb[0].mxu0 %v4372
        %v4474 = vpop.f32.mrb[0].mxu0
        %v4475 = vadd.f32 0.0, %v4474
        %v4476 = vpop.f32.mrb[0].mxu0
        %v4477 = vadd.f32 0.0, %v4476
        %v4478 = vpop.f32.mrb[0].mxu0
        %v4479 = vadd.f32 0.0, %v4478
        %v4480 = vpop.f32.mrb[0].mxu0
        %v4481 = vadd.f32 0.0, %v4480
        %4482 = vmatprep.mubr.bf16.mxu0 %v4375
        %4483 = vmatmul.mubr.bf16.gmra.mrb[0].mxu0 %v4374
        %v4484 = vpop.f32.mrb[0].mxu0
        %v4485 = vadd.f32 0.0, %v4484
        %v4486 = vpop.f32.mrb[0].mxu0
        %v4487 = vadd.f32 0.0, %v4486
        %v4488 = vpop.f32.mrb[0].mxu0
        %v4489 = vadd.f32 0.0, %v4488
        %v4490 = vpop.f32.mrb[0].mxu0
        %v4491 = vadd.f32 0.0, %v4490
        %4492 = vdwg.mxu0
        %v4493 = vmax.f32 %v4238, %v4425
        %v4494 = vmax.f32 %v4240, %v4427
        %v4495 = vmax.f32 %v4242, %v4429
        %v4496 = vmax.f32 %v4244, %v4431
        %v4497 = vmax.f32 %v4248, %v4435
        %v4498 = vmax.f32 %v4250, %v4437
        %v4499 = vmax.f32 %v4252, %v4439
        %v4500 = vmax.f32 %v4254, %v4441
        %v4501 = vmax.f32 %v4258, %v4445
        %v4502 = vmax.f32 %v4260, %v4447
        %v4503 = vmax.f32 %v4262, %v4449
        %v4504 = vmax.f32 %v4264, %v4451
        %v4505 = vmax.f32 %v4268, %v4455
        %v4506 = vmax.f32 %v4270, %v4457
        %v4507 = vmax.f32 %v4272, %v4459
        %v4508 = vmax.f32 %v4274, %v4461
        %v4509 = vmax.f32 %v4278, %v4465
        %v4510 = vmax.f32 %v4280, %v4467
        %v4511 = vmax.f32 %v4282, %v4469
        %v4512 = vmax.f32 %v4284, %v4471
        %v4513 = vmax.f32 %v4288, %v4475
        %v4514 = vmax.f32 %v4290, %v4477
        %v4515 = vmax.f32 %v4292, %v4479
        %v4516 = vmax.f32 %v4294, %v4481
        %v4517 = vmax.f32 %v4298, %v4485
        %v4518 = vmax.f32 %v4300, %v4487
        %v4519 = vmax.f32 %v4302, %v4489
        %v4520 = vmax.f32 %v4304, %v4491
        %v4521 = vpack.c.bf16 %v4495, %v4493
        %v4522 = vpack.c.bf16 %v4496, %v4494
        %v4523 = vpack.c.bf16 %v4499, %v4497
        %v4524 = vpack.c.bf16 %v4500, %v4498
        %v4525 = vpack.c.bf16 %v4503, %v4501
        %v4526 = vpack.c.bf16 %v4504, %v4502
        %v4527 = vpack.c.bf16 %v4507, %v4505
        %v4528 = vpack.c.bf16 %v4508, %v4506
        %v4529 = vpack.c.bf16 %v4511, %v4509
        %v4530 = vpack.c.bf16 %v4512, %v4510
        %v4531 = vpack.c.bf16 %v4515, %v4513
        %v4532 = vpack.c.bf16 %v4516, %v4514
        %v4533 = vpack.c.bf16 %v4519, %v4517
        %v4534 = vpack.c.bf16 %v4520, %v4518
        %v4535 = vld [vmem:[%s6] sm:$0xf]
        %v4536 = vld [vmem:[%s6 + $0x4] sm:$0xf]
        %v4537 = vld [vmem:[%s6 + $0x8] sm:$0xf]
        %v4538 = vld [vmem:[%s6 + $0xc] sm:$0xf]
        %v4539 = vld [vmem:[%s6 + $0x10] sm:$0xf]
        %v4540 = vld [vmem:[%s6 + $0x14] sm:$0xf]
        %v4541 = vld [vmem:[%s6 + $0x18] sm:$0xf]
        %v4542 = vld [vmem:[%s6 + $0x1c] sm:$0xf]
        %v4543 = vld [vmem:[%s6 + $0x20] sm:$0xf]
        %v4544 = vld [vmem:[%s6 + $0x24] sm:$0xf]
        %v4545 = vld [vmem:[%s6 + $0x28] sm:$0xf]
        %v4546 = vld [vmem:[%s6 + $0x2c] sm:$0xf]
        %v4547 = vld [vmem:[%s6 + $0x30] sm:$0xf]
        %v4548 = vld [vmem:[%s6 + $0x34] sm:$0xf]
        %v4549 = vld [vmem:[%s6 + $0x38] sm:$0xf]
        %v4550 = vld [vmem:[%s6 + $0x3c] sm:$0xf]
        %v4551 = vld [vmem:[%s6 + $0x40] sm:$0xf]
        %v4552 = vld [vmem:[%s6 + $0x44] sm:$0xf]
        %v4553 = vld [vmem:[%s6 + $0x48] sm:$0xf]
        %v4554 = vld [vmem:[%s6 + $0x4c] sm:$0xf]
        %v4555 = vld [vmem:[%s6 + $0x50] sm:$0xf]
        %v4577 = vunpack.c.l.b16 %v4535
        %v4578 = vunpack.c.l.b16 %v4536
        %v4579 = vunpack.c.l.b16 %v4537
        %v4580 = vunpack.c.l.b16 %v4538
        %v4581 = vunpack.c.l.b16 %v4539
        %v4582 = vunpack.c.l.b16 %v4540
        %v4583 = vunpack.c.l.b16 %v4541
        %v4584 = vunpack.c.l.b16 %v4542
        %v4585 = vunpack.c.l.b16 %v4543
        %v4586 = vunpack.c.l.b16 %v4544
        %v4587 = vunpack.c.l.b16 %v4545
        %v4588 = vunpack.c.l.b16 %v4546
        %v4589 = vunpack.c.l.b16 %v4547
        %v4590 = vunpack.c.l.b16 %v4548
        %v4591 = vunpack.c.l.b16 %v4549
        %v4592 = vunpack.c.l.b16 %v4550
        %v4593 = vunpack.c.l.b16 %v4551
        %v4594 = vunpack.c.l.b16 %v4552
        %v4595 = vunpack.c.l.b16 %v4553
        %v4596 = vunpack.c.l.b16 %v4554
        %v4597 = vunpack.c.l.b16 %v4555
        %v4598 = vpack.c.b16 %v4578, %v4577
        %v4599 = vpack.c.b16 %v4580, %v4579
        %v4600 = vpack.c.b16 %v4582, %v4581
        %v4601 = vpack.c.b16 %v4584, %v4583
        %v4602 = vpack.c.b16 %v4586, %v4585
        %v4603 = vpack.c.b16 %v4588, %v4587
        %v4604 = vpack.c.b16 %v4590, %v4589
        %v4605 = vpack.c.b16 %v4592, %v4591
        %v4606 = vpack.c.b16 %v4594, %v4593
        %v4607 = vpack.c.b16 %v4596, %v4595
        %v4608 = vpack.c.b16 %v4597, %v4597
        %vm4619 = vcmask 326656
        %v4621 = vsel %vm4619, %v4522, 0
        %v4624 = vsel %vm4619, %v4524, 0
        %v4627 = vsel %vm4619, %v4526, 0
        %v4630 = vsel %vm4619, %v4528, 0
        %v4633 = vsel %vm4619, %v4530, 0
        %v4636 = vsel %vm4619, %v4532, 0
        %v4639 = vsel %vm4619, %v4534, 0
        %vm4641 = vcmask 1043456
        %v4643 = vsel %vm4641, %v4608, 0
        %4645 = vmatprep.subr.bf16.mxu0 0
        %4646 = vmatpush1.bf16.msra.mxu0 %v4598
        %4647 = vmatprep.subr.bf16.mxu0 0
        %4648 = vmatpush1.bf16.msra.mxu0 %v4599
        %4649 = vmatprep.subr.bf16.mxu0 0
        %4650 = vmatpush1.bf16.msra.mxu0 %v4600
        %4651 = vmatprep.subr.bf16.mxu0 0
        %4652 = vmatpush1.bf16.msra.mxu0 %v4601
        %4653 = vmatprep.subr.bf16.mxu0 0
        %4654 = vmatpush1.bf16.msra.mxu0 %v4602
        %4655 = vmatprep.subr.bf16.mxu0 0
        %4656 = vmatpush1.bf16.msra.mxu0 %v4603
        %4657 = vmatprep.subr.bf16.mxu0 0
        %4658 = vmatpush1.bf16.msra.mxu0 %v4604
        %4659 = vmatprep.subr.bf16.mxu0 0
        %4660 = vmatpush1.bf16.msra.mxu0 %v4605
        %4661 = vmatprep.subr.bf16.mxu0 0
        %4662 = vmatpush1.bf16.msra.mxu0 %v4606
        %4663 = vmatprep.subr.bf16.mxu0 0
        %4664 = vmatpush1.bf16.msra.mxu0 %v4607
        %4665 = vmatprep.subr.bf16.mxu0 0
        %4666 = vmatpush1.bf16.msra.mxu0 %v4643
        %4667 = vmatprep.subr.bf16.mxu0 0
        %4668 = vmatpush1.bf16.msra.mxu0 0
        %4669 = vmatprep.subr.bf16.mxu0 0
        %4670 = vmatpush1.bf16.msra.mxu0 0
        %4671 = vmatprep.subr.bf16.mxu0 0
        %4672 = vmatpush1.bf16.msra.mxu0 0
        %4673 = vmatprep.subr.bf16.mxu0 0
        %4674 = vmatpush1.bf16.msra.mxu0 0
        %4675 = vmatprep.subr.bf16.mxu0 0
        %4676 = vmatpush1.bf16.msra.mxu0 0
        %4677 = vmatprep.mubr.bf16.mxu0 %v4621
        %4678 = vmatmul.mubr.bf16.gmra.mrb[0].mxu0 %v4521
        %v4679 = vpop.f32.mrb[0].mxu0
        %v4680 = vadd.f32 0.0, %v4679
        %v4681 = vpop.f32.mrb[0].mxu0
        %v4682 = vpop.f32.mrb[0].mxu0
        %v4683 = vadd.f32 0.0, %v4682
        %v4684 = vpop.f32.mrb[0].mxu0
        %4685 = vmatprep.mubr.bf16.mxu0 %v4624
        %4686 = vmatmul.mubr.bf16.gmra.mrb[0].mxu0 %v4523
        %v4687 = vpop.f32.mrb[0].mxu0
        %v4688 = vadd.f32 0.0, %v4687
        %v4689 = vpop.f32.mrb[0].mxu0
        %v4690 = vpop.f32.mrb[0].mxu0
        %v4691 = vadd.f32 0.0, %v4690
        %v4692 = vpop.f32.mrb[0].mxu0
        %4693 = vmatprep.mubr.bf16.mxu0 %v4627
        %4694 = vmatmul.mubr.bf16.gmra.mrb[0].mxu0 %v4525
        %v4695 = vpop.f32.mrb[0].mxu0
        %v4696 = vadd.f32 0.0, %v4695
        %v4697 = vpop.f32.mrb[0].mxu0
        %v4698 = vpop.f32.mrb[0].mxu0
        %v4699 = vadd.f32 0.0, %v4698
        %v4700 = vpop.f32.mrb[0].mxu0
        %4701 = vmatprep.mubr.bf16.mxu0 %v4630
        %4702 = vmatmul.mubr.bf16.gmra.mrb[0].mxu0 %v4527
        %v4703 = vpop.f32.mrb[0].mxu0
        %v4704 = vadd.f32 0.0, %v4703
        %v4705 = vpop.f32.mrb[0].mxu0
        %v4706 = vpop.f32.mrb[0].mxu0
        %v4707 = vadd.f32 0.0, %v4706
        %v4708 = vpop.f32.mrb[0].mxu0
        %4709 = vmatprep.mubr.bf16.mxu0 %v4633
        %4710 = vmatmul.mubr.bf16.gmra.mrb[0].mxu0 %v4529
        %v4711 = vpop.f32.mrb[0].mxu0
        %v4712 = vadd.f32 0.0, %v4711
        %v4713 = vpop.f32.mrb[0].mxu0
        %v4714 = vpop.f32.mrb[0].mxu0
        %v4715 = vadd.f32 0.0, %v4714
        %v4716 = vpop.f32.mrb[0].mxu0
        %4717 = vmatprep.mubr.bf16.mxu0 %v4636
        %4718 = vmatmul.mubr.bf16.gmra.mrb[0].mxu0 %v4531
        %v4719 = vpop.f32.mrb[0].mxu0
        %v4720 = vadd.f32 0.0, %v4719
        %v4721 = vpop.f32.mrb[0].mxu0
        %v4722 = vpop.f32.mrb[0].mxu0
        %v4723 = vadd.f32 0.0, %v4722
        %v4724 = vpop.f32.mrb[0].mxu0
        %4725 = vmatprep.mubr.bf16.mxu0 %v4639
        %4726 = vmatmul.mubr.bf16.gmra.mrb[0].mxu0 %v4533
        %v4727 = vpop.f32.mrb[0].mxu0
        %v4728 = vadd.f32 0.0, %v4727
        %v4729 = vpop.f32.mrb[0].mxu0
        %v4730 = vpop.f32.mrb[0].mxu0
        %v4731 = vadd.f32 0.0, %v4730
        %v4732 = vpop.f32.mrb[0].mxu0
        %4733 = vdwg.mxu0
        %v4734 = vld [vmem:[%s7] sm:$0xf]
        %v4735 = vld [vmem:[%s7 + $0x4] sm:$0xf]
        %v4736 = vld [vmem:[%s7 + $0x8] sm:$0xf]
        %v4737 = vld [vmem:[%s7 + $0xc] sm:$0xf]
        %v4738 = vld [vmem:[%s7 + $0x10] sm:$0xf]
        %v4739 = vld [vmem:[%s7 + $0x14] sm:$0xf]
        %v4740 = vld [vmem:[%s7 + $0x18] sm:$0xf]
        %v4741 = vld [vmem:[%s7 + $0x1c] sm:$0xf]
        %v4742 = vld [vmem:[%s7 + $0x20] sm:$0xf]
        %v4743 = vld [vmem:[%s7 + $0x24] sm:$0xf]
        %v4744 = vld [vmem:[%s7 + $0x28] sm:$0xf]
        %v4745 = vld [vmem:[%s7 + $0x2c] sm:$0xf]
        %v4746 = vld [vmem:[%s7 + $0x30] sm:$0xf]
        %v4747 = vld [vmem:[%s7 + $0x34] sm:$0xf]
        %v4748 = vld [vmem:[%s7 + $0x38] sm:$0xf]
        %v4749 = vld [vmem:[%s7 + $0x3c] sm:$0xf]
        %v4750 = vld [vmem:[%s7 + $0x40] sm:$0xf]
        %v4751 = vld [vmem:[%s7 + $0x44] sm:$0xf]
        %v4752 = vld [vmem:[%s7 + $0x48] sm:$0xf]
        %v4753 = vld [vmem:[%s7 + $0x4c] sm:$0xf]
        %v4754 = vld [vmem:[%s7 + $0x50] sm:$0xf]
        %v4776 = vunpack.c.l.b16 %v4734
        %v4777 = vunpack.c.l.b16 %v4735
        %v4778 = vunpack.c.l.b16 %v4736
        %v4779 = vunpack.c.l.b16 %v4737
        %v4780 = vunpack.c.l.b16 %v4738
        %v4781 = vunpack.c.l.b16 %v4739
        %v4782 = vunpack.c.l.b16 %v4740
        %v4783 = vunpack.c.l.b16 %v4741
        %v4784 = vunpack.c.l.b16 %v4742
        %v4785 = vunpack.c.l.b16 %v4743
        %v4786 = vunpack.c.l.b16 %v4744
        %v4787 = vunpack.c.l.b16 %v4745
        %v4788 = vunpack.c.l.b16 %v4746
        %v4789 = vunpack.c.l.b16 %v4747
        %v4790 = vunpack.c.l.b16 %v4748
        %v4791 = vunpack.c.l.b16 %v4749
        %v4792 = vunpack.c.l.b16 %v4750
        %v4793 = vunpack.c.l.b16 %v4751
        %v4794 = vunpack.c.l.b16 %v4752
        %v4795 = vunpack.c.l.b16 %v4753
        %v4796 = vunpack.c.l.b16 %v4754
        %v4797 = vpack.c.b16 %v4777, %v4776
        %v4798 = vpack.c.b16 %v4779, %v4778
        %v4799 = vpack.c.b16 %v4781, %v4780
        %v4800 = vpack.c.b16 %v4783, %v4782
        %v4801 = vpack.c.b16 %v4785, %v4784
        %v4802 = vpack.c.b16 %v4787, %v4786
        %v4803 = vpack.c.b16 %v4789, %v4788
        %v4804 = vpack.c.b16 %v4791, %v4790
        %v4805 = vpack.c.b16 %v4793, %v4792
        %v4806 = vpack.c.b16 %v4795, %v4794
        %v4807 = vpack.c.b16 %v4796, %v4796
        %v4819 = vsel %vm4641, %v4807, 0
        %4821 = vmatprep.subr.bf16.mxu0 0
        %4822 = vmatpush1.bf16.msra.mxu0 %v4797
        %4823 = vmatprep.subr.bf16.mxu0 0
        %4824 = vmatpush1.bf16.msra.mxu0 %v4798
        %4825 = vmatprep.subr.bf16.mxu0 0
        %4826 = vmatpush1.bf16.msra.mxu0 %v4799
        %4827 = vmatprep.subr.bf16.mxu0 0
        %4828 = vmatpush1.bf16.msra.mxu0 %v4800
        %4829 = vmatprep.subr.bf16.mxu0 0
        %4830 = vmatpush1.bf16.msra.mxu0 %v4801
        %4831 = vmatprep.subr.bf16.mxu0 0
        %4832 = vmatpush1.bf16.msra.mxu0 %v4802
        %4833 = vmatprep.subr.bf16.mxu0 0
        %4834 = vmatpush1.bf16.msra.mxu0 %v4803
        %4835 = vmatprep.subr.bf16.mxu0 0
        %4836 = vmatpush1.bf16.msra.mxu0 %v4804
        %4837 = vmatprep.subr.bf16.mxu0 0
        %4838 = vmatpush1.bf16.msra.mxu0 %v4805
        %4839 = vmatprep.subr.bf16.mxu0 0
        %4840 = vmatpush1.bf16.msra.mxu0 %v4806
        %4841 = vmatprep.subr.bf16.mxu0 0
        %4842 = vmatpush1.bf16.msra.mxu0 %v4819
        %4843 = vmatprep.subr.bf16.mxu0 0
        %4844 = vmatpush1.bf16.msra.mxu0 0
        %4845 = vmatprep.subr.bf16.mxu0 0
        %4846 = vmatpush1.bf16.msra.mxu0 0
        %4847 = vmatprep.subr.bf16.mxu0 0
        %4848 = vmatpush1.bf16.msra.mxu0 0
        %4849 = vmatprep.subr.bf16.mxu0 0
        %4850 = vmatpush1.bf16.msra.mxu0 0
        %4851 = vmatprep.subr.bf16.mxu0 0
        %4852 = vmatpush1.bf16.msra.mxu0 0
        %4853 = vmatprep.mubr.bf16.mxu0 %v4621
        %4854 = vmatmul.mubr.bf16.gmra.mrb[0].mxu0 %v4521
        %v4855 = vpop.f32.mrb[0].mxu0
        %v4856 = vadd.f32 0.0, %v4855
        %v4857 = vpop.f32.mrb[0].mxu0
        %v4858 = vpop.f32.mrb[0].mxu0
        %v4859 = vadd.f32 0.0, %v4858
        %v4860 = vpop.f32.mrb[0].mxu0
        %4861 = vmatprep.mubr.bf16.mxu0 %v4624
        %4862 = vmatmul.mubr.bf16.gmra.mrb[0].mxu0 %v4523
        %v4863 = vpop.f32.mrb[0].mxu0
        %v4864 = vadd.f32 0.0, %v4863
        %v4865 = vpop.f32.mrb[0].mxu0
        %v4866 = vpop.f32.mrb[0].mxu0
        %v4867 = vadd.f32 0.0, %v4866
        %v4868 = vpop.f32.mrb[0].mxu0
        %4869 = vmatprep.mubr.bf16.mxu0 %v4627
        %4870 = vmatmul.mubr.bf16.gmra.mrb[0].mxu0 %v4525
        %v4871 = vpop.f32.mrb[0].mxu0
        %v4872 = vadd.f32 0.0, %v4871
        %v4873 = vpop.f32.mrb[0].mxu0
        %v4874 = vpop.f32.mrb[0].mxu0
        %v4875 = vadd.f32 0.0, %v4874
        %v4876 = vpop.f32.mrb[0].mxu0
        %4877 = vmatprep.mubr.bf16.mxu0 %v4630
        %4878 = vmatmul.mubr.bf16.gmra.mrb[0].mxu0 %v4527
        %v4879 = vpop.f32.mrb[0].mxu0
        %v4880 = vadd.f32 0.0, %v4879
        %v4881 = vpop.f32.mrb[0].mxu0
        %v4882 = vpop.f32.mrb[0].mxu0
        %v4883 = vadd.f32 0.0, %v4882
        %v4884 = vpop.f32.mrb[0].mxu0
        %4885 = vmatprep.mubr.bf16.mxu0 %v4633
        %4886 = vmatmul.mubr.bf16.gmra.mrb[0].mxu0 %v4529
        %v4887 = vpop.f32.mrb[0].mxu0
        %v4888 = vadd.f32 0.0, %v4887
        %v4889 = vpop.f32.mrb[0].mxu0
        %v4890 = vpop.f32.mrb[0].mxu0
        %v4891 = vadd.f32 0.0, %v4890
        %v4892 = vpop.f32.mrb[0].mxu0
        %4893 = vmatprep.mubr.bf16.mxu0 %v4636
        %4894 = vmatmul.mubr.bf16.gmra.mrb[0].mxu0 %v4531
        %v4895 = vpop.f32.mrb[0].mxu0
        %v4896 = vadd.f32 0.0, %v4895
        %v4897 = vpop.f32.mrb[0].mxu0
        %v4898 = vpop.f32.mrb[0].mxu0
        %v4899 = vadd.f32 0.0, %v4898
        %v4900 = vpop.f32.mrb[0].mxu0
        %4901 = vmatprep.mubr.bf16.mxu0 %v4639
        %4902 = vmatmul.mubr.bf16.gmra.mrb[0].mxu0 %v4533
        %v4903 = vpop.f32.mrb[0].mxu0
        %v4904 = vadd.f32 0.0, %v4903
        %v4905 = vpop.f32.mrb[0].mxu0
        %v4906 = vpop.f32.mrb[0].mxu0
        %v4907 = vadd.f32 0.0, %v4906
        %v4908 = vpop.f32.mrb[0].mxu0
        %4909 = vdwg.mxu0
        %v4910 = vmax.f32 %v4680, %v4856
        %v4911 = vmax.f32 %v4683, %v4859
        %v4912 = vmax.f32 %v4688, %v4864
        %v4913 = vmax.f32 %v4691, %v4867
        %v4914 = vmax.f32 %v4696, %v4872
        %v4915 = vmax.f32 %v4699, %v4875
        %v4916 = vmax.f32 %v4704, %v4880
        %v4917 = vmax.f32 %v4707, %v4883
        %v4918 = vmax.f32 %v4712, %v4888
        %v4919 = vmax.f32 %v4715, %v4891
        %v4920 = vmax.f32 %v4720, %v4896
        %v4921 = vmax.f32 %v4723, %v4899
        %v4922 = vmax.f32 %v4728, %v4904
        %v4923 = vmax.f32 %v4731, %v4907
        %v4924 = vpack.c.bf16 %v4911, %v4910
        %v4925 = vpack.c.bf16 %v4913, %v4912
        %v4926 = vpack.c.bf16 %v4915, %v4914
        %v4927 = vpack.c.bf16 %v4917, %v4916
        %v4928 = vpack.c.bf16 %v4919, %v4918
        %v4929 = vpack.c.bf16 %v4921, %v4920
        %v4930 = vpack.c.bf16 %v4923, %v4922
        %v4931 = vld [vmem:[%s9] sm:$0xff]
        %v4932 = vld [vmem:[%s9 + $0x8] sm:$0xff]
        %v4933 = vld [vmem:[%s9 + $0x10] sm:$0xff]
        %v4934 = vld [vmem:[%s9 + $0x18] sm:$0xff]
        %v4935 = vld [vmem:[%s9 + $0x20] sm:$0xff]
        %v4936 = vld [vmem:[%s9 + $0x28] sm:$0xff]
        %v4937 = vld [vmem:[%s9 + $0x30] sm:$0xff]
        %v4938 = vld [vmem:[%s9 + $0x38] sm:$0xff]
        %v4939 = vld [vmem:[%s9 + $0x40] sm:$0xff]
        %v4940 = vld [vmem:[%s9 + $0x48] sm:$0xff]
        %v4941 = vld [vmem:[%s9 + $0x50] sm:$0x33]
        %v4942 = vld [vmem:[%s8] sm:$0xf]
        %v4943 = vld [vmem:[%s8 + $0x4] sm:$0xf]
        %v4944 = vld [vmem:[%s8 + $0x8] sm:$0xf]
        %v4945 = vld [vmem:[%s8 + $0xc] sm:$0xf]
        %v4946 = vld [vmem:[%s8 + $0x10] sm:$0xf]
        %v4947 = vld [vmem:[%s8 + $0x14] sm:$0xf]
        %v4948 = vld [vmem:[%s8 + $0x18] sm:$0xf]
        %v4949 = vld [vmem:[%s8 + $0x1c] sm:$0xf]
        %v4950 = vld [vmem:[%s8 + $0x20] sm:$0xf]
        %v4951 = vld [vmem:[%s8 + $0x24] sm:$0xf]
        %v4952 = vld [vmem:[%s8 + $0x28] sm:$0xf]
        %v4953 = vld [vmem:[%s8 + $0x2c] sm:$0xf]
        %v4954 = vld [vmem:[%s8 + $0x30] sm:$0xf]
        %v4955 = vld [vmem:[%s8 + $0x34] sm:$0xf]
        %v4970 = vunpack.c.l.b16 %v4942
        %v4971 = vunpack.c.l.b16 %v4943
        %v4972 = vunpack.c.l.b16 %v4944
        %v4973 = vunpack.c.l.b16 %v4945
        %v4974 = vunpack.c.l.b16 %v4946
        %v4975 = vunpack.c.l.b16 %v4947
        %v4976 = vunpack.c.l.b16 %v4948
        %v4977 = vunpack.c.l.b16 %v4949
        %v4978 = vunpack.c.l.b16 %v4950
        %v4979 = vunpack.c.l.b16 %v4951
        %v4980 = vunpack.c.l.b16 %v4952
        %v4981 = vunpack.c.l.b16 %v4953
        %v4982 = vunpack.c.l.b16 %v4954
        %v4983 = vunpack.c.l.b16 %v4955
        %v4984 = vpack.c.b16 %v4971, %v4970
        %v4985 = vpack.c.b16 %v4973, %v4972
        %v4986 = vpack.c.b16 %v4975, %v4974
        %v4987 = vpack.c.b16 %v4977, %v4976
        %v4988 = vpack.c.b16 %v4979, %v4978
        %v4989 = vpack.c.b16 %v4981, %v4980
        %v4990 = vpack.c.b16 %v4983, %v4982
        %vm4991 = vcmask 916480
        %v4993 = vsel %vm4991, %v4984, 0
        %v4996 = vsel %vm4991, %v4985, 0
        %v4999 = vsel %vm4991, %v4986, 0
        %v5002 = vsel %vm4991, %v4987, 0
        %v5005 = vsel %vm4991, %v4988, 0
        %v5008 = vsel %vm4991, %v4989, 0
        %v5011 = vsel %vm4991, %v4990, 0
        %5013 = vmatprep.subr.bf16.mxu0 0
        %5014 = vmatpush1.bf16.msra.mxu0 %v4924
        %5015 = vmatprep.subr.bf16.mxu0 0
        %5016 = vmatpush1.bf16.msra.mxu0 %v4925
        %5017 = vmatprep.subr.bf16.mxu0 0
        %5018 = vmatpush1.bf16.msra.mxu0 %v4926
        %5019 = vmatprep.subr.bf16.mxu0 0
        %5020 = vmatpush1.bf16.msra.mxu0 %v4927
        %5021 = vmatprep.subr.bf16.mxu0 0
        %5022 = vmatpush1.bf16.msra.mxu0 %v4928
        %5023 = vmatprep.subr.bf16.mxu0 0
        %5024 = vmatpush1.bf16.msra.mxu0 %v4929
        %5025 = vmatprep.subr.bf16.mxu0 0
        %5026 = vmatpush1.bf16.msra.mxu0 %v4930
        %5027 = vmatprep.subr.bf16.mxu0 0
        %5028 = vmatpush1.bf16.msra.mxu0 0
        %5029 = vmatprep.subr.bf16.mxu0 0
        %5030 = vmatpush1.bf16.msra.mxu0 0
        %5031 = vmatprep.subr.bf16.mxu0 0
        %5032 = vmatpush1.bf16.msra.mxu0 0
        %5033 = vmatprep.subr.bf16.mxu0 0
        %5034 = vmatpush1.bf16.msra.mxu0 0
        %5035 = vmatprep.subr.bf16.mxu0 0
        %5036 = vmatpush1.bf16.msra.mxu0 0
        %5037 = vmatprep.subr.bf16.mxu0 0
        %5038 = vmatpush1.bf16.msra.mxu0 0
        %5039 = vmatprep.subr.bf16.mxu0 0
        %5040 = vmatpush1.bf16.msra.mxu0 0
        %5041 = vmatprep.subr.bf16.mxu0 0
        %5042 = vmatpush1.bf16.msra.mxu0 0
        %5043 = vmatprep.subr.bf16.mxu0 0
        %5044 = vmatpush1.bf16.msra.mxu0 0
        %5045 = vmatprep.mubr.bf16.mxu0 0
        %5046 = vmatmul.mubr.bf16.gmra.mrb[0].mxu0 %v4993
        %v5047 = vpop.f32.mrb[0].mxu0
        %v5048 = vadd.f32 0.0, %v5047
        %v5049 = vpop.f32.mrb[0].mxu0
        %v5050 = vpop.f32.mrb[0].mxu0
        %v5051 = vadd.f32 0.0, %v5050
        %v5052 = vpop.f32.mrb[0].mxu0
        %5053 = vmatprep.mubr.bf16.mxu0 0
        %5054 = vmatmul.mubr.bf16.gmra.mrb[0].mxu0 %v4996
        %v5055 = vpop.f32.mrb[0].mxu0
        %v5056 = vadd.f32 0.0, %v5055
        %v5057 = vpop.f32.mrb[0].mxu0
        %v5058 = vpop.f32.mrb[0].mxu0
        %v5059 = vadd.f32 0.0, %v5058
        %v5060 = vpop.f32.mrb[0].mxu0
        %5061 = vmatprep.mubr.bf16.mxu0 0
        %5062 = vmatmul.mubr.bf16.gmra.mrb[0].mxu0 %v4999
        %v5063 = vpop.f32.mrb[0].mxu0
        %v5064 = vadd.f32 0.0, %v5063
        %v5065 = vpop.f32.mrb[0].mxu0
        %v5066 = vpop.f32.mrb[0].mxu0
        %v5067 = vadd.f32 0.0, %v5066
        %v5068 = vpop.f32.mrb[0].mxu0
        %5069 = vmatprep.mubr.bf16.mxu0 0
        %5070 = vmatmul.mubr.bf16.gmra.mrb[0].mxu0 %v5002
        %v5071 = vpop.f32.mrb[0].mxu0
        %v5072 = vadd.f32 0.0, %v5071
        %v5073 = vpop.f32.mrb[0].mxu0
        %v5074 = vpop.f32.mrb[0].mxu0
        %v5075 = vadd.f32 0.0, %v5074
        %v5076 = vpop.f32.mrb[0].mxu0
        %5077 = vmatprep.mubr.bf16.mxu0 0
        %5078 = vmatmul.mubr.bf16.gmra.mrb[0].mxu0 %v5005
        %v5079 = vpop.f32.mrb[0].mxu0
        %v5080 = vadd.f32 0.0, %v5079
        %v5081 = vpop.f32.mrb[0].mxu0
        %v5082 = vpop.f32.mrb[0].mxu0
        %v5083 = vadd.f32 0.0, %v5082
        %v5084 = vpop.f32.mrb[0].mxu0
        %5085 = vmatprep.mubr.bf16.mxu0 0
        %5086 = vmatmul.mubr.bf16.gmra.mrb[0].mxu0 %v5008
        %v5087 = vpop.f32.mrb[0].mxu0
        %v5088 = vadd.f32 0.0, %v5087
        %v5089 = vpop.f32.mrb[0].mxu0
        %v5090 = vpop.f32.mrb[0].mxu0
        %v5091 = vadd.f32 0.0, %v5090
        %v5092 = vpop.f32.mrb[0].mxu0
        %5093 = vmatprep.mubr.bf16.mxu0 0
        %5094 = vmatmul.mubr.bf16.gmra.mrb[0].mxu0 %v5011
        %v5095 = vpop.f32.mrb[0].mxu0
        %v5096 = vadd.f32 0.0, %v5095
        %v5097 = vpop.f32.mrb[0].mxu0
        %v5098 = vpop.f32.mrb[0].mxu0
        %v5099 = vadd.f32 0.0, %v5098
        %v5100 = vpop.f32.mrb[0].mxu0
        %5101 = vdwg.mxu0
        %v5102 = vpack.c.bf16 %v5051, %v5048
        %v5103 = vpack.c.bf16 %v5059, %v5056
        %v5104 = vpack.c.bf16 %v5067, %v5064
        %v5105 = vpack.c.bf16 %v5075, %v5072
        %v5106 = vpack.c.bf16 %v5083, %v5080
        %v5107 = vpack.c.bf16 %v5091, %v5088
        %v5108 = vpack.c.bf16 %v5099, %v5096
        %s5109 = scalar_lea.vmem %s9, 88
        %v5110 = vld [vmem:[%s5109] sm:$0xff]
        %v5111 = vld [vmem:[%s5109 + $0x8] sm:$0xff]
        %v5112 = vld [vmem:[%s5109 + $0x10] sm:$0xff]
        %v5113 = vld [vmem:[%s5109 + $0x18] sm:$0xff]
        %v5114 = vld [vmem:[%s5109 + $0x20] sm:$0xff]
        %v5115 = vld [vmem:[%s5109 + $0x28] sm:$0xff]
        %v5116 = vld [vmem:[%s5109 + $0x30] sm:$0xff]
        %v5117 = vld [vmem:[%s5109 + $0x38] sm:$0xff]
        %v5118 = vld [vmem:[%s5109 + $0x40] sm:$0xff]
        %v5119 = vld [vmem:[%s5109 + $0x48] sm:$0xff]
        %v5120 = vld [vmem:[%s5109 + $0x50] sm:$0x33]
        %v5132 = vunpack.c.l.b16 %v5110
        %v5133 = vunpack.c.h.b16 %v5110
        %v5134 = vunpack.c.l.b16 %v5111
        %v5135 = vunpack.c.h.b16 %v5111
        %v5136 = vunpack.c.l.b16 %v5112
        %v5137 = vunpack.c.h.b16 %v5112
        %v5138 = vunpack.c.l.b16 %v5113
        %v5139 = vunpack.c.h.b16 %v5113
        %v5140 = vunpack.c.l.b16 %v5114
        %v5141 = vunpack.c.h.b16 %v5114
        %v5142 = vunpack.c.l.b16 %v5115
        %v5143 = vunpack.c.h.b16 %v5115
        %v5144 = vunpack.c.l.b16 %v5116
        %v5145 = vunpack.c.h.b16 %v5116
        %v5146 = vunpack.c.l.b16 %v5117
        %v5147 = vunpack.c.h.b16 %v5117
        %v5148 = vunpack.c.l.b16 %v5118
        %v5149 = vunpack.c.h.b16 %v5118
        %v5150 = vunpack.c.l.b16 %v5119
        %v5151 = vunpack.c.h.b16 %v5119
        %v5152 = vunpack.c.l.b16 %v5120
        %v5153 = vunpack.c.h.b16 %v5120
        %v5154 = vpack.c.b16 %v5134, %v5132
        %v5155 = vpack.c.b16 %v5135, %v5133
        %v5156 = vpack.c.b16 %v5138, %v5136
        %v5157 = vpack.c.b16 %v5139, %v5137
        %v5158 = vpack.c.b16 %v5142, %v5140
        %v5159 = vpack.c.b16 %v5143, %v5141
        %v5160 = vpack.c.b16 %v5146, %v5144
        %v5161 = vpack.c.b16 %v5147, %v5145
        %v5162 = vpack.c.b16 %v5150, %v5148
        %v5163 = vpack.c.b16 %v5151, %v5149
        %v5164 = vpack.c.b16 %v5152, %v5152
        %v5165 = vpack.c.b16 %v5153, %v5153
        %vm5176 = vcmask 687104
        %v5178 = vsel %vm5176, %v5102, 0
        %v5181 = vsel %vm5176, %v5103, 0
        %v5184 = vsel %vm5176, %v5104, 0
        %v5187 = vsel %vm5176, %v5105, 0
        %v5190 = vsel %vm5176, %v5106, 0
        %v5193 = vsel %vm5176, %v5107, 0
        %v5196 = vsel %vm5176, %v5108, 0
        %vm5198 = vcmask 1041408
        %v5200 = vsel %vm5198, %v5164, 0
        %v5203 = vsel %vm5198, %v5165, 0
        %5205 = vmatprep.subr.bf16.mxu0 %v5155
        %5206 = vmatpush1.bf16.msra.mxu0 %v5154
        %5207 = vmatprep.subr.bf16.mxu0 %v5157
        %5208 = vmatpush1.bf16.msra.mxu0 %v5156
        %5209 = vmatprep.subr.bf16.mxu0 %v5159
        %5210 = vmatpush1.bf16.msra.mxu0 %v5158
        %5211 = vmatprep.subr.bf16.mxu0 %v5161
        %5212 = vmatpush1.bf16.msra.mxu0 %v5160
        %5213 = vmatprep.subr.bf16.mxu0 %v5163
        %5214 = vmatpush1.bf16.msra.mxu0 %v5162
        %5215 = vmatprep.subr.bf16.mxu0 %v5203
        %5216 = vmatpush1.bf16.msra.mxu0 %v5200
        %5217 = vmatprep.subr.bf16.mxu0 0
        %5218 = vmatpush1.bf16.msra.mxu0 0
        %5219 = vmatprep.subr.bf16.mxu0 0
        %5220 = vmatpush1.bf16.msra.mxu0 0
        %5221 = vmatprep.subr.bf16.mxu0 0
        %5222 = vmatpush1.bf16.msra.mxu0 0
        %5223 = vmatprep.subr.bf16.mxu0 0
        %5224 = vmatpush1.bf16.msra.mxu0 0
        %5225 = vmatprep.subr.bf16.mxu0 0
        %5226 = vmatpush1.bf16.msra.mxu0 0
        %5227 = vmatprep.subr.bf16.mxu0 0
        %5228 = vmatpush1.bf16.msra.mxu0 0
        %5229 = vmatprep.subr.bf16.mxu0 0
        %5230 = vmatpush1.bf16.msra.mxu0 0
        %5231 = vmatprep.subr.bf16.mxu0 0
        %5232 = vmatpush1.bf16.msra.mxu0 0
        %5233 = vmatprep.subr.bf16.mxu0 0
        %5234 = vmatpush1.bf16.msra.mxu0 0
        %5235 = vmatprep.subr.bf16.mxu0 0
        %5236 = vmatpush1.bf16.msra.mxu0 0
        %5237 = vmatprep.mubr.bf16.mxu0 0
        %5238 = vmatmul.mubr.bf16.gmra.mrb[0].mxu0 %v5178
        %v5239 = vpop.f32.mrb[0].mxu0
        %v5240 = vadd.f32 0.0, %v5239
        %v5241 = vpop.f32.mrb[0].mxu0
        %v5242 = vadd.f32 0.0, %v5241
        %v5243 = vpop.f32.mrb[0].mxu0
        %v5244 = vadd.f32 0.0, %v5243
        %v5245 = vpop.f32.mrb[0].mxu0
        %v5246 = vadd.f32 0.0, %v5245
        %5247 = vmatprep.mubr.bf16.mxu0 0
        %5248 = vmatmul.mubr.bf16.gmra.mrb[0].mxu0 %v5181
        %v5249 = vpop.f32.mrb[0].mxu0
        %v5250 = vadd.f32 0.0, %v5249
        %v5251 = vpop.f32.mrb[0].mxu0
        %v5252 = vadd.f32 0.0, %v5251
        %v5253 = vpop.f32.mrb[0].mxu0
        %v5254 = vadd.f32 0.0, %v5253
        %v5255 = vpop.f32.mrb[0].mxu0
        %v5256 = vadd.f32 0.0, %v5255
        %5257 = vmatprep.mubr.bf16.mxu0 0
        %5258 = vmatmul.mubr.bf16.gmra.mrb[0].mxu0 %v5184
        %v5259 = vpop.f32.mrb[0].mxu0
        %v5260 = vadd.f32 0.0, %v5259
        %v5261 = vpop.f32.mrb[0].mxu0
        %v5262 = vadd.f32 0.0, %v5261
        %v5263 = vpop.f32.mrb[0].mxu0
        %v5264 = vadd.f32 0.0, %v5263
        %v5265 = vpop.f32.mrb[0].mxu0
        %v5266 = vadd.f32 0.0, %v5265
        %5267 = vmatprep.mubr.bf16.mxu0 0
        %5268 = vmatmul.mubr.bf16.gmra.mrb[0].mxu0 %v5187
        %v5269 = vpop.f32.mrb[0].mxu0
        %v5270 = vadd.f32 0.0, %v5269
        %v5271 = vpop.f32.mrb[0].mxu0
        %v5272 = vadd.f32 0.0, %v5271
        %v5273 = vpop.f32.mrb[0].mxu0
        %v5274 = vadd.f32 0.0, %v5273
        %v5275 = vpop.f32.mrb[0].mxu0
        %v5276 = vadd.f32 0.0, %v5275
        %5277 = vmatprep.mubr.bf16.mxu0 0
        %5278 = vmatmul.mubr.bf16.gmra.mrb[0].mxu0 %v5190
        %v5279 = vpop.f32.mrb[0].mxu0
        %v5280 = vadd.f32 0.0, %v5279
        %v5281 = vpop.f32.mrb[0].mxu0
        %v5282 = vadd.f32 0.0, %v5281
        %v5283 = vpop.f32.mrb[0].mxu0
        %v5284 = vadd.f32 0.0, %v5283
        %v5285 = vpop.f32.mrb[0].mxu0
        %v5286 = vadd.f32 0.0, %v5285
        %5287 = vmatprep.mubr.bf16.mxu0 0
        %5288 = vmatmul.mubr.bf16.gmra.mrb[0].mxu0 %v5193
        %v5289 = vpop.f32.mrb[0].mxu0
        %v5290 = vadd.f32 0.0, %v5289
        %v5291 = vpop.f32.mrb[0].mxu0
        %v5292 = vadd.f32 0.0, %v5291
        %v5293 = vpop.f32.mrb[0].mxu0
        %v5294 = vadd.f32 0.0, %v5293
        %v5295 = vpop.f32.mrb[0].mxu0
        %v5296 = vadd.f32 0.0, %v5295
        %5297 = vmatprep.mubr.bf16.mxu0 0
        %5298 = vmatmul.mubr.bf16.gmra.mrb[0].mxu0 %v5196
        %v5299 = vpop.f32.mrb[0].mxu0
        %v5300 = vadd.f32 0.0, %v5299
        %v5301 = vpop.f32.mrb[0].mxu0
        %v5302 = vadd.f32 0.0, %v5301
        %v5303 = vpop.f32.mrb[0].mxu0
        %v5304 = vadd.f32 0.0, %v5303
        %v5305 = vpop.f32.mrb[0].mxu0
        %v5306 = vadd.f32 0.0, %v5305
        %5307 = vdwg.mxu0
        %v5319 = vunpack.c.l.b16 %v4931
        %v5320 = vunpack.c.h.b16 %v4931
        %v5321 = vunpack.c.l.b16 %v4932
        %v5322 = vunpack.c.h.b16 %v4932
        %v5323 = vunpack.c.l.b16 %v4933
        %v5324 = vunpack.c.h.b16 %v4933
        %v5325 = vunpack.c.l.b16 %v4934
        %v5326 = vunpack.c.h.b16 %v4934
        %v5327 = vunpack.c.l.b16 %v4935
        %v5328 = vunpack.c.h.b16 %v4935
        %v5329 = vunpack.c.l.b16 %v4936
        %v5330 = vunpack.c.h.b16 %v4936
        %v5331 = vunpack.c.l.b16 %v4937
        %v5332 = vunpack.c.h.b16 %v4937
        %v5333 = vunpack.c.l.b16 %v4938
        %v5334 = vunpack.c.h.b16 %v4938
        %v5335 = vunpack.c.l.b16 %v4939
        %v5336 = vunpack.c.h.b16 %v4939
        %v5337 = vunpack.c.l.b16 %v4940
        %v5338 = vunpack.c.h.b16 %v4940
        %v5339 = vunpack.c.l.b16 %v4941
        %v5340 = vunpack.c.h.b16 %v4941
        %v5341 = vpack.c.b16 %v5321, %v5319
        %v5342 = vpack.c.b16 %v5322, %v5320
        %v5343 = vpack.c.b16 %v5325, %v5323
        %v5344 = vpack.c.b16 %v5326, %v5324
        %v5345 = vpack.c.b16 %v5329, %v5327
        %v5346 = vpack.c.b16 %v5330, %v5328
        %v5347 = vpack.c.b16 %v5333, %v5331
        %v5348 = vpack.c.b16 %v5334, %v5332
        %v5349 = vpack.c.b16 %v5337, %v5335
        %v5350 = vpack.c.b16 %v5338, %v5336
        %v5351 = vpack.c.b16 %v5339, %v5339
        %v5352 = vpack.c.b16 %v5340, %v5340
        %v5364 = vsel %vm5176, %v4924, 0
        %v5367 = vsel %vm5176, %v4925, 0
        %v5370 = vsel %vm5176, %v4926, 0
        %v5373 = vsel %vm5176, %v4927, 0
        %v5376 = vsel %vm5176, %v4928, 0
        %v5379 = vsel %vm5176, %v4929, 0
        %v5382 = vsel %vm5176, %v4930, 0
        %v5385 = vsel %vm5198, %v5351, 0
        %v5388 = vsel %vm5198, %v5352, 0
        %5390 = vmatprep.subr.bf16.mxu0 %v5342
        %5391 = vmatpush1.bf16.msra.mxu0 %v5341
        %5392 = vmatprep.subr.bf16.mxu0 %v5344
        %5393 = vmatpush1.bf16.msra.mxu0 %v5343
        %5394 = vmatprep.subr.bf16.mxu0 %v5346
        %5395 = vmatpush1.bf16.msra.mxu0 %v5345
        %5396 = vmatprep.subr.bf16.mxu0 %v5348
        %5397 = vmatpush1.bf16.msra.mxu0 %v5347
        %5398 = vmatprep.subr.bf16.mxu0 %v5350
        %5399 = vmatpush1.bf16.msra.mxu0 %v5349
        %5400 = vmatprep.subr.bf16.mxu0 %v5388
        %5401 = vmatpush1.bf16.msra.mxu0 %v5385
        %5402 = vmatprep.subr.bf16.mxu0 0
        %5403 = vmatpush1.bf16.msra.mxu0 0
        %5404 = vmatprep.subr.bf16.mxu0 0
        %5405 = vmatpush1.bf16.msra.mxu0 0
        %5406 = vmatprep.subr.bf16.mxu0 0
        %5407 = vmatpush1.bf16.msra.mxu0 0
        %5408 = vmatprep.subr.bf16.mxu0 0
        %5409 = vmatpush1.bf16.msra.mxu0 0
        %5410 = vmatprep.subr.bf16.mxu0 0
        %5411 = vmatpush1.bf16.msra.mxu0 0
        %5412 = vmatprep.subr.bf16.mxu0 0
        %5413 = vmatpush1.bf16.msra.mxu0 0
        %5414 = vmatprep.subr.bf16.mxu0 0
        %5415 = vmatpush1.bf16.msra.mxu0 0
        %5416 = vmatprep.subr.bf16.mxu0 0
        %5417 = vmatpush1.bf16.msra.mxu0 0
        %5418 = vmatprep.subr.bf16.mxu0 0
        %5419 = vmatpush1.bf16.msra.mxu0 0
        %5420 = vmatprep.subr.bf16.mxu0 0
        %5421 = vmatpush1.bf16.msra.mxu0 0
        %5422 = vmatprep.mubr.bf16.mxu0 0
        %5423 = vmatmul.mubr.bf16.gmra.mrb[0].mxu0 %v5364
        %v5424 = vpop.f32.mrb[0].mxu0
        %v5425 = vadd.f32 %v5240, %v5424
        %v5426 = vpop.f32.mrb[0].mxu0
        %v5427 = vadd.f32 %v5242, %v5426
        %v5428 = vpop.f32.mrb[0].mxu0
        %v5429 = vadd.f32 %v5244, %v5428
        %v5430 = vpop.f32.mrb[0].mxu0
        %v5431 = vadd.f32 %v5246, %v5430
        %5432 = vmatprep.mubr.bf16.mxu0 0
        %5433 = vmatmul.mubr.bf16.gmra.mrb[0].mxu0 %v5367
        %v5434 = vpop.f32.mrb[0].mxu0
        %v5435 = vadd.f32 %v5250, %v5434
        %v5436 = vpop.f32.mrb[0].mxu0
        %v5437 = vadd.f32 %v5252, %v5436
        %v5438 = vpop.f32.mrb[0].mxu0
        %v5439 = vadd.f32 %v5254, %v5438
        %v5440 = vpop.f32.mrb[0].mxu0
        %v5441 = vadd.f32 %v5256, %v5440
        %5442 = vmatprep.mubr.bf16.mxu0 0
        %5443 = vmatmul.mubr.bf16.gmra.mrb[0].mxu0 %v5370
        %v5444 = vpop.f32.mrb[0].mxu0
        %v5445 = vadd.f32 %v5260, %v5444
        %v5446 = vpop.f32.mrb[0].mxu0
        %v5447 = vadd.f32 %v5262, %v5446
        %v5448 = vpop.f32.mrb[0].mxu0
        %v5449 = vadd.f32 %v5264, %v5448
        %v5450 = vpop.f32.mrb[0].mxu0
        %v5451 = vadd.f32 %v5266, %v5450
        %5452 = vmatprep.mubr.bf16.mxu0 0
        %5453 = vmatmul.mubr.bf16.gmra.mrb[0].mxu0 %v5373
        %v5454 = vpop.f32.mrb[0].mxu0
        %v5455 = vadd.f32 %v5270, %v5454
        %v5456 = vpop.f32.mrb[0].mxu0
        %v5457 = vadd.f32 %v5272, %v5456
        %v5458 = vpop.f32.mrb[0].mxu0
        %v5459 = vadd.f32 %v5274, %v5458
        %v5460 = vpop.f32.mrb[0].mxu0
        %v5461 = vadd.f32 %v5276, %v5460
        %5462 = vmatprep.mubr.bf16.mxu0 0
        %5463 = vmatmul.mubr.bf16.gmra.mrb[0].mxu0 %v5376
        %v5464 = vpop.f32.mrb[0].mxu0
        %v5465 = vadd.f32 %v5280, %v5464
        %v5466 = vpop.f32.mrb[0].mxu0
        %v5467 = vadd.f32 %v5282, %v5466
        %v5468 = vpop.f32.mrb[0].mxu0
        %v5469 = vadd.f32 %v5284, %v5468
        %v5470 = vpop.f32.mrb[0].mxu0
        %v5471 = vadd.f32 %v5286, %v5470
        %5472 = vmatprep.mubr.bf16.mxu0 0
        %5473 = vmatmul.mubr.bf16.gmra.mrb[0].mxu0 %v5379
        %v5474 = vpop.f32.mrb[0].mxu0
        %v5475 = vadd.f32 %v5290, %v5474
        %v5476 = vpop.f32.mrb[0].mxu0
        %v5477 = vadd.f32 %v5292, %v5476
        %v5478 = vpop.f32.mrb[0].mxu0
        %v5479 = vadd.f32 %v5294, %v5478
        %v5480 = vpop.f32.mrb[0].mxu0
        %v5481 = vadd.f32 %v5296, %v5480
        %5482 = vmatprep.mubr.bf16.mxu0 0
        %5483 = vmatmul.mubr.bf16.gmra.mrb[0].mxu0 %v5382
        %v5484 = vpop.f32.mrb[0].mxu0
        %v5485 = vadd.f32 %v5300, %v5484
        %v5486 = vpop.f32.mrb[0].mxu0
        %v5487 = vadd.f32 %v5302, %v5486
        %v5488 = vpop.f32.mrb[0].mxu0
        %v5489 = vadd.f32 %v5304, %v5488
        %v5490 = vpop.f32.mrb[0].mxu0
        %v5491 = vadd.f32 %v5306, %v5490
        %5492 = vdwg.mxu0
        %s5493 = scalar_lea.vmem %s8, 56
        %v5494 = vld [vmem:[%s5493] sm:$0xf]
        %v5495 = vld [vmem:[%s5493 + $0x4] sm:$0xf]
        %v5496 = vld [vmem:[%s5493 + $0x8] sm:$0xf]
        %v5497 = vld [vmem:[%s5493 + $0xc] sm:$0xf]
        %v5498 = vld [vmem:[%s5493 + $0x10] sm:$0xf]
        %v5499 = vld [vmem:[%s5493 + $0x14] sm:$0xf]
        %v5500 = vld [vmem:[%s5493 + $0x18] sm:$0xf]
        %v5501 = vld [vmem:[%s5493 + $0x1c] sm:$0xf]
        %v5502 = vld [vmem:[%s5493 + $0x20] sm:$0xf]
        %v5503 = vld [vmem:[%s5493 + $0x24] sm:$0xf]
        %v5504 = vld [vmem:[%s5493 + $0x28] sm:$0xf]
        %v5505 = vld [vmem:[%s5493 + $0x2c] sm:$0xf]
        %v5506 = vld [vmem:[%s5493 + $0x30] sm:$0xf]
        %v5507 = vld [vmem:[%s5493 + $0x34] sm:$0xf]
        %v5522 = vunpack.c.l.b16 %v5494
        %v5523 = vunpack.c.l.b16 %v5495
        %v5524 = vunpack.c.l.b16 %v5496
        %v5525 = vunpack.c.l.b16 %v5497
        %v5526 = vunpack.c.l.b16 %v5498
        %v5527 = vunpack.c.l.b16 %v5499
        %v5528 = vunpack.c.l.b16 %v5500
        %v5529 = vunpack.c.l.b16 %v5501
        %v5530 = vunpack.c.l.b16 %v5502
        %v5531 = vunpack.c.l.b16 %v5503
        %v5532 = vunpack.c.l.b16 %v5504
        %v5533 = vunpack.c.l.b16 %v5505
        %v5534 = vunpack.c.l.b16 %v5506
        %v5535 = vunpack.c.l.b16 %v5507
        %v5536 = vpack.c.b16 %v5523, %v5522
        %v5537 = vpack.c.b16 %v5525, %v5524
        %v5538 = vpack.c.b16 %v5527, %v5526
        %v5539 = vpack.c.b16 %v5529, %v5528
        %v5540 = vpack.c.b16 %v5531, %v5530
        %v5541 = vpack.c.b16 %v5533, %v5532
        %v5542 = vpack.c.b16 %v5535, %v5534
        %v5544 = vsel %vm4991, %v5536, 0
        %v5547 = vsel %vm4991, %v5537, 0
        %v5550 = vsel %vm4991, %v5538, 0
        %v5553 = vsel %vm4991, %v5539, 0
        %v5556 = vsel %vm4991, %v5540, 0
        %v5559 = vsel %vm4991, %v5541, 0
        %v5562 = vsel %vm4991, %v5542, 0
        %5564 = vmatprep.subr.bf16.mxu0 0
        %5565 = vmatpush1.bf16.msra.mxu0 %v4924
        %5566 = vmatprep.subr.bf16.mxu0 0
        %5567 = vmatpush1.bf16.msra.mxu0 %v4925
        %5568 = vmatprep.subr.bf16.mxu0 0
        %5569 = vmatpush1.bf16.msra.mxu0 %v4926
        %5570 = vmatprep.subr.bf16.mxu0 0
        %5571 = vmatpush1.bf16.msra.mxu0 %v4927
        %5572 = vmatprep.subr.bf16.mxu0 0
        %5573 = vmatpush1.bf16.msra.mxu0 %v4928
        %5574 = vmatprep.subr.bf16.mxu0 0
        %5575 = vmatpush1.bf16.msra.mxu0 %v4929
        %5576 = vmatprep.subr.bf16.mxu0 0
        %5577 = vmatpush1.bf16.msra.mxu0 %v4930
        %5578 = vmatprep.subr.bf16.mxu0 0
        %5579 = vmatpush1.bf16.msra.mxu0 0
        %5580 = vmatprep.subr.bf16.mxu0 0
        %5581 = vmatpush1.bf16.msra.mxu0 0
        %5582 = vmatprep.subr.bf16.mxu0 0
        %5583 = vmatpush1.bf16.msra.mxu0 0
        %5584 = vmatprep.subr.bf16.mxu0 0
        %5585 = vmatpush1.bf16.msra.mxu0 0
        %5586 = vmatprep.subr.bf16.mxu0 0
        %5587 = vmatpush1.bf16.msra.mxu0 0
        %5588 = vmatprep.subr.bf16.mxu0 0
        %5589 = vmatpush1.bf16.msra.mxu0 0
        %5590 = vmatprep.subr.bf16.mxu0 0
        %5591 = vmatpush1.bf16.msra.mxu0 0
        %5592 = vmatprep.subr.bf16.mxu0 0
        %5593 = vmatpush1.bf16.msra.mxu0 0
        %5594 = vmatprep.subr.bf16.mxu0 0
        %5595 = vmatpush1.bf16.msra.mxu0 0
        %5596 = vmatprep.mubr.bf16.mxu0 0
        %5597 = vmatmul.mubr.bf16.gmra.mrb[0].mxu0 %v5544
        %v5598 = vpop.f32.mrb[0].mxu0
        %v5599 = vadd.f32 0.0, %v5598
        %v5600 = vpop.f32.mrb[0].mxu0
        %v5601 = vpop.f32.mrb[0].mxu0
        %v5602 = vadd.f32 0.0, %v5601
        %v5603 = vpop.f32.mrb[0].mxu0
        %5604 = vmatprep.mubr.bf16.mxu0 0
        %5605 = vmatmul.mubr.bf16.gmra.mrb[0].mxu0 %v5547
        %v5606 = vpop.f32.mrb[0].mxu0
        %v5607 = vadd.f32 0.0, %v5606
        %v5608 = vpop.f32.mrb[0].mxu0
        %v5609 = vpop.f32.mrb[0].mxu0
        %v5610 = vadd.f32 0.0, %v5609
        %v5611 = vpop.f32.mrb[0].mxu0
        %5612 = vmatprep.mubr.bf16.mxu0 0
        %5613 = vmatmul.mubr.bf16.gmra.mrb[0].mxu0 %v5550
        %v5614 = vpop.f32.mrb[0].mxu0
        %v5615 = vadd.f32 0.0, %v5614
        %v5616 = vpop.f32.mrb[0].mxu0
        %v5617 = vpop.f32.mrb[0].mxu0
        %v5618 = vadd.f32 0.0, %v5617
        %v5619 = vpop.f32.mrb[0].mxu0
        %5620 = vmatprep.mubr.bf16.mxu0 0
        %5621 = vmatmul.mubr.bf16.gmra.mrb[0].mxu0 %v5553
        %v5622 = vpop.f32.mrb[0].mxu0
        %v5623 = vadd.f32 0.0, %v5622
        %v5624 = vpop.f32.mrb[0].mxu0
        %v5625 = vpop.f32.mrb[0].mxu0
        %v5626 = vadd.f32 0.0, %v5625
        %v5627 = vpop.f32.mrb[0].mxu0
        %5628 = vmatprep.mubr.bf16.mxu0 0
        %5629 = vmatmul.mubr.bf16.gmra.mrb[0].mxu0 %v5556
        %v5630 = vpop.f32.mrb[0].mxu0
        %v5631 = vadd.f32 0.0, %v5630
        %v5632 = vpop.f32.mrb[0].mxu0
        %v5633 = vpop.f32.mrb[0].mxu0
        %v5634 = vadd.f32 0.0, %v5633
        %v5635 = vpop.f32.mrb[0].mxu0
        %5636 = vmatprep.mubr.bf16.mxu0 0
        %5637 = vmatmul.mubr.bf16.gmra.mrb[0].mxu0 %v5559
        %v5638 = vpop.f32.mrb[0].mxu0
        %v5639 = vadd.f32 0.0, %v5638
        %v5640 = vpop.f32.mrb[0].mxu0
        %v5641 = vpop.f32.mrb[0].mxu0
        %v5642 = vadd.f32 0.0, %v5641
        %v5643 = vpop.f32.mrb[0].mxu0
        %5644 = vmatprep.mubr.bf16.mxu0 0
        %5645 = vmatmul.mubr.bf16.gmra.mrb[0].mxu0 %v5562
        %v5646 = vpop.f32.mrb[0].mxu0
        %v5647 = vadd.f32 0.0, %v5646
        %v5648 = vpop.f32.mrb[0].mxu0
        %v5649 = vpop.f32.mrb[0].mxu0
        %v5650 = vadd.f32 0.0, %v5649
        %v5651 = vpop.f32.mrb[0].mxu0
        %5652 = vdwg.mxu0
        %v5653 = vpack.c.bf16 %v5602, %v5599
        %v5654 = vpack.c.bf16 %v5610, %v5607
        %v5655 = vpack.c.bf16 %v5618, %v5615
        %v5656 = vpack.c.bf16 %v5626, %v5623
        %v5657 = vpack.c.bf16 %v5634, %v5631
        %v5658 = vpack.c.bf16 %v5642, %v5639
        %v5659 = vpack.c.bf16 %v5650, %v5647
        %s5660 = scalar_lea.vmem %s9, 176
        %v5661 = vld [vmem:[%s5660] sm:$0xff]
        %v5662 = vld [vmem:[%s5660 + $0x8] sm:$0xff]
        %v5663 = vld [vmem:[%s5660 + $0x10] sm:$0xff]
        %v5664 = vld [vmem:[%s5660 + $0x18] sm:$0xff]
        %v5665 = vld [vmem:[%s5660 + $0x20] sm:$0xff]
        %v5666 = vld [vmem:[%s5660 + $0x28] sm:$0xff]
        %v5667 = vld [vmem:[%s5660 + $0x30] sm:$0xff]
        %v5668 = vld [vmem:[%s5660 + $0x38] sm:$0xff]
        %v5669 = vld [vmem:[%s5660 + $0x40] sm:$0xff]
        %v5670 = vld [vmem:[%s5660 + $0x48] sm:$0xff]
        %v5671 = vld [vmem:[%s5660 + $0x50] sm:$0x33]
        %v5683 = vunpack.c.l.b16 %v5661
        %v5684 = vunpack.c.h.b16 %v5661
        %v5685 = vunpack.c.l.b16 %v5662
        %v5686 = vunpack.c.h.b16 %v5662
        %v5687 = vunpack.c.l.b16 %v5663
        %v5688 = vunpack.c.h.b16 %v5663
        %v5689 = vunpack.c.l.b16 %v5664
        %v5690 = vunpack.c.h.b16 %v5664
        %v5691 = vunpack.c.l.b16 %v5665
        %v5692 = vunpack.c.h.b16 %v5665
        %v5693 = vunpack.c.l.b16 %v5666
        %v5694 = vunpack.c.h.b16 %v5666
        %v5695 = vunpack.c.l.b16 %v5667
        %v5696 = vunpack.c.h.b16 %v5667
        %v5697 = vunpack.c.l.b16 %v5668
        %v5698 = vunpack.c.h.b16 %v5668
        %v5699 = vunpack.c.l.b16 %v5669
        %v5700 = vunpack.c.h.b16 %v5669
        %v5701 = vunpack.c.l.b16 %v5670
        %v5702 = vunpack.c.h.b16 %v5670
        %v5703 = vunpack.c.l.b16 %v5671
        %v5704 = vunpack.c.h.b16 %v5671
        %v5705 = vpack.c.b16 %v5685, %v5683
        %v5706 = vpack.c.b16 %v5686, %v5684
        %v5707 = vpack.c.b16 %v5689, %v5687
        %v5708 = vpack.c.b16 %v5690, %v5688
        %v5709 = vpack.c.b16 %v5693, %v5691
        %v5710 = vpack.c.b16 %v5694, %v5692
        %v5711 = vpack.c.b16 %v5697, %v5695
        %v5712 = vpack.c.b16 %v5698, %v5696
        %v5713 = vpack.c.b16 %v5701, %v5699
        %v5714 = vpack.c.b16 %v5702, %v5700
        %v5715 = vpack.c.b16 %v5703, %v5703
        %v5716 = vpack.c.b16 %v5704, %v5704
        %v5728 = vsel %vm5176, %v5653, 0
        %v5731 = vsel %vm5176, %v5654, 0
        %v5734 = vsel %vm5176, %v5655, 0
        %v5737 = vsel %vm5176, %v5656, 0
        %v5740 = vsel %vm5176, %v5657, 0
        %v5743 = vsel %vm5176, %v5658, 0
        %v5746 = vsel %vm5176, %v5659, 0
        %v5749 = vsel %vm5198, %v5715, 0
        %v5752 = vsel %vm5198, %v5716, 0
        %5754 = vmatprep.subr.bf16.mxu0 %v5706
        %5755 = vmatpush1.bf16.msra.mxu0 %v5705
        %5756 = vmatprep.subr.bf16.mxu0 %v5708
        %5757 = vmatpush1.bf16.msra.mxu0 %v5707
        %5758 = vmatprep.subr.bf16.mxu0 %v5710
        %5759 = vmatpush1.bf16.msra.mxu0 %v5709
        %5760 = vmatprep.subr.bf16.mxu0 %v5712
        %5761 = vmatpush1.bf16.msra.mxu0 %v5711
        %5762 = vmatprep.subr.bf16.mxu0 %v5714
        %5763 = vmatpush1.bf16.msra.mxu0 %v5713
        %5764 = vmatprep.subr.bf16.mxu0 %v5752
        %5765 = vmatpush1.bf16.msra.mxu0 %v5749
        %5766 = vmatprep.subr.bf16.mxu0 0
        %5767 = vmatpush1.bf16.msra.mxu0 0
        %5768 = vmatprep.subr.bf16.mxu0 0
        %5769 = vmatpush1.bf16.msra.mxu0 0
        %5770 = vmatprep.subr.bf16.mxu0 0
        %5771 = vmatpush1.bf16.msra.mxu0 0
        %5772 = vmatprep.subr.bf16.mxu0 0
        %5773 = vmatpush1.bf16.msra.mxu0 0
        %5774 = vmatprep.subr.bf16.mxu0 0
        %5775 = vmatpush1.bf16.msra.mxu0 0
        %5776 = vmatprep.subr.bf16.mxu0 0
        %5777 = vmatpush1.bf16.msra.mxu0 0
        %5778 = vmatprep.subr.bf16.mxu0 0
        %5779 = vmatpush1.bf16.msra.mxu0 0
        %5780 = vmatprep.subr.bf16.mxu0 0
        %5781 = vmatpush1.bf16.msra.mxu0 0
        %5782 = vmatprep.subr.bf16.mxu0 0
        %5783 = vmatpush1.bf16.msra.mxu0 0
        %5784 = vmatprep.subr.bf16.mxu0 0
        %5785 = vmatpush1.bf16.msra.mxu0 0
        %5786 = vmatprep.mubr.bf16.mxu0 0
        %5787 = vmatmul.mubr.bf16.gmra.mrb[0].mxu0 %v5728
        %v5788 = vpop.f32.mrb[0].mxu0
        %v5789 = vadd.f32 0.0, %v5788
        %v5790 = vpop.f32.mrb[0].mxu0
        %v5791 = vadd.f32 0.0, %v5790
        %v5792 = vpop.f32.mrb[0].mxu0
        %v5793 = vadd.f32 0.0, %v5792
        %v5794 = vpop.f32.mrb[0].mxu0
        %v5795 = vadd.f32 0.0, %v5794
        %5796 = vmatprep.mubr.bf16.mxu0 0
        %5797 = vmatmul.mubr.bf16.gmra.mrb[0].mxu0 %v5731
        %v5798 = vpop.f32.mrb[0].mxu0
        %v5799 = vadd.f32 0.0, %v5798
        %v5800 = vpop.f32.mrb[0].mxu0
        %v5801 = vadd.f32 0.0, %v5800
        %v5802 = vpop.f32.mrb[0].mxu0
        %v5803 = vadd.f32 0.0, %v5802
        %v5804 = vpop.f32.mrb[0].mxu0
        %v5805 = vadd.f32 0.0, %v5804
        %5806 = vmatprep.mubr.bf16.mxu0 0
        %5807 = vmatmul.mubr.bf16.gmra.mrb[0].mxu0 %v5734
        %v5808 = vpop.f32.mrb[0].mxu0
        %v5809 = vadd.f32 0.0, %v5808
        %v5810 = vpop.f32.mrb[0].mxu0
        %v5811 = vadd.f32 0.0, %v5810
        %v5812 = vpop.f32.mrb[0].mxu0
        %v5813 = vadd.f32 0.0, %v5812
        %v5814 = vpop.f32.mrb[0].mxu0
        %v5815 = vadd.f32 0.0, %v5814
        %5816 = vmatprep.mubr.bf16.mxu0 0
        %5817 = vmatmul.mubr.bf16.gmra.mrb[0].mxu0 %v5737
        %v5818 = vpop.f32.mrb[0].mxu0
        %v5819 = vadd.f32 0.0, %v5818
        %v5820 = vpop.f32.mrb[0].mxu0
        %v5821 = vadd.f32 0.0, %v5820
        %v5822 = vpop.f32.mrb[0].mxu0
        %v5823 = vadd.f32 0.0, %v5822
        %v5824 = vpop.f32.mrb[0].mxu0
        %v5825 = vadd.f32 0.0, %v5824
        %5826 = vmatprep.mubr.bf16.mxu0 0
        %5827 = vmatmul.mubr.bf16.gmra.mrb[0].mxu0 %v5740
        %v5828 = vpop.f32.mrb[0].mxu0
        %v5829 = vadd.f32 0.0, %v5828
        %v5830 = vpop.f32.mrb[0].mxu0
        %v5831 = vadd.f32 0.0, %v5830
        %v5832 = vpop.f32.mrb[0].mxu0
        %v5833 = vadd.f32 0.0, %v5832
        %v5834 = vpop.f32.mrb[0].mxu0
        %v5835 = vadd.f32 0.0, %v5834
        %5836 = vmatprep.mubr.bf16.mxu0 0
        %5837 = vmatmul.mubr.bf16.gmra.mrb[0].mxu0 %v5743
        %v5838 = vpop.f32.mrb[0].mxu0
        %v5839 = vadd.f32 0.0, %v5838
        %v5840 = vpop.f32.mrb[0].mxu0
        %v5841 = vadd.f32 0.0, %v5840
        %v5842 = vpop.f32.mrb[0].mxu0
        %v5843 = vadd.f32 0.0, %v5842
        %v5844 = vpop.f32.mrb[0].mxu0
        %v5845 = vadd.f32 0.0, %v5844
        %5846 = vmatprep.mubr.bf16.mxu0 0
        %5847 = vmatmul.mubr.bf16.gmra.mrb[0].mxu0 %v5746
        %v5848 = vpop.f32.mrb[0].mxu0
        %v5849 = vadd.f32 0.0, %v5848
        %v5850 = vpop.f32.mrb[0].mxu0
        %v5851 = vadd.f32 0.0, %v5850
        %v5852 = vpop.f32.mrb[0].mxu0
        %v5853 = vadd.f32 0.0, %v5852
        %v5854 = vpop.f32.mrb[0].mxu0
        %v5855 = vadd.f32 0.0, %v5854
        %5856 = vdwg.mxu0
        %v5857 = vadd.f32 %v5425, %v5789
        %v5858 = vadd.f32 %v5427, %v5791
        %v5859 = vadd.f32 %v5429, %v5793
        %v5860 = vadd.f32 %v5431, %v5795
        %v5861 = vadd.f32 %v5435, %v5799
        %v5862 = vadd.f32 %v5437, %v5801
        %v5863 = vadd.f32 %v5439, %v5803
        %v5864 = vadd.f32 %v5441, %v5805
        %v5865 = vadd.f32 %v5445, %v5809
        %v5866 = vadd.f32 %v5447, %v5811
        %v5867 = vadd.f32 %v5449, %v5813
        %v5868 = vadd.f32 %v5451, %v5815
        %v5869 = vadd.f32 %v5455, %v5819
        %v5870 = vadd.f32 %v5457, %v5821
        %v5871 = vadd.f32 %v5459, %v5823
        %v5872 = vadd.f32 %v5461, %v5825
        %v5873 = vadd.f32 %v5465, %v5829
        %v5874 = vadd.f32 %v5467, %v5831
        %v5875 = vadd.f32 %v5469, %v5833
        %v5876 = vadd.f32 %v5471, %v5835
        %v5877 = vadd.f32 %v5475, %v5839
        %v5878 = vadd.f32 %v5477, %v5841
        %v5879 = vadd.f32 %v5479, %v5843
        %v5880 = vadd.f32 %v5481, %v5845
        %v5881 = vadd.f32 %v5485, %v5849
        %v5882 = vadd.f32 %v5487, %v5851
        %v5883 = vadd.f32 %v5489, %v5853
        %v5884 = vadd.f32 %v5491, %v5855
        %s5885 = scalar_lea.vmem %s8, 112
        %v5886 = vld [vmem:[%s5885] sm:$0xf]
        %v5887 = vld [vmem:[%s5885 + $0x4] sm:$0xf]
        %v5888 = vld [vmem:[%s5885 + $0x8] sm:$0xf]
        %v5889 = vld [vmem:[%s5885 + $0xc] sm:$0xf]
        %v5890 = vld [vmem:[%s5885 + $0x10] sm:$0xf]
        %v5891 = vld [vmem:[%s5885 + $0x14] sm:$0xf]
        %v5892 = vld [vmem:[%s5885 + $0x18] sm:$0xf]
        %v5893 = vld [vmem:[%s5885 + $0x1c] sm:$0xf]
        %v5894 = vld [vmem:[%s5885 + $0x20] sm:$0xf]
        %v5895 = vld [vmem:[%s5885 + $0x24] sm:$0xf]
        %v5896 = vld [vmem:[%s5885 + $0x28] sm:$0xf]
        %v5897 = vld [vmem:[%s5885 + $0x2c] sm:$0xf]
        %v5898 = vld [vmem:[%s5885 + $0x30] sm:$0xf]
        %v5899 = vld [vmem:[%s5885 + $0x34] sm:$0xf]
        %v5914 = vunpack.c.l.b16 %v5886
        %v5915 = vunpack.c.l.b16 %v5887
        %v5916 = vunpack.c.l.b16 %v5888
        %v5917 = vunpack.c.l.b16 %v5889
        %v5918 = vunpack.c.l.b16 %v5890
        %v5919 = vunpack.c.l.b16 %v5891
        %v5920 = vunpack.c.l.b16 %v5892
        %v5921 = vunpack.c.l.b16 %v5893
        %v5922 = vunpack.c.l.b16 %v5894
        %v5923 = vunpack.c.l.b16 %v5895
        %v5924 = vunpack.c.l.b16 %v5896
        %v5925 = vunpack.c.l.b16 %v5897
        %v5926 = vunpack.c.l.b16 %v5898
        %v5927 = vunpack.c.l.b16 %v5899
        %v5928 = vpack.c.b16 %v5915, %v5914
        %v5929 = vpack.c.b16 %v5917, %v5916
        %v5930 = vpack.c.b16 %v5919, %v5918
        %v5931 = vpack.c.b16 %v5921, %v5920
        %v5932 = vpack.c.b16 %v5923, %v5922
        %v5933 = vpack.c.b16 %v5925, %v5924
        %v5934 = vpack.c.b16 %v5927, %v5926
        %v5936 = vsel %vm4991, %v5928, 0
        %v5939 = vsel %vm4991, %v5929, 0
        %v5942 = vsel %vm4991, %v5930, 0
        %v5945 = vsel %vm4991, %v5931, 0
        %v5948 = vsel %vm4991, %v5932, 0
        %v5951 = vsel %vm4991, %v5933, 0
        %v5954 = vsel %vm4991, %v5934, 0
        %5956 = vmatprep.subr.bf16.mxu0 0
        %5957 = vmatpush1.bf16.msra.mxu0 %v4924
        %5958 = vmatprep.subr.bf16.mxu0 0
        %5959 = vmatpush1.bf16.msra.mxu0 %v4925
        %5960 = vmatprep.subr.bf16.mxu0 0
        %5961 = vmatpush1.bf16.msra.mxu0 %v4926
        %5962 = vmatprep.subr.bf16.mxu0 0
        %5963 = vmatpush1.bf16.msra.mxu0 %v4927
        %5964 = vmatprep.subr.bf16.mxu0 0
        %5965 = vmatpush1.bf16.msra.mxu0 %v4928
        %5966 = vmatprep.subr.bf16.mxu0 0
        %5967 = vmatpush1.bf16.msra.mxu0 %v4929
        %5968 = vmatprep.subr.bf16.mxu0 0
        %5969 = vmatpush1.bf16.msra.mxu0 %v4930
        %5970 = vmatprep.subr.bf16.mxu0 0
        %5971 = vmatpush1.bf16.msra.mxu0 0
        %5972 = vmatprep.subr.bf16.mxu0 0
        %5973 = vmatpush1.bf16.msra.mxu0 0
        %5974 = vmatprep.subr.bf16.mxu0 0
        %5975 = vmatpush1.bf16.msra.mxu0 0
        %5976 = vmatprep.subr.bf16.mxu0 0
        %5977 = vmatpush1.bf16.msra.mxu0 0
        %5978 = vmatprep.subr.bf16.mxu0 0
        %5979 = vmatpush1.bf16.msra.mxu0 0
        %5980 = vmatprep.subr.bf16.mxu0 0
        %5981 = vmatpush1.bf16.msra.mxu0 0
        %5982 = vmatprep.subr.bf16.mxu0 0
        %5983 = vmatpush1.bf16.msra.mxu0 0
        %5984 = vmatprep.subr.bf16.mxu0 0
        %5985 = vmatpush1.bf16.msra.mxu0 0
        %5986 = vmatprep.subr.bf16.mxu0 0
        %5987 = vmatpush1.bf16.msra.mxu0 0
        %5988 = vmatprep.mubr.bf16.mxu0 0
        %5989 = vmatmul.mubr.bf16.gmra.mrb[0].mxu0 %v5936
        %v5990 = vpop.f32.mrb[0].mxu0
        %v5991 = vadd.f32 0.0, %v5990
        %v5992 = vpop.f32.mrb[0].mxu0
        %v5993 = vpop.f32.mrb[0].mxu0
        %v5994 = vadd.f32 0.0, %v5993
        %v5995 = vpop.f32.mrb[0].mxu0
        %5996 = vmatprep.mubr.bf16.mxu0 0
        %5997 = vmatmul.mubr.bf16.gmra.mrb[0].mxu0 %v5939
        %v5998 = vpop.f32.mrb[0].mxu0
        %v5999 = vadd.f32 0.0, %v5998
        %v6000 = vpop.f32.mrb[0].mxu0
        %v6001 = vpop.f32.mrb[0].mxu0
        %v6002 = vadd.f32 0.0, %v6001
        %v6003 = vpop.f32.mrb[0].mxu0
        %6004 = vmatprep.mubr.bf16.mxu0 0
        %6005 = vmatmul.mubr.bf16.gmra.mrb[0].mxu0 %v5942
        %v6006 = vpop.f32.mrb[0].mxu0
        %v6007 = vadd.f32 0.0, %v6006
        %v6008 = vpop.f32.mrb[0].mxu0
        %v6009 = vpop.f32.mrb[0].mxu0
        %v6010 = vadd.f32 0.0, %v6009
        %v6011 = vpop.f32.mrb[0].mxu0
        %6012 = vmatprep.mubr.bf16.mxu0 0
        %6013 = vmatmul.mubr.bf16.gmra.mrb[0].mxu0 %v5945
        %v6014 = vpop.f32.mrb[0].mxu0
        %v6015 = vadd.f32 0.0, %v6014
        %v6016 = vpop.f32.mrb[0].mxu0
        %v6017 = vpop.f32.mrb[0].mxu0
        %v6018 = vadd.f32 0.0, %v6017
        %v6019 = vpop.f32.mrb[0].mxu0
        %6020 = vmatprep.mubr.bf16.mxu0 0
        %6021 = vmatmul.mubr.bf16.gmra.mrb[0].mxu0 %v5948
        %v6022 = vpop.f32.mrb[0].mxu0
        %v6023 = vadd.f32 0.0, %v6022
        %v6024 = vpop.f32.mrb[0].mxu0
        %v6025 = vpop.f32.mrb[0].mxu0
        %v6026 = vadd.f32 0.0, %v6025
        %v6027 = vpop.f32.mrb[0].mxu0
        %6028 = vmatprep.mubr.bf16.mxu0 0
        %6029 = vmatmul.mubr.bf16.gmra.mrb[0].mxu0 %v5951
        %v6030 = vpop.f32.mrb[0].mxu0
        %v6031 = vadd.f32 0.0, %v6030
        %v6032 = vpop.f32.mrb[0].mxu0
        %v6033 = vpop.f32.mrb[0].mxu0
        %v6034 = vadd.f32 0.0, %v6033
        %v6035 = vpop.f32.mrb[0].mxu0
        %6036 = vmatprep.mubr.bf16.mxu0 0
        %6037 = vmatmul.mubr.bf16.gmra.mrb[0].mxu0 %v5954
        %v6038 = vpop.f32.mrb[0].mxu0
        %v6039 = vadd.f32 0.0, %v6038
        %v6040 = vpop.f32.mrb[0].mxu0
        %v6041 = vpop.f32.mrb[0].mxu0
        %v6042 = vadd.f32 0.0, %v6041
        %v6043 = vpop.f32.mrb[0].mxu0
        %6044 = vdwg.mxu0
        %v6045 = vpack.c.bf16 %v5994, %v5991
        %v6046 = vpack.c.bf16 %v6002, %v5999
        %v6047 = vpack.c.bf16 %v6010, %v6007
        %v6048 = vpack.c.bf16 %v6018, %v6015
        %v6049 = vpack.c.bf16 %v6026, %v6023
        %v6050 = vpack.c.bf16 %v6034, %v6031
        %v6051 = vpack.c.bf16 %v6042, %v6039
        %s6052 = scalar_lea.vmem %s9, 264
        %v6053 = vld [vmem:[%s6052] sm:$0xff]
        %v6054 = vld [vmem:[%s6052 + $0x8] sm:$0xff]
        %v6055 = vld [vmem:[%s6052 + $0x10] sm:$0xff]
        %v6056 = vld [vmem:[%s6052 + $0x18] sm:$0xff]
        %v6057 = vld [vmem:[%s6052 + $0x20] sm:$0xff]
        %v6058 = vld [vmem:[%s6052 + $0x28] sm:$0xff]
        %v6059 = vld [vmem:[%s6052 + $0x30] sm:$0xff]
        %v6060 = vld [vmem:[%s6052 + $0x38] sm:$0xff]
        %v6061 = vld [vmem:[%s6052 + $0x40] sm:$0xff]
        %v6062 = vld [vmem:[%s6052 + $0x48] sm:$0xff]
        %v6063 = vld [vmem:[%s6052 + $0x50] sm:$0x33]
        %v6075 = vunpack.c.l.b16 %v6053
        %v6076 = vunpack.c.h.b16 %v6053
        %v6077 = vunpack.c.l.b16 %v6054
        %v6078 = vunpack.c.h.b16 %v6054
        %v6079 = vunpack.c.l.b16 %v6055
        %v6080 = vunpack.c.h.b16 %v6055
        %v6081 = vunpack.c.l.b16 %v6056
        %v6082 = vunpack.c.h.b16 %v6056
        %v6083 = vunpack.c.l.b16 %v6057
        %v6084 = vunpack.c.h.b16 %v6057
        %v6085 = vunpack.c.l.b16 %v6058
        %v6086 = vunpack.c.h.b16 %v6058
        %v6087 = vunpack.c.l.b16 %v6059
        %v6088 = vunpack.c.h.b16 %v6059
        %v6089 = vunpack.c.l.b16 %v6060
        %v6090 = vunpack.c.h.b16 %v6060
        %v6091 = vunpack.c.l.b16 %v6061
        %v6092 = vunpack.c.h.b16 %v6061
        %v6093 = vunpack.c.l.b16 %v6062
        %v6094 = vunpack.c.h.b16 %v6062
        %v6095 = vunpack.c.l.b16 %v6063
        %v6096 = vunpack.c.h.b16 %v6063
        %v6097 = vpack.c.b16 %v6077, %v6075
        %v6098 = vpack.c.b16 %v6078, %v6076
        %v6099 = vpack.c.b16 %v6081, %v6079
        %v6100 = vpack.c.b16 %v6082, %v6080
        %v6101 = vpack.c.b16 %v6085, %v6083
        %v6102 = vpack.c.b16 %v6086, %v6084
        %v6103 = vpack.c.b16 %v6089, %v6087
        %v6104 = vpack.c.b16 %v6090, %v6088
        %v6105 = vpack.c.b16 %v6093, %v6091
        %v6106 = vpack.c.b16 %v6094, %v6092
        %v6107 = vpack.c.b16 %v6095, %v6095
        %v6108 = vpack.c.b16 %v6096, %v6096
        %v6120 = vsel %vm5176, %v6045, 0
        %v6123 = vsel %vm5176, %v6046, 0
        %v6126 = vsel %vm5176, %v6047, 0
        %v6129 = vsel %vm5176, %v6048, 0
        %v6132 = vsel %vm5176, %v6049, 0
        %v6135 = vsel %vm5176, %v6050, 0
        %v6138 = vsel %vm5176, %v6051, 0
        %v6141 = vsel %vm5198, %v6107, 0
        %v6144 = vsel %vm5198, %v6108, 0
        %6146 = vmatprep.subr.bf16.mxu0 %v6098
        %6147 = vmatpush1.bf16.msra.mxu0 %v6097
        %6148 = vmatprep.subr.bf16.mxu0 %v6100
        %6149 = vmatpush1.bf16.msra.mxu0 %v6099
        %6150 = vmatprep.subr.bf16.mxu0 %v6102
        %6151 = vmatpush1.bf16.msra.mxu0 %v6101
        %6152 = vmatprep.subr.bf16.mxu0 %v6104
        %6153 = vmatpush1.bf16.msra.mxu0 %v6103
        %6154 = vmatprep.subr.bf16.mxu0 %v6106
        %6155 = vmatpush1.bf16.msra.mxu0 %v6105
        %6156 = vmatprep.subr.bf16.mxu0 %v6144
        %6157 = vmatpush1.bf16.msra.mxu0 %v6141
        %6158 = vmatprep.subr.bf16.mxu0 0
        %6159 = vmatpush1.bf16.msra.mxu0 0
        %6160 = vmatprep.subr.bf16.mxu0 0
        %6161 = vmatpush1.bf16.msra.mxu0 0
        %6162 = vmatprep.subr.bf16.mxu0 0
        %6163 = vmatpush1.bf16.msra.mxu0 0
        %6164 = vmatprep.subr.bf16.mxu0 0
        %6165 = vmatpush1.bf16.msra.mxu0 0
        %6166 = vmatprep.subr.bf16.mxu0 0
        %6167 = vmatpush1.bf16.msra.mxu0 0
        %6168 = vmatprep.subr.bf16.mxu0 0
        %6169 = vmatpush1.bf16.msra.mxu0 0
        %6170 = vmatprep.subr.bf16.mxu0 0
        %6171 = vmatpush1.bf16.msra.mxu0 0
        %6172 = vmatprep.subr.bf16.mxu0 0
        %6173 = vmatpush1.bf16.msra.mxu0 0
        %6174 = vmatprep.subr.bf16.mxu0 0
        %6175 = vmatpush1.bf16.msra.mxu0 0
        %6176 = vmatprep.subr.bf16.mxu0 0
        %6177 = vmatpush1.bf16.msra.mxu0 0
        %6178 = vmatprep.mubr.bf16.mxu0 0
        %6179 = vmatmul.mubr.bf16.gmra.mrb[0].mxu0 %v6120
        %v6180 = vpop.f32.mrb[0].mxu0
        %v6181 = vadd.f32 0.0, %v6180
        %v6182 = vpop.f32.mrb[0].mxu0
        %v6183 = vadd.f32 0.0, %v6182
        %v6184 = vpop.f32.mrb[0].mxu0
        %v6185 = vadd.f32 0.0, %v6184
        %v6186 = vpop.f32.mrb[0].mxu0
        %v6187 = vadd.f32 0.0, %v6186
        %6188 = vmatprep.mubr.bf16.mxu0 0
        %6189 = vmatmul.mubr.bf16.gmra.mrb[0].mxu0 %v6123
        %v6190 = vpop.f32.mrb[0].mxu0
        %v6191 = vadd.f32 0.0, %v6190
        %v6192 = vpop.f32.mrb[0].mxu0
        %v6193 = vadd.f32 0.0, %v6192
        %v6194 = vpop.f32.mrb[0].mxu0
        %v6195 = vadd.f32 0.0, %v6194
        %v6196 = vpop.f32.mrb[0].mxu0
        %v6197 = vadd.f32 0.0, %v6196
        %6198 = vmatprep.mubr.bf16.mxu0 0
        %6199 = vmatmul.mubr.bf16.gmra.mrb[0].mxu0 %v6126
        %v6200 = vpop.f32.mrb[0].mxu0
        %v6201 = vadd.f32 0.0, %v6200
        %v6202 = vpop.f32.mrb[0].mxu0
        %v6203 = vadd.f32 0.0, %v6202
        %v6204 = vpop.f32.mrb[0].mxu0
        %v6205 = vadd.f32 0.0, %v6204
        %v6206 = vpop.f32.mrb[0].mxu0
        %v6207 = vadd.f32 0.0, %v6206
        %6208 = vmatprep.mubr.bf16.mxu0 0
        %6209 = vmatmul.mubr.bf16.gmra.mrb[0].mxu0 %v6129
        %v6210 = vpop.f32.mrb[0].mxu0
        %v6211 = vadd.f32 0.0, %v6210
        %v6212 = vpop.f32.mrb[0].mxu0
        %v6213 = vadd.f32 0.0, %v6212
        %v6214 = vpop.f32.mrb[0].mxu0
        %v6215 = vadd.f32 0.0, %v6214
        %v6216 = vpop.f32.mrb[0].mxu0
        %v6217 = vadd.f32 0.0, %v6216
        %6218 = vmatprep.mubr.bf16.mxu0 0
        %6219 = vmatmul.mubr.bf16.gmra.mrb[0].mxu0 %v6132
        %v6220 = vpop.f32.mrb[0].mxu0
        %v6221 = vadd.f32 0.0, %v6220
        %v6222 = vpop.f32.mrb[0].mxu0
        %v6223 = vadd.f32 0.0, %v6222
        %v6224 = vpop.f32.mrb[0].mxu0
        %v6225 = vadd.f32 0.0, %v6224
        %v6226 = vpop.f32.mrb[0].mxu0
        %v6227 = vadd.f32 0.0, %v6226
        %6228 = vmatprep.mubr.bf16.mxu0 0
        %6229 = vmatmul.mubr.bf16.gmra.mrb[0].mxu0 %v6135
        %v6230 = vpop.f32.mrb[0].mxu0
        %v6231 = vadd.f32 0.0, %v6230
        %v6232 = vpop.f32.mrb[0].mxu0
        %v6233 = vadd.f32 0.0, %v6232
        %v6234 = vpop.f32.mrb[0].mxu0
        %v6235 = vadd.f32 0.0, %v6234
        %v6236 = vpop.f32.mrb[0].mxu0
        %v6237 = vadd.f32 0.0, %v6236
        %6238 = vmatprep.mubr.bf16.mxu0 0
        %6239 = vmatmul.mubr.bf16.gmra.mrb[0].mxu0 %v6138
        %v6240 = vpop.f32.mrb[0].mxu0
        %v6241 = vadd.f32 0.0, %v6240
        %v6242 = vpop.f32.mrb[0].mxu0
        %v6243 = vadd.f32 0.0, %v6242
        %v6244 = vpop.f32.mrb[0].mxu0
        %v6245 = vadd.f32 0.0, %v6244
        %v6246 = vpop.f32.mrb[0].mxu0
        %v6247 = vadd.f32 0.0, %v6246
        %6248 = vdwg.mxu0
        %v6249 = vadd.f32 %v5857, %v6181
        %v6250 = vadd.f32 %v5858, %v6183
        %v6251 = vadd.f32 %v5859, %v6185
        %v6252 = vadd.f32 %v5860, %v6187
        %v6253 = vadd.f32 %v5861, %v6191
        %v6254 = vadd.f32 %v5862, %v6193
        %v6255 = vadd.f32 %v5863, %v6195
        %v6256 = vadd.f32 %v5864, %v6197
        %v6257 = vadd.f32 %v5865, %v6201
        %v6258 = vadd.f32 %v5866, %v6203
        %v6259 = vadd.f32 %v5867, %v6205
        %v6260 = vadd.f32 %v5868, %v6207
        %v6261 = vadd.f32 %v5869, %v6211
        %v6262 = vadd.f32 %v5870, %v6213
        %v6263 = vadd.f32 %v5871, %v6215
        %v6264 = vadd.f32 %v5872, %v6217
        %v6265 = vadd.f32 %v5873, %v6221
        %v6266 = vadd.f32 %v5874, %v6223
        %v6267 = vadd.f32 %v5875, %v6225
        %v6268 = vadd.f32 %v5876, %v6227
        %v6269 = vadd.f32 %v5877, %v6231
        %v6270 = vadd.f32 %v5878, %v6233
        %v6271 = vadd.f32 %v5879, %v6235
        %v6272 = vadd.f32 %v5880, %v6237
        %v6273 = vadd.f32 %v5881, %v6241
        %v6274 = vadd.f32 %v5882, %v6243
        %v6275 = vadd.f32 %v5883, %v6245
        %v6276 = vadd.f32 %v5884, %v6247
        %s6277 = scalar_lea.vmem %s8, 168
        %v6278 = vld [vmem:[%s6277] sm:$0xf]
        %v6279 = vld [vmem:[%s6277 + $0x4] sm:$0xf]
        %v6280 = vld [vmem:[%s6277 + $0x8] sm:$0xf]
        %v6281 = vld [vmem:[%s6277 + $0xc] sm:$0xf]
        %v6282 = vld [vmem:[%s6277 + $0x10] sm:$0xf]
        %v6283 = vld [vmem:[%s6277 + $0x14] sm:$0xf]
        %v6284 = vld [vmem:[%s6277 + $0x18] sm:$0xf]
        %v6285 = vld [vmem:[%s6277 + $0x1c] sm:$0xf]
        %v6286 = vld [vmem:[%s6277 + $0x20] sm:$0xf]
        %v6287 = vld [vmem:[%s6277 + $0x24] sm:$0xf]
        %v6288 = vld [vmem:[%s6277 + $0x28] sm:$0xf]
        %v6289 = vld [vmem:[%s6277 + $0x2c] sm:$0xf]
        %v6290 = vld [vmem:[%s6277 + $0x30] sm:$0xf]
        %v6291 = vld [vmem:[%s6277 + $0x34] sm:$0xf]
        %v6306 = vunpack.c.l.b16 %v6278
        %v6307 = vunpack.c.l.b16 %v6279
        %v6308 = vunpack.c.l.b16 %v6280
        %v6309 = vunpack.c.l.b16 %v6281
        %v6310 = vunpack.c.l.b16 %v6282
        %v6311 = vunpack.c.l.b16 %v6283
        %v6312 = vunpack.c.l.b16 %v6284
        %v6313 = vunpack.c.l.b16 %v6285
        %v6314 = vunpack.c.l.b16 %v6286
        %v6315 = vunpack.c.l.b16 %v6287
        %v6316 = vunpack.c.l.b16 %v6288
        %v6317 = vunpack.c.l.b16 %v6289
        %v6318 = vunpack.c.l.b16 %v6290
        %v6319 = vunpack.c.l.b16 %v6291
        %v6320 = vpack.c.b16 %v6307, %v6306
        %v6321 = vpack.c.b16 %v6309, %v6308
        %v6322 = vpack.c.b16 %v6311, %v6310
        %v6323 = vpack.c.b16 %v6313, %v6312
        %v6324 = vpack.c.b16 %v6315, %v6314
        %v6325 = vpack.c.b16 %v6317, %v6316
        %v6326 = vpack.c.b16 %v6319, %v6318
        %v6328 = vsel %vm4991, %v6320, 0
        %v6331 = vsel %vm4991, %v6321, 0
        %v6334 = vsel %vm4991, %v6322, 0
        %v6337 = vsel %vm4991, %v6323, 0
        %v6340 = vsel %vm4991, %v6324, 0
        %v6343 = vsel %vm4991, %v6325, 0
        %v6346 = vsel %vm4991, %v6326, 0
        %6348 = vmatprep.subr.bf16.mxu0 0
        %6349 = vmatpush1.bf16.msra.mxu0 %v4924
        %6350 = vmatprep.subr.bf16.mxu0 0
        %6351 = vmatpush1.bf16.msra.mxu0 %v4925
        %6352 = vmatprep.subr.bf16.mxu0 0
        %6353 = vmatpush1.bf16.msra.mxu0 %v4926
        %6354 = vmatprep.subr.bf16.mxu0 0
        %6355 = vmatpush1.bf16.msra.mxu0 %v4927
        %6356 = vmatprep.subr.bf16.mxu0 0
        %6357 = vmatpush1.bf16.msra.mxu0 %v4928
        %6358 = vmatprep.subr.bf16.mxu0 0
        %6359 = vmatpush1.bf16.msra.mxu0 %v4929
        %6360 = vmatprep.subr.bf16.mxu0 0
        %6361 = vmatpush1.bf16.msra.mxu0 %v4930
        %6362 = vmatprep.subr.bf16.mxu0 0
        %6363 = vmatpush1.bf16.msra.mxu0 0
        %6364 = vmatprep.subr.bf16.mxu0 0
        %6365 = vmatpush1.bf16.msra.mxu0 0
        %6366 = vmatprep.subr.bf16.mxu0 0
        %6367 = vmatpush1.bf16.msra.mxu0 0
        %6368 = vmatprep.subr.bf16.mxu0 0
        %6369 = vmatpush1.bf16.msra.mxu0 0
        %6370 = vmatprep.subr.bf16.mxu0 0
        %6371 = vmatpush1.bf16.msra.mxu0 0
        %6372 = vmatprep.subr.bf16.mxu0 0
        %6373 = vmatpush1.bf16.msra.mxu0 0
        %6374 = vmatprep.subr.bf16.mxu0 0
        %6375 = vmatpush1.bf16.msra.mxu0 0
        %6376 = vmatprep.subr.bf16.mxu0 0
        %6377 = vmatpush1.bf16.msra.mxu0 0
        %6378 = vmatprep.subr.bf16.mxu0 0
        %6379 = vmatpush1.bf16.msra.mxu0 0
        %6380 = vmatprep.mubr.bf16.mxu0 0
        %6381 = vmatmul.mubr.bf16.gmra.mrb[0].mxu0 %v6328
        %v6382 = vpop.f32.mrb[0].mxu0
        %v6383 = vadd.f32 0.0, %v6382
        %v6384 = vpop.f32.mrb[0].mxu0
        %v6385 = vpop.f32.mrb[0].mxu0
        %v6386 = vadd.f32 0.0, %v6385
        %v6387 = vpop.f32.mrb[0].mxu0
        %6388 = vmatprep.mubr.bf16.mxu0 0
        %6389 = vmatmul.mubr.bf16.gmra.mrb[0].mxu0 %v6331
        %v6390 = vpop.f32.mrb[0].mxu0
        %v6391 = vadd.f32 0.0, %v6390
        %v6392 = vpop.f32.mrb[0].mxu0
        %v6393 = vpop.f32.mrb[0].mxu0
        %v6394 = vadd.f32 0.0, %v6393
        %v6395 = vpop.f32.mrb[0].mxu0
        %6396 = vmatprep.mubr.bf16.mxu0 0
        %6397 = vmatmul.mubr.bf16.gmra.mrb[0].mxu0 %v6334
        %v6398 = vpop.f32.mrb[0].mxu0
        %v6399 = vadd.f32 0.0, %v6398
        %v6400 = vpop.f32.mrb[0].mxu0
        %v6401 = vpop.f32.mrb[0].mxu0
        %v6402 = vadd.f32 0.0, %v6401
        %v6403 = vpop.f32.mrb[0].mxu0
        %6404 = vmatprep.mubr.bf16.mxu0 0
        %6405 = vmatmul.mubr.bf16.gmra.mrb[0].mxu0 %v6337
        %v6406 = vpop.f32.mrb[0].mxu0
        %v6407 = vadd.f32 0.0, %v6406
        %v6408 = vpop.f32.mrb[0].mxu0
        %v6409 = vpop.f32.mrb[0].mxu0
        %v6410 = vadd.f32 0.0, %v6409
        %v6411 = vpop.f32.mrb[0].mxu0
        %6412 = vmatprep.mubr.bf16.mxu0 0
        %6413 = vmatmul.mubr.bf16.gmra.mrb[0].mxu0 %v6340
        %v6414 = vpop.f32.mrb[0].mxu0
        %v6415 = vadd.f32 0.0, %v6414
        %v6416 = vpop.f32.mrb[0].mxu0
        %v6417 = vpop.f32.mrb[0].mxu0
        %v6418 = vadd.f32 0.0, %v6417
        %v6419 = vpop.f32.mrb[0].mxu0
        %6420 = vmatprep.mubr.bf16.mxu0 0
        %6421 = vmatmul.mubr.bf16.gmra.mrb[0].mxu0 %v6343
        %v6422 = vpop.f32.mrb[0].mxu0
        %v6423 = vadd.f32 0.0, %v6422
        %v6424 = vpop.f32.mrb[0].mxu0
        %v6425 = vpop.f32.mrb[0].mxu0
        %v6426 = vadd.f32 0.0, %v6425
        %v6427 = vpop.f32.mrb[0].mxu0
        %6428 = vmatprep.mubr.bf16.mxu0 0
        %6429 = vmatmul.mubr.bf16.gmra.mrb[0].mxu0 %v6346
        %v6430 = vpop.f32.mrb[0].mxu0
        %v6431 = vadd.f32 0.0, %v6430
        %v6432 = vpop.f32.mrb[0].mxu0
        %v6433 = vpop.f32.mrb[0].mxu0
        %v6434 = vadd.f32 0.0, %v6433
        %v6435 = vpop.f32.mrb[0].mxu0
        %6436 = vdwg.mxu0
        %v6437 = vpack.c.bf16 %v6386, %v6383
        %v6438 = vpack.c.bf16 %v6394, %v6391
        %v6439 = vpack.c.bf16 %v6402, %v6399
        %v6440 = vpack.c.bf16 %v6410, %v6407
        %v6441 = vpack.c.bf16 %v6418, %v6415
        %v6442 = vpack.c.bf16 %v6426, %v6423
        %v6443 = vpack.c.bf16 %v6434, %v6431
        %s6444 = scalar_lea.vmem %s9, 352
        %v6445 = vld [vmem:[%s6444] sm:$0xff]
        %v6446 = vld [vmem:[%s6444 + $0x8] sm:$0xff]
        %v6447 = vld [vmem:[%s6444 + $0x10] sm:$0xff]
        %v6448 = vld [vmem:[%s6444 + $0x18] sm:$0xff]
        %v6449 = vld [vmem:[%s6444 + $0x20] sm:$0xff]
        %v6450 = vld [vmem:[%s6444 + $0x28] sm:$0xff]
        %v6451 = vld [vmem:[%s6444 + $0x30] sm:$0xff]
        %v6452 = vld [vmem:[%s6444 + $0x38] sm:$0xff]
        %v6453 = vld [vmem:[%s6444 + $0x40] sm:$0xff]
        %v6454 = vld [vmem:[%s6444 + $0x48] sm:$0xff]
        %v6455 = vld [vmem:[%s6444 + $0x50] sm:$0x33]
        %v6467 = vunpack.c.l.b16 %v6445
        %v6468 = vunpack.c.h.b16 %v6445
        %v6469 = vunpack.c.l.b16 %v6446
        %v6470 = vunpack.c.h.b16 %v6446
        %v6471 = vunpack.c.l.b16 %v6447
        %v6472 = vunpack.c.h.b16 %v6447
        %v6473 = vunpack.c.l.b16 %v6448
        %v6474 = vunpack.c.h.b16 %v6448
        %v6475 = vunpack.c.l.b16 %v6449
        %v6476 = vunpack.c.h.b16 %v6449
        %v6477 = vunpack.c.l.b16 %v6450
        %v6478 = vunpack.c.h.b16 %v6450
        %v6479 = vunpack.c.l.b16 %v6451
        %v6480 = vunpack.c.h.b16 %v6451
        %v6481 = vunpack.c.l.b16 %v6452
        %v6482 = vunpack.c.h.b16 %v6452
        %v6483 = vunpack.c.l.b16 %v6453
        %v6484 = vunpack.c.h.b16 %v6453
        %v6485 = vunpack.c.l.b16 %v6454
        %v6486 = vunpack.c.h.b16 %v6454
        %v6487 = vunpack.c.l.b16 %v6455
        %v6488 = vunpack.c.h.b16 %v6455
        %v6489 = vpack.c.b16 %v6469, %v6467
        %v6490 = vpack.c.b16 %v6470, %v6468
        %v6491 = vpack.c.b16 %v6473, %v6471
        %v6492 = vpack.c.b16 %v6474, %v6472
        %v6493 = vpack.c.b16 %v6477, %v6475
        %v6494 = vpack.c.b16 %v6478, %v6476
        %v6495 = vpack.c.b16 %v6481, %v6479
        %v6496 = vpack.c.b16 %v6482, %v6480
        %v6497 = vpack.c.b16 %v6485, %v6483
        %v6498 = vpack.c.b16 %v6486, %v6484
        %v6499 = vpack.c.b16 %v6487, %v6487
        %v6500 = vpack.c.b16 %v6488, %v6488
        %v6512 = vsel %vm5176, %v6437, 0
        %v6515 = vsel %vm5176, %v6438, 0
        %v6518 = vsel %vm5176, %v6439, 0
        %v6521 = vsel %vm5176, %v6440, 0
        %v6524 = vsel %vm5176, %v6441, 0
        %v6527 = vsel %vm5176, %v6442, 0
        %v6530 = vsel %vm5176, %v6443, 0
        %v6533 = vsel %vm5198, %v6499, 0
        %v6536 = vsel %vm5198, %v6500, 0
        %6538 = vmatprep.subr.bf16.mxu0 %v6490
        %6539 = vmatpush1.bf16.msra.mxu0 %v6489
        %6540 = vmatprep.subr.bf16.mxu0 %v6492
        %6541 = vmatpush1.bf16.msra.mxu0 %v6491
        %6542 = vmatprep.subr.bf16.mxu0 %v6494
        %6543 = vmatpush1.bf16.msra.mxu0 %v6493
        %6544 = vmatprep.subr.bf16.mxu0 %v6496
        %6545 = vmatpush1.bf16.msra.mxu0 %v6495
        %6546 = vmatprep.subr.bf16.mxu0 %v6498
        %6547 = vmatpush1.bf16.msra.mxu0 %v6497
        %6548 = vmatprep.subr.bf16.mxu0 %v6536
        %6549 = vmatpush1.bf16.msra.mxu0 %v6533
        %6550 = vmatprep.subr.bf16.mxu0 0
        %6551 = vmatpush1.bf16.msra.mxu0 0
        %6552 = vmatprep.subr.bf16.mxu0 0
        %6553 = vmatpush1.bf16.msra.mxu0 0
        %6554 = vmatprep.subr.bf16.mxu0 0
        %6555 = vmatpush1.bf16.msra.mxu0 0
        %6556 = vmatprep.subr.bf16.mxu0 0
        %6557 = vmatpush1.bf16.msra.mxu0 0
        %6558 = vmatprep.subr.bf16.mxu0 0
        %6559 = vmatpush1.bf16.msra.mxu0 0
        %6560 = vmatprep.subr.bf16.mxu0 0
        %6561 = vmatpush1.bf16.msra.mxu0 0
        %6562 = vmatprep.subr.bf16.mxu0 0
        %6563 = vmatpush1.bf16.msra.mxu0 0
        %6564 = vmatprep.subr.bf16.mxu0 0
        %6565 = vmatpush1.bf16.msra.mxu0 0
        %6566 = vmatprep.subr.bf16.mxu0 0
        %6567 = vmatpush1.bf16.msra.mxu0 0
        %6568 = vmatprep.subr.bf16.mxu0 0
        %6569 = vmatpush1.bf16.msra.mxu0 0
        %6570 = vmatprep.mubr.bf16.mxu0 0
        %6571 = vmatmul.mubr.bf16.gmra.mrb[0].mxu0 %v6512
        %v6572 = vpop.f32.mrb[0].mxu0
        %v6573 = vadd.f32 0.0, %v6572
        %v6574 = vpop.f32.mrb[0].mxu0
        %v6575 = vadd.f32 0.0, %v6574
        %v6576 = vpop.f32.mrb[0].mxu0
        %v6577 = vadd.f32 0.0, %v6576
        %v6578 = vpop.f32.mrb[0].mxu0
        %v6579 = vadd.f32 0.0, %v6578
        %6580 = vmatprep.mubr.bf16.mxu0 0
        %6581 = vmatmul.mubr.bf16.gmra.mrb[0].mxu0 %v6515
        %v6582 = vpop.f32.mrb[0].mxu0
        %v6583 = vadd.f32 0.0, %v6582
        %v6584 = vpop.f32.mrb[0].mxu0
        %v6585 = vadd.f32 0.0, %v6584
        %v6586 = vpop.f32.mrb[0].mxu0
        %v6587 = vadd.f32 0.0, %v6586
        %v6588 = vpop.f32.mrb[0].mxu0
        %v6589 = vadd.f32 0.0, %v6588
        %6590 = vmatprep.mubr.bf16.mxu0 0
        %6591 = vmatmul.mubr.bf16.gmra.mrb[0].mxu0 %v6518
        %v6592 = vpop.f32.mrb[0].mxu0
        %v6593 = vadd.f32 0.0, %v6592
        %v6594 = vpop.f32.mrb[0].mxu0
        %v6595 = vadd.f32 0.0, %v6594
        %v6596 = vpop.f32.mrb[0].mxu0
        %v6597 = vadd.f32 0.0, %v6596
        %v6598 = vpop.f32.mrb[0].mxu0
        %v6599 = vadd.f32 0.0, %v6598
        %6600 = vmatprep.mubr.bf16.mxu0 0
        %6601 = vmatmul.mubr.bf16.gmra.mrb[0].mxu0 %v6521
        %v6602 = vpop.f32.mrb[0].mxu0
        %v6603 = vadd.f32 0.0, %v6602
        %v6604 = vpop.f32.mrb[0].mxu0
        %v6605 = vadd.f32 0.0, %v6604
        %v6606 = vpop.f32.mrb[0].mxu0
        %v6607 = vadd.f32 0.0, %v6606
        %v6608 = vpop.f32.mrb[0].mxu0
        %v6609 = vadd.f32 0.0, %v6608
        %6610 = vmatprep.mubr.bf16.mxu0 0
        %6611 = vmatmul.mubr.bf16.gmra.mrb[0].mxu0 %v6524
        %v6612 = vpop.f32.mrb[0].mxu0
        %v6613 = vadd.f32 0.0, %v6612
        %v6614 = vpop.f32.mrb[0].mxu0
        %v6615 = vadd.f32 0.0, %v6614
        %v6616 = vpop.f32.mrb[0].mxu0
        %v6617 = vadd.f32 0.0, %v6616
        %v6618 = vpop.f32.mrb[0].mxu0
        %v6619 = vadd.f32 0.0, %v6618
        %6620 = vmatprep.mubr.bf16.mxu0 0
        %6621 = vmatmul.mubr.bf16.gmra.mrb[0].mxu0 %v6527
        %v6622 = vpop.f32.mrb[0].mxu0
        %v6623 = vadd.f32 0.0, %v6622
        %v6624 = vpop.f32.mrb[0].mxu0
        %v6625 = vadd.f32 0.0, %v6624
        %v6626 = vpop.f32.mrb[0].mxu0
        %v6627 = vadd.f32 0.0, %v6626
        %v6628 = vpop.f32.mrb[0].mxu0
        %v6629 = vadd.f32 0.0, %v6628
        %6630 = vmatprep.mubr.bf16.mxu0 0
        %6631 = vmatmul.mubr.bf16.gmra.mrb[0].mxu0 %v6530
        %v6632 = vpop.f32.mrb[0].mxu0
        %v6633 = vadd.f32 0.0, %v6632
        %v6634 = vpop.f32.mrb[0].mxu0
        %v6635 = vadd.f32 0.0, %v6634
        %v6636 = vpop.f32.mrb[0].mxu0
        %v6637 = vadd.f32 0.0, %v6636
        %v6638 = vpop.f32.mrb[0].mxu0
        %v6639 = vadd.f32 0.0, %v6638
        %6640 = vdwg.mxu0
        %v6641 = vadd.f32 %v6249, %v6573
        %v6642 = vadd.f32 %v6250, %v6575
        %v6643 = vadd.f32 %v6251, %v6577
        %v6644 = vadd.f32 %v6252, %v6579
        %v6645 = vadd.f32 %v6253, %v6583
        %v6646 = vadd.f32 %v6254, %v6585
        %v6647 = vadd.f32 %v6255, %v6587
        %v6648 = vadd.f32 %v6256, %v6589
        %v6649 = vadd.f32 %v6257, %v6593
        %v6650 = vadd.f32 %v6258, %v6595
        %v6651 = vadd.f32 %v6259, %v6597
        %v6652 = vadd.f32 %v6260, %v6599
        %v6653 = vadd.f32 %v6261, %v6603
        %v6654 = vadd.f32 %v6262, %v6605
        %v6655 = vadd.f32 %v6263, %v6607
        %v6656 = vadd.f32 %v6264, %v6609
        %v6657 = vadd.f32 %v6265, %v6613
        %v6658 = vadd.f32 %v6266, %v6615
        %v6659 = vadd.f32 %v6267, %v6617
        %v6660 = vadd.f32 %v6268, %v6619
        %v6661 = vadd.f32 %v6269, %v6623
        %v6662 = vadd.f32 %v6270, %v6625
        %v6663 = vadd.f32 %v6271, %v6627
        %v6664 = vadd.f32 %v6272, %v6629
        %v6665 = vadd.f32 %v6273, %v6633
        %v6666 = vadd.f32 %v6274, %v6635
        %v6667 = vadd.f32 %v6275, %v6637
        %v6668 = vadd.f32 %v6276, %v6639
        %v6669 = vld [vmem:[%s10] sm:$0x3]
        %v6671 = vlaneseq
        %v6672 = vshrl.u32 %v6671, 7
        %v6673 = vsub.s32 0, %v6672
        %v6674 = vrot.slane %v6669, %v6673
        %v6675 = vlaneseq
        %v6676 = vshrl.u32 %v6675, 7
        %v6677 = vsub.s32 1, %v6676
        %v6678 = vrot.slane %v6669, %v6677
        %v6681 = vadd.f32 %v6641, %v6674
        %v6682 = vadd.f32 %v6642, %v6678
        %v6683 = vadd.f32 %v6643, %v6674
        %v6684 = vadd.f32 %v6644, %v6678
        %v6685 = vadd.f32 %v6645, %v6674
        %v6686 = vadd.f32 %v6646, %v6678
        %v6687 = vadd.f32 %v6647, %v6674
        %v6688 = vadd.f32 %v6648, %v6678
        %v6689 = vadd.f32 %v6649, %v6674
        %v6690 = vadd.f32 %v6650, %v6678
        %v6691 = vadd.f32 %v6651, %v6674
        %v6692 = vadd.f32 %v6652, %v6678
        %v6693 = vadd.f32 %v6653, %v6674
        %v6694 = vadd.f32 %v6654, %v6678
        %v6695 = vadd.f32 %v6655, %v6674
        %v6696 = vadd.f32 %v6656, %v6678
        %v6697 = vadd.f32 %v6657, %v6674
        %v6698 = vadd.f32 %v6658, %v6678
        %v6699 = vadd.f32 %v6659, %v6674
        %v6700 = vadd.f32 %v6660, %v6678
        %v6701 = vadd.f32 %v6661, %v6674
        %v6702 = vadd.f32 %v6662, %v6678
        %v6703 = vadd.f32 %v6663, %v6674
        %v6704 = vadd.f32 %v6664, %v6678
        %v6705 = vadd.f32 %v6665, %v6674
        %v6706 = vadd.f32 %v6666, %v6678
        %v6707 = vadd.f32 %v6667, %v6674
        %v6708 = vadd.f32 %v6668, %v6678
        %v6709 = vmax.f32 %v6681, 0.0
        %v6710 = vmax.f32 %v6682, 0.0
        %v6711 = vmax.f32 %v6683, 0.0
        %v6712 = vmax.f32 %v6684, 0.0
        %v6713 = vmax.f32 %v6685, 0.0
        %v6714 = vmax.f32 %v6686, 0.0
        %v6715 = vmax.f32 %v6687, 0.0
        %v6716 = vmax.f32 %v6688, 0.0
        %v6717 = vmax.f32 %v6689, 0.0
        %v6718 = vmax.f32 %v6690, 0.0
        %v6719 = vmax.f32 %v6691, 0.0
        %v6720 = vmax.f32 %v6692, 0.0
        %v6721 = vmax.f32 %v6693, 0.0
        %v6722 = vmax.f32 %v6694, 0.0
        %v6723 = vmax.f32 %v6695, 0.0
        %v6724 = vmax.f32 %v6696, 0.0
        %v6725 = vmax.f32 %v6697, 0.0
        %v6726 = vmax.f32 %v6698, 0.0
        %v6727 = vmax.f32 %v6699, 0.0
        %v6728 = vmax.f32 %v6700, 0.0
        %v6729 = vmax.f32 %v6701, 0.0
        %v6730 = vmax.f32 %v6702, 0.0
        %v6731 = vmax.f32 %v6703, 0.0
        %v6732 = vmax.f32 %v6704, 0.0
        %v6733 = vmax.f32 %v6705, 0.0
        %v6734 = vmax.f32 %v6706, 0.0
        %v6735 = vmax.f32 %v6707, 0.0
        %v6736 = vmax.f32 %v6708, 0.0
        %v6737 = vpack.c.bf16 %v6711, %v6709
        %v6738 = vpack.c.bf16 %v6712, %v6710
        %v6739 = vpack.c.bf16 %v6715, %v6713
        %v6740 = vpack.c.bf16 %v6716, %v6714
        %v6741 = vpack.c.bf16 %v6719, %v6717
        %v6742 = vpack.c.bf16 %v6720, %v6718
        %v6743 = vpack.c.bf16 %v6723, %v6721
        %v6744 = vpack.c.bf16 %v6724, %v6722
        %v6745 = vpack.c.bf16 %v6727, %v6725
        %v6746 = vpack.c.bf16 %v6728, %v6726
        %v6747 = vpack.c.bf16 %v6731, %v6729
        %v6748 = vpack.c.bf16 %v6732, %v6730
        %v6749 = vpack.c.bf16 %v6735, %v6733
        %v6750 = vpack.c.bf16 %v6736, %v6734
        %v6751 = vld [vmem:[%s11] sm:$0xf]
        %v6752 = vld [vmem:[%s11 + $0x4] sm:$0xf]
        %v6753 = vld [vmem:[%s11 + $0x8] sm:$0xf]
        %v6754 = vld [vmem:[%s11 + $0xc] sm:$0xf]
        %v6755 = vld [vmem:[%s11 + $0x10] sm:$0xf]
        %v6761 = vunpack.c.l.b16 %v6751
        %v6762 = vunpack.c.l.b16 %v6752
        %v6763 = vunpack.c.l.b16 %v6753
        %v6764 = vunpack.c.l.b16 %v6754
        %v6765 = vunpack.c.l.b16 %v6755
        %v6766 = vpack.c.b16 %v6762, %v6761
        %v6767 = vpack.c.b16 %v6764, %v6763
        %v6768 = vpack.c.b16 %v6765, %v6765
        %v6770 = vsel %vm4991, %v6766, 0
        %v6773 = vsel %vm4991, %v6767, 0
        %v6776 = vsel %vm4991, %v6768, 0
        %6778 = vmatprep.subr.bf16.mxu0 %v6738
        %6779 = vmatpush1.bf16.msra.mxu0 %v6737
        %6780 = vmatprep.subr.bf16.mxu0 %v6740
        %6781 = vmatpush1.bf16.msra.mxu0 %v6739
        %6782 = vmatprep.subr.bf16.mxu0 %v6742
        %6783 = vmatpush1.bf16.msra.mxu0 %v6741
        %6784 = vmatprep.subr.bf16.mxu0 %v6744
        %6785 = vmatpush1.bf16.msra.mxu0 %v6743
        %6786 = vmatprep.subr.bf16.mxu0 %v6746
        %6787 = vmatpush1.bf16.msra.mxu0 %v6745
        %6788 = vmatprep.subr.bf16.mxu0 %v6748
        %6789 = vmatpush1.bf16.msra.mxu0 %v6747
        %6790 = vmatprep.subr.bf16.mxu0 %v6750
        %6791 = vmatpush1.bf16.msra.mxu0 %v6749
        %6792 = vmatprep.subr.bf16.mxu0 0
        %6793 = vmatpush1.bf16.msra.mxu0 0
        %6794 = vmatprep.subr.bf16.mxu0 0
        %6795 = vmatpush1.bf16.msra.mxu0 0
        %6796 = vmatprep.subr.bf16.mxu0 0
        %6797 = vmatpush1.bf16.msra.mxu0 0
        %6798 = vmatprep.subr.bf16.mxu0 0
        %6799 = vmatpush1.bf16.msra.mxu0 0
        %6800 = vmatprep.subr.bf16.mxu0 0
        %6801 = vmatpush1.bf16.msra.mxu0 0
        %6802 = vmatprep.subr.bf16.mxu0 0
        %6803 = vmatpush1.bf16.msra.mxu0 0
        %6804 = vmatprep.subr.bf16.mxu0 0
        %6805 = vmatpush1.bf16.msra.mxu0 0
        %6806 = vmatprep.subr.bf16.mxu0 0
        %6807 = vmatpush1.bf16.msra.mxu0 0
        %6808 = vmatprep.subr.bf16.mxu0 0
        %6809 = vmatpush1.bf16.msra.mxu0 0
        %6810 = vmatprep.mubr.bf16.mxu0 0
        %6811 = vmatmul.mubr.bf16.gmra.mrb[0].mxu0 %v6770
        %v6812 = vpop.f32.mrb[0].mxu0
        %v6813 = vadd.f32 0.0, %v6812
        %v6814 = vpop.f32.mrb[0].mxu0
        %v6815 = vadd.f32 0.0, %v6814
        %v6816 = vpop.f32.mrb[0].mxu0
        %v6817 = vadd.f32 0.0, %v6816
        %v6818 = vpop.f32.mrb[0].mxu0
        %v6819 = vadd.f32 0.0, %v6818
        %6820 = vmatprep.mubr.bf16.mxu0 0
        %6821 = vmatmul.mubr.bf16.gmra.mrb[0].mxu0 %v6773
        %v6822 = vpop.f32.mrb[0].mxu0
        %v6823 = vadd.f32 0.0, %v6822
        %v6824 = vpop.f32.mrb[0].mxu0
        %v6825 = vadd.f32 0.0, %v6824
        %v6826 = vpop.f32.mrb[0].mxu0
        %v6827 = vadd.f32 0.0, %v6826
        %v6828 = vpop.f32.mrb[0].mxu0
        %v6829 = vadd.f32 0.0, %v6828
        %6830 = vmatprep.mubr.bf16.mxu0 0
        %6831 = vmatmul.mubr.bf16.gmra.mrb[0].mxu0 %v6776
        %v6832 = vpop.f32.mrb[0].mxu0
        %v6833 = vadd.f32 0.0, %v6832
        %v6834 = vpop.f32.mrb[0].mxu0
        %v6835 = vadd.f32 0.0, %v6834
        %v6836 = vpop.f32.mrb[0].mxu0
        %v6837 = vpop.f32.mrb[0].mxu0
        %6838 = vdwg.mxu0
        %v6839 = vld [vmem:[%s12] sm:$0xf]
        %v6840 = vld [vmem:[%s12 + $0x4] sm:$0xf]
        %v6841 = vld [vmem:[%s12 + $0x8] sm:$0xf]
        %v6842 = vld [vmem:[%s12 + $0xc] sm:$0xf]
        %v6843 = vld [vmem:[%s12 + $0x10] sm:$0xf]
        %v6849 = vunpack.c.l.b16 %v6839
        %v6850 = vunpack.c.l.b16 %v6840
        %v6851 = vunpack.c.l.b16 %v6841
        %v6852 = vunpack.c.l.b16 %v6842
        %v6853 = vunpack.c.l.b16 %v6843
        %v6854 = vpack.c.b16 %v6850, %v6849
        %v6855 = vpack.c.b16 %v6852, %v6851
        %v6856 = vpack.c.b16 %v6853, %v6853
        %v6858 = vsel %vm4991, %v6854, 0
        %v6861 = vsel %vm4991, %v6855, 0
        %v6864 = vsel %vm4991, %v6856, 0
        %6866 = vmatprep.subr.bf16.mxu0 %v6738
        %6867 = vmatpush1.bf16.msra.mxu0 %v6737
        %6868 = vmatprep.subr.bf16.mxu0 %v6740
        %6869 = vmatpush1.bf16.msra.mxu0 %v6739
        %6870 = vmatprep.subr.bf16.mxu0 %v6742
        %6871 = vmatpush1.bf16.msra.mxu0 %v6741
        %6872 = vmatprep.subr.bf16.mxu0 %v6744
        %6873 = vmatpush1.bf16.msra.mxu0 %v6743
        %6874 = vmatprep.subr.bf16.mxu0 %v6746
        %6875 = vmatpush1.bf16.msra.mxu0 %v6745
        %6876 = vmatprep.subr.bf16.mxu0 %v6748
        %6877 = vmatpush1.bf16.msra.mxu0 %v6747
        %6878 = vmatprep.subr.bf16.mxu0 %v6750
        %6879 = vmatpush1.bf16.msra.mxu0 %v6749
        %6880 = vmatprep.subr.bf16.mxu0 0
        %6881 = vmatpush1.bf16.msra.mxu0 0
        %6882 = vmatprep.subr.bf16.mxu0 0
        %6883 = vmatpush1.bf16.msra.mxu0 0
        %6884 = vmatprep.subr.bf16.mxu0 0
        %6885 = vmatpush1.bf16.msra.mxu0 0
        %6886 = vmatprep.subr.bf16.mxu0 0
        %6887 = vmatpush1.bf16.msra.mxu0 0
        %6888 = vmatprep.subr.bf16.mxu0 0
        %6889 = vmatpush1.bf16.msra.mxu0 0
        %6890 = vmatprep.subr.bf16.mxu0 0
        %6891 = vmatpush1.bf16.msra.mxu0 0
        %6892 = vmatprep.subr.bf16.mxu0 0
        %6893 = vmatpush1.bf16.msra.mxu0 0
        %6894 = vmatprep.subr.bf16.mxu0 0
        %6895 = vmatpush1.bf16.msra.mxu0 0
        %6896 = vmatprep.subr.bf16.mxu0 0
        %6897 = vmatpush1.bf16.msra.mxu0 0
        %6898 = vmatprep.mubr.bf16.mxu0 0
        %6899 = vmatmul.mubr.bf16.gmra.mrb[0].mxu0 %v6858
        %v6900 = vpop.f32.mrb[0].mxu0
        %v6901 = vadd.f32 0.0, %v6900
        %v6902 = vpop.f32.mrb[0].mxu0
        %v6903 = vadd.f32 0.0, %v6902
        %v6904 = vpop.f32.mrb[0].mxu0
        %v6905 = vadd.f32 0.0, %v6904
        %v6906 = vpop.f32.mrb[0].mxu0
        %v6907 = vadd.f32 0.0, %v6906
        %6908 = vmatprep.mubr.bf16.mxu0 0
        %6909 = vmatmul.mubr.bf16.gmra.mrb[0].mxu0 %v6861
        %v6910 = vpop.f32.mrb[0].mxu0
        %v6911 = vadd.f32 0.0, %v6910
        %v6912 = vpop.f32.mrb[0].mxu0
        %v6913 = vadd.f32 0.0, %v6912
        %v6914 = vpop.f32.mrb[0].mxu0
        %v6915 = vadd.f32 0.0, %v6914
        %v6916 = vpop.f32.mrb[0].mxu0
        %v6917 = vadd.f32 0.0, %v6916
        %6918 = vmatprep.mubr.bf16.mxu0 0
        %6919 = vmatmul.mubr.bf16.gmra.mrb[0].mxu0 %v6864
        %v6920 = vpop.f32.mrb[0].mxu0
        %v6921 = vadd.f32 0.0, %v6920
        %v6922 = vpop.f32.mrb[0].mxu0
        %v6923 = vadd.f32 0.0, %v6922
        %v6924 = vpop.f32.mrb[0].mxu0
        %v6925 = vpop.f32.mrb[0].mxu0
        %6926 = vdwg.mxu0
        %v6927 = vmax.f32 %v6813, %v6901
        %v6928 = vmax.f32 %v6815, %v6903
        %v6929 = vmax.f32 %v6817, %v6905
        %v6930 = vmax.f32 %v6819, %v6907
        %v6931 = vmax.f32 %v6823, %v6911
        %v6932 = vmax.f32 %v6825, %v6913
        %v6933 = vmax.f32 %v6827, %v6915
        %v6934 = vmax.f32 %v6829, %v6917
        %v6935 = vmax.f32 %v6833, %v6921
        %v6936 = vmax.f32 %v6835, %v6923
        %v6937 = vpack.c.bf16 %v6929, %v6927
        %v6938 = vpack.c.bf16 %v6930, %v6928
        %v6939 = vpack.c.bf16 %v6933, %v6931
        %v6940 = vpack.c.bf16 %v6934, %v6932
        %v6941 = vpack.c.bf16 %v6935, %v6935
        %v6942 = vpack.c.bf16 %v6936, %v6936
        %v6943 = vld [vmem:[%s13] sm:$0xf]
        %v6944 = vld [vmem:[%s13 + $0x4] sm:$0xf]
        %v6945 = vld [vmem:[%s13 + $0x8] sm:$0xf]
        %v6946 = vld [vmem:[%s13 + $0xc] sm:$0xf]
        %v6947 = vld [vmem:[%s13 + $0x10] sm:$0xf]
        %v6948 = vld [vmem:[%s13 + $0x14] sm:$0xf]
        %v6949 = vld [vmem:[%s13 + $0x18] sm:$0xf]
        %v6950 = vld [vmem:[%s13 + $0x1c] sm:$0xf]
        %v6951 = vld [vmem:[%s13 + $0x20] sm:$0xf]
        %v6952 = vld [vmem:[%s13 + $0x24] sm:$0xf]
        %v6953 = vld [vmem:[%s13 + $0x28] sm:$0xf]
        %v6954 = vld [vmem:[%s13 + $0x2c] sm:$0xf]
        %v6955 = vld [vmem:[%s13 + $0x30] sm:$0xf]
        %v6956 = vld [vmem:[%s13 + $0x34] sm:$0xf]
        %v6957 = vld [vmem:[%s13 + $0x38] sm:$0xf]
        %v6958 = vld [vmem:[%s13 + $0x3c] sm:$0xf]
        %v6959 = vld [vmem:[%s13 + $0x40] sm:$0xf]
        %v6960 = vld [vmem:[%s13 + $0x44] sm:$0xf]
        %v6961 = vld [vmem:[%s13 + $0x48] sm:$0xf]
        %v6962 = vld [vmem:[%s13 + $0x4c] sm:$0xf]
        %v6983 = vunpack.c.l.b16 %v6943
        %v6984 = vunpack.c.l.b16 %v6944
        %v6985 = vunpack.c.l.b16 %v6945
        %v6986 = vunpack.c.l.b16 %v6946
        %v6987 = vunpack.c.l.b16 %v6947
        %v6988 = vunpack.c.l.b16 %v6948
        %v6989 = vunpack.c.l.b16 %v6949
        %v6990 = vunpack.c.l.b16 %v6950
        %v6991 = vunpack.c.l.b16 %v6951
        %v6992 = vunpack.c.l.b16 %v6952
        %v6993 = vunpack.c.l.b16 %v6953
        %v6994 = vunpack.c.l.b16 %v6954
        %v6995 = vunpack.c.l.b16 %v6955
        %v6996 = vunpack.c.l.b16 %v6956
        %v6997 = vunpack.c.l.b16 %v6957
        %v6998 = vunpack.c.l.b16 %v6958
        %v6999 = vunpack.c.l.b16 %v6959
        %v7000 = vunpack.c.l.b16 %v6960
        %v7001 = vunpack.c.l.b16 %v6961
        %v7002 = vunpack.c.l.b16 %v6962
        %v7003 = vpack.c.b16 %v6984, %v6983
        %v7004 = vpack.c.b16 %v6986, %v6985
        %v7005 = vpack.c.b16 %v6988, %v6987
        %v7006 = vpack.c.b16 %v6990, %v6989
        %v7007 = vpack.c.b16 %v6992, %v6991
        %v7008 = vpack.c.b16 %v6994, %v6993
        %v7009 = vpack.c.b16 %v6996, %v6995
        %v7010 = vpack.c.b16 %v6998, %v6997
        %v7011 = vpack.c.b16 %v7000, %v6999
        %v7012 = vpack.c.b16 %v7002, %v7001
        %vm7023 = vcmask 261120
        %v7025 = vsel %vm7023, %v6938, 0
        %v7028 = vsel %vm7023, %v6940, 0
        %v7031 = vsel %vm7023, %v6942, 0
        %7033 = vmatprep.subr.bf16.mxu0 0
        %7034 = vmatpush1.bf16.msra.mxu0 %v7003
        %7035 = vmatprep.subr.bf16.mxu0 0
        %7036 = vmatpush1.bf16.msra.mxu0 %v7004
        %7037 = vmatprep.subr.bf16.mxu0 0
        %7038 = vmatpush1.bf16.msra.mxu0 %v7005
        %7039 = vmatprep.subr.bf16.mxu0 0
        %7040 = vmatpush1.bf16.msra.mxu0 %v7006
        %7041 = vmatprep.subr.bf16.mxu0 0
        %7042 = vmatpush1.bf16.msra.mxu0 %v7007
        %7043 = vmatprep.subr.bf16.mxu0 0
        %7044 = vmatpush1.bf16.msra.mxu0 %v7008
        %7045 = vmatprep.subr.bf16.mxu0 0
        %7046 = vmatpush1.bf16.msra.mxu0 %v7009
        %7047 = vmatprep.subr.bf16.mxu0 0
        %7048 = vmatpush1.bf16.msra.mxu0 %v7010
        %7049 = vmatprep.subr.bf16.mxu0 0
        %7050 = vmatpush1.bf16.msra.mxu0 %v7011
        %7051 = vmatprep.subr.bf16.mxu0 0
        %7052 = vmatpush1.bf16.msra.mxu0 %v7012
        %7053 = vmatprep.subr.bf16.mxu0 0
        %7054 = vmatpush1.bf16.msra.mxu0 0
        %7055 = vmatprep.subr.bf16.mxu0 0
        %7056 = vmatpush1.bf16.msra.mxu0 0
        %7057 = vmatprep.subr.bf16.mxu0 0
        %7058 = vmatpush1.bf16.msra.mxu0 0
        %7059 = vmatprep.subr.bf16.mxu0 0
        %7060 = vmatpush1.bf16.msra.mxu0 0
        %7061 = vmatprep.subr.bf16.mxu0 0
        %7062 = vmatpush1.bf16.msra.mxu0 0
        %7063 = vmatprep.subr.bf16.mxu0 0
        %7064 = vmatpush1.bf16.msra.mxu0 0
        %7065 = vmatprep.mubr.bf16.mxu0 %v7025
        %7066 = vmatmul.mubr.bf16.gmra.mrb[0].mxu0 %v6937
        %v7067 = vpop.f32.mrb[0].mxu0
        %v7068 = vadd.f32 0.0, %v7067
        %v7069 = vpop.f32.mrb[0].mxu0
        %v7070 = vpop.f32.mrb[0].mxu0
        %v7071 = vadd.f32 0.0, %v7070
        %v7072 = vpop.f32.mrb[0].mxu0
        %7073 = vmatprep.mubr.bf16.mxu0 %v7028
        %7074 = vmatmul.mubr.bf16.gmra.mrb[0].mxu0 %v6939
        %v7075 = vpop.f32.mrb[0].mxu0
        %v7076 = vadd.f32 0.0, %v7075
        %v7077 = vpop.f32.mrb[0].mxu0
        %v7078 = vpop.f32.mrb[0].mxu0
        %v7079 = vadd.f32 0.0, %v7078
        %v7080 = vpop.f32.mrb[0].mxu0
        %7081 = vmatprep.mubr.bf16.mxu0 %v7031
        %7082 = vmatmul.mubr.bf16.gmra.mrb[0].mxu0 %v6941
        %v7083 = vpop.f32.mrb[0].mxu0
        %v7084 = vadd.f32 0.0, %v7083
        %v7085 = vpop.f32.mrb[0].mxu0
        %v7086 = vpop.f32.mrb[0].mxu0
        %v7087 = vpop.f32.mrb[0].mxu0
        %7088 = vdwg.mxu0
        %v7089 = vld [vmem:[%s14] sm:$0xf]
        %v7090 = vld [vmem:[%s14 + $0x4] sm:$0xf]
        %v7091 = vld [vmem:[%s14 + $0x8] sm:$0xf]
        %v7092 = vld [vmem:[%s14 + $0xc] sm:$0xf]
        %v7093 = vld [vmem:[%s14 + $0x10] sm:$0xf]
        %v7094 = vld [vmem:[%s14 + $0x14] sm:$0xf]
        %v7095 = vld [vmem:[%s14 + $0x18] sm:$0xf]
        %v7096 = vld [vmem:[%s14 + $0x1c] sm:$0xf]
        %v7097 = vld [vmem:[%s14 + $0x20] sm:$0xf]
        %v7098 = vld [vmem:[%s14 + $0x24] sm:$0xf]
        %v7099 = vld [vmem:[%s14 + $0x28] sm:$0xf]
        %v7100 = vld [vmem:[%s14 + $0x2c] sm:$0xf]
        %v7101 = vld [vmem:[%s14 + $0x30] sm:$0xf]
        %v7102 = vld [vmem:[%s14 + $0x34] sm:$0xf]
        %v7103 = vld [vmem:[%s14 + $0x38] sm:$0xf]
        %v7104 = vld [vmem:[%s14 + $0x3c] sm:$0xf]
        %v7105 = vld [vmem:[%s14 + $0x40] sm:$0xf]
        %v7106 = vld [vmem:[%s14 + $0x44] sm:$0xf]
        %v7107 = vld [vmem:[%s14 + $0x48] sm:$0xf]
        %v7108 = vld [vmem:[%s14 + $0x4c] sm:$0xf]
        %v7129 = vunpack.c.l.b16 %v7089
        %v7130 = vunpack.c.l.b16 %v7090
        %v7131 = vunpack.c.l.b16 %v7091
        %v7132 = vunpack.c.l.b16 %v7092
        %v7133 = vunpack.c.l.b16 %v7093
        %v7134 = vunpack.c.l.b16 %v7094
        %v7135 = vunpack.c.l.b16 %v7095
        %v7136 = vunpack.c.l.b16 %v7096
        %v7137 = vunpack.c.l.b16 %v7097
        %v7138 = vunpack.c.l.b16 %v7098
        %v7139 = vunpack.c.l.b16 %v7099
        %v7140 = vunpack.c.l.b16 %v7100
        %v7141 = vunpack.c.l.b16 %v7101
        %v7142 = vunpack.c.l.b16 %v7102
        %v7143 = vunpack.c.l.b16 %v7103
        %v7144 = vunpack.c.l.b16 %v7104
        %v7145 = vunpack.c.l.b16 %v7105
        %v7146 = vunpack.c.l.b16 %v7106
        %v7147 = vunpack.c.l.b16 %v7107
        %v7148 = vunpack.c.l.b16 %v7108
        %v7149 = vpack.c.b16 %v7130, %v7129
        %v7150 = vpack.c.b16 %v7132, %v7131
        %v7151 = vpack.c.b16 %v7134, %v7133
        %v7152 = vpack.c.b16 %v7136, %v7135
        %v7153 = vpack.c.b16 %v7138, %v7137
        %v7154 = vpack.c.b16 %v7140, %v7139
        %v7155 = vpack.c.b16 %v7142, %v7141
        %v7156 = vpack.c.b16 %v7144, %v7143
        %v7157 = vpack.c.b16 %v7146, %v7145
        %v7158 = vpack.c.b16 %v7148, %v7147
        %7169 = vmatprep.subr.bf16.mxu0 0
        %7170 = vmatpush1.bf16.msra.mxu0 %v7149
        %7171 = vmatprep.subr.bf16.mxu0 0
        %7172 = vmatpush1.bf16.msra.mxu0 %v7150
        %7173 = vmatprep.subr.bf16.mxu0 0
        %7174 = vmatpush1.bf16.msra.mxu0 %v7151
        %7175 = vmatprep.subr.bf16.mxu0 0
        %7176 = vmatpush1.bf16.msra.mxu0 %v7152
        %7177 = vmatprep.subr.bf16.mxu0 0
        %7178 = vmatpush1.bf16.msra.mxu0 %v7153
        %7179 = vmatprep.subr.bf16.mxu0 0
        %7180 = vmatpush1.bf16.msra.mxu0 %v7154
        %7181 = vmatprep.subr.bf16.mxu0 0
        %7182 = vmatpush1.bf16.msra.mxu0 %v7155
        %7183 = vmatprep.subr.bf16.mxu0 0
        %7184 = vmatpush1.bf16.msra.mxu0 %v7156
        %7185 = vmatprep.subr.bf16.mxu0 0
        %7186 = vmatpush1.bf16.msra.mxu0 %v7157
        %7187 = vmatprep.subr.bf16.mxu0 0
        %7188 = vmatpush1.bf16.msra.mxu0 %v7158
        %7189 = vmatprep.subr.bf16.mxu0 0
        %7190 = vmatpush1.bf16.msra.mxu0 0
        %7191 = vmatprep.subr.bf16.mxu0 0
        %7192 = vmatpush1.bf16.msra.mxu0 0
        %7193 = vmatprep.subr.bf16.mxu0 0
        %7194 = vmatpush1.bf16.msra.mxu0 0
        %7195 = vmatprep.subr.bf16.mxu0 0
        %7196 = vmatpush1.bf16.msra.mxu0 0
        %7197 = vmatprep.subr.bf16.mxu0 0
        %7198 = vmatpush1.bf16.msra.mxu0 0
        %7199 = vmatprep.subr.bf16.mxu0 0
        %7200 = vmatpush1.bf16.msra.mxu0 0
        %7201 = vmatprep.mubr.bf16.mxu0 %v7025
        %7202 = vmatmul.mubr.bf16.gmra.mrb[0].mxu0 %v6937
        %v7203 = vpop.f32.mrb[0].mxu0
        %v7204 = vadd.f32 0.0, %v7203
        %v7205 = vpop.f32.mrb[0].mxu0
        %v7206 = vpop.f32.mrb[0].mxu0
        %v7207 = vadd.f32 0.0, %v7206
        %v7208 = vpop.f32.mrb[0].mxu0
        %7209 = vmatprep.mubr.bf16.mxu0 %v7028
        %7210 = vmatmul.mubr.bf16.gmra.mrb[0].mxu0 %v6939
        %v7211 = vpop.f32.mrb[0].mxu0
        %v7212 = vadd.f32 0.0, %v7211
        %v7213 = vpop.f32.mrb[0].mxu0
        %v7214 = vpop.f32.mrb[0].mxu0
        %v7215 = vadd.f32 0.0, %v7214
        %v7216 = vpop.f32.mrb[0].mxu0
        %7217 = vmatprep.mubr.bf16.mxu0 %v7031
        %7218 = vmatmul.mubr.bf16.gmra.mrb[0].mxu0 %v6941
        %v7219 = vpop.f32.mrb[0].mxu0
        %v7220 = vadd.f32 0.0, %v7219
        %v7221 = vpop.f32.mrb[0].mxu0
        %v7222 = vpop.f32.mrb[0].mxu0
        %v7223 = vpop.f32.mrb[0].mxu0
        %7224 = vdwg.mxu0
        %v7225 = vmax.f32 %v7068, %v7204
        %v7226 = vmax.f32 %v7071, %v7207
        %v7227 = vmax.f32 %v7076, %v7212
        %v7228 = vmax.f32 %v7079, %v7215
        %v7229 = vmax.f32 %v7084, %v7220
        %v7230 = vpack.c.bf16 %v7226, %v7225
        %v7231 = vpack.c.bf16 %v7228, %v7227
        %v7232 = vpack.c.bf16 %v7229, %v7229
        %v7233 = vld [vmem:[%s15] sm:$0xf]
        %v7234 = vld [vmem:[%s15 + $0x4] sm:$0xf]
        %v7235 = vld [vmem:[%s15 + $0x8] sm:$0xf]
        %v7236 = vld [vmem:[%s15 + $0xc] sm:$0xf]
        %v7237 = vld [vmem:[%s15 + $0x10] sm:$0xf]
        %v7238 = vld [vmem:[%s15 + $0x14] sm:$0xf]
        %v7239 = vld [vmem:[%s15 + $0x18] sm:$0xf]
        %v7240 = vld [vmem:[%s15 + $0x1c] sm:$0xf]
        %v7241 = vld [vmem:[%s15 + $0x20] sm:$0xf]
        %v7242 = vld [vmem:[%s15 + $0x24] sm:$0xf]
        %s7243 = scalar_lea.vmem %s15, 40
        %v7244 = vld [vmem:[%s7243] sm:$0xf]
        %v7245 = vld [vmem:[%s7243 + $0x4] sm:$0xf]
        %v7246 = vld [vmem:[%s7243 + $0x8] sm:$0xf]
        %v7247 = vld [vmem:[%s7243 + $0xc] sm:$0xf]
        %v7248 = vld [vmem:[%s7243 + $0x10] sm:$0xf]
        %v7249 = vld [vmem:[%s7243 + $0x14] sm:$0xf]
        %v7250 = vld [vmem:[%s7243 + $0x18] sm:$0xf]
        %v7251 = vld [vmem:[%s7243 + $0x1c] sm:$0xf]
        %v7252 = vld [vmem:[%s7243 + $0x20] sm:$0xf]
        %v7253 = vld [vmem:[%s7243 + $0x24] sm:$0xf]
        %v7255 = vrot.slane %v7230, 4
        %v7266 = vunpack.c.l.b16 %v7244
        %v7267 = vunpack.c.l.b16 %v7245
        %v7268 = vunpack.c.l.b16 %v7246
        %v7269 = vunpack.c.l.b16 %v7247
        %v7270 = vunpack.c.l.b16 %v7248
        %v7271 = vunpack.c.l.b16 %v7249
        %v7272 = vunpack.c.l.b16 %v7250
        %v7273 = vunpack.c.l.b16 %v7251
        %v7274 = vunpack.c.l.b16 %v7252
        %v7275 = vunpack.c.l.b16 %v7253
        %v7276 = vpack.c.b16 %v7267, %v7266
        %v7277 = vpack.c.b16 %v7269, %v7268
        %v7278 = vpack.c.b16 %v7271, %v7270
        %v7279 = vpack.c.b16 %v7273, %v7272
        %v7280 = vpack.c.b16 %v7275, %v7274
        %vm7286 = vcmask 654336
        %v7288 = vsel %vm7286, %v7255, 0
        %7290 = vmatprep.subr.bf16.mxu0 0
        %7291 = vmatpush1.bf16.msra.mxu0 %v7276
        %7292 = vmatprep.subr.bf16.mxu0 0
        %7293 = vmatpush1.bf16.msra.mxu0 %v7277
        %7294 = vmatprep.subr.bf16.mxu0 0
        %7295 = vmatpush1.bf16.msra.mxu0 %v7278
        %7296 = vmatprep.subr.bf16.mxu0 0
        %7297 = vmatpush1.bf16.msra.mxu0 %v7279
        %7298 = vmatprep.subr.bf16.mxu0 0
        %7299 = vmatpush1.bf16.msra.mxu0 %v7280
        %7300 = vmatprep.subr.bf16.mxu0 0
        %7301 = vmatpush1.bf16.msra.mxu0 0
        %7302 = vmatprep.subr.bf16.mxu0 0
        %7303 = vmatpush1.bf16.msra.mxu0 0
        %7304 = vmatprep.subr.bf16.mxu0 0
        %7305 = vmatpush1.bf16.msra.mxu0 0
        %7306 = vmatprep.subr.bf16.mxu0 0
        %7307 = vmatpush1.bf16.msra.mxu0 0
        %7308 = vmatprep.subr.bf16.mxu0 0
        %7309 = vmatpush1.bf16.msra.mxu0 0
        %7310 = vmatprep.subr.bf16.mxu0 0
        %7311 = vmatpush1.bf16.msra.mxu0 0
        %7312 = vmatprep.subr.bf16.mxu0 0
        %7313 = vmatpush1.bf16.msra.mxu0 0
        %7314 = vmatprep.subr.bf16.mxu0 0
        %7315 = vmatpush1.bf16.msra.mxu0 0
        %7316 = vmatprep.subr.bf16.mxu0 0
        %7317 = vmatpush1.bf16.msra.mxu0 0
        %7318 = vmatprep.subr.bf16.mxu0 0
        %7319 = vmatpush1.bf16.msra.mxu0 0
        %7320 = vmatprep.subr.bf16.mxu0 0
        %7321 = vmatpush1.bf16.msra.mxu0 0
        %7322 = vmatprep.mubr.bf16.mxu0 0
        %7323 = vmatmul.mubr.bf16.gmra.mrb[0].mxu0 %v7288
        %v7324 = vpop.f32.mrb[0].mxu0
        %v7325 = vadd.f32 0.0, %v7324
        %v7326 = vpop.f32.mrb[0].mxu0
        %v7327 = vpop.f32.mrb[0].mxu0
        %v7328 = vpop.f32.mrb[0].mxu0
        %7329 = vdwg.mxu0
        %v7340 = vunpack.c.l.b16 %v7233
        %v7341 = vunpack.c.l.b16 %v7234
        %v7342 = vunpack.c.l.b16 %v7235
        %v7343 = vunpack.c.l.b16 %v7236
        %v7344 = vunpack.c.l.b16 %v7237
        %v7345 = vunpack.c.l.b16 %v7238
        %v7346 = vunpack.c.l.b16 %v7239
        %v7347 = vunpack.c.l.b16 %v7240
        %v7348 = vunpack.c.l.b16 %v7241
        %v7349 = vunpack.c.l.b16 %v7242
        %v7350 = vpack.c.b16 %v7341, %v7340
        %v7351 = vpack.c.b16 %v7343, %v7342
        %v7352 = vpack.c.b16 %v7345, %v7344
        %v7353 = vpack.c.b16 %v7347, %v7346
        %v7354 = vpack.c.b16 %v7349, %v7348
        %v7361 = vsel %vm7286, %v7230, 0
        %7363 = vmatprep.subr.bf16.mxu0 0
        %7364 = vmatpush1.bf16.msra.mxu0 %v7350
        %7365 = vmatprep.subr.bf16.mxu0 0
        %7366 = vmatpush1.bf16.msra.mxu0 %v7351
        %7367 = vmatprep.subr.bf16.mxu0 0
        %7368 = vmatpush1.bf16.msra.mxu0 %v7352
        %7369 = vmatprep.subr.bf16.mxu0 0
        %7370 = vmatpush1.bf16.msra.mxu0 %v7353
        %7371 = vmatprep.subr.bf16.mxu0 0
        %7372 = vmatpush1.bf16.msra.mxu0 %v7354
        %7373 = vmatprep.subr.bf16.mxu0 0
        %7374 = vmatpush1.bf16.msra.mxu0 0
        %7375 = vmatprep.subr.bf16.mxu0 0
        %7376 = vmatpush1.bf16.msra.mxu0 0
        %7377 = vmatprep.subr.bf16.mxu0 0
        %7378 = vmatpush1.bf16.msra.mxu0 0
        %7379 = vmatprep.subr.bf16.mxu0 0
        %7380 = vmatpush1.bf16.msra.mxu0 0
        %7381 = vmatprep.subr.bf16.mxu0 0
        %7382 = vmatpush1.bf16.msra.mxu0 0
        %7383 = vmatprep.subr.bf16.mxu0 0
        %7384 = vmatpush1.bf16.msra.mxu0 0
        %7385 = vmatprep.subr.bf16.mxu0 0
        %7386 = vmatpush1.bf16.msra.mxu0 0
        %7387 = vmatprep.subr.bf16.mxu0 0
        %7388 = vmatpush1.bf16.msra.mxu0 0
        %7389 = vmatprep.subr.bf16.mxu0 0
        %7390 = vmatpush1.bf16.msra.mxu0 0
        %7391 = vmatprep.subr.bf16.mxu0 0
        %7392 = vmatpush1.bf16.msra.mxu0 0
        %7393 = vmatprep.subr.bf16.mxu0 0
        %7394 = vmatpush1.bf16.msra.mxu0 0
        %7395 = vmatprep.mubr.bf16.mxu0 0
        %7396 = vmatmul.mubr.bf16.gmra.mrb[0].mxu0 %v7361
        %v7397 = vpop.f32.mrb[0].mxu0
        %v7398 = vadd.f32 %v7325, %v7397
        %v7399 = vpop.f32.mrb[0].mxu0
        %v7400 = vpop.f32.mrb[0].mxu0
        %v7401 = vpop.f32.mrb[0].mxu0
        %7402 = vdwg.mxu0
        %s7403 = scalar_lea.vmem %s15, 80
        %v7404 = vld [vmem:[%s7403] sm:$0xf]
        %v7405 = vld [vmem:[%s7403 + $0x4] sm:$0xf]
        %v7406 = vld [vmem:[%s7403 + $0x8] sm:$0xf]
        %v7407 = vld [vmem:[%s7403 + $0xc] sm:$0xf]
        %v7408 = vld [vmem:[%s7403 + $0x10] sm:$0xf]
        %v7409 = vld [vmem:[%s7403 + $0x14] sm:$0xf]
        %v7410 = vld [vmem:[%s7403 + $0x18] sm:$0xf]
        %v7411 = vld [vmem:[%s7403 + $0x1c] sm:$0xf]
        %v7412 = vld [vmem:[%s7403 + $0x20] sm:$0xf]
        %v7413 = vld [vmem:[%s7403 + $0x24] sm:$0xf]
        %v7424 = vunpack.c.l.b16 %v7404
        %v7425 = vunpack.c.l.b16 %v7405
        %v7426 = vunpack.c.l.b16 %v7406
        %v7427 = vunpack.c.l.b16 %v7407
        %v7428 = vunpack.c.l.b16 %v7408
        %v7429 = vunpack.c.l.b16 %v7409
        %v7430 = vunpack.c.l.b16 %v7410
        %v7431 = vunpack.c.l.b16 %v7411
        %v7432 = vunpack.c.l.b16 %v7412
        %v7433 = vunpack.c.l.b16 %v7413
        %v7434 = vpack.c.b16 %v7425, %v7424
        %v7435 = vpack.c.b16 %v7427, %v7426
        %v7436 = vpack.c.b16 %v7429, %v7428
        %v7437 = vpack.c.b16 %v7431, %v7430
        %v7438 = vpack.c.b16 %v7433, %v7432
        %v7445 = vsel %vm7286, %v7231, 0
        %7447 = vmatprep.subr.bf16.mxu0 0
        %7448 = vmatpush1.bf16.msra.mxu0 %v7434
        %7449 = vmatprep.subr.bf16.mxu0 0
        %7450 = vmatpush1.bf16.msra.mxu0 %v7435
        %7451 = vmatprep.subr.bf16.mxu0 0
        %7452 = vmatpush1.bf16.msra.mxu0 %v7436
        %7453 = vmatprep.subr.bf16.mxu0 0
        %7454 = vmatpush1.bf16.msra.mxu0 %v7437
        %7455 = vmatprep.subr.bf16.mxu0 0
        %7456 = vmatpush1.bf16.msra.mxu0 %v7438
        %7457 = vmatprep.subr.bf16.mxu0 0
        %7458 = vmatpush1.bf16.msra.mxu0 0
        %7459 = vmatprep.subr.bf16.mxu0 0
        %7460 = vmatpush1.bf16.msra.mxu0 0
        %7461 = vmatprep.subr.bf16.mxu0 0
        %7462 = vmatpush1.bf16.msra.mxu0 0
        %7463 = vmatprep.subr.bf16.mxu0 0
        %7464 = vmatpush1.bf16.msra.mxu0 0
        %7465 = vmatprep.subr.bf16.mxu0 0
        %7466 = vmatpush1.bf16.msra.mxu0 0
        %7467 = vmatprep.subr.bf16.mxu0 0
        %7468 = vmatpush1.bf16.msra.mxu0 0
        %7469 = vmatprep.subr.bf16.mxu0 0
        %7470 = vmatpush1.bf16.msra.mxu0 0
        %7471 = vmatprep.subr.bf16.mxu0 0
        %7472 = vmatpush1.bf16.msra.mxu0 0
        %7473 = vmatprep.subr.bf16.mxu0 0
        %7474 = vmatpush1.bf16.msra.mxu0 0
        %7475 = vmatprep.subr.bf16.mxu0 0
        %7476 = vmatpush1.bf16.msra.mxu0 0
        %7477 = vmatprep.subr.bf16.mxu0 0
        %7478 = vmatpush1.bf16.msra.mxu0 0
        %7479 = vmatprep.mubr.bf16.mxu0 0
        %7480 = vmatmul.mubr.bf16.gmra.mrb[0].mxu0 %v7445
        %v7481 = vpop.f32.mrb[0].mxu0
        %v7482 = vadd.f32 0.0, %v7481
        %v7483 = vpop.f32.mrb[0].mxu0
        %v7484 = vpop.f32.mrb[0].mxu0
        %v7485 = vpop.f32.mrb[0].mxu0
        %7486 = vdwg.mxu0
        %v7487 = vadd.f32 %v7398, %v7482
        %s7488 = scalar_lea.vmem %s15, 120
        %v7489 = vld [vmem:[%s7488] sm:$0xf]
        %v7490 = vld [vmem:[%s7488 + $0x4] sm:$0xf]
        %v7491 = vld [vmem:[%s7488 + $0x8] sm:$0xf]
        %v7492 = vld [vmem:[%s7488 + $0xc] sm:$0xf]
        %v7493 = vld [vmem:[%s7488 + $0x10] sm:$0xf]
        %v7494 = vld [vmem:[%s7488 + $0x14] sm:$0xf]
        %v7495 = vld [vmem:[%s7488 + $0x18] sm:$0xf]
        %v7496 = vld [vmem:[%s7488 + $0x1c] sm:$0xf]
        %v7497 = vld [vmem:[%s7488 + $0x20] sm:$0xf]
        %v7498 = vld [vmem:[%s7488 + $0x24] sm:$0xf]
        %v7500 = vrot.slane %v7231, 4
        %v7511 = vunpack.c.l.b16 %v7489
        %v7512 = vunpack.c.l.b16 %v7490
        %v7513 = vunpack.c.l.b16 %v7491
        %v7514 = vunpack.c.l.b16 %v7492
        %v7515 = vunpack.c.l.b16 %v7493
        %v7516 = vunpack.c.l.b16 %v7494
        %v7517 = vunpack.c.l.b16 %v7495
        %v7518 = vunpack.c.l.b16 %v7496
        %v7519 = vunpack.c.l.b16 %v7497
        %v7520 = vunpack.c.l.b16 %v7498
        %v7521 = vpack.c.b16 %v7512, %v7511
        %v7522 = vpack.c.b16 %v7514, %v7513
        %v7523 = vpack.c.b16 %v7516, %v7515
        %v7524 = vpack.c.b16 %v7518, %v7517
        %v7525 = vpack.c.b16 %v7520, %v7519
        %v7532 = vsel %vm7286, %v7500, 0
        %7534 = vmatprep.subr.bf16.mxu0 0
        %7535 = vmatpush1.bf16.msra.mxu0 %v7521
        %7536 = vmatprep.subr.bf16.mxu0 0
        %7537 = vmatpush1.bf16.msra.mxu0 %v7522
        %7538 = vmatprep.subr.bf16.mxu0 0
        %7539 = vmatpush1.bf16.msra.mxu0 %v7523
        %7540 = vmatprep.subr.bf16.mxu0 0
        %7541 = vmatpush1.bf16.msra.mxu0 %v7524
        %7542 = vmatprep.subr.bf16.mxu0 0
        %7543 = vmatpush1.bf16.msra.mxu0 %v7525
        %7544 = vmatprep.subr.bf16.mxu0 0
        %7545 = vmatpush1.bf16.msra.mxu0 0
        %7546 = vmatprep.subr.bf16.mxu0 0
        %7547 = vmatpush1.bf16.msra.mxu0 0
        %7548 = vmatprep.subr.bf16.mxu0 0
        %7549 = vmatpush1.bf16.msra.mxu0 0
        %7550 = vmatprep.subr.bf16.mxu0 0
        %7551 = vmatpush1.bf16.msra.mxu0 0
        %7552 = vmatprep.subr.bf16.mxu0 0
        %7553 = vmatpush1.bf16.msra.mxu0 0
        %7554 = vmatprep.subr.bf16.mxu0 0
        %7555 = vmatpush1.bf16.msra.mxu0 0
        %7556 = vmatprep.subr.bf16.mxu0 0
        %7557 = vmatpush1.bf16.msra.mxu0 0
        %7558 = vmatprep.subr.bf16.mxu0 0
        %7559 = vmatpush1.bf16.msra.mxu0 0
        %7560 = vmatprep.subr.bf16.mxu0 0
        %7561 = vmatpush1.bf16.msra.mxu0 0
        %7562 = vmatprep.subr.bf16.mxu0 0
        %7563 = vmatpush1.bf16.msra.mxu0 0
        %7564 = vmatprep.subr.bf16.mxu0 0
        %7565 = vmatpush1.bf16.msra.mxu0 0
        %7566 = vmatprep.mubr.bf16.mxu0 0
        %7567 = vmatmul.mubr.bf16.gmra.mrb[0].mxu0 %v7532
        %v7568 = vpop.f32.mrb[0].mxu0
        %v7569 = vadd.f32 0.0, %v7568
        %v7570 = vpop.f32.mrb[0].mxu0
        %v7571 = vpop.f32.mrb[0].mxu0
        %v7572 = vpop.f32.mrb[0].mxu0
        %7573 = vdwg.mxu0
        %v7574 = vadd.f32 %v7487, %v7569
        %s7575 = scalar_lea.vmem %s15, 160
        %v7576 = vld [vmem:[%s7575] sm:$0xf]
        %v7577 = vld [vmem:[%s7575 + $0x4] sm:$0xf]
        %v7578 = vld [vmem:[%s7575 + $0x8] sm:$0xf]
        %v7579 = vld [vmem:[%s7575 + $0xc] sm:$0xf]
        %v7580 = vld [vmem:[%s7575 + $0x10] sm:$0xf]
        %v7581 = vld [vmem:[%s7575 + $0x14] sm:$0xf]
        %v7582 = vld [vmem:[%s7575 + $0x18] sm:$0xf]
        %v7583 = vld [vmem:[%s7575 + $0x1c] sm:$0xf]
        %v7584 = vld [vmem:[%s7575 + $0x20] sm:$0xf]
        %v7585 = vld [vmem:[%s7575 + $0x24] sm:$0xf]
        %v7596 = vunpack.c.l.b16 %v7576
        %v7597 = vunpack.c.l.b16 %v7577
        %v7598 = vunpack.c.l.b16 %v7578
        %v7599 = vunpack.c.l.b16 %v7579
        %v7600 = vunpack.c.l.b16 %v7580
        %v7601 = vunpack.c.l.b16 %v7581
        %v7602 = vunpack.c.l.b16 %v7582
        %v7603 = vunpack.c.l.b16 %v7583
        %v7604 = vunpack.c.l.b16 %v7584
        %v7605 = vunpack.c.l.b16 %v7585
        %v7606 = vpack.c.b16 %v7597, %v7596
        %v7607 = vpack.c.b16 %v7599, %v7598
        %v7608 = vpack.c.b16 %v7601, %v7600
        %v7609 = vpack.c.b16 %v7603, %v7602
        %v7610 = vpack.c.b16 %v7605, %v7604
        %v7617 = vsel %vm7286, %v7232, 0
        %7619 = vmatprep.subr.bf16.mxu0 0
        %7620 = vmatpush1.bf16.msra.mxu0 %v7606
        %7621 = vmatprep.subr.bf16.mxu0 0
        %7622 = vmatpush1.bf16.msra.mxu0 %v7607
        %7623 = vmatprep.subr.bf16.mxu0 0
        %7624 = vmatpush1.bf16.msra.mxu0 %v7608
        %7625 = vmatprep.subr.bf16.mxu0 0
        %7626 = vmatpush1.bf16.msra.mxu0 %v7609
        %7627 = vmatprep.subr.bf16.mxu0 0
        %7628 = vmatpush1.bf16.msra.mxu0 %v7610
        %7629 = vmatprep.subr.bf16.mxu0 0
        %7630 = vmatpush1.bf16.msra.mxu0 0
        %7631 = vmatprep.subr.bf16.mxu0 0
        %7632 = vmatpush1.bf16.msra.mxu0 0
        %7633 = vmatprep.subr.bf16.mxu0 0
        %7634 = vmatpush1.bf16.msra.mxu0 0
        %7635 = vmatprep.subr.bf16.mxu0 0
        %7636 = vmatpush1.bf16.msra.mxu0 0
        %7637 = vmatprep.subr.bf16.mxu0 0
        %7638 = vmatpush1.bf16.msra.mxu0 0
        %7639 = vmatprep.subr.bf16.mxu0 0
        %7640 = vmatpush1.bf16.msra.mxu0 0
        %7641 = vmatprep.subr.bf16.mxu0 0
        %7642 = vmatpush1.bf16.msra.mxu0 0
        %7643 = vmatprep.subr.bf16.mxu0 0
        %7644 = vmatpush1.bf16.msra.mxu0 0
        %7645 = vmatprep.subr.bf16.mxu0 0
        %7646 = vmatpush1.bf16.msra.mxu0 0
        %7647 = vmatprep.subr.bf16.mxu0 0
        %7648 = vmatpush1.bf16.msra.mxu0 0
        %7649 = vmatprep.subr.bf16.mxu0 0
        %7650 = vmatpush1.bf16.msra.mxu0 0
        %7651 = vmatprep.mubr.bf16.mxu0 0
        %7652 = vmatmul.mubr.bf16.gmra.mrb[0].mxu0 %v7617
        %v7653 = vpop.f32.mrb[0].mxu0
        %v7654 = vadd.f32 0.0, %v7653
        %v7655 = vpop.f32.mrb[0].mxu0
        %v7656 = vpop.f32.mrb[0].mxu0
        %v7657 = vpop.f32.mrb[0].mxu0
        %7658 = vdwg.mxu0
        %v7659 = vadd.f32 %v7574, %v7654
        %v7660 = vld [vmem:[%s16] sm:$0x1]
        %v7662 = vlaneseq
        %v7663 = vshrl.u32 %v7662, 7
        %v7664 = vsub.s32 0, %v7663
        %v7665 = vrot.slane %v7660, %v7664
        %v7667 = vadd.f32 %v7659, %v7665
        %v7668 = vmax.f32 %v7667, 0.0
        %v7669 = vpack.c.bf16 %v7668, %v7668
        %v7670 = vld [vmem:[%s17] sm:$0xf]
        %v7671 = vld [vmem:[%s17 + $0x4] sm:$0xf]
        %v7672 = vld [vmem:[%s17 + $0x8] sm:$0xf]
        %v7673 = vld [vmem:[%s17 + $0xc] sm:$0xf]
        %v7674 = vld [vmem:[%s17 + $0x10] sm:$0xf]
        %v7675 = vld [vmem:[%s17 + $0x14] sm:$0xf]
        %v7676 = vld [vmem:[%s17 + $0x18] sm:$0xf]
        %v7677 = vld [vmem:[%s17 + $0x1c] sm:$0xf]
        %v7678 = vld [vmem:[%s17 + $0x20] sm:$0xf]
        %v7679 = vld [vmem:[%s17 + $0x24] sm:$0xf]
        %v7680 = vld [vmem:[%s17 + $0x28] sm:$0xf]
        %v7681 = vld [vmem:[%s17 + $0x2c] sm:$0xf]
        %v7682 = vld [vmem:[%s17 + $0x30] sm:$0xf]
        %v7683 = vld [vmem:[%s17 + $0x34] sm:$0xf]
        %v7684 = vld [vmem:[%s17 + $0x38] sm:$0xf]
        %v7685 = vld [vmem:[%s18] sm:$0x1]
        %v7687 = vlaneseq
        %v7688 = vshrl.u32 %v7687, 7
        %v7689 = vsub.s32 0, %v7688
        %v7690 = vrot.slane %v7685, %v7689
        %v7707 = vunpack.c.l.b16 %v7670
        %v7708 = vunpack.c.l.b16 %v7671
        %v7709 = vunpack.c.l.b16 %v7672
        %v7710 = vunpack.c.l.b16 %v7673
        %v7711 = vunpack.c.l.b16 %v7674
        %v7712 = vunpack.c.l.b16 %v7675
        %v7713 = vunpack.c.l.b16 %v7676
        %v7714 = vunpack.c.l.b16 %v7677
        %v7715 = vunpack.c.l.b16 %v7678
        %v7716 = vunpack.c.l.b16 %v7679
        %v7717 = vunpack.c.l.b16 %v7680
        %v7718 = vunpack.c.l.b16 %v7681
        %v7719 = vunpack.c.l.b16 %v7682
        %v7720 = vunpack.c.l.b16 %v7683
        %v7721 = vunpack.c.l.b16 %v7684
        %v7722 = vpack.c.b16 %v7708, %v7707
        %v7723 = vpack.c.b16 %v7710, %v7709
        %v7724 = vpack.c.b16 %v7712, %v7711
        %v7725 = vpack.c.b16 %v7714, %v7713
        %v7726 = vpack.c.b16 %v7716, %v7715
        %v7727 = vpack.c.b16 %v7718, %v7717
        %v7728 = vpack.c.b16 %v7720, %v7719
        %v7729 = vpack.c.b16 %v7721, %v7721
        %vm7737 = vcmask 982016
        %v7739 = vsel %vm7737, %v7669, 0
        %v7742 = vsel %vm4641, %v7729, 0
        %7744 = vmatprep.subr.bf16.mxu0 0
        %7745 = vmatpush1.bf16.msra.mxu0 %v7722
        %7746 = vmatprep.subr.bf16.mxu0 0
        %7747 = vmatpush1.bf16.msra.mxu0 %v7723
        %7748 = vmatprep.subr.bf16.mxu0 0
        %7749 = vmatpush1.bf16.msra.mxu0 %v7724
        %7750 = vmatprep.subr.bf16.mxu0 0
        %7751 = vmatpush1.bf16.msra.mxu0 %v7725
        %7752 = vmatprep.subr.bf16.mxu0 0
        %7753 = vmatpush1.bf16.msra.mxu0 %v7726
        %7754 = vmatprep.subr.bf16.mxu0 0
        %7755 = vmatpush1.bf16.msra.mxu0 %v7727
        %7756 = vmatprep.subr.bf16.mxu0 0
        %7757 = vmatpush1.bf16.msra.mxu0 %v7728
        %7758 = vmatprep.subr.bf16.mxu0 0
        %7759 = vmatpush1.bf16.msra.mxu0 %v7742
        %7760 = vmatprep.subr.bf16.mxu0 0
        %7761 = vmatpush1.bf16.msra.mxu0 0
        %7762 = vmatprep.subr.bf16.mxu0 0
        %7763 = vmatpush1.bf16.msra.mxu0 0
        %7764 = vmatprep.subr.bf16.mxu0 0
        %7765 = vmatpush1.bf16.msra.mxu0 0
        %7766 = vmatprep.subr.bf16.mxu0 0
        %7767 = vmatpush1.bf16.msra.mxu0 0
        %7768 = vmatprep.subr.bf16.mxu0 0
        %7769 = vmatpush1.bf16.msra.mxu0 0
        %7770 = vmatprep.subr.bf16.mxu0 0
        %7771 = vmatpush1.bf16.msra.mxu0 0
        %7772 = vmatprep.subr.bf16.mxu0 0
        %7773 = vmatpush1.bf16.msra.mxu0 0
        %7774 = vmatprep.subr.bf16.mxu0 0
        %7775 = vmatpush1.bf16.msra.mxu0 0
        %7776 = vmatprep.mubr.bf16.mxu0 0
        %7777 = vmatmul.mubr.bf16.gmra.mrb[0].mxu0 %v7739
        %v7778 = vpop.f32.mrb[0].mxu0
        %v7779 = vadd.f32 %v7690, %v7778
        %v7780 = vpop.f32.mrb[0].mxu0
        %v7781 = vpop.f32.mrb[0].mxu0
        %v7782 = vpop.f32.mrb[0].mxu0
        %7783 = vdwg.mxu0
        %v7784 = vmax.f32 %v7779, 0.0
        %v7785 = vpack.c.bf16 %v7784, %v7784
        %v7786 = vld [vmem:[%s19] sm:$0xf]
        %v7787 = vld [vmem:[%s19 + $0x4] sm:$0xf]
        %v7788 = vld [vmem:[%s19 + $0x8] sm:$0xf]
        %v7789 = vld [vmem:[%s19 + $0xc] sm:$0xf]
        %v7790 = vld [vmem:[%s19 + $0x10] sm:$0xf]
        %v7791 = vld [vmem:[%s19 + $0x14] sm:$0xf]
        %v7792 = vld [vmem:[%s19 + $0x18] sm:$0xf]
        %v7793 = vld [vmem:[%s19 + $0x1c] sm:$0xf]
        %v7794 = vld [vmem:[%s19 + $0x20] sm:$0xf]
        %v7795 = vld [vmem:[%s19 + $0x24] sm:$0xf]
        %v7796 = vld [vmem:[%s19 + $0x28] sm:$0x3]
        %v7797 = vld [vmem:[%s20] sm:$0x1]
        %v7799 = vlaneseq
        %v7800 = vshrl.u32 %v7799, 7
        %v7801 = vsub.s32 0, %v7800
        %v7802 = vrot.slane %v7797, %v7801
        %v7815 = vunpack.c.l.b16 %v7786
        %v7816 = vunpack.c.l.b16 %v7787
        %v7817 = vunpack.c.l.b16 %v7788
        %v7818 = vunpack.c.l.b16 %v7789
        %v7819 = vunpack.c.l.b16 %v7790
        %v7820 = vunpack.c.l.b16 %v7791
        %v7821 = vunpack.c.l.b16 %v7792
        %v7822 = vunpack.c.l.b16 %v7793
        %v7823 = vunpack.c.l.b16 %v7794
        %v7824 = vunpack.c.l.b16 %v7795
        %v7825 = vunpack.c.l.b16 %v7796
        %v7826 = vpack.c.b16 %v7816, %v7815
        %v7827 = vpack.c.b16 %v7818, %v7817
        %v7828 = vpack.c.b16 %v7820, %v7819
        %v7829 = vpack.c.b16 %v7822, %v7821
        %v7830 = vpack.c.b16 %v7824, %v7823
        %v7831 = vpack.c.b16 %v7825, %v7825
        %v7838 = vsel %vm5176, %v7785, 0
        %v7841 = vsel %vm5198, %v7831, 0
        %7843 = vmatprep.subr.bf16.mxu0 0
        %7844 = vmatpush1.bf16.msra.mxu0 %v7826
        %7845 = vmatprep.subr.bf16.mxu0 0
        %7846 = vmatpush1.bf16.msra.mxu0 %v7827
        %7847 = vmatprep.subr.bf16.mxu0 0
        %7848 = vmatpush1.bf16.msra.mxu0 %v7828
        %7849 = vmatprep.subr.bf16.mxu0 0
        %7850 = vmatpush1.bf16.msra.mxu0 %v7829
        %7851 = vmatprep.subr.bf16.mxu0 0
        %7852 = vmatpush1.bf16.msra.mxu0 %v7830
        %7853 = vmatprep.subr.bf16.mxu0 0
        %7854 = vmatpush1.bf16.msra.mxu0 %v7841
        %7855 = vmatprep.subr.bf16.mxu0 0
        %7856 = vmatpush1.bf16.msra.mxu0 0
        %7857 = vmatprep.subr.bf16.mxu0 0
        %7858 = vmatpush1.bf16.msra.mxu0 0
        %7859 = vmatprep.subr.bf16.mxu0 0
        %7860 = vmatpush1.bf16.msra.mxu0 0
        %7861 = vmatprep.subr.bf16.mxu0 0
        %7862 = vmatpush1.bf16.msra.mxu0 0
        %7863 = vmatprep.subr.bf16.mxu0 0
        %7864 = vmatpush1.bf16.msra.mxu0 0
        %7865 = vmatprep.subr.bf16.mxu0 0
        %7866 = vmatpush1.bf16.msra.mxu0 0
        %7867 = vmatprep.subr.bf16.mxu0 0
        %7868 = vmatpush1.bf16.msra.mxu0 0
        %7869 = vmatprep.subr.bf16.mxu0 0
        %7870 = vmatpush1.bf16.msra.mxu0 0
        %7871 = vmatprep.subr.bf16.mxu0 0
        %7872 = vmatpush1.bf16.msra.mxu0 0
        %7873 = vmatprep.subr.bf16.mxu0 0
        %7874 = vmatpush1.bf16.msra.mxu0 0
        %7875 = vmatprep.mubr.bf16.mxu0 0
        %7876 = vmatmul.mubr.bf16.gmra.mrb[0].mxu0 %v7838
        %v7877 = vpop.f32.mrb[0].mxu0
        %v7878 = vadd.f32 %v7802, %v7877
        %v7879 = vpop.f32.mrb[0].mxu0
        %v7880 = vpop.f32.mrb[0].mxu0
        %v7881 = vpop.f32.mrb[0].mxu0
        %7882 = vdwg.mxu0
        %7883 = vst [vmem:[%s650] sm:$0xff] %v7878
        %s7884 = sand.u32 %s489, 1
        %s7885 = scalar_lea.sflag [#allocation3], %s7884
        %s7886 = sand.u32 %s489, 1
        %s7887 = smul.addr %s7886, 8
        %s7888 = scalar_lea.vmem [#allocation2], %s7887
        // Predicated region
        $region105: #{convonn_forward.1} parent=103 // pred_check
          %p7889 = pneg %p499
        $region106: #{convonn_forward.1} parent=103 // pred_check_branch
          %7891 = sbr.rel (%p7889) target = $region108
        $region107: #{convonn_forward.1} parent=103 // pred_region
          %s7893 = ssub.s32 128, 128
          %7894 = vsyncadd %s7885, %s7893
          %s7895 = smul.addr %s35, 128
          %s7896 = scalar_lea.hbm %s21, %s7895
          %s7898 = sshll.u32 %s7888, 4
          %s7899 = int_to_ptr.vmem [resolvable:$true] %s7898
          %7901 = dma.vmem_to_hbm [thread:$0]  %s7899, 128, %s7896, %s7885
        $region108: #{convonn_forward.1} parent=103 // pred_fallthru
          _
      $region104: #{convonn_forward.1} parent=5 // pred_fallthru
        _
      %p7902 = scmp.le.s32.totalorder 2, %s30
      // Predicated region
      $region109: #{convonn_forward.1} parent=5 // pred_check
        %p7903 = pneg %p7902
      $region110: #{convonn_forward.1} parent=5 // pred_check_branch
        %7905 = sbr.rel (%p7903) target = $region112
      $region111: #{convonn_forward.1} parent=5 // pred_region
        %s7906 = ssub.s32 %s30, 2
        // Predicated region
        $region113: #{convonn_forward.1} parent=111 // pred_check
          %p7907 = pneg %p505
        $region114: #{convonn_forward.1} parent=111 // pred_check_branch
          %7909 = sbr.rel (%p7907) target = $region116
        $region115: #{convonn_forward.1} parent=111 // pred_region
          %s7910 = sand.u32 %s490, 1
          %s7911 = scalar_lea.sflag [#allocation3], %s7910
          %s7912 = sand.u32 %s490, 1
          %s7913 = smul.addr %s7912, 8
          %s7914 = scalar_lea.vmem [#allocation2], %s7913
          %7915 = dma.done %s7911, 128
        $region116: #{convonn_forward.1} parent=111 // pred_fallthru
          _
      $region112: #{convonn_forward.1} parent=5 // pred_fallthru
        _
    $region6: #{convonn_forward.1} parent=1 // loop_footer
      %s34 = sadd.s32 1, %s30
    $region7: #{convonn_forward.1} parent=1 // loop_footer_branch
      %29 = sbr.rel target = $region3
    $region8: #{convonn_forward.1} parent=1 // loop_exit
      _
    %7916 = vsyncpa [#allocation3], 1
    %s7917 = scalar_lea.sflag [#allocation3], 1
    %7918 = vsyncpa %s7917, 1

</llo_original>
